<compile_context>
chip_gen: v7x
topology: tpu7x:2x2x1
jax: 0.10.0
libtpu: 0.0.40
codegen_flags: <defaults>
</compile_context>

<pallas_src>
import functools

import jax
import jax.numpy as jnp
import numpy as np
from jax import lax
from jax.experimental import pallas as pl
from jax.experimental.pallas import tpu as pltpu

# Left pad (in padded-W columns) in front of the interior of the padded
# scratch. 16 keeps the big interior store sublane-tile aligned for bf16
# (16-row sublane tiles) as well as f32 (8-row tiles); the kw = 0..2 windows
# then start at columns _LPAD - 1 + kw (unaligned *loads* only, done once each).
_LPAD = 16


def conv_block_kernel(x_ref, w_ref, b_ref, o_ref, xpad_ref, xcat_ref, *,
                      H, W, B, bypass):
    """B batch images per grid step.

    x_ref:    (B, Cin, H*W)              NCHW input, spatial dims flattened
    w_ref:    (Cout, 9*Cin)              weights, inner order (kh, kw, ci)
                                         (eval-mode BN scale folded), MXU dtype
    b_ref:    (Cout, 1)                  f32 bias (BN shift folded in)
    o_ref:    (B, Cout, H*W)             output (lane-dense last dim)
    xpad_ref: (B*(H+2), _LPAD+W+1, Cin)  MXU-dtype scratch, zero halo
    xcat_ref: (B*H*W, 9*Cin)             MXU-dtype scratch (im2col slab)
    """
    cin = x_ref.shape[1]
    HW = H * W
    Hp = H + 2

    zrow = jnp.zeros((1, W + 2, cin), xpad_ref.dtype)
    zcol = jnp.zeros((H, 1, cin), xpad_ref.dtype)

    for b in range(B):
        r0 = b * Hp

        # ---- stage 1: NCHW tile -> zero-padded channels-last scratch.
        # Only the halo cells actually read by the 3x3 windows are zeroed
        # (rows 0 / H+1 and columns _LPAD-1, _LPAD+W); the interior is fully
        # overwritten below and columns < _LPAD-1 are never read.
        xpad_ref[r0:r0 + 1, _LPAD - 1:_LPAD + W + 1, :] = zrow
        xpad_ref[r0 + H + 1:r0 + H + 2, _LPAD - 1:_LPAD + W + 1, :] = zrow
        xpad_ref[r0 + 1:r0 + 1 + H, _LPAD - 1:_LPAD, :] = zcol
        xpad_ref[r0 + 1:r0 + 1 + H, _LPAD + W:_LPAD + W + 1, :] = zcol

        x_cp = x_ref[b]                                          # (Cin, H*W)
        x_hwc = jnp.transpose(x_cp, (1, 0)).reshape(H, W, cin)   # (H, W, Cin)
        xpad_ref[r0 + 1:r0 + 1 + H, _LPAD:_LPAD + W, :] = (
            x_hwc.astype(xpad_ref.dtype))                        # cast at store

        # ---- stage 2: im2col slab with kh AND kw fused along channels
        # (single K = 9*Cin contraction).  Each shifted window is loaded once
        # and written with a direct slice-store (no vreg-materialized concat).
        # NOTE: the (H, W, Cin)->(H*W, Cin) reshape is a free view when W is a
        # multiple of the sublane tile of the MXU dtype (16 for bf16).
        for kh in range(3):
            for kw in range(3):
                c0 = _LPAD - 1 + kw
                win = xpad_ref[r0 + kh:r0 + kh + H, c0:c0 + W, :]  # (H,W,Cin)
                idx = kh * 3 + kw
                xcat_ref[b * HW:(b + 1) * HW,
                         idx * cin:(idx + 1) * cin] = win.reshape(HW, cin)

    # ---- stage 3: one MXU contraction, K = 9*Cin, f32 accumulation.  Result
    # is channel-major (Cout, B*H*W) so all output stores are lane-dense.
    acc = lax.dot_general(
        w_ref[...], xcat_ref[...], (((1,), (1,)), ((), ())),
        preferred_element_type=jnp.float32)                      # (Cout, B*HW)

    # ---- stage 4: epilogue in f32 (bias, optional residual, ReLU).
    for b in range(B):
        y = acc[:, b * HW:(b + 1) * HW] + b_ref[...]             # (Cout, HW)
        if bypass:
            y = y + x_ref[b].astype(jnp.float32)                 # Cin == Cout
        o_ref[b] = jnp.maximum(y, 0.0).astype(o_ref.dtype)


def _pick_batch_block(n, cout, hw):
    """Images per grid step: amortize per-step overhead, but keep the live
    f32 accumulator (Cout * B*HW * 4 B) <= 128 KiB (half the vreg file)."""
    for b in (4, 3, 2, 1):
        if n % b == 0 and cout * b * hw * 4 <= 128 * 1024:
            return b
    return 1


def convolutional_block(x_nchw, weight_oihw, bias, *, bypass=False,
                        bn_gamma=None, bn_beta=None, bn_mean=None, bn_var=None,
                        bn_eps=1e-5, mxu_dtype=jnp.bfloat16,
                        vmem_limit_bytes=None):
    """Forward pass of ConvolutionalBlock (Conv3x3 [+BN] [+bypass] -> ReLU).

    Eval-mode BatchNorm (running stats) is folded into the conv weight/bias.
    Passing bf16 activations halves the input/output DMA; accumulation and
    the epilogue stay in f32 regardless.
    """
    # TODO(synk): training-mode BatchNorm (batch statistics) is not folded;
    # only eval-mode running-stat semantics are implemented here.
    N, Cin, H, W = x_nchw.shape
    Cout, Cin_w, KH, KW = weight_oihw.shape
    assert (KH, KW) == (3, 3) and Cin_w == Cin
    if bypass:
        assert Cin == Cout, "bypass=True requires in_channels == out_channels"

    # Fold eval-mode BN into the conv weight/bias (f32); arrange the weight as
    # (Cout, 9*Cin) with inner order (kh, kw, ci) matching the im2col slab.
    w_f32 = weight_oihw.astype(jnp.float32)
    b_f32 = bias.astype(jnp.float32)
    if bn_gamma is not None:
        scale = bn_gamma / jnp.sqrt(bn_var + bn_eps)
        w_f32 = w_f32 * scale[:, None, None, None]
        b_f32 = b_f32 * scale + (bn_beta - bn_mean * scale)
    w9 = jnp.transpose(w_f32, (0, 2, 3, 1)).reshape(Cout, 9 * Cin)
    w9 = w9.astype(mxu_dtype)
    b2 = b_f32.reshape(Cout, 1)

    HW = H * W
    x_flat = x_nchw.reshape(N, Cin, HW)          # pure view of NCHW, no copies
    B = _pick_batch_block(N, Cout, HW)

    # Explicit scoped-VMEM limit (matters on v5e, 16 MiB default): scratches +
    # double-buffered in/out blocks + weights, with generous headroom.
    itemsize = jnp.dtype(mxu_dtype).itemsize
    xpad_bytes = B * (H + 2) * (_LPAD + W + 1) * Cin * itemsize
    xcat_bytes = B * HW * 9 * Cin * itemsize
    io_bytes = 2 * (B * Cin * HW + B * Cout * HW) * x_flat.dtype.itemsize
    w_bytes = Cout * 9 * Cin * itemsize + Cout * 4
    if vmem_limit_bytes is None:
        vmem_limit_bytes = min(
            128 * 1024 * 1024,
            max(8 * 1024 * 1024,
                2 * (xpad_bytes + xcat_bytes + io_bytes + w_bytes) + (2 << 20)))

    flops = 2 * N * HW * 9 * Cin * Cout
    bytes_accessed = (x_flat.size * x_flat.dtype.itemsize
                      + w9.size * w9.dtype.itemsize + b2.size * 4
                      + N * Cout * HW * x_nchw.dtype.itemsize)

    kernel = functools.partial(conv_block_kernel, H=H, W=W, B=B, bypass=bypass)
    out_flat = pl.pallas_call(
        kernel,
        out_shape=jax.ShapeDtypeStruct((N, Cout, HW), x_nchw.dtype),
        grid_spec=pltpu.PrefetchScalarGridSpec(
            num_scalar_prefetch=0,
            grid=(N // B,),
            in_specs=[
                pl.BlockSpec((B, Cin, HW), lambda n: (n, 0, 0)),
                pl.BlockSpec((Cout, 9 * Cin), lambda n: (0, 0)),
                pl.BlockSpec((Cout, 1), lambda n: (0, 0)),
            ],
            out_specs=pl.BlockSpec((B, Cout, HW), lambda n: (n, 0, 0)),
            scratch_shapes=[
                pltpu.VMEM((B * (H + 2), _LPAD + W + 1, Cin), mxu_dtype),
                pltpu.VMEM((B * HW, 9 * Cin), mxu_dtype),
            ]),
        compiler_params=pltpu.CompilerParams(
            dimension_semantics=("parallel",),
            vmem_limit_bytes=int(vmem_limit_bytes)),
        cost_estimate=pl.CostEstimate(
            flops=flops, transcendentals=0, bytes_accessed=bytes_accessed),
    )(x_flat, w9, b2)

    return out_flat.reshape(N, Cout, H, W)


def _reference(x_nchw, weight_oihw, bias, *, bypass=False, bn=None):
    y = lax.conv_general_dilated(
        x_nchw, weight_oihw, window_strides=(1, 1), padding=((1, 1), (1, 1)),
        dimension_numbers=("NCHW", "OIHW", "NCHW"))
    y = y + bias[None, :, None, None]
    if bn is not None:
        gamma, beta, mean, var, eps = bn
        y = ((y - mean[None, :, None, None])
             / jnp.sqrt(var[None, :, None, None] + eps)
             * gamma[None, :, None, None] + beta[None, :, None, None])
    if bypass:
        y = y + x_nchw
    return jnp.maximum(y, 0.0)


if __name__ == "__main__":
    # Module defaults: in_channels=32, out_channels=32, bypass=False, batch_norm=False
    N, Cin, Cout, H, W = 2, 32, 32, 16, 16

    key = jax.random.PRNGKey(0)
    kx, kw_, kb, kg, kbt, km, kv = jax.random.split(key, 7)

    x = jax.random.normal(kx, (N, Cin, H, W), dtype=jnp.float32)
    # PyTorch-style init: uniform(-bound, bound), bound = 1/sqrt(fan_in)
    fan_in = Cin * 3 * 3
    bound = 1.0 / np.sqrt(fan_in)
    weight = jax.random.uniform(kw_, (Cout, Cin, 3, 3), jnp.float32, -bound, bound)
    bias = jax.random.uniform(kb, (Cout,), jnp.float32, -bound, bound)

    # 1) Default config (bypass=False, no BN).
    out = jax.block_until_ready(convolutional_block(x, weight, bias, bypass=False))
    ref = _reference(x, weight, bias, bypass=False)
    assert out.shape == (N, Cout, H, W)
    # bf16 MXU inputs with f32 accumulation -> loose tolerance vs f32 reference.
    assert np.allclose(np.asarray(out), np.asarray(ref), atol=2e-2, rtol=2e-2)

    # 2) Residual bypass path (Cin == Cout).
    out_b = jax.block_until_ready(convolutional_block(x, weight, bias, bypass=True))
    ref_b = _reference(x, weight, bias, bypass=True)
    assert np.allclose(np.asarray(out_b), np.asarray(ref_b), atol=2e-2, rtol=2e-2)

    # 3) Eval-mode BatchNorm fold (batch_norm=True config).
    gamma = jax.random.uniform(kg, (Cout,), jnp.float32, 0.5, 1.5)
    beta = 0.1 * jax.random.normal(kbt, (Cout,), jnp.float32)
    mean = 0.1 * jax.random.normal(km, (Cout,), jnp.float32)
    var = jax.random.uniform(kv, (Cout,), jnp.float32, 0.5, 1.5)
    out_bn = jax.block_until_ready(convolutional_block(
        x, weight, bias, bypass=False,
        bn_gamma=gamma, bn_beta=beta, bn_mean=mean, bn_var=var, bn_eps=1e-5))
    ref_bn = _reference(x, weight, bias, bypass=False,
                        bn=(gamma, beta, mean, var, 1e-5))
    assert np.allclose(np.asarray(out_bn), np.asarray(ref_bn), atol=3e-2, rtol=3e-2)

    print("KERNEL_OK")
</pallas_src>

<mosaic_0001>
module attributes {stable_mosaic.version = 11 : i64} {
  func.func @conv_block_kernel(%arg0: i32, %arg1: memref<2x32x256xf32, #tpu.memory_space<vmem>>, %arg2: memref<32x288xbf16, #tpu.memory_space<vmem>>, %arg3: memref<32x1xf32, #tpu.memory_space<vmem>>, %arg4: memref<2x32x256xf32, #tpu.memory_space<vmem>>, %arg5: memref<36x33x32xbf16, #tpu.memory_space<vmem>>, %arg6: memref<512x288xbf16, #tpu.memory_space<vmem>>) attributes {dimension_semantics = [#tpu.dimension_semantics<parallel>], iteration_bounds = array<i64: 1>, scalar_prefetch = 0 : i64, scratch_operands = 2 : i64, tpu.core_type = #tpu.core_type<tc>, window_params = [{transform_indices = @transform_0, window_bounds = array<i64: 2, 32, 256>}, {pipeline_mode = #tpu.pipeline_mode<synchronous>, transform_indices = @transform_1, window_bounds = array<i64: 32, 288>}, {pipeline_mode = #tpu.pipeline_mode<synchronous>, transform_indices = @transform_2, window_bounds = array<i64: 32, 1>}, {transform_indices = @transform_3, window_bounds = array<i64: 2, 32, 256>}]} {
    %cst = arith.constant 0.000000e+00 : bf16
    %0 = vector.broadcast %cst : bf16 to vector<1x18x32xbf16>
    %cst_0 = arith.constant 0.000000e+00 : bf16
    %1 = vector.broadcast %cst_0 : bf16 to vector<16x1x32xbf16>
    %c0 = arith.constant 0 : index
    %c15 = arith.constant 15 : index
    %c0_1 = arith.constant 0 : index
    %2 = vector.load %arg5[%c0, %c15, %c0_1] : memref<36x33x32xbf16, #tpu.memory_space<vmem>>, vector<1x18x32xbf16>
    tpu.vector_store %arg5[%c0, %c15, %c0_1], %0 {strides = array<i32>} : memref<36x33x32xbf16, #tpu.memory_space<vmem>>, vector<1x18x32xbf16>,
    %c17 = arith.constant 17 : index
    %c15_2 = arith.constant 15 : index
    %c0_3 = arith.constant 0 : index
    %3 = vector.load %arg5[%c17, %c15_2, %c0_3] : memref<36x33x32xbf16, #tpu.memory_space<vmem>>, vector<1x18x32xbf16>
    tpu.vector_store %arg5[%c17, %c15_2, %c0_3], %0 {strides = array<i32>} : memref<36x33x32xbf16, #tpu.memory_space<vmem>>, vector<1x18x32xbf16>,
    %c1 = arith.constant 1 : index
    %c15_4 = arith.constant 15 : index
    %c0_5 = arith.constant 0 : index
    %4 = vector.load %arg5[%c1, %c15_4, %c0_5] : memref<36x33x32xbf16, #tpu.memory_space<vmem>>, vector<16x1x32xbf16>
    tpu.vector_store %arg5[%c1, %c15_4, %c0_5], %1 {strides = array<i32>} : memref<36x33x32xbf16, #tpu.memory_space<vmem>>, vector<16x1x32xbf16>,
    %c1_6 = arith.constant 1 : index
    %c32 = arith.constant 32 : index
    %c0_7 = arith.constant 0 : index
    %5 = vector.load %arg5[%c1_6, %c32, %c0_7] : memref<36x33x32xbf16, #tpu.memory_space<vmem>>, vector<16x1x32xbf16>
    tpu.vector_store %arg5[%c1_6, %c32, %c0_7], %1 {strides = array<i32>} : memref<36x33x32xbf16, #tpu.memory_space<vmem>>, vector<16x1x32xbf16>,
    %c0_8 = arith.constant 0 : index
    %c0_9 = arith.constant 0 : index
    %c0_10 = arith.constant 0 : index
    %6 = vector.load %arg1[%c0_8, %c0_9, %c0_10] : memref<2x32x256xf32, #tpu.memory_space<vmem>>, vector<1x32x256xf32>
    %7 = vector.shape_cast %6 : vector<1x32x256xf32> to vector<32x256xf32>
    %8 = tpu.transpose %7, [1, 0] : vector<32x256xf32> -> vector<256x32xf32>
    %9 = vector.shape_cast %8 : vector<256x32xf32> to vector<16x16x32xf32>
    %10 = arith.truncf %9 : vector<16x16x32xf32> to vector<16x16x32xbf16>
    %c1_11 = arith.constant 1 : index
    %c16 = arith.constant 16 : index
    %c0_12 = arith.constant 0 : index
    %11 = vector.load %arg5[%c1_11, %c16, %c0_12] : memref<36x33x32xbf16, #tpu.memory_space<vmem>>, vector<16x16x32xbf16>
    tpu.vector_store %arg5[%c1_11, %c16, %c0_12], %10 {strides = array<i32>} : memref<36x33x32xbf16, #tpu.memory_space<vmem>>, vector<16x16x32xbf16>,
    %c0_13 = arith.constant 0 : index
    %c15_14 = arith.constant 15 : index
    %c0_15 = arith.constant 0 : index
    %12 = vector.load %arg5[%c0_13, %c15_14, %c0_15] : memref<36x33x32xbf16, #tpu.memory_space<vmem>>, vector<16x16x32xbf16>
    %13 = vector.shape_cast %12 : vector<16x16x32xbf16> to vector<256x32xbf16>
    %c0_16 = arith.constant 0 : index
    %c0_17 = arith.constant 0 : index
    %14 = vector.load %arg6[%c0_16, %c0_17] : memref<512x288xbf16, #tpu.memory_space<vmem>>, vector<256x32xbf16>
    tpu.vector_store %arg6[%c0_16, %c0_17], %13 {strides = array<i32>} : memref<512x288xbf16, #tpu.memory_space<vmem>>, vector<256x32xbf16>,
    %c0_18 = arith.constant 0 : index
    %c16_19 = arith.constant 16 : index
    %c0_20 = arith.constant 0 : index
    %15 = vector.load %arg5[%c0_18, %c16_19, %c0_20] : memref<36x33x32xbf16, #tpu.memory_space<vmem>>, vector<16x16x32xbf16>
    %16 = vector.shape_cast %15 : vector<16x16x32xbf16> to vector<256x32xbf16>
    %c0_21 = arith.constant 0 : index
    %c32_22 = arith.constant 32 : index
    %17 = vector.load %arg6[%c0_21, %c32_22] : memref<512x288xbf16, #tpu.memory_space<vmem>>, vector<256x32xbf16>
    tpu.vector_store %arg6[%c0_21, %c32_22], %16 {strides = array<i32>} : memref<512x288xbf16, #tpu.memory_space<vmem>>, vector<256x32xbf16>,
    %c0_23 = arith.constant 0 : index
    %c17_24 = arith.constant 17 : index
    %c0_25 = arith.constant 0 : index
    %18 = vector.load %arg5[%c0_23, %c17_24, %c0_25] : memref<36x33x32xbf16, #tpu.memory_space<vmem>>, vector<16x16x32xbf16>
    %19 = vector.shape_cast %18 : vector<16x16x32xbf16> to vector<256x32xbf16>
    %c0_26 = arith.constant 0 : index
    %c64 = arith.constant 64 : index
    %20 = vector.load %arg6[%c0_26, %c64] : memref<512x288xbf16, #tpu.memory_space<vmem>>, vector<256x32xbf16>
    tpu.vector_store %arg6[%c0_26, %c64], %19 {strides = array<i32>} : memref<512x288xbf16, #tpu.memory_space<vmem>>, vector<256x32xbf16>,
    %c1_27 = arith.constant 1 : index
    %c15_28 = arith.constant 15 : index
    %c0_29 = arith.constant 0 : index
    %21 = vector.load %arg5[%c1_27, %c15_28, %c0_29] : memref<36x33x32xbf16, #tpu.memory_space<vmem>>, vector<16x16x32xbf16>
    %22 = vector.shape_cast %21 : vector<16x16x32xbf16> to vector<256x32xbf16>
    %c0_30 = arith.constant 0 : index
    %c96 = arith.constant 96 : index
    %23 = vector.load %arg6[%c0_30, %c96] : memref<512x288xbf16, #tpu.memory_space<vmem>>, vector<256x32xbf16>
    tpu.vector_store %arg6[%c0_30, %c96], %22 {strides = array<i32>} : memref<512x288xbf16, #tpu.memory_space<vmem>>, vector<256x32xbf16>,
    %c1_31 = arith.constant 1 : index
    %c16_32 = arith.constant 16 : index
    %c0_33 = arith.constant 0 : index
    %24 = vector.load %arg5[%c1_31, %c16_32, %c0_33] : memref<36x33x32xbf16, #tpu.memory_space<vmem>>, vector<16x16x32xbf16>
    %25 = vector.shape_cast %24 : vector<16x16x32xbf16> to vector<256x32xbf16>
    %c0_34 = arith.constant 0 : index
    %c128 = arith.constant 128 : index
    %26 = vector.load %arg6[%c0_34, %c128] : memref<512x288xbf16, #tpu.memory_space<vmem>>, vector<256x32xbf16>
    tpu.vector_store %arg6[%c0_34, %c128], %25 {strides = array<i32>} : memref<512x288xbf16, #tpu.memory_space<vmem>>, vector<256x32xbf16>,
    %c1_35 = arith.constant 1 : index
    %c17_36 = arith.constant 17 : index
    %c0_37 = arith.constant 0 : index
    %27 = vector.load %arg5[%c1_35, %c17_36, %c0_37] : memref<36x33x32xbf16, #tpu.memory_space<vmem>>, vector<16x16x32xbf16>
    %28 = vector.shape_cast %27 : vector<16x16x32xbf16> to vector<256x32xbf16>
    %c0_38 = arith.constant 0 : index
    %c160 = arith.constant 160 : index
    %29 = vector.load %arg6[%c0_38, %c160] : memref<512x288xbf16, #tpu.memory_space<vmem>>, vector<256x32xbf16>
    tpu.vector_store %arg6[%c0_38, %c160], %28 {strides = array<i32>} : memref<512x288xbf16, #tpu.memory_space<vmem>>, vector<256x32xbf16>,
    %c2 = arith.constant 2 : index
    %c15_39 = arith.constant 15 : index
    %c0_40 = arith.constant 0 : index
    %30 = vector.load %arg5[%c2, %c15_39, %c0_40] : memref<36x33x32xbf16, #tpu.memory_space<vmem>>, vector<16x16x32xbf16>
    %31 = vector.shape_cast %30 : vector<16x16x32xbf16> to vector<256x32xbf16>
    %c0_41 = arith.constant 0 : index
    %c192 = arith.constant 192 : index
    %32 = vector.load %arg6[%c0_41, %c192] : memref<512x288xbf16, #tpu.memory_space<vmem>>, vector<256x32xbf16>
    tpu.vector_store %arg6[%c0_41, %c192], %31 {strides = array<i32>} : memref<512x288xbf16, #tpu.memory_space<vmem>>, vector<256x32xbf16>,
    %c2_42 = arith.constant 2 : index
    %c16_43 = arith.constant 16 : index
    %c0_44 = arith.constant 0 : index
    %33 = vector.load %arg5[%c2_42, %c16_43, %c0_44] : memref<36x33x32xbf16, #tpu.memory_space<vmem>>, vector<16x16x32xbf16>
    %34 = vector.shape_cast %33 : vector<16x16x32xbf16> to vector<256x32xbf16>
    %c0_45 = arith.constant 0 : index
    %c224 = arith.constant 224 : index
    %35 = vector.load %arg6[%c0_45, %c224] : memref<512x288xbf16, #tpu.memory_space<vmem>>, vector<256x32xbf16>
    tpu.vector_store %arg6[%c0_45, %c224], %34 {strides = array<i32>} : memref<512x288xbf16, #tpu.memory_space<vmem>>, vector<256x32xbf16>,
    %c2_46 = arith.constant 2 : index
    %c17_47 = arith.constant 17 : index
    %c0_48 = arith.constant 0 : index
    %36 = vector.load %arg5[%c2_46, %c17_47, %c0_48] : memref<36x33x32xbf16, #tpu.memory_space<vmem>>, vector<16x16x32xbf16>
    %37 = vector.shape_cast %36 : vector<16x16x32xbf16> to vector<256x32xbf16>
    %c0_49 = arith.constant 0 : index
    %c256 = arith.constant 256 : index
    %38 = vector.load %arg6[%c0_49, %c256] : memref<512x288xbf16, #tpu.memory_space<vmem>>, vector<256x32xbf16>
    tpu.vector_store %arg6[%c0_49, %c256], %37 {strides = array<i32>} : memref<512x288xbf16, #tpu.memory_space<vmem>>, vector<256x32xbf16>,
    %c18 = arith.constant 18 : index
    %c15_50 = arith.constant 15 : index
    %c0_51 = arith.constant 0 : index
    %39 = vector.load %arg5[%c18, %c15_50, %c0_51] : memref<36x33x32xbf16, #tpu.memory_space<vmem>>, vector<1x18x32xbf16>
    tpu.vector_store %arg5[%c18, %c15_50, %c0_51], %0 {strides = array<i32>} : memref<36x33x32xbf16, #tpu.memory_space<vmem>>, vector<1x18x32xbf16>,
    %c35 = arith.constant 35 : index
    %c15_52 = arith.constant 15 : index
    %c0_53 = arith.constant 0 : index
    %40 = vector.load %arg5[%c35, %c15_52, %c0_53] : memref<36x33x32xbf16, #tpu.memory_space<vmem>>, vector<1x18x32xbf16>
    tpu.vector_store %arg5[%c35, %c15_52, %c0_53], %0 {strides = array<i32>} : memref<36x33x32xbf16, #tpu.memory_space<vmem>>, vector<1x18x32xbf16>,
    %c19 = arith.constant 19 : index
    %c15_54 = arith.constant 15 : index
    %c0_55 = arith.constant 0 : index
    %41 = vector.load %arg5[%c19, %c15_54, %c0_55] : memref<36x33x32xbf16, #tpu.memory_space<vmem>>, vector<16x1x32xbf16>
    tpu.vector_store %arg5[%c19, %c15_54, %c0_55], %1 {strides = array<i32>} : memref<36x33x32xbf16, #tpu.memory_space<vmem>>, vector<16x1x32xbf16>,
    %c19_56 = arith.constant 19 : index
    %c32_57 = arith.constant 32 : index
    %c0_58 = arith.constant 0 : index
    %42 = vector.load %arg5[%c19_56, %c32_57, %c0_58] : memref<36x33x32xbf16, #tpu.memory_space<vmem>>, vector<16x1x32xbf16>
    tpu.vector_store %arg5[%c19_56, %c32_57, %c0_58], %1 {strides = array<i32>} : memref<36x33x32xbf16, #tpu.memory_space<vmem>>, vector<16x1x32xbf16>,
    %c1_59 = arith.constant 1 : index
    %c0_60 = arith.constant 0 : index
    %c0_61 = arith.constant 0 : index
    %43 = vector.load %arg1[%c1_59, %c0_60, %c0_61] : memref<2x32x256xf32, #tpu.memory_space<vmem>>, vector<1x32x256xf32>
    %44 = vector.shape_cast %43 : vector<1x32x256xf32> to vector<32x256xf32>
    %45 = tpu.transpose %44, [1, 0] : vector<32x256xf32> -> vector<256x32xf32>
    %46 = vector.shape_cast %45 : vector<256x32xf32> to vector<16x16x32xf32>
    %47 = arith.truncf %46 : vector<16x16x32xf32> to vector<16x16x32xbf16>
    %c19_62 = arith.constant 19 : index
    %c16_63 = arith.constant 16 : index
    %c0_64 = arith.constant 0 : index
    %48 = vector.load %arg5[%c19_62, %c16_63, %c0_64] : memref<36x33x32xbf16, #tpu.memory_space<vmem>>, vector<16x16x32xbf16>
    tpu.vector_store %arg5[%c19_62, %c16_63, %c0_64], %47 {strides = array<i32>} : memref<36x33x32xbf16, #tpu.memory_space<vmem>>, vector<16x16x32xbf16>,
    %c18_65 = arith.constant 18 : index
    %c15_66 = arith.constant 15 : index
    %c0_67 = arith.constant 0 : index
    %49 = vector.load %arg5[%c18_65, %c15_66, %c0_67] : memref<36x33x32xbf16, #tpu.memory_space<vmem>>, vector<16x16x32xbf16>
    %50 = vector.shape_cast %49 : vector<16x16x32xbf16> to vector<256x32xbf16>
    %c256_68 = arith.constant 256 : index
    %c0_69 = arith.constant 0 : index
    %51 = vector.load %arg6[%c256_68, %c0_69] : memref<512x288xbf16, #tpu.memory_space<vmem>>, vector<256x32xbf16>
    tpu.vector_store %arg6[%c256_68, %c0_69], %50 {strides = array<i32>} : memref<512x288xbf16, #tpu.memory_space<vmem>>, vector<256x32xbf16>,
    %c18_70 = arith.constant 18 : index
    %c16_71 = arith.constant 16 : index
    %c0_72 = arith.constant 0 : index
    %52 = vector.load %arg5[%c18_70, %c16_71, %c0_72] : memref<36x33x32xbf16, #tpu.memory_space<vmem>>, vector<16x16x32xbf16>
    %53 = vector.shape_cast %52 : vector<16x16x32xbf16> to vector<256x32xbf16>
    %c256_73 = arith.constant 256 : index
    %c32_74 = arith.constant 32 : index
    %54 = vector.load %arg6[%c256_73, %c32_74] : memref<512x288xbf16, #tpu.memory_space<vmem>>, vector<256x32xbf16>
    tpu.vector_store %arg6[%c256_73, %c32_74], %53 {strides = array<i32>} : memref<512x288xbf16, #tpu.memory_space<vmem>>, vector<256x32xbf16>,
    %c18_75 = arith.constant 18 : index
    %c17_76 = arith.constant 17 : index
    %c0_77 = arith.constant 0 : index
    %55 = vector.load %arg5[%c18_75, %c17_76, %c0_77] : memref<36x33x32xbf16, #tpu.memory_space<vmem>>, vector<16x16x32xbf16>
    %56 = vector.shape_cast %55 : vector<16x16x32xbf16> to vector<256x32xbf16>
    %c256_78 = arith.constant 256 : index
    %c64_79 = arith.constant 64 : index
    %57 = vector.load %arg6[%c256_78, %c64_79] : memref<512x288xbf16, #tpu.memory_space<vmem>>, vector<256x32xbf16>
    tpu.vector_store %arg6[%c256_78, %c64_79], %56 {strides = array<i32>} : memref<512x288xbf16, #tpu.memory_space<vmem>>, vector<256x32xbf16>,
    %c19_80 = arith.constant 19 : index
    %c15_81 = arith.constant 15 : index
    %c0_82 = arith.constant 0 : index
    %58 = vector.load %arg5[%c19_80, %c15_81, %c0_82] : memref<36x33x32xbf16, #tpu.memory_space<vmem>>, vector<16x16x32xbf16>
    %59 = vector.shape_cast %58 : vector<16x16x32xbf16> to vector<256x32xbf16>
    %c256_83 = arith.constant 256 : index
    %c96_84 = arith.constant 96 : index
    %60 = vector.load %arg6[%c256_83, %c96_84] : memref<512x288xbf16, #tpu.memory_space<vmem>>, vector<256x32xbf16>
    tpu.vector_store %arg6[%c256_83, %c96_84], %59 {strides = array<i32>} : memref<512x288xbf16, #tpu.memory_space<vmem>>, vector<256x32xbf16>,
    %c19_85 = arith.constant 19 : index
    %c16_86 = arith.constant 16 : index
    %c0_87 = arith.constant 0 : index
    %61 = vector.load %arg5[%c19_85, %c16_86, %c0_87] : memref<36x33x32xbf16, #tpu.memory_space<vmem>>, vector<16x16x32xbf16>
    %62 = vector.shape_cast %61 : vector<16x16x32xbf16> to vector<256x32xbf16>
    %c256_88 = arith.constant 256 : index
    %c128_89 = arith.constant 128 : index
    %63 = vector.load %arg6[%c256_88, %c128_89] : memref<512x288xbf16, #tpu.memory_space<vmem>>, vector<256x32xbf16>
    tpu.vector_store %arg6[%c256_88, %c128_89], %62 {strides = array<i32>} : memref<512x288xbf16, #tpu.memory_space<vmem>>, vector<256x32xbf16>,
    %c19_90 = arith.constant 19 : index
    %c17_91 = arith.constant 17 : index
    %c0_92 = arith.constant 0 : index
    %64 = vector.load %arg5[%c19_90, %c17_91, %c0_92] : memref<36x33x32xbf16, #tpu.memory_space<vmem>>, vector<16x16x32xbf16>
    %65 = vector.shape_cast %64 : vector<16x16x32xbf16> to vector<256x32xbf16>
    %c256_93 = arith.constant 256 : index
    %c160_94 = arith.constant 160 : index
    %66 = vector.load %arg6[%c256_93, %c160_94] : memref<512x288xbf16, #tpu.memory_space<vmem>>, vector<256x32xbf16>
    tpu.vector_store %arg6[%c256_93, %c160_94], %65 {strides = array<i32>} : memref<512x288xbf16, #tpu.memory_space<vmem>>, vector<256x32xbf16>,
    %c20 = arith.constant 20 : index
    %c15_95 = arith.constant 15 : index
    %c0_96 = arith.constant 0 : index
    %67 = vector.load %arg5[%c20, %c15_95, %c0_96] : memref<36x33x32xbf16, #tpu.memory_space<vmem>>, vector<16x16x32xbf16>
    %68 = vector.shape_cast %67 : vector<16x16x32xbf16> to vector<256x32xbf16>
    %c256_97 = arith.constant 256 : index
    %c192_98 = arith.constant 192 : index
    %69 = vector.load %arg6[%c256_97, %c192_98] : memref<512x288xbf16, #tpu.memory_space<vmem>>, vector<256x32xbf16>
    tpu.vector_store %arg6[%c256_97, %c192_98], %68 {strides = array<i32>} : memref<512x288xbf16, #tpu.memory_space<vmem>>, vector<256x32xbf16>,
    %c20_99 = arith.constant 20 : index
    %c16_100 = arith.constant 16 : index
    %c0_101 = arith.constant 0 : index
    %70 = vector.load %arg5[%c20_99, %c16_100, %c0_101] : memref<36x33x32xbf16, #tpu.memory_space<vmem>>, vector<16x16x32xbf16>
    %71 = vector.shape_cast %70 : vector<16x16x32xbf16> to vector<256x32xbf16>
    %c256_102 = arith.constant 256 : index
    %c224_103 = arith.constant 224 : index
    %72 = vector.load %arg6[%c256_102, %c224_103] : memref<512x288xbf16, #tpu.memory_space<vmem>>, vector<256x32xbf16>
    tpu.vector_store %arg6[%c256_102, %c224_103], %71 {strides = array<i32>} : memref<512x288xbf16, #tpu.memory_space<vmem>>, vector<256x32xbf16>,
    %c20_104 = arith.constant 20 : index
    %c17_105 = arith.constant 17 : index
    %c0_106 = arith.constant 0 : index
    %73 = vector.load %arg5[%c20_104, %c17_105, %c0_106] : memref<36x33x32xbf16, #tpu.memory_space<vmem>>, vector<16x16x32xbf16>
    %74 = vector.shape_cast %73 : vector<16x16x32xbf16> to vector<256x32xbf16>
    %c256_107 = arith.constant 256 : index
    %c256_108 = arith.constant 256 : index
    %75 = vector.load %arg6[%c256_107, %c256_108] : memref<512x288xbf16, #tpu.memory_space<vmem>>, vector<256x32xbf16>
    tpu.vector_store %arg6[%c256_107, %c256_108], %74 {strides = array<i32>} : memref<512x288xbf16, #tpu.memory_space<vmem>>, vector<256x32xbf16>,
    %c0_109 = arith.constant 0 : index
    %c0_110 = arith.constant 0 : index
    %76 = vector.load %arg2[%c0_109, %c0_110] : memref<32x288xbf16, #tpu.memory_space<vmem>>, vector<32x288xbf16>
    %c0_111 = arith.constant 0 : index
    %c0_112 = arith.constant 0 : index
    %77 = vector.load %arg6[%c0_111, %c0_112] : memref<512x288xbf16, #tpu.memory_space<vmem>>, vector<512x288xbf16>
    %cst_113 = arith.constant dense<0.000000e+00> : vector<32x512xf32>
    %78 = tpu.matmul %76, %77, %cst_113 {dimension_numbers = #tpu.dot_dimension_numbers<[1], [1], [0], [0], [0, 0, 1, 0], [], []>} : vector<32x288xbf16>, vector<512x288xbf16>, vector<32x512xf32> -> vector<32x512xf32>
    %79 = vector.extract_strided_slice %78 {offsets = [0, 0], sizes = [32, 256], strides = [1, 1]} : vector<32x512xf32> to vector<32x256xf32>
    %c0_114 = arith.constant 0 : index
    %c0_115 = arith.constant 0 : index
    %80 = vector.load %arg3[%c0_114, %c0_115] : memref<32x1xf32, #tpu.memory_space<vmem>>, vector<32x1xf32>
    %81 = vector.broadcast %80 : vector<32x1xf32> to vector<32x256xf32>
    %82 = arith.addf %79, %81 : vector<32x256xf32>
    %cst_116 = arith.constant 0.000000e+00 : f32
    %83 = vector.broadcast %cst_116 : f32 to vector<32x256xf32>
    %84 = arith.maximumf %82, %83 : vector<32x256xf32>
    %c0_117 = arith.constant 0 : index
    %c0_118 = arith.constant 0 : index
    %c0_119 = arith.constant 0 : index
    %85 = vector.load %arg4[%c0_117, %c0_118, %c0_119] : memref<2x32x256xf32, #tpu.memory_space<vmem>>, vector<1x32x256xf32>
    %86 = vector.shape_cast %85 : vector<1x32x256xf32> to vector<32x256xf32>
    %87 = vector.shape_cast %84 : vector<32x256xf32> to vector<1x32x256xf32>
    tpu.vector_store %arg4[%c0_117, %c0_118, %c0_119], %87 {strides = array<i32>} : memref<2x32x256xf32, #tpu.memory_space<vmem>>, vector<1x32x256xf32>,
    %88 = vector.extract_strided_slice %78 {offsets = [0, 256], sizes = [32, 256], strides = [1, 1]} : vector<32x512xf32> to vector<32x256xf32>
    %c0_120 = arith.constant 0 : index
    %c0_121 = arith.constant 0 : index
    %89 = vector.load %arg3[%c0_120, %c0_121] : memref<32x1xf32, #tpu.memory_space<vmem>>, vector<32x1xf32>
    %90 = vector.broadcast %89 : vector<32x1xf32> to vector<32x256xf32>
    %91 = arith.addf %88, %90 : vector<32x256xf32>
    %cst_122 = arith.constant 0.000000e+00 : f32
    %92 = vector.broadcast %cst_122 : f32 to vector<32x256xf32>
    %93 = arith.maximumf %91, %92 : vector<32x256xf32>
    %c1_123 = arith.constant 1 : index
    %c0_124 = arith.constant 0 : index
    %c0_125 = arith.constant 0 : index
    %94 = vector.load %arg4[%c1_123, %c0_124, %c0_125] : memref<2x32x256xf32, #tpu.memory_space<vmem>>, vector<1x32x256xf32>
    %95 = vector.shape_cast %94 : vector<1x32x256xf32> to vector<32x256xf32>
    %96 = vector.shape_cast %93 : vector<32x256xf32> to vector<1x32x256xf32>
    tpu.vector_store %arg4[%c1_123, %c0_124, %c0_125], %96 {strides = array<i32>} : memref<2x32x256xf32, #tpu.memory_space<vmem>>, vector<1x32x256xf32>,
    return
  }
  func.func @transform_0(%arg0: i32) -> (i32, i32, i32) {
    %c0_i32 = arith.constant 0 : i32
    %c0_i32_0 = arith.constant 0 : i32
    %c0_i32_1 = arith.constant 0 : i32
    return %arg0, %c0_i32, %c0_i32_0 : i32, i32, i32
  }
  func.func @transform_1(%arg0: i32) -> (i32, i32) {
    %c0_i32 = arith.constant 0 : i32
    %c0_i32_0 = arith.constant 0 : i32
    %c0_i32_1 = arith.constant 0 : i32
    return %c0_i32, %c0_i32_0 : i32, i32
  }
  func.func @transform_2(%arg0: i32) -> (i32, i32) {
    %c0_i32 = arith.constant 0 : i32
    %c0_i32_0 = arith.constant 0 : i32
    %c0_i32_1 = arith.constant 0 : i32
    return %c0_i32, %c0_i32_0 : i32, i32
  }
  func.func @transform_3(%arg0: i32) -> (i32, i32, i32) {
    %c0_i32 = arith.constant 0 : i32
    %c0_i32_0 = arith.constant 0 : i32
    %c0_i32_1 = arith.constant 0 : i32
    return %arg0, %c0_i32, %c0_i32_0 : i32, i32, i32
  }
}

</mosaic_0001>

<llo_original>
// kernel: tpu_custom_call.1
$region0: #{tpu_custom_call.1}
  #allocation0 [shape = 'u32[]', space=smem, size = 0x4, offset = 0x4, fixed_abs, tag = 'smem constant byte address 0x4 - core index']
  #allocation1 [shape = 'u32[144,128]{1,0:T(1,128)}', space=vmem, size = 0x12000, scoped, tag = 'internal scratch']
  #allocation2 [shape = 'bf16[36,33,32]{2,1,0:T(8,128)(2,1)}', space=vmem, size = 0x5a000, scoped, tag = 'scratch operand']
  #allocation3 [shape = 'bf16[512,288]{1,0:T(16,128)(2,1)}', space=vmem, size = 0x60000, scoped, tag = 'scratch operand']
  %s0 = inlined_call_operand.hbm [shape: f32[2,32,256], index: 0, kind: input, shape index: {}]
  %s1 = inlined_call_operand.hbm [shape: bf16[32,288], index: 1, kind: input, shape index: {}]
  %s2 = inlined_call_operand.vmem [shape: f32[32,1], index: 2, kind: input, shape index: {}]
  %s3 = inlined_call_operand.hbm [shape: f32[2,32,256], index: 3, kind: output, shape index: {}]
  %s4 = sld [smem:[#allocation0]]
  $region30: #{tpu_custom_call.1} parent=0
    _
  %s6 = ssub.s32 1, %s4
  %s7 = scalar_select 0, %s6, %s4
  $region1: #{tpu_custom_call.1} parent=0
    #allocation4 [shape = 'u8[65536]{0}', space=vmem, size = 0x10000, scoped, tag = 'input window, operand 0, single buffered']
    #allocation5 [shape = 's32[1]{0}', space=sflag, size = 0x4, scoped, tag = 'scoped memory for tpu_custom_call.1']
    #allocation6 [shape = 's32[1]{0}', space=sflag, size = 0x4, scoped, tag = 'scoped memory for tpu_custom_call.1']
    #allocation7 [shape = 'u8[24576]{0}', space=vmem, size = 0x6000, scoped, tag = 'input window, operand 1, single buffered']
    #allocation8 [shape = 's32[1]{0}', space=sflag, size = 0x4, scoped, tag = 'scoped memory for tpu_custom_call.1']
    #allocation9 [shape = 'u8[65536]{0}', space=vmem, size = 0x10000, scoped, tag = 'output window, operand 0, single buffered']
    %8 = vsyncpa [#allocation5], 0
    %9 = vsyncpa [#allocation8], 0
    %10 = vsyncpa [#allocation6], 0
    // Predicated region
    $region2: #{tpu_custom_call.1} parent=1 // pred_check
      _
    $region3: #{tpu_custom_call.1} parent=1 // pred_check_branch
      %12 = sbr.rel (0) target = $region5
    $region4: #{tpu_custom_call.1} parent=1 // pred_region
      %s14 = ssub.s32 2048, 2048
      %15 = vsyncadd [#allocation5], %s14
      %s16 = sshll.u32 [#allocation4], 4
      %s17 = int_to_ptr.vmem [resolvable:$true] %s16
      %22 = dma.hbm_to_vmem [thread:$0]  %s0, 2048, %s17, [#allocation5], 256, 256, 16
    $region5: #{tpu_custom_call.1} parent=1 // pred_fallthru
      _
    // Predicated region
    $region6: #{tpu_custom_call.1} parent=1 // pred_check
      _
    $region7: #{tpu_custom_call.1} parent=1 // pred_check_branch
      %24 = sbr.rel (0) target = $region9
    $region8: #{tpu_custom_call.1} parent=1 // pred_region
      %s26 = ssub.s32 768, 768
      %27 = vsyncadd [#allocation8], %s26
      %s28 = sshll.u32 [#allocation7], 4
      %s29 = int_to_ptr.vmem [resolvable:$true] %s28
      %34 = dma.hbm_to_vmem [thread:$0]  %s1, 768, %s29, [#allocation8], 192, 192, 12
    $region9: #{tpu_custom_call.1} parent=1 // pred_fallthru
      _
    // Predicated region
    $region10: #{tpu_custom_call.1} parent=1 // pred_check
      _
    $region11: #{tpu_custom_call.1} parent=1 // pred_check_branch
      %36 = sbr.rel (0) target = $region13
    $region12: #{tpu_custom_call.1} parent=1 // pred_region
      _
    $region13: #{tpu_custom_call.1} parent=1 // pred_fallthru
      _
    // Predicated region
    $region14: #{tpu_custom_call.1} parent=1 // pred_check
      _
    $region15: #{tpu_custom_call.1} parent=1 // pred_check_branch
      %38 = sbr.rel (0) target = $region17
    $region16: #{tpu_custom_call.1} parent=1 // pred_region
      %39 = dma.done [#allocation5], 2048
    $region17: #{tpu_custom_call.1} parent=1 // pred_fallthru
      _
    // Predicated region
    $region18: #{tpu_custom_call.1} parent=1 // pred_check
      _
    $region19: #{tpu_custom_call.1} parent=1 // pred_check_branch
      %41 = sbr.rel (0) target = $region21
    $region20: #{tpu_custom_call.1} parent=1 // pred_region
      %42 = dma.done [#allocation8], 768
    $region21: #{tpu_custom_call.1} parent=1 // pred_fallthru
      _
    %vm44 = vcmask 257027
    %vm45 = vsmask.f32 7950
    %vm46 = vmand %vm44, %vm45
    %v47 = vld [vmem:[#allocation2 + $0x4] sm:$0x8]
    %v48 = vsel %vm46, 0, %v47
    %49 = vst [vmem:[#allocation2 + $0x4] sm:$0x8] %v48
    %vm50 = vcmask 257024
    %51 = vst.msk [vmem:[#allocation2 + $0x8] sm:$0xf] %vm50, 0
    %52 = vst.msk [vmem:[#allocation2 + $0xc] sm:$0xf] %vm50, 0
    %vm53 = vcmask 253952
    %vm54 = vsmask.f32 256
    %vm55 = vmand %vm53, %vm54
    %v56 = vld [vmem:[#allocation2 + $0x10] sm:$0x1]
    %v57 = vsel %vm55, 0, %v56
    %58 = vst [vmem:[#allocation2 + $0x10] sm:$0x1] %v57
    %s59 = scalar_lea.vmem [#allocation2], 340
    %v60 = vld [vmem:[%s59 + $0x4] sm:$0x8]
    %v61 = vsel %vm46, 0, %v60
    %62 = vst [vmem:[%s59 + $0x4] sm:$0x8] %v61
    %63 = vst.msk [vmem:[%s59 + $0x8] sm:$0xf] %vm50, 0
    %64 = vst.msk [vmem:[%s59 + $0xc] sm:$0xf] %vm50, 0
    %v65 = vld [vmem:[%s59 + $0x10] sm:$0x1]
    %v66 = vsel %vm55, 0, %v65
    %67 = vst [vmem:[%s59 + $0x10] sm:$0x1] %v66
    %s68 = scalar_lea.vmem [#allocation2], 20
    %v69 = vld [vmem:[%s68 + $0x4] sm:$0x8]
    %v70 = vsel %vm46, 0, %v69
    %71 = vst [vmem:[%s68 + $0x4] sm:$0x8] %v70
    %v72 = vld [vmem:[%s68 + $0x18] sm:$0x8]
    %v73 = vsel %vm46, 0, %v72
    %74 = vst [vmem:[%s68 + $0x18] sm:$0x8] %v73
    %v75 = vld [vmem:[%s68 + $0x2c] sm:$0x8]
    %v76 = vsel %vm46, 0, %v75
    %77 = vst [vmem:[%s68 + $0x2c] sm:$0x8] %v76
    %v78 = vld [vmem:[%s68 + $0x40] sm:$0x8]
    %v79 = vsel %vm46, 0, %v78
    %80 = vst [vmem:[%s68 + $0x40] sm:$0x8] %v79
    %v81 = vld [vmem:[%s68 + $0x54] sm:$0x8]
    %v82 = vsel %vm46, 0, %v81
    %83 = vst [vmem:[%s68 + $0x54] sm:$0x8] %v82
    %v84 = vld [vmem:[%s68 + $0x68] sm:$0x8]
    %v85 = vsel %vm46, 0, %v84
    %86 = vst [vmem:[%s68 + $0x68] sm:$0x8] %v85
    %v87 = vld [vmem:[%s68 + $0x7c] sm:$0x8]
    %v88 = vsel %vm46, 0, %v87
    %89 = vst [vmem:[%s68 + $0x7c] sm:$0x8] %v88
    %v90 = vld [vmem:[%s68 + $0x90] sm:$0x8]
    %v91 = vsel %vm46, 0, %v90
    %92 = vst [vmem:[%s68 + $0x90] sm:$0x8] %v91
    %v93 = vld [vmem:[%s68 + $0xa4] sm:$0x8]
    %v94 = vsel %vm46, 0, %v93
    %95 = vst [vmem:[%s68 + $0xa4] sm:$0x8] %v94
    %v96 = vld [vmem:[%s68 + $0xb8] sm:$0x8]
    %v97 = vsel %vm46, 0, %v96
    %98 = vst [vmem:[%s68 + $0xb8] sm:$0x8] %v97
    %v99 = vld [vmem:[%s68 + $0xcc] sm:$0x8]
    %v100 = vsel %vm46, 0, %v99
    %101 = vst [vmem:[%s68 + $0xcc] sm:$0x8] %v100
    %v102 = vld [vmem:[%s68 + $0xe0] sm:$0x8]
    %v103 = vsel %vm46, 0, %v102
    %104 = vst [vmem:[%s68 + $0xe0] sm:$0x8] %v103
    %v105 = vld [vmem:[%s68 + $0xf4] sm:$0x8]
    %v106 = vsel %vm46, 0, %v105
    %107 = vst [vmem:[%s68 + $0xf4] sm:$0x8] %v106
    %v108 = vld [vmem:[%s68 + $0x108] sm:$0x8]
    %v109 = vsel %vm46, 0, %v108
    %110 = vst [vmem:[%s68 + $0x108] sm:$0x8] %v109
    %v111 = vld [vmem:[%s68 + $0x11c] sm:$0x8]
    %v112 = vsel %vm46, 0, %v111
    %113 = vst [vmem:[%s68 + $0x11c] sm:$0x8] %v112
    %v114 = vld [vmem:[%s68 + $0x130] sm:$0x8]
    %v115 = vsel %vm46, 0, %v114
    %116 = vst [vmem:[%s68 + $0x130] sm:$0x8] %v115
    %v117 = vld [vmem:[%s68 + $0x10] sm:$0x1]
    %v118 = vsel %vm55, 0, %v117
    %119 = vst [vmem:[%s68 + $0x10] sm:$0x1] %v118
    %v120 = vld [vmem:[%s68 + $0x24] sm:$0x1]
    %v121 = vsel %vm55, 0, %v120
    %122 = vst [vmem:[%s68 + $0x24] sm:$0x1] %v121
    %v123 = vld [vmem:[%s68 + $0x38] sm:$0x1]
    %v124 = vsel %vm55, 0, %v123
    %125 = vst [vmem:[%s68 + $0x38] sm:$0x1] %v124
    %v126 = vld [vmem:[%s68 + $0x4c] sm:$0x1]
    %v127 = vsel %vm55, 0, %v126
    %128 = vst [vmem:[%s68 + $0x4c] sm:$0x1] %v127
    %v129 = vld [vmem:[%s68 + $0x60] sm:$0x1]
    %v130 = vsel %vm55, 0, %v129
    %131 = vst [vmem:[%s68 + $0x60] sm:$0x1] %v130
    %v132 = vld [vmem:[%s68 + $0x74] sm:$0x1]
    %v133 = vsel %vm55, 0, %v132
    %134 = vst [vmem:[%s68 + $0x74] sm:$0x1] %v133
    %v135 = vld [vmem:[%s68 + $0x88] sm:$0x1]
    %v136 = vsel %vm55, 0, %v135
    %137 = vst [vmem:[%s68 + $0x88] sm:$0x1] %v136
    %v138 = vld [vmem:[%s68 + $0x9c] sm:$0x1]
    %v139 = vsel %vm55, 0, %v138
    %140 = vst [vmem:[%s68 + $0x9c] sm:$0x1] %v139
    %v141 = vld [vmem:[%s68 + $0xb0] sm:$0x1]
    %v142 = vsel %vm55, 0, %v141
    %143 = vst [vmem:[%s68 + $0xb0] sm:$0x1] %v142
    %v144 = vld [vmem:[%s68 + $0xc4] sm:$0x1]
    %v145 = vsel %vm55, 0, %v144
    %146 = vst [vmem:[%s68 + $0xc4] sm:$0x1] %v145
    %v147 = vld [vmem:[%s68 + $0xd8] sm:$0x1]
    %v148 = vsel %vm55, 0, %v147
    %149 = vst [vmem:[%s68 + $0xd8] sm:$0x1] %v148
    %v150 = vld [vmem:[%s68 + $0xec] sm:$0x1]
    %v151 = vsel %vm55, 0, %v150
    %152 = vst [vmem:[%s68 + $0xec] sm:$0x1] %v151
    %v153 = vld [vmem:[%s68 + $0x100] sm:$0x1]
    %v154 = vsel %vm55, 0, %v153
    %155 = vst [vmem:[%s68 + $0x100] sm:$0x1] %v154
    %v156 = vld [vmem:[%s68 + $0x114] sm:$0x1]
    %v157 = vsel %vm55, 0, %v156
    %158 = vst [vmem:[%s68 + $0x114] sm:$0x1] %v157
    %v159 = vld [vmem:[%s68 + $0x128] sm:$0x1]
    %v160 = vsel %vm55, 0, %v159
    %161 = vst [vmem:[%s68 + $0x128] sm:$0x1] %v160
    %v162 = vld [vmem:[%s68 + $0x13c] sm:$0x1]
    %v163 = vsel %vm55, 0, %v162
    %164 = vst [vmem:[%s68 + $0x13c] sm:$0x1] %v163
    %v165 = vld [vmem:[#allocation4] sm:$0xff]
    %v166 = vld [vmem:[#allocation4 + $0x8] sm:$0xff]
    %v167 = vld [vmem:[#allocation4 + $0x10] sm:$0xff]
    %v168 = vld [vmem:[#allocation4 + $0x18] sm:$0xff]
    %v169 = vld [vmem:[#allocation4 + $0x20] sm:$0xff]
    %v170 = vld [vmem:[#allocation4 + $0x28] sm:$0xff]
    %v171 = vld [vmem:[#allocation4 + $0x30] sm:$0xff]
    %v172 = vld [vmem:[#allocation4 + $0x38] sm:$0xff]
    %173 = vxpose.xlu0.b32.start [1/16] %v165, 128
    %174 = vxpose.xlu0.b32.cont [2/16] %v167, 128
    %175 = vxpose.xlu0.b32.cont [3/16] %v169, 128
    %176 = vxpose.xlu0.b32.cont [4/16] %v171, 128
    %177 = vxpose.xlu0.b32.cont [5/16] 0.0, 128
    %178 = vxpose.xlu0.b32.cont [6/16] 0.0, 128
    %179 = vxpose.xlu0.b32.cont [7/16] 0.0, 128
    %180 = vxpose.xlu0.b32.cont [8/16] 0.0, 128
    %181 = vxpose.xlu0.b32.cont [9/16] 0.0, 128
    %182 = vxpose.xlu0.b32.cont [10/16] 0.0, 128
    %183 = vxpose.xlu0.b32.cont [11/16] 0.0, 128
    %184 = vxpose.xlu0.b32.cont [12/16] 0.0, 128
    %185 = vxpose.xlu0.b32.cont [13/16] 0.0, 128
    %186 = vxpose.xlu0.b32.cont [14/16] 0.0, 128
    %187 = vxpose.xlu0.b32.cont [15/16] 0.0, 128
    %188 = vxpose.xlu0.b32.end [16/16] 0.0, 128
    %v189 = vpop.trf.xlu0
    %v190 = vpop.trf.xlu0
    %v191 = vpop.trf.xlu0
    %v192 = vpop.trf.xlu0
    %v193 = vpop.trf.xlu0
    %v194 = vpop.trf.xlu0
    %v195 = vpop.trf.xlu0
    %v196 = vpop.trf.xlu0
    %v197 = vpop.trf.xlu0
    %v198 = vpop.trf.xlu0
    %v199 = vpop.trf.xlu0
    %v200 = vpop.trf.xlu0
    %v201 = vpop.trf.xlu0
    %v202 = vpop.trf.xlu0
    %v203 = vpop.trf.xlu0
    %v204 = vpop.trf.xlu0
    %205 = vxpose.xlu0.b32.start [1/16] %v166, 128
    %206 = vxpose.xlu0.b32.cont [2/16] %v168, 128
    %207 = vxpose.xlu0.b32.cont [3/16] %v170, 128
    %208 = vxpose.xlu0.b32.cont [4/16] %v172, 128
    %209 = vxpose.xlu0.b32.cont [5/16] 0.0, 128
    %210 = vxpose.xlu0.b32.cont [6/16] 0.0, 128
    %211 = vxpose.xlu0.b32.cont [7/16] 0.0, 128
    %212 = vxpose.xlu0.b32.cont [8/16] 0.0, 128
    %213 = vxpose.xlu0.b32.cont [9/16] 0.0, 128
    %214 = vxpose.xlu0.b32.cont [10/16] 0.0, 128
    %215 = vxpose.xlu0.b32.cont [11/16] 0.0, 128
    %216 = vxpose.xlu0.b32.cont [12/16] 0.0, 128
    %217 = vxpose.xlu0.b32.cont [13/16] 0.0, 128
    %218 = vxpose.xlu0.b32.cont [14/16] 0.0, 128
    %219 = vxpose.xlu0.b32.cont [15/16] 0.0, 128
    %220 = vxpose.xlu0.b32.end [16/16] 0.0, 128
    %v221 = vpop.trf.xlu0
    %v222 = vpop.trf.xlu0
    %v223 = vpop.trf.xlu0
    %v224 = vpop.trf.xlu0
    %v225 = vpop.trf.xlu0
    %v226 = vpop.trf.xlu0
    %v227 = vpop.trf.xlu0
    %v228 = vpop.trf.xlu0
    %v229 = vpop.trf.xlu0
    %v230 = vpop.trf.xlu0
    %v231 = vpop.trf.xlu0
    %v232 = vpop.trf.xlu0
    %v233 = vpop.trf.xlu0
    %v234 = vpop.trf.xlu0
    %v235 = vpop.trf.xlu0
    %v236 = vpop.trf.xlu0
    %v237 = vpack.c.bf16 %v190, %v189
    %v238 = vpack.c.bf16 %v192, %v191
    %v239 = vpack.c.bf16 %v194, %v193
    %v240 = vpack.c.bf16 %v196, %v195
    %v241 = vpack.c.bf16 %v198, %v197
    %v242 = vpack.c.bf16 %v200, %v199
    %v243 = vpack.c.bf16 %v202, %v201
    %v244 = vpack.c.bf16 %v204, %v203
    %v245 = vpack.c.bf16 %v222, %v221
    %v246 = vpack.c.bf16 %v224, %v223
    %v247 = vpack.c.bf16 %v226, %v225
    %v248 = vpack.c.bf16 %v228, %v227
    %v249 = vpack.c.bf16 %v230, %v229
    %v250 = vpack.c.bf16 %v232, %v231
    %v251 = vpack.c.bf16 %v234, %v233
    %v252 = vpack.c.bf16 %v236, %v235
    %v269 = vunpack.c.l.b16 %v237
    %v270 = vunpack.c.h.b16 %v237
    %v271 = vunpack.c.l.b16 %v238
    %v272 = vunpack.c.h.b16 %v238
    %v273 = vunpack.c.l.b16 %v239
    %v274 = vunpack.c.h.b16 %v239
    %v275 = vunpack.c.l.b16 %v240
    %v276 = vunpack.c.h.b16 %v240
    %v277 = vunpack.c.l.b16 %v241
    %v278 = vunpack.c.h.b16 %v241
    %v279 = vunpack.c.l.b16 %v242
    %v280 = vunpack.c.h.b16 %v242
    %v281 = vunpack.c.l.b16 %v243
    %v282 = vunpack.c.h.b16 %v243
    %v283 = vunpack.c.l.b16 %v244
    %v284 = vunpack.c.h.b16 %v244
    %v285 = vunpack.c.l.b16 %v245
    %v286 = vunpack.c.h.b16 %v245
    %v287 = vunpack.c.l.b16 %v246
    %v288 = vunpack.c.h.b16 %v246
    %v289 = vunpack.c.l.b16 %v247
    %v290 = vunpack.c.h.b16 %v247
    %v291 = vunpack.c.l.b16 %v248
    %v292 = vunpack.c.h.b16 %v248
    %v293 = vunpack.c.l.b16 %v249
    %v294 = vunpack.c.h.b16 %v249
    %v295 = vunpack.c.l.b16 %v250
    %v296 = vunpack.c.h.b16 %v250
    %v297 = vunpack.c.l.b16 %v251
    %v298 = vunpack.c.h.b16 %v251
    %v299 = vunpack.c.l.b16 %v252
    %v300 = vunpack.c.h.b16 %v252
    %v301 = vpack.c.b16 %v269, %v269
    %v302 = vpack.c.b16 %v270, %v270
    %v303 = vpack.c.b16 %v271, %v271
    %v304 = vpack.c.b16 %v272, %v272
    %v305 = vpack.c.b16 %v273, %v273
    %v306 = vpack.c.b16 %v274, %v274
    %v307 = vpack.c.b16 %v275, %v275
    %v308 = vpack.c.b16 %v276, %v276
    %v309 = vpack.c.b16 %v277, %v277
    %v310 = vpack.c.b16 %v278, %v278
    %v311 = vpack.c.b16 %v279, %v279
    %v312 = vpack.c.b16 %v280, %v280
    %v313 = vpack.c.b16 %v281, %v281
    %v314 = vpack.c.b16 %v282, %v282
    %v315 = vpack.c.b16 %v283, %v283
    %v316 = vpack.c.b16 %v284, %v284
    %v317 = vpack.c.b16 %v285, %v285
    %v318 = vpack.c.b16 %v286, %v286
    %v319 = vpack.c.b16 %v287, %v287
    %v320 = vpack.c.b16 %v288, %v288
    %v321 = vpack.c.b16 %v289, %v289
    %v322 = vpack.c.b16 %v290, %v290
    %v323 = vpack.c.b16 %v291, %v291
    %v324 = vpack.c.b16 %v292, %v292
    %v325 = vpack.c.b16 %v293, %v293
    %v326 = vpack.c.b16 %v294, %v294
    %v327 = vpack.c.b16 %v295, %v295
    %v328 = vpack.c.b16 %v296, %v296
    %v329 = vpack.c.b16 %v297, %v297
    %v330 = vpack.c.b16 %v298, %v298
    %v331 = vpack.c.b16 %v299, %v299
    %v332 = vpack.c.b16 %v300, %v300
    %365 = vst.msk [vmem:[%s68 + $0x8] sm:$0xf] %vm50, %v301
    %366 = vst.msk [vmem:[%s68 + $0xc] sm:$0xf] %vm50, %v302
    %367 = vst.msk [vmem:[%s68 + $0x1c] sm:$0xf] %vm50, %v303
    %368 = vst.msk [vmem:[%s68 + $0x20] sm:$0xf] %vm50, %v304
    %369 = vst.msk [vmem:[%s68 + $0x30] sm:$0xf] %vm50, %v305
    %370 = vst.msk [vmem:[%s68 + $0x34] sm:$0xf] %vm50, %v306
    %371 = vst.msk [vmem:[%s68 + $0x44] sm:$0xf] %vm50, %v307
    %372 = vst.msk [vmem:[%s68 + $0x48] sm:$0xf] %vm50, %v308
    %373 = vst.msk [vmem:[%s68 + $0x58] sm:$0xf] %vm50, %v309
    %374 = vst.msk [vmem:[%s68 + $0x5c] sm:$0xf] %vm50, %v310
    %375 = vst.msk [vmem:[%s68 + $0x6c] sm:$0xf] %vm50, %v311
    %376 = vst.msk [vmem:[%s68 + $0x70] sm:$0xf] %vm50, %v312
    %377 = vst.msk [vmem:[%s68 + $0x80] sm:$0xf] %vm50, %v313
    %378 = vst.msk [vmem:[%s68 + $0x84] sm:$0xf] %vm50, %v314
    %379 = vst.msk [vmem:[%s68 + $0x94] sm:$0xf] %vm50, %v315
    %380 = vst.msk [vmem:[%s68 + $0x98] sm:$0xf] %vm50, %v316
    %381 = vst.msk [vmem:[%s68 + $0xa8] sm:$0xf] %vm50, %v317
    %382 = vst.msk [vmem:[%s68 + $0xac] sm:$0xf] %vm50, %v318
    %383 = vst.msk [vmem:[%s68 + $0xbc] sm:$0xf] %vm50, %v319
    %384 = vst.msk [vmem:[%s68 + $0xc0] sm:$0xf] %vm50, %v320
    %385 = vst.msk [vmem:[%s68 + $0xd0] sm:$0xf] %vm50, %v321
    %386 = vst.msk [vmem:[%s68 + $0xd4] sm:$0xf] %vm50, %v322
    %387 = vst.msk [vmem:[%s68 + $0xe4] sm:$0xf] %vm50, %v323
    %388 = vst.msk [vmem:[%s68 + $0xe8] sm:$0xf] %vm50, %v324
    %389 = vst.msk [vmem:[%s68 + $0xf8] sm:$0xf] %vm50, %v325
    %390 = vst.msk [vmem:[%s68 + $0xfc] sm:$0xf] %vm50, %v326
    %391 = vst.msk [vmem:[%s68 + $0x10c] sm:$0xf] %vm50, %v327
    %392 = vst.msk [vmem:[%s68 + $0x110] sm:$0xf] %vm50, %v328
    %393 = vst.msk [vmem:[%s68 + $0x120] sm:$0xf] %vm50, %v329
    %394 = vst.msk [vmem:[%s68 + $0x124] sm:$0xf] %vm50, %v330
    %395 = vst.msk [vmem:[%s68 + $0x134] sm:$0xf] %vm50, %v331
    %396 = vst.msk [vmem:[%s68 + $0x138] sm:$0xf] %vm50, %v332
    %v397 = vld [vmem:[#allocation2 + $0x4] sm:$0x8]
    %v398 = vld [vmem:[#allocation2 + $0x8] sm:$0xf]
    %v399 = vld [vmem:[#allocation2 + $0xc] sm:$0xf]
    %v400 = vld [vmem:[#allocation2 + $0x18] sm:$0x8]
    %v401 = vld [vmem:[#allocation2 + $0x1c] sm:$0xf]
    %v402 = vld [vmem:[#allocation2 + $0x20] sm:$0xf]
    %v403 = vld [vmem:[#allocation2 + $0x2c] sm:$0x8]
    %v404 = vld [vmem:[#allocation2 + $0x30] sm:$0xf]
    %v405 = vld [vmem:[#allocation2 + $0x34] sm:$0xf]
    %v406 = vld [vmem:[#allocation2 + $0x40] sm:$0x8]
    %v407 = vld [vmem:[#allocation2 + $0x44] sm:$0xf]
    %v408 = vld [vmem:[#allocation2 + $0x48] sm:$0xf]
    %v409 = vld [vmem:[#allocation2 + $0x54] sm:$0x8]
    %v410 = vld [vmem:[#allocation2 + $0x58] sm:$0xf]
    %v411 = vld [vmem:[#allocation2 + $0x5c] sm:$0xf]
    %v412 = vld [vmem:[#allocation2 + $0x68] sm:$0x8]
    %v413 = vld [vmem:[#allocation2 + $0x6c] sm:$0xf]
    %v414 = vld [vmem:[#allocation2 + $0x70] sm:$0xf]
    %v415 = vld [vmem:[#allocation2 + $0x7c] sm:$0x8]
    %v416 = vld [vmem:[#allocation2 + $0x80] sm:$0xf]
    %v417 = vld [vmem:[#allocation2 + $0x84] sm:$0xf]
    %v418 = vld [vmem:[#allocation2 + $0x90] sm:$0x8]
    %v419 = vld [vmem:[#allocation2 + $0x94] sm:$0xf]
    %v420 = vld [vmem:[#allocation2 + $0x98] sm:$0xf]
    %v421 = vld [vmem:[#allocation2 + $0xa4] sm:$0x8]
    %v422 = vld [vmem:[#allocation2 + $0xa8] sm:$0xf]
    %v423 = vld [vmem:[#allocation2 + $0xac] sm:$0xf]
    %v424 = vld [vmem:[#allocation2 + $0xb8] sm:$0x8]
    %v425 = vld [vmem:[#allocation2 + $0xbc] sm:$0xf]
    %v426 = vld [vmem:[#allocation2 + $0xc0] sm:$0xf]
    %v427 = vld [vmem:[#allocation2 + $0xcc] sm:$0x8]
    %v428 = vld [vmem:[#allocation2 + $0xd0] sm:$0xf]
    %v429 = vld [vmem:[#allocation2 + $0xd4] sm:$0xf]
    %v430 = vld [vmem:[#allocation2 + $0xe0] sm:$0x8]
    %v431 = vld [vmem:[#allocation2 + $0xe4] sm:$0xf]
    %v432 = vld [vmem:[#allocation2 + $0xe8] sm:$0xf]
    %v433 = vld [vmem:[#allocation2 + $0xf4] sm:$0x8]
    %v434 = vld [vmem:[#allocation2 + $0xf8] sm:$0xf]
    %v435 = vld [vmem:[#allocation2 + $0xfc] sm:$0xf]
    %v436 = vld [vmem:[#allocation2 + $0x108] sm:$0x8]
    %v437 = vld [vmem:[#allocation2 + $0x10c] sm:$0xf]
    %v438 = vld [vmem:[#allocation2 + $0x110] sm:$0xf]
    %v439 = vld [vmem:[#allocation2 + $0x11c] sm:$0x8]
    %v440 = vld [vmem:[#allocation2 + $0x120] sm:$0xf]
    %v441 = vld [vmem:[#allocation2 + $0x124] sm:$0xf]
    %v442 = vld [vmem:[#allocation2 + $0x130] sm:$0x8]
    %v443 = vld [vmem:[#allocation2 + $0x134] sm:$0xf]
    %v444 = vld [vmem:[#allocation2 + $0x138] sm:$0xf]
    %vm445 = vsmask.f32 4368
    %vm446 = vmor %vm54, %vm445
    %v448 = vshrl.u32 %v397, 16
    %v450 = vrot.slane %v448, 7
    %v451 = vrot.slane %v450, 4
    %v453 = vshrl.u32 %v398, 16
    %v455 = vrot.slane %v453, 7
    %v456 = vshll.u32 %v398, 16
    %v458 = vor.u32 %v455, %v456
    %v459 = vsel %vm446, %v451, %v458
    %v460 = vrot.slane %v455, 4
    %v462 = vshrl.u32 %v399, 16
    %v464 = vrot.slane %v462, 7
    %v465 = vshll.u32 %v399, 16
    %v467 = vor.u32 %v464, %v465
    %v468 = vsel %vm446, %v460, %v467
    %v470 = vshrl.u32 %v400, 16
    %v472 = vrot.slane %v470, 7
    %v473 = vrot.slane %v472, 4
    %v475 = vshrl.u32 %v401, 16
    %v477 = vrot.slane %v475, 7
    %v478 = vshll.u32 %v401, 16
    %v480 = vor.u32 %v477, %v478
    %v481 = vsel %vm446, %v473, %v480
    %v482 = vrot.slane %v477, 4
    %v484 = vshrl.u32 %v402, 16
    %v486 = vrot.slane %v484, 7
    %v487 = vshll.u32 %v402, 16
    %v489 = vor.u32 %v486, %v487
    %v490 = vsel %vm446, %v482, %v489
    %v492 = vshrl.u32 %v403, 16
    %v494 = vrot.slane %v492, 7
    %v495 = vrot.slane %v494, 4
    %v497 = vshrl.u32 %v404, 16
    %v499 = vrot.slane %v497, 7
    %v500 = vshll.u32 %v404, 16
    %v502 = vor.u32 %v499, %v500
    %v503 = vsel %vm446, %v495, %v502
    %v504 = vrot.slane %v499, 4
    %v506 = vshrl.u32 %v405, 16
    %v508 = vrot.slane %v506, 7
    %v509 = vshll.u32 %v405, 16
    %v511 = vor.u32 %v508, %v509
    %v512 = vsel %vm446, %v504, %v511
    %v514 = vshrl.u32 %v406, 16
    %v516 = vrot.slane %v514, 7
    %v517 = vrot.slane %v516, 4
    %v519 = vshrl.u32 %v407, 16
    %v521 = vrot.slane %v519, 7
    %v522 = vshll.u32 %v407, 16
    %v524 = vor.u32 %v521, %v522
    %v525 = vsel %vm446, %v517, %v524
    %v526 = vrot.slane %v521, 4
    %v528 = vshrl.u32 %v408, 16
    %v530 = vrot.slane %v528, 7
    %v531 = vshll.u32 %v408, 16
    %v533 = vor.u32 %v530, %v531
    %v534 = vsel %vm446, %v526, %v533
    %v536 = vshrl.u32 %v409, 16
    %v538 = vrot.slane %v536, 7
    %v539 = vrot.slane %v538, 4
    %v541 = vshrl.u32 %v410, 16
    %v543 = vrot.slane %v541, 7
    %v544 = vshll.u32 %v410, 16
    %v546 = vor.u32 %v543, %v544
    %v547 = vsel %vm446, %v539, %v546
    %v548 = vrot.slane %v543, 4
    %v550 = vshrl.u32 %v411, 16
    %v552 = vrot.slane %v550, 7
    %v553 = vshll.u32 %v411, 16
    %v555 = vor.u32 %v552, %v553
    %v556 = vsel %vm446, %v548, %v555
    %v558 = vshrl.u32 %v412, 16
    %v560 = vrot.slane %v558, 7
    %v561 = vrot.slane %v560, 4
    %v563 = vshrl.u32 %v413, 16
    %v565 = vrot.slane %v563, 7
    %v566 = vshll.u32 %v413, 16
    %v568 = vor.u32 %v565, %v566
    %v569 = vsel %vm446, %v561, %v568
    %v570 = vrot.slane %v565, 4
    %v572 = vshrl.u32 %v414, 16
    %v574 = vrot.slane %v572, 7
    %v575 = vshll.u32 %v414, 16
    %v577 = vor.u32 %v574, %v575
    %v578 = vsel %vm446, %v570, %v577
    %v580 = vshrl.u32 %v415, 16
    %v582 = vrot.slane %v580, 7
    %v583 = vrot.slane %v582, 4
    %v585 = vshrl.u32 %v416, 16
    %v587 = vrot.slane %v585, 7
    %v588 = vshll.u32 %v416, 16
    %v590 = vor.u32 %v587, %v588
    %v591 = vsel %vm446, %v583, %v590
    %v592 = vrot.slane %v587, 4
    %v594 = vshrl.u32 %v417, 16
    %v596 = vrot.slane %v594, 7
    %v597 = vshll.u32 %v417, 16
    %v599 = vor.u32 %v596, %v597
    %v600 = vsel %vm446, %v592, %v599
    %v602 = vshrl.u32 %v418, 16
    %v604 = vrot.slane %v602, 7
    %v605 = vrot.slane %v604, 4
    %v607 = vshrl.u32 %v419, 16
    %v609 = vrot.slane %v607, 7
    %v610 = vshll.u32 %v419, 16
    %v612 = vor.u32 %v609, %v610
    %v613 = vsel %vm446, %v605, %v612
    %v614 = vrot.slane %v609, 4
    %v616 = vshrl.u32 %v420, 16
    %v618 = vrot.slane %v616, 7
    %v619 = vshll.u32 %v420, 16
    %v621 = vor.u32 %v618, %v619
    %v622 = vsel %vm446, %v614, %v621
    %v624 = vshrl.u32 %v421, 16
    %v626 = vrot.slane %v624, 7
    %v627 = vrot.slane %v626, 4
    %v629 = vshrl.u32 %v422, 16
    %v631 = vrot.slane %v629, 7
    %v632 = vshll.u32 %v422, 16
    %v634 = vor.u32 %v631, %v632
    %v635 = vsel %vm446, %v627, %v634
    %v636 = vrot.slane %v631, 4
    %v638 = vshrl.u32 %v423, 16
    %v640 = vrot.slane %v638, 7
    %v641 = vshll.u32 %v423, 16
    %v643 = vor.u32 %v640, %v641
    %v644 = vsel %vm446, %v636, %v643
    %v646 = vshrl.u32 %v424, 16
    %v648 = vrot.slane %v646, 7
    %v649 = vrot.slane %v648, 4
    %v651 = vshrl.u32 %v425, 16
    %v653 = vrot.slane %v651, 7
    %v654 = vshll.u32 %v425, 16
    %v656 = vor.u32 %v653, %v654
    %v657 = vsel %vm446, %v649, %v656
    %v658 = vrot.slane %v653, 4
    %v660 = vshrl.u32 %v426, 16
    %v662 = vrot.slane %v660, 7
    %v663 = vshll.u32 %v426, 16
    %v665 = vor.u32 %v662, %v663
    %v666 = vsel %vm446, %v658, %v665
    %v668 = vshrl.u32 %v427, 16
    %v670 = vrot.slane %v668, 7
    %v671 = vrot.slane %v670, 4
    %v673 = vshrl.u32 %v428, 16
    %v675 = vrot.slane %v673, 7
    %v676 = vshll.u32 %v428, 16
    %v678 = vor.u32 %v675, %v676
    %v679 = vsel %vm446, %v671, %v678
    %v680 = vrot.slane %v675, 4
    %v682 = vshrl.u32 %v429, 16
    %v684 = vrot.slane %v682, 7
    %v685 = vshll.u32 %v429, 16
    %v687 = vor.u32 %v684, %v685
    %v688 = vsel %vm446, %v680, %v687
    %v690 = vshrl.u32 %v430, 16
    %v692 = vrot.slane %v690, 7
    %v693 = vrot.slane %v692, 4
    %v695 = vshrl.u32 %v431, 16
    %v697 = vrot.slane %v695, 7
    %v698 = vshll.u32 %v431, 16
    %v700 = vor.u32 %v697, %v698
    %v701 = vsel %vm446, %v693, %v700
    %v702 = vrot.slane %v697, 4
    %v704 = vshrl.u32 %v432, 16
    %v706 = vrot.slane %v704, 7
    %v707 = vshll.u32 %v432, 16
    %v709 = vor.u32 %v706, %v707
    %v710 = vsel %vm446, %v702, %v709
    %v712 = vshrl.u32 %v433, 16
    %v714 = vrot.slane %v712, 7
    %v715 = vrot.slane %v714, 4
    %v717 = vshrl.u32 %v434, 16
    %v719 = vrot.slane %v717, 7
    %v720 = vshll.u32 %v434, 16
    %v722 = vor.u32 %v719, %v720
    %v723 = vsel %vm446, %v715, %v722
    %v724 = vrot.slane %v719, 4
    %v726 = vshrl.u32 %v435, 16
    %v728 = vrot.slane %v726, 7
    %v729 = vshll.u32 %v435, 16
    %v731 = vor.u32 %v728, %v729
    %v732 = vsel %vm446, %v724, %v731
    %v734 = vshrl.u32 %v436, 16
    %v736 = vrot.slane %v734, 7
    %v737 = vrot.slane %v736, 4
    %v739 = vshrl.u32 %v437, 16
    %v741 = vrot.slane %v739, 7
    %v742 = vshll.u32 %v437, 16
    %v744 = vor.u32 %v741, %v742
    %v745 = vsel %vm446, %v737, %v744
    %v746 = vrot.slane %v741, 4
    %v748 = vshrl.u32 %v438, 16
    %v750 = vrot.slane %v748, 7
    %v751 = vshll.u32 %v438, 16
    %v753 = vor.u32 %v750, %v751
    %v754 = vsel %vm446, %v746, %v753
    %v756 = vshrl.u32 %v439, 16
    %v758 = vrot.slane %v756, 7
    %v759 = vrot.slane %v758, 4
    %v761 = vshrl.u32 %v440, 16
    %v763 = vrot.slane %v761, 7
    %v764 = vshll.u32 %v440, 16
    %v766 = vor.u32 %v763, %v764
    %v767 = vsel %vm446, %v759, %v766
    %v768 = vrot.slane %v763, 4
    %v770 = vshrl.u32 %v441, 16
    %v772 = vrot.slane %v770, 7
    %v773 = vshll.u32 %v441, 16
    %v775 = vor.u32 %v772, %v773
    %v776 = vsel %vm446, %v768, %v775
    %v778 = vshrl.u32 %v442, 16
    %v780 = vrot.slane %v778, 7
    %v781 = vrot.slane %v780, 4
    %v783 = vshrl.u32 %v443, 16
    %v785 = vrot.slane %v783, 7
    %v786 = vshll.u32 %v443, 16
    %v788 = vor.u32 %v785, %v786
    %v789 = vsel %vm446, %v781, %v788
    %v790 = vrot.slane %v785, 4
    %v792 = vshrl.u32 %v444, 16
    %v794 = vrot.slane %v792, 7
    %v795 = vshll.u32 %v444, 16
    %v797 = vor.u32 %v794, %v795
    %v798 = vsel %vm446, %v790, %v797
    %v799 = vunpack.c.l.b16 %v459
    %v800 = vunpack.c.l.b16 %v468
    %v801 = vunpack.c.l.b16 %v481
    %v802 = vunpack.c.l.b16 %v490
    %v803 = vunpack.c.l.b16 %v503
    %v804 = vunpack.c.l.b16 %v512
    %v805 = vunpack.c.l.b16 %v525
    %v806 = vunpack.c.l.b16 %v534
    %v807 = vunpack.c.l.b16 %v547
    %v808 = vunpack.c.l.b16 %v556
    %v809 = vunpack.c.l.b16 %v569
    %v810 = vunpack.c.l.b16 %v578
    %v811 = vunpack.c.l.b16 %v591
    %v812 = vunpack.c.l.b16 %v600
    %v813 = vunpack.c.l.b16 %v613
    %v814 = vunpack.c.l.b16 %v622
    %v815 = vunpack.c.l.b16 %v635
    %v816 = vunpack.c.l.b16 %v644
    %v817 = vunpack.c.l.b16 %v657
    %v818 = vunpack.c.l.b16 %v666
    %v819 = vunpack.c.l.b16 %v679
    %v820 = vunpack.c.l.b16 %v688
    %v821 = vunpack.c.l.b16 %v701
    %v822 = vunpack.c.l.b16 %v710
    %v823 = vunpack.c.l.b16 %v723
    %v824 = vunpack.c.l.b16 %v732
    %v825 = vunpack.c.l.b16 %v745
    %v826 = vunpack.c.l.b16 %v754
    %v827 = vunpack.c.l.b16 %v767
    %v828 = vunpack.c.l.b16 %v776
    %v829 = vunpack.c.l.b16 %v789
    %v830 = vunpack.c.l.b16 %v798
    %v831 = vpack.c.b16 %v800, %v799
    %v832 = vpack.c.b16 %v802, %v801
    %v833 = vpack.c.b16 %v804, %v803
    %v834 = vpack.c.b16 %v806, %v805
    %v835 = vpack.c.b16 %v808, %v807
    %v836 = vpack.c.b16 %v810, %v809
    %v837 = vpack.c.b16 %v812, %v811
    %v838 = vpack.c.b16 %v814, %v813
    %v839 = vpack.c.b16 %v816, %v815
    %v840 = vpack.c.b16 %v818, %v817
    %v841 = vpack.c.b16 %v820, %v819
    %v842 = vpack.c.b16 %v822, %v821
    %v843 = vpack.c.b16 %v824, %v823
    %v844 = vpack.c.b16 %v826, %v825
    %v845 = vpack.c.b16 %v828, %v827
    %v846 = vpack.c.b16 %v830, %v829
    %vm863 = vcmask 261120
    %864 = vst.msk [vmem:[#allocation3] sm:$0xff] %vm863, %v831
    %865 = vst.msk [vmem:[#allocation3 + $0x18] sm:$0xff] %vm863, %v832
    %866 = vst.msk [vmem:[#allocation3 + $0x30] sm:$0xff] %vm863, %v833
    %867 = vst.msk [vmem:[#allocation3 + $0x48] sm:$0xff] %vm863, %v834
    %868 = vst.msk [vmem:[#allocation3 + $0x60] sm:$0xff] %vm863, %v835
    %869 = vst.msk [vmem:[#allocation3 + $0x78] sm:$0xff] %vm863, %v836
    %870 = vst.msk [vmem:[#allocation3 + $0x90] sm:$0xff] %vm863, %v837
    %871 = vst.msk [vmem:[#allocation3 + $0xa8] sm:$0xff] %vm863, %v838
    %872 = vst.msk [vmem:[#allocation3 + $0xc0] sm:$0xff] %vm863, %v839
    %873 = vst.msk [vmem:[#allocation3 + $0xd8] sm:$0xff] %vm863, %v840
    %874 = vst.msk [vmem:[#allocation3 + $0xf0] sm:$0xff] %vm863, %v841
    %875 = vst.msk [vmem:[#allocation3 + $0x108] sm:$0xff] %vm863, %v842
    %876 = vst.msk [vmem:[#allocation3 + $0x120] sm:$0xff] %vm863, %v843
    %877 = vst.msk [vmem:[#allocation3 + $0x138] sm:$0xff] %vm863, %v844
    %878 = vst.msk [vmem:[#allocation3 + $0x150] sm:$0xff] %vm863, %v845
    %879 = vst.msk [vmem:[#allocation3 + $0x168] sm:$0xff] %vm863, %v846
    %v880 = vld [vmem:[#allocation2 + $0x8] sm:$0xf]
    %v881 = vld [vmem:[#allocation2 + $0xc] sm:$0xf]
    %v882 = vld [vmem:[#allocation2 + $0x1c] sm:$0xf]
    %v883 = vld [vmem:[#allocation2 + $0x20] sm:$0xf]
    %v884 = vld [vmem:[#allocation2 + $0x30] sm:$0xf]
    %v885 = vld [vmem:[#allocation2 + $0x34] sm:$0xf]
    %v886 = vld [vmem:[#allocation2 + $0x44] sm:$0xf]
    %v887 = vld [vmem:[#allocation2 + $0x48] sm:$0xf]
    %v888 = vld [vmem:[#allocation2 + $0x58] sm:$0xf]
    %v889 = vld [vmem:[#allocation2 + $0x5c] sm:$0xf]
    %v890 = vld [vmem:[#allocation2 + $0x6c] sm:$0xf]
    %v891 = vld [vmem:[#allocation2 + $0x70] sm:$0xf]
    %v892 = vld [vmem:[#allocation2 + $0x80] sm:$0xf]
    %v893 = vld [vmem:[#allocation2 + $0x84] sm:$0xf]
    %v894 = vld [vmem:[#allocation2 + $0x94] sm:$0xf]
    %v895 = vld [vmem:[#allocation2 + $0x98] sm:$0xf]
    %v896 = vld [vmem:[#allocation2 + $0xa8] sm:$0xf]
    %v897 = vld [vmem:[#allocation2 + $0xac] sm:$0xf]
    %v898 = vld [vmem:[#allocation2 + $0xbc] sm:$0xf]
    %v899 = vld [vmem:[#allocation2 + $0xc0] sm:$0xf]
    %v900 = vld [vmem:[#allocation2 + $0xd0] sm:$0xf]
    %v901 = vld [vmem:[#allocation2 + $0xd4] sm:$0xf]
    %v902 = vld [vmem:[#allocation2 + $0xe4] sm:$0xf]
    %v903 = vld [vmem:[#allocation2 + $0xe8] sm:$0xf]
    %v904 = vld [vmem:[#allocation2 + $0xf8] sm:$0xf]
    %v905 = vld [vmem:[#allocation2 + $0xfc] sm:$0xf]
    %v906 = vld [vmem:[#allocation2 + $0x10c] sm:$0xf]
    %v907 = vld [vmem:[#allocation2 + $0x110] sm:$0xf]
    %v908 = vld [vmem:[#allocation2 + $0x120] sm:$0xf]
    %v909 = vld [vmem:[#allocation2 + $0x124] sm:$0xf]
    %v910 = vld [vmem:[#allocation2 + $0x134] sm:$0xf]
    %v911 = vld [vmem:[#allocation2 + $0x138] sm:$0xf]
    %v944 = vunpack.c.l.b16 %v880
    %v945 = vunpack.c.l.b16 %v881
    %v946 = vunpack.c.l.b16 %v882
    %v947 = vunpack.c.l.b16 %v883
    %v948 = vunpack.c.l.b16 %v884
    %v949 = vunpack.c.l.b16 %v885
    %v950 = vunpack.c.l.b16 %v886
    %v951 = vunpack.c.l.b16 %v887
    %v952 = vunpack.c.l.b16 %v888
    %v953 = vunpack.c.l.b16 %v889
    %v954 = vunpack.c.l.b16 %v890
    %v955 = vunpack.c.l.b16 %v891
    %v956 = vunpack.c.l.b16 %v892
    %v957 = vunpack.c.l.b16 %v893
    %v958 = vunpack.c.l.b16 %v894
    %v959 = vunpack.c.l.b16 %v895
    %v960 = vunpack.c.l.b16 %v896
    %v961 = vunpack.c.l.b16 %v897
    %v962 = vunpack.c.l.b16 %v898
    %v963 = vunpack.c.l.b16 %v899
    %v964 = vunpack.c.l.b16 %v900
    %v965 = vunpack.c.l.b16 %v901
    %v966 = vunpack.c.l.b16 %v902
    %v967 = vunpack.c.l.b16 %v903
    %v968 = vunpack.c.l.b16 %v904
    %v969 = vunpack.c.l.b16 %v905
    %v970 = vunpack.c.l.b16 %v906
    %v971 = vunpack.c.l.b16 %v907
    %v972 = vunpack.c.l.b16 %v908
    %v973 = vunpack.c.l.b16 %v909
    %v974 = vunpack.c.l.b16 %v910
    %v975 = vunpack.c.l.b16 %v911
    %v976 = vpack.c.b16 %v945, %v944
    %v977 = vpack.c.b16 %v947, %v946
    %v978 = vpack.c.b16 %v949, %v948
    %v979 = vpack.c.b16 %v951, %v950
    %v980 = vpack.c.b16 %v953, %v952
    %v981 = vpack.c.b16 %v955, %v954
    %v982 = vpack.c.b16 %v957, %v956
    %v983 = vpack.c.b16 %v959, %v958
    %v984 = vpack.c.b16 %v961, %v960
    %v985 = vpack.c.b16 %v963, %v962
    %v986 = vpack.c.b16 %v965, %v964
    %v987 = vpack.c.b16 %v967, %v966
    %v988 = vpack.c.b16 %v969, %v968
    %v989 = vpack.c.b16 %v971, %v970
    %v990 = vpack.c.b16 %v973, %v972
    %v991 = vpack.c.b16 %v975, %v974
    %992 = vrot.lane.b32.xlu0 %v976, 32
    %v993 = vpop.permute.xlu0 %992
    %994 = vrot.lane.b32.xlu0 %v977, 32
    %v995 = vpop.permute.xlu0 %994
    %996 = vrot.lane.b32.xlu0 %v978, 32
    %v997 = vpop.permute.xlu0 %996
    %998 = vrot.lane.b32.xlu0 %v979, 32
    %v999 = vpop.permute.xlu0 %998
    %1000 = vrot.lane.b32.xlu0 %v980, 32
    %v1001 = vpop.permute.xlu0 %1000
    %1002 = vrot.lane.b32.xlu0 %v981, 32
    %v1003 = vpop.permute.xlu0 %1002
    %1004 = vrot.lane.b32.xlu0 %v982, 32
    %v1005 = vpop.permute.xlu0 %1004
    %1006 = vrot.lane.b32.xlu0 %v983, 32
    %v1007 = vpop.permute.xlu0 %1006
    %1008 = vrot.lane.b32.xlu0 %v984, 32
    %v1009 = vpop.permute.xlu0 %1008
    %1010 = vrot.lane.b32.xlu0 %v985, 32
    %v1011 = vpop.permute.xlu0 %1010
    %1012 = vrot.lane.b32.xlu0 %v986, 32
    %v1013 = vpop.permute.xlu0 %1012
    %1014 = vrot.lane.b32.xlu0 %v987, 32
    %v1015 = vpop.permute.xlu0 %1014
    %1016 = vrot.lane.b32.xlu0 %v988, 32
    %v1017 = vpop.permute.xlu0 %1016
    %1018 = vrot.lane.b32.xlu0 %v989, 32
    %v1019 = vpop.permute.xlu0 %1018
    %1020 = vrot.lane.b32.xlu0 %v990, 32
    %v1021 = vpop.permute.xlu0 %1020
    %1022 = vrot.lane.b32.xlu0 %v991, 32
    %v1023 = vpop.permute.xlu0 %1022
    %vm1040 = vcmask 523520
    %1041 = vst.msk [vmem:[#allocation3] sm:$0xff] %vm1040, %v993
    %1042 = vst.msk [vmem:[#allocation3 + $0x18] sm:$0xff] %vm1040, %v995
    %1043 = vst.msk [vmem:[#allocation3 + $0x30] sm:$0xff] %vm1040, %v997
    %1044 = vst.msk [vmem:[#allocation3 + $0x48] sm:$0xff] %vm1040, %v999
    %1045 = vst.msk [vmem:[#allocation3 + $0x60] sm:$0xff] %vm1040, %v1001
    %1046 = vst.msk [vmem:[#allocation3 + $0x78] sm:$0xff] %vm1040, %v1003
    %1047 = vst.msk [vmem:[#allocation3 + $0x90] sm:$0xff] %vm1040, %v1005
    %1048 = vst.msk [vmem:[#allocation3 + $0xa8] sm:$0xff] %vm1040, %v1007
    %1049 = vst.msk [vmem:[#allocation3 + $0xc0] sm:$0xff] %vm1040, %v1009
    %1050 = vst.msk [vmem:[#allocation3 + $0xd8] sm:$0xff] %vm1040, %v1011
    %1051 = vst.msk [vmem:[#allocation3 + $0xf0] sm:$0xff] %vm1040, %v1013
    %1052 = vst.msk [vmem:[#allocation3 + $0x108] sm:$0xff] %vm1040, %v1015
    %1053 = vst.msk [vmem:[#allocation3 + $0x120] sm:$0xff] %vm1040, %v1017
    %1054 = vst.msk [vmem:[#allocation3 + $0x138] sm:$0xff] %vm1040, %v1019
    %1055 = vst.msk [vmem:[#allocation3 + $0x150] sm:$0xff] %vm1040, %v1021
    %1056 = vst.msk [vmem:[#allocation3 + $0x168] sm:$0xff] %vm1040, %v1023
    %v1057 = vld [vmem:[#allocation2 + $0x8] sm:$0xf]
    %v1058 = vld [vmem:[#allocation2 + $0xc] sm:$0xf]
    %v1059 = vld [vmem:[#allocation2 + $0x10] sm:$0x1]
    %v1060 = vld [vmem:[#allocation2 + $0x1c] sm:$0xf]
    %v1061 = vld [vmem:[#allocation2 + $0x20] sm:$0xf]
    %v1062 = vld [vmem:[#allocation2 + $0x24] sm:$0x1]
    %v1063 = vld [vmem:[#allocation2 + $0x30] sm:$0xf]
    %v1064 = vld [vmem:[#allocation2 + $0x34] sm:$0xf]
    %v1065 = vld [vmem:[#allocation2 + $0x38] sm:$0x1]
    %v1066 = vld [vmem:[#allocation2 + $0x44] sm:$0xf]
    %v1067 = vld [vmem:[#allocation2 + $0x48] sm:$0xf]
    %v1068 = vld [vmem:[#allocation2 + $0x4c] sm:$0x1]
    %v1069 = vld [vmem:[#allocation2 + $0x58] sm:$0xf]
    %v1070 = vld [vmem:[#allocation2 + $0x5c] sm:$0xf]
    %v1071 = vld [vmem:[#allocation2 + $0x60] sm:$0x1]
    %v1072 = vld [vmem:[#allocation2 + $0x6c] sm:$0xf]
    %v1073 = vld [vmem:[#allocation2 + $0x70] sm:$0xf]
    %v1074 = vld [vmem:[#allocation2 + $0x74] sm:$0x1]
    %v1075 = vld [vmem:[#allocation2 + $0x80] sm:$0xf]
    %v1076 = vld [vmem:[#allocation2 + $0x84] sm:$0xf]
    %v1077 = vld [vmem:[#allocation2 + $0x88] sm:$0x1]
    %v1078 = vld [vmem:[#allocation2 + $0x94] sm:$0xf]
    %v1079 = vld [vmem:[#allocation2 + $0x98] sm:$0xf]
    %v1080 = vld [vmem:[#allocation2 + $0x9c] sm:$0x1]
    %v1081 = vld [vmem:[#allocation2 + $0xa8] sm:$0xf]
    %v1082 = vld [vmem:[#allocation2 + $0xac] sm:$0xf]
    %v1083 = vld [vmem:[#allocation2 + $0xb0] sm:$0x1]
    %v1084 = vld [vmem:[#allocation2 + $0xbc] sm:$0xf]
    %v1085 = vld [vmem:[#allocation2 + $0xc0] sm:$0xf]
    %v1086 = vld [vmem:[#allocation2 + $0xc4] sm:$0x1]
    %v1087 = vld [vmem:[#allocation2 + $0xd0] sm:$0xf]
    %v1088 = vld [vmem:[#allocation2 + $0xd4] sm:$0xf]
    %v1089 = vld [vmem:[#allocation2 + $0xd8] sm:$0x1]
    %v1090 = vld [vmem:[#allocation2 + $0xe4] sm:$0xf]
    %v1091 = vld [vmem:[#allocation2 + $0xe8] sm:$0xf]
    %v1092 = vld [vmem:[#allocation2 + $0xec] sm:$0x1]
    %v1093 = vld [vmem:[#allocation2 + $0xf8] sm:$0xf]
    %v1094 = vld [vmem:[#allocation2 + $0xfc] sm:$0xf]
    %v1095 = vld [vmem:[#allocation2 + $0x100] sm:$0x1]
    %v1096 = vld [vmem:[#allocation2 + $0x10c] sm:$0xf]
    %v1097 = vld [vmem:[#allocation2 + $0x110] sm:$0xf]
    %v1098 = vld [vmem:[#allocation2 + $0x114] sm:$0x1]
    %v1099 = vld [vmem:[#allocation2 + $0x120] sm:$0xf]
    %v1100 = vld [vmem:[#allocation2 + $0x124] sm:$0xf]
    %v1101 = vld [vmem:[#allocation2 + $0x128] sm:$0x1]
    %v1102 = vld [vmem:[#allocation2 + $0x134] sm:$0xf]
    %v1103 = vld [vmem:[#allocation2 + $0x138] sm:$0xf]
    %v1104 = vld [vmem:[#allocation2 + $0x13c] sm:$0x1]
    %vm1105 = vsmask.f32 3328
    %vm1106 = vsmask.f32 7440
    %vm1107 = vmor %vm1105, %vm1106
    %v1109 = vshrl.u32 %v1057, 16
    %v1111 = vrot.slane %v1109, 4
    %v1112 = vshll.u32 %v1057, 16
    %v1114 = vrot.slane %v1112, 5
    %v1115 = vor.u32 %v1111, %v1114
    %v1116 = vrot.slane %v1115, 4
    %v1118 = vshll.u32 %v1058, 16
    %v1120 = vrot.slane %v1118, 5
    %v1121 = vsel %vm1107, %v1116, %v1120
    %v1122 = vshrl.u32 %v1058, 16
    %v1124 = vrot.slane %v1122, 4
    %v1125 = vor.u32 %v1124, %v1120
    %v1126 = vrot.slane %v1125, 4
    %v1128 = vshll.u32 %v1059, 16
    %v1130 = vrot.slane %v1128, 5
    %v1131 = vsel %vm1107, %v1126, %v1130
    %v1133 = vshrl.u32 %v1060, 16
    %v1135 = vrot.slane %v1133, 4
    %v1136 = vshll.u32 %v1060, 16
    %v1138 = vrot.slane %v1136, 5
    %v1139 = vor.u32 %v1135, %v1138
    %v1140 = vrot.slane %v1139, 4
    %v1142 = vshll.u32 %v1061, 16
    %v1144 = vrot.slane %v1142, 5
    %v1145 = vsel %vm1107, %v1140, %v1144
    %v1146 = vshrl.u32 %v1061, 16
    %v1148 = vrot.slane %v1146, 4
    %v1149 = vor.u32 %v1148, %v1144
    %v1150 = vrot.slane %v1149, 4
    %v1152 = vshll.u32 %v1062, 16
    %v1154 = vrot.slane %v1152, 5
    %v1155 = vsel %vm1107, %v1150, %v1154
    %v1157 = vshrl.u32 %v1063, 16
    %v1159 = vrot.slane %v1157, 4
    %v1160 = vshll.u32 %v1063, 16
    %v1162 = vrot.slane %v1160, 5
    %v1163 = vor.u32 %v1159, %v1162
    %v1164 = vrot.slane %v1163, 4
    %v1166 = vshll.u32 %v1064, 16
    %v1168 = vrot.slane %v1166, 5
    %v1169 = vsel %vm1107, %v1164, %v1168
    %v1170 = vshrl.u32 %v1064, 16
    %v1172 = vrot.slane %v1170, 4
    %v1173 = vor.u32 %v1172, %v1168
    %v1174 = vrot.slane %v1173, 4
    %v1176 = vshll.u32 %v1065, 16
    %v1178 = vrot.slane %v1176, 5
    %v1179 = vsel %vm1107, %v1174, %v1178
    %v1181 = vshrl.u32 %v1066, 16
    %v1183 = vrot.slane %v1181, 4
    %v1184 = vshll.u32 %v1066, 16
    %v1186 = vrot.slane %v1184, 5
    %v1187 = vor.u32 %v1183, %v1186
    %v1188 = vrot.slane %v1187, 4
    %v1190 = vshll.u32 %v1067, 16
    %v1192 = vrot.slane %v1190, 5
    %v1193 = vsel %vm1107, %v1188, %v1192
    %v1194 = vshrl.u32 %v1067, 16
    %v1196 = vrot.slane %v1194, 4
    %v1197 = vor.u32 %v1196, %v1192
    %v1198 = vrot.slane %v1197, 4
    %v1200 = vshll.u32 %v1068, 16
    %v1202 = vrot.slane %v1200, 5
    %v1203 = vsel %vm1107, %v1198, %v1202
    %v1205 = vshrl.u32 %v1069, 16
    %v1207 = vrot.slane %v1205, 4
    %v1208 = vshll.u32 %v1069, 16
    %v1210 = vrot.slane %v1208, 5
    %v1211 = vor.u32 %v1207, %v1210
    %v1212 = vrot.slane %v1211, 4
    %v1214 = vshll.u32 %v1070, 16
    %v1216 = vrot.slane %v1214, 5
    %v1217 = vsel %vm1107, %v1212, %v1216
    %v1218 = vshrl.u32 %v1070, 16
    %v1220 = vrot.slane %v1218, 4
    %v1221 = vor.u32 %v1220, %v1216
    %v1222 = vrot.slane %v1221, 4
    %v1224 = vshll.u32 %v1071, 16
    %v1226 = vrot.slane %v1224, 5
    %v1227 = vsel %vm1107, %v1222, %v1226
    %v1229 = vshrl.u32 %v1072, 16
    %v1231 = vrot.slane %v1229, 4
    %v1232 = vshll.u32 %v1072, 16
    %v1234 = vrot.slane %v1232, 5
    %v1235 = vor.u32 %v1231, %v1234
    %v1236 = vrot.slane %v1235, 4
    %v1238 = vshll.u32 %v1073, 16
    %v1240 = vrot.slane %v1238, 5
    %v1241 = vsel %vm1107, %v1236, %v1240
    %v1242 = vshrl.u32 %v1073, 16
    %v1244 = vrot.slane %v1242, 4
    %v1245 = vor.u32 %v1244, %v1240
    %v1246 = vrot.slane %v1245, 4
    %v1248 = vshll.u32 %v1074, 16
    %v1250 = vrot.slane %v1248, 5
    %v1251 = vsel %vm1107, %v1246, %v1250
    %v1253 = vshrl.u32 %v1075, 16
    %v1255 = vrot.slane %v1253, 4
    %v1256 = vshll.u32 %v1075, 16
    %v1258 = vrot.slane %v1256, 5
    %v1259 = vor.u32 %v1255, %v1258
    %v1260 = vrot.slane %v1259, 4
    %v1262 = vshll.u32 %v1076, 16
    %v1264 = vrot.slane %v1262, 5
    %v1265 = vsel %vm1107, %v1260, %v1264
    %v1266 = vshrl.u32 %v1076, 16
    %v1268 = vrot.slane %v1266, 4
    %v1269 = vor.u32 %v1268, %v1264
    %v1270 = vrot.slane %v1269, 4
    %v1272 = vshll.u32 %v1077, 16
    %v1274 = vrot.slane %v1272, 5
    %v1275 = vsel %vm1107, %v1270, %v1274
    %v1277 = vshrl.u32 %v1078, 16
    %v1279 = vrot.slane %v1277, 4
    %v1280 = vshll.u32 %v1078, 16
    %v1282 = vrot.slane %v1280, 5
    %v1283 = vor.u32 %v1279, %v1282
    %v1284 = vrot.slane %v1283, 4
    %v1286 = vshll.u32 %v1079, 16
    %v1288 = vrot.slane %v1286, 5
    %v1289 = vsel %vm1107, %v1284, %v1288
    %v1290 = vshrl.u32 %v1079, 16
    %v1292 = vrot.slane %v1290, 4
    %v1293 = vor.u32 %v1292, %v1288
    %v1294 = vrot.slane %v1293, 4
    %v1296 = vshll.u32 %v1080, 16
    %v1298 = vrot.slane %v1296, 5
    %v1299 = vsel %vm1107, %v1294, %v1298
    %v1301 = vshrl.u32 %v1081, 16
    %v1303 = vrot.slane %v1301, 4
    %v1304 = vshll.u32 %v1081, 16
    %v1306 = vrot.slane %v1304, 5
    %v1307 = vor.u32 %v1303, %v1306
    %v1308 = vrot.slane %v1307, 4
    %v1310 = vshll.u32 %v1082, 16
    %v1312 = vrot.slane %v1310, 5
    %v1313 = vsel %vm1107, %v1308, %v1312
    %v1314 = vshrl.u32 %v1082, 16
    %v1316 = vrot.slane %v1314, 4
    %v1317 = vor.u32 %v1316, %v1312
    %v1318 = vrot.slane %v1317, 4
    %v1320 = vshll.u32 %v1083, 16
    %v1322 = vrot.slane %v1320, 5
    %v1323 = vsel %vm1107, %v1318, %v1322
    %v1325 = vshrl.u32 %v1084, 16
    %v1327 = vrot.slane %v1325, 4
    %v1328 = vshll.u32 %v1084, 16
    %v1330 = vrot.slane %v1328, 5
    %v1331 = vor.u32 %v1327, %v1330
    %v1332 = vrot.slane %v1331, 4
    %v1334 = vshll.u32 %v1085, 16
    %v1336 = vrot.slane %v1334, 5
    %v1337 = vsel %vm1107, %v1332, %v1336
    %v1338 = vshrl.u32 %v1085, 16
    %v1340 = vrot.slane %v1338, 4
    %v1341 = vor.u32 %v1340, %v1336
    %v1342 = vrot.slane %v1341, 4
    %v1344 = vshll.u32 %v1086, 16
    %v1346 = vrot.slane %v1344, 5
    %v1347 = vsel %vm1107, %v1342, %v1346
    %v1349 = vshrl.u32 %v1087, 16
    %v1351 = vrot.slane %v1349, 4
    %v1352 = vshll.u32 %v1087, 16
    %v1354 = vrot.slane %v1352, 5
    %v1355 = vor.u32 %v1351, %v1354
    %v1356 = vrot.slane %v1355, 4
    %v1358 = vshll.u32 %v1088, 16
    %v1360 = vrot.slane %v1358, 5
    %v1361 = vsel %vm1107, %v1356, %v1360
    %v1362 = vshrl.u32 %v1088, 16
    %v1364 = vrot.slane %v1362, 4
    %v1365 = vor.u32 %v1364, %v1360
    %v1366 = vrot.slane %v1365, 4
    %v1368 = vshll.u32 %v1089, 16
    %v1370 = vrot.slane %v1368, 5
    %v1371 = vsel %vm1107, %v1366, %v1370
    %v1373 = vshrl.u32 %v1090, 16
    %v1375 = vrot.slane %v1373, 4
    %v1376 = vshll.u32 %v1090, 16
    %v1378 = vrot.slane %v1376, 5
    %v1379 = vor.u32 %v1375, %v1378
    %v1380 = vrot.slane %v1379, 4
    %v1382 = vshll.u32 %v1091, 16
    %v1384 = vrot.slane %v1382, 5
    %v1385 = vsel %vm1107, %v1380, %v1384
    %v1386 = vshrl.u32 %v1091, 16
    %v1388 = vrot.slane %v1386, 4
    %v1389 = vor.u32 %v1388, %v1384
    %v1390 = vrot.slane %v1389, 4
    %v1392 = vshll.u32 %v1092, 16
    %v1394 = vrot.slane %v1392, 5
    %v1395 = vsel %vm1107, %v1390, %v1394
    %v1397 = vshrl.u32 %v1093, 16
    %v1399 = vrot.slane %v1397, 4
    %v1400 = vshll.u32 %v1093, 16
    %v1402 = vrot.slane %v1400, 5
    %v1403 = vor.u32 %v1399, %v1402
    %v1404 = vrot.slane %v1403, 4
    %v1406 = vshll.u32 %v1094, 16
    %v1408 = vrot.slane %v1406, 5
    %v1409 = vsel %vm1107, %v1404, %v1408
    %v1410 = vshrl.u32 %v1094, 16
    %v1412 = vrot.slane %v1410, 4
    %v1413 = vor.u32 %v1412, %v1408
    %v1414 = vrot.slane %v1413, 4
    %v1416 = vshll.u32 %v1095, 16
    %v1418 = vrot.slane %v1416, 5
    %v1419 = vsel %vm1107, %v1414, %v1418
    %v1421 = vshrl.u32 %v1096, 16
    %v1423 = vrot.slane %v1421, 4
    %v1424 = vshll.u32 %v1096, 16
    %v1426 = vrot.slane %v1424, 5
    %v1427 = vor.u32 %v1423, %v1426
    %v1428 = vrot.slane %v1427, 4
    %v1430 = vshll.u32 %v1097, 16
    %v1432 = vrot.slane %v1430, 5
    %v1433 = vsel %vm1107, %v1428, %v1432
    %v1434 = vshrl.u32 %v1097, 16
    %v1436 = vrot.slane %v1434, 4
    %v1437 = vor.u32 %v1436, %v1432
    %v1438 = vrot.slane %v1437, 4
    %v1440 = vshll.u32 %v1098, 16
    %v1442 = vrot.slane %v1440, 5
    %v1443 = vsel %vm1107, %v1438, %v1442
    %v1445 = vshrl.u32 %v1099, 16
    %v1447 = vrot.slane %v1445, 4
    %v1448 = vshll.u32 %v1099, 16
    %v1450 = vrot.slane %v1448, 5
    %v1451 = vor.u32 %v1447, %v1450
    %v1452 = vrot.slane %v1451, 4
    %v1454 = vshll.u32 %v1100, 16
    %v1456 = vrot.slane %v1454, 5
    %v1457 = vsel %vm1107, %v1452, %v1456
    %v1458 = vshrl.u32 %v1100, 16
    %v1460 = vrot.slane %v1458, 4
    %v1461 = vor.u32 %v1460, %v1456
    %v1462 = vrot.slane %v1461, 4
    %v1464 = vshll.u32 %v1101, 16
    %v1466 = vrot.slane %v1464, 5
    %v1467 = vsel %vm1107, %v1462, %v1466
    %v1469 = vshrl.u32 %v1102, 16
    %v1471 = vrot.slane %v1469, 4
    %v1472 = vshll.u32 %v1102, 16
    %v1474 = vrot.slane %v1472, 5
    %v1475 = vor.u32 %v1471, %v1474
    %v1476 = vrot.slane %v1475, 4
    %v1478 = vshll.u32 %v1103, 16
    %v1480 = vrot.slane %v1478, 5
    %v1481 = vsel %vm1107, %v1476, %v1480
    %v1482 = vshrl.u32 %v1103, 16
    %v1484 = vrot.slane %v1482, 4
    %v1485 = vor.u32 %v1484, %v1480
    %v1486 = vrot.slane %v1485, 4
    %v1488 = vshll.u32 %v1104, 16
    %v1490 = vrot.slane %v1488, 5
    %v1491 = vsel %vm1107, %v1486, %v1490
    %v1492 = vunpack.c.l.b16 %v1121
    %v1493 = vunpack.c.l.b16 %v1131
    %v1494 = vunpack.c.l.b16 %v1145
    %v1495 = vunpack.c.l.b16 %v1155
    %v1496 = vunpack.c.l.b16 %v1169
    %v1497 = vunpack.c.l.b16 %v1179
    %v1498 = vunpack.c.l.b16 %v1193
    %v1499 = vunpack.c.l.b16 %v1203
    %v1500 = vunpack.c.l.b16 %v1217
    %v1501 = vunpack.c.l.b16 %v1227
    %v1502 = vunpack.c.l.b16 %v1241
    %v1503 = vunpack.c.l.b16 %v1251
    %v1504 = vunpack.c.l.b16 %v1265
    %v1505 = vunpack.c.l.b16 %v1275
    %v1506 = vunpack.c.l.b16 %v1289
    %v1507 = vunpack.c.l.b16 %v1299
    %v1508 = vunpack.c.l.b16 %v1313
    %v1509 = vunpack.c.l.b16 %v1323
    %v1510 = vunpack.c.l.b16 %v1337
    %v1511 = vunpack.c.l.b16 %v1347
    %v1512 = vunpack.c.l.b16 %v1361
    %v1513 = vunpack.c.l.b16 %v1371
    %v1514 = vunpack.c.l.b16 %v1385
    %v1515 = vunpack.c.l.b16 %v1395
    %v1516 = vunpack.c.l.b16 %v1409
    %v1517 = vunpack.c.l.b16 %v1419
    %v1518 = vunpack.c.l.b16 %v1433
    %v1519 = vunpack.c.l.b16 %v1443
    %v1520 = vunpack.c.l.b16 %v1457
    %v1521 = vunpack.c.l.b16 %v1467
    %v1522 = vunpack.c.l.b16 %v1481
    %v1523 = vunpack.c.l.b16 %v1491
    %v1524 = vpack.c.b16 %v1493, %v1492
    %v1525 = vpack.c.b16 %v1495, %v1494
    %v1526 = vpack.c.b16 %v1497, %v1496
    %v1527 = vpack.c.b16 %v1499, %v1498
    %v1528 = vpack.c.b16 %v1501, %v1500
    %v1529 = vpack.c.b16 %v1503, %v1502
    %v1530 = vpack.c.b16 %v1505, %v1504
    %v1531 = vpack.c.b16 %v1507, %v1506
    %v1532 = vpack.c.b16 %v1509, %v1508
    %v1533 = vpack.c.b16 %v1511, %v1510
    %v1534 = vpack.c.b16 %v1513, %v1512
    %v1535 = vpack.c.b16 %v1515, %v1514
    %v1536 = vpack.c.b16 %v1517, %v1516
    %v1537 = vpack.c.b16 %v1519, %v1518
    %v1538 = vpack.c.b16 %v1521, %v1520
    %v1539 = vpack.c.b16 %v1523, %v1522
    %1540 = vrot.lane.b32.xlu0 %v1524, 64
    %v1541 = vpop.permute.xlu0 %1540
    %1542 = vrot.lane.b32.xlu0 %v1525, 64
    %v1543 = vpop.permute.xlu0 %1542
    %1544 = vrot.lane.b32.xlu0 %v1526, 64
    %v1545 = vpop.permute.xlu0 %1544
    %1546 = vrot.lane.b32.xlu0 %v1527, 64
    %v1547 = vpop.permute.xlu0 %1546
    %1548 = vrot.lane.b32.xlu0 %v1528, 64
    %v1549 = vpop.permute.xlu0 %1548
    %1550 = vrot.lane.b32.xlu0 %v1529, 64
    %v1551 = vpop.permute.xlu0 %1550
    %1552 = vrot.lane.b32.xlu0 %v1530, 64
    %v1553 = vpop.permute.xlu0 %1552
    %1554 = vrot.lane.b32.xlu0 %v1531, 64
    %v1555 = vpop.permute.xlu0 %1554
    %1556 = vrot.lane.b32.xlu0 %v1532, 64
    %v1557 = vpop.permute.xlu0 %1556
    %1558 = vrot.lane.b32.xlu0 %v1533, 64
    %v1559 = vpop.permute.xlu0 %1558
    %1560 = vrot.lane.b32.xlu0 %v1534, 64
    %v1561 = vpop.permute.xlu0 %1560
    %1562 = vrot.lane.b32.xlu0 %v1535, 64
    %v1563 = vpop.permute.xlu0 %1562
    %1564 = vrot.lane.b32.xlu0 %v1536, 64
    %v1565 = vpop.permute.xlu0 %1564
    %1566 = vrot.lane.b32.xlu0 %v1537, 64
    %v1567 = vpop.permute.xlu0 %1566
    %1568 = vrot.lane.b32.xlu0 %v1538, 64
    %v1569 = vpop.permute.xlu0 %1568
    %1570 = vrot.lane.b32.xlu0 %v1539, 64
    %v1571 = vpop.permute.xlu0 %1570
    %vm1588 = vcmask 785920
    %1589 = vst.msk [vmem:[#allocation3] sm:$0xff] %vm1588, %v1541
    %1590 = vst.msk [vmem:[#allocation3 + $0x18] sm:$0xff] %vm1588, %v1543
    %1591 = vst.msk [vmem:[#allocation3 + $0x30] sm:$0xff] %vm1588, %v1545
    %1592 = vst.msk [vmem:[#allocation3 + $0x48] sm:$0xff] %vm1588, %v1547
    %1593 = vst.msk [vmem:[#allocation3 + $0x60] sm:$0xff] %vm1588, %v1549
    %1594 = vst.msk [vmem:[#allocation3 + $0x78] sm:$0xff] %vm1588, %v1551
    %1595 = vst.msk [vmem:[#allocation3 + $0x90] sm:$0xff] %vm1588, %v1553
    %1596 = vst.msk [vmem:[#allocation3 + $0xa8] sm:$0xff] %vm1588, %v1555
    %1597 = vst.msk [vmem:[#allocation3 + $0xc0] sm:$0xff] %vm1588, %v1557
    %1598 = vst.msk [vmem:[#allocation3 + $0xd8] sm:$0xff] %vm1588, %v1559
    %1599 = vst.msk [vmem:[#allocation3 + $0xf0] sm:$0xff] %vm1588, %v1561
    %1600 = vst.msk [vmem:[#allocation3 + $0x108] sm:$0xff] %vm1588, %v1563
    %1601 = vst.msk [vmem:[#allocation3 + $0x120] sm:$0xff] %vm1588, %v1565
    %1602 = vst.msk [vmem:[#allocation3 + $0x138] sm:$0xff] %vm1588, %v1567
    %1603 = vst.msk [vmem:[#allocation3 + $0x150] sm:$0xff] %vm1588, %v1569
    %1604 = vst.msk [vmem:[#allocation3 + $0x168] sm:$0xff] %vm1588, %v1571
    %v1605 = vld [vmem:[%s68 + $0x4] sm:$0x8]
    %v1606 = vld [vmem:[%s68 + $0x8] sm:$0xf]
    %v1607 = vld [vmem:[%s68 + $0xc] sm:$0xf]
    %v1608 = vld [vmem:[%s68 + $0x18] sm:$0x8]
    %v1609 = vld [vmem:[%s68 + $0x1c] sm:$0xf]
    %v1610 = vld [vmem:[%s68 + $0x20] sm:$0xf]
    %v1611 = vld [vmem:[%s68 + $0x2c] sm:$0x8]
    %v1612 = vld [vmem:[%s68 + $0x30] sm:$0xf]
    %v1613 = vld [vmem:[%s68 + $0x34] sm:$0xf]
    %v1614 = vld [vmem:[%s68 + $0x40] sm:$0x8]
    %v1615 = vld [vmem:[%s68 + $0x44] sm:$0xf]
    %v1616 = vld [vmem:[%s68 + $0x48] sm:$0xf]
    %v1617 = vld [vmem:[%s68 + $0x54] sm:$0x8]
    %v1618 = vld [vmem:[%s68 + $0x58] sm:$0xf]
    %v1619 = vld [vmem:[%s68 + $0x5c] sm:$0xf]
    %v1620 = vld [vmem:[%s68 + $0x68] sm:$0x8]
    %v1621 = vld [vmem:[%s68 + $0x6c] sm:$0xf]
    %v1622 = vld [vmem:[%s68 + $0x70] sm:$0xf]
    %v1623 = vld [vmem:[%s68 + $0x7c] sm:$0x8]
    %v1624 = vld [vmem:[%s68 + $0x80] sm:$0xf]
    %v1625 = vld [vmem:[%s68 + $0x84] sm:$0xf]
    %v1626 = vld [vmem:[%s68 + $0x90] sm:$0x8]
    %v1627 = vld [vmem:[%s68 + $0x94] sm:$0xf]
    %v1628 = vld [vmem:[%s68 + $0x98] sm:$0xf]
    %v1629 = vld [vmem:[%s68 + $0xa4] sm:$0x8]
    %v1630 = vld [vmem:[%s68 + $0xa8] sm:$0xf]
    %v1631 = vld [vmem:[%s68 + $0xac] sm:$0xf]
    %v1632 = vld [vmem:[%s68 + $0xb8] sm:$0x8]
    %v1633 = vld [vmem:[%s68 + $0xbc] sm:$0xf]
    %v1634 = vld [vmem:[%s68 + $0xc0] sm:$0xf]
    %v1635 = vld [vmem:[%s68 + $0xcc] sm:$0x8]
    %v1636 = vld [vmem:[%s68 + $0xd0] sm:$0xf]
    %v1637 = vld [vmem:[%s68 + $0xd4] sm:$0xf]
    %v1638 = vld [vmem:[%s68 + $0xe0] sm:$0x8]
    %v1639 = vld [vmem:[%s68 + $0xe4] sm:$0xf]
    %v1640 = vld [vmem:[%s68 + $0xe8] sm:$0xf]
    %v1641 = vld [vmem:[%s68 + $0xf4] sm:$0x8]
    %v1642 = vld [vmem:[%s68 + $0xf8] sm:$0xf]
    %v1643 = vld [vmem:[%s68 + $0xfc] sm:$0xf]
    %v1644 = vld [vmem:[%s68 + $0x108] sm:$0x8]
    %v1645 = vld [vmem:[%s68 + $0x10c] sm:$0xf]
    %v1646 = vld [vmem:[%s68 + $0x110] sm:$0xf]
    %v1647 = vld [vmem:[%s68 + $0x11c] sm:$0x8]
    %v1648 = vld [vmem:[%s68 + $0x120] sm:$0xf]
    %v1649 = vld [vmem:[%s68 + $0x124] sm:$0xf]
    %v1650 = vld [vmem:[%s68 + $0x130] sm:$0x8]
    %v1651 = vld [vmem:[%s68 + $0x134] sm:$0xf]
    %v1652 = vld [vmem:[%s68 + $0x138] sm:$0xf]
    %v1654 = vshrl.u32 %v1605, 16
    %v1656 = vrot.slane %v1654, 7
    %v1657 = vrot.slane %v1656, 4
    %v1659 = vshrl.u32 %v1606, 16
    %v1661 = vrot.slane %v1659, 7
    %v1662 = vshll.u32 %v1606, 16
    %v1664 = vor.u32 %v1661, %v1662
    %v1665 = vsel %vm446, %v1657, %v1664
    %v1666 = vrot.slane %v1661, 4
    %v1668 = vshrl.u32 %v1607, 16
    %v1670 = vrot.slane %v1668, 7
    %v1671 = vshll.u32 %v1607, 16
    %v1673 = vor.u32 %v1670, %v1671
    %v1674 = vsel %vm446, %v1666, %v1673
    %v1676 = vshrl.u32 %v1608, 16
    %v1678 = vrot.slane %v1676, 7
    %v1679 = vrot.slane %v1678, 4
    %v1681 = vshrl.u32 %v1609, 16
    %v1683 = vrot.slane %v1681, 7
    %v1684 = vshll.u32 %v1609, 16
    %v1686 = vor.u32 %v1683, %v1684
    %v1687 = vsel %vm446, %v1679, %v1686
    %v1688 = vrot.slane %v1683, 4
    %v1690 = vshrl.u32 %v1610, 16
    %v1692 = vrot.slane %v1690, 7
    %v1693 = vshll.u32 %v1610, 16
    %v1695 = vor.u32 %v1692, %v1693
    %v1696 = vsel %vm446, %v1688, %v1695
    %v1698 = vshrl.u32 %v1611, 16
    %v1700 = vrot.slane %v1698, 7
    %v1701 = vrot.slane %v1700, 4
    %v1703 = vshrl.u32 %v1612, 16
    %v1705 = vrot.slane %v1703, 7
    %v1706 = vshll.u32 %v1612, 16
    %v1708 = vor.u32 %v1705, %v1706
    %v1709 = vsel %vm446, %v1701, %v1708
    %v1710 = vrot.slane %v1705, 4
    %v1712 = vshrl.u32 %v1613, 16
    %v1714 = vrot.slane %v1712, 7
    %v1715 = vshll.u32 %v1613, 16
    %v1717 = vor.u32 %v1714, %v1715
    %v1718 = vsel %vm446, %v1710, %v1717
    %v1720 = vshrl.u32 %v1614, 16
    %v1722 = vrot.slane %v1720, 7
    %v1723 = vrot.slane %v1722, 4
    %v1725 = vshrl.u32 %v1615, 16
    %v1727 = vrot.slane %v1725, 7
    %v1728 = vshll.u32 %v1615, 16
    %v1730 = vor.u32 %v1727, %v1728
    %v1731 = vsel %vm446, %v1723, %v1730
    %v1732 = vrot.slane %v1727, 4
    %v1734 = vshrl.u32 %v1616, 16
    %v1736 = vrot.slane %v1734, 7
    %v1737 = vshll.u32 %v1616, 16
    %v1739 = vor.u32 %v1736, %v1737
    %v1740 = vsel %vm446, %v1732, %v1739
    %v1742 = vshrl.u32 %v1617, 16
    %v1744 = vrot.slane %v1742, 7
    %v1745 = vrot.slane %v1744, 4
    %v1747 = vshrl.u32 %v1618, 16
    %v1749 = vrot.slane %v1747, 7
    %v1750 = vshll.u32 %v1618, 16
    %v1752 = vor.u32 %v1749, %v1750
    %v1753 = vsel %vm446, %v1745, %v1752
    %v1754 = vrot.slane %v1749, 4
    %v1756 = vshrl.u32 %v1619, 16
    %v1758 = vrot.slane %v1756, 7
    %v1759 = vshll.u32 %v1619, 16
    %v1761 = vor.u32 %v1758, %v1759
    %v1762 = vsel %vm446, %v1754, %v1761
    %v1764 = vshrl.u32 %v1620, 16
    %v1766 = vrot.slane %v1764, 7
    %v1767 = vrot.slane %v1766, 4
    %v1769 = vshrl.u32 %v1621, 16
    %v1771 = vrot.slane %v1769, 7
    %v1772 = vshll.u32 %v1621, 16
    %v1774 = vor.u32 %v1771, %v1772
    %v1775 = vsel %vm446, %v1767, %v1774
    %v1776 = vrot.slane %v1771, 4
    %v1778 = vshrl.u32 %v1622, 16
    %v1780 = vrot.slane %v1778, 7
    %v1781 = vshll.u32 %v1622, 16
    %v1783 = vor.u32 %v1780, %v1781
    %v1784 = vsel %vm446, %v1776, %v1783
    %v1786 = vshrl.u32 %v1623, 16
    %v1788 = vrot.slane %v1786, 7
    %v1789 = vrot.slane %v1788, 4
    %v1791 = vshrl.u32 %v1624, 16
    %v1793 = vrot.slane %v1791, 7
    %v1794 = vshll.u32 %v1624, 16
    %v1796 = vor.u32 %v1793, %v1794
    %v1797 = vsel %vm446, %v1789, %v1796
    %v1798 = vrot.slane %v1793, 4
    %v1800 = vshrl.u32 %v1625, 16
    %v1802 = vrot.slane %v1800, 7
    %v1803 = vshll.u32 %v1625, 16
    %v1805 = vor.u32 %v1802, %v1803
    %v1806 = vsel %vm446, %v1798, %v1805
    %v1808 = vshrl.u32 %v1626, 16
    %v1810 = vrot.slane %v1808, 7
    %v1811 = vrot.slane %v1810, 4
    %v1813 = vshrl.u32 %v1627, 16
    %v1815 = vrot.slane %v1813, 7
    %v1816 = vshll.u32 %v1627, 16
    %v1818 = vor.u32 %v1815, %v1816
    %v1819 = vsel %vm446, %v1811, %v1818
    %v1820 = vrot.slane %v1815, 4
    %v1822 = vshrl.u32 %v1628, 16
    %v1824 = vrot.slane %v1822, 7
    %v1825 = vshll.u32 %v1628, 16
    %v1827 = vor.u32 %v1824, %v1825
    %v1828 = vsel %vm446, %v1820, %v1827
    %v1830 = vshrl.u32 %v1629, 16
    %v1832 = vrot.slane %v1830, 7
    %v1833 = vrot.slane %v1832, 4
    %v1835 = vshrl.u32 %v1630, 16
    %v1837 = vrot.slane %v1835, 7
    %v1838 = vshll.u32 %v1630, 16
    %v1840 = vor.u32 %v1837, %v1838
    %v1841 = vsel %vm446, %v1833, %v1840
    %v1842 = vrot.slane %v1837, 4
    %v1844 = vshrl.u32 %v1631, 16
    %v1846 = vrot.slane %v1844, 7
    %v1847 = vshll.u32 %v1631, 16
    %v1849 = vor.u32 %v1846, %v1847
    %v1850 = vsel %vm446, %v1842, %v1849
    %v1852 = vshrl.u32 %v1632, 16
    %v1854 = vrot.slane %v1852, 7
    %v1855 = vrot.slane %v1854, 4
    %v1857 = vshrl.u32 %v1633, 16
    %v1859 = vrot.slane %v1857, 7
    %v1860 = vshll.u32 %v1633, 16
    %v1862 = vor.u32 %v1859, %v1860
    %v1863 = vsel %vm446, %v1855, %v1862
    %v1864 = vrot.slane %v1859, 4
    %v1866 = vshrl.u32 %v1634, 16
    %v1868 = vrot.slane %v1866, 7
    %v1869 = vshll.u32 %v1634, 16
    %v1871 = vor.u32 %v1868, %v1869
    %v1872 = vsel %vm446, %v1864, %v1871
    %v1874 = vshrl.u32 %v1635, 16
    %v1876 = vrot.slane %v1874, 7
    %v1877 = vrot.slane %v1876, 4
    %v1879 = vshrl.u32 %v1636, 16
    %v1881 = vrot.slane %v1879, 7
    %v1882 = vshll.u32 %v1636, 16
    %v1884 = vor.u32 %v1881, %v1882
    %v1885 = vsel %vm446, %v1877, %v1884
    %v1886 = vrot.slane %v1881, 4
    %v1888 = vshrl.u32 %v1637, 16
    %v1890 = vrot.slane %v1888, 7
    %v1891 = vshll.u32 %v1637, 16
    %v1893 = vor.u32 %v1890, %v1891
    %v1894 = vsel %vm446, %v1886, %v1893
    %v1896 = vshrl.u32 %v1638, 16
    %v1898 = vrot.slane %v1896, 7
    %v1899 = vrot.slane %v1898, 4
    %v1901 = vshrl.u32 %v1639, 16
    %v1903 = vrot.slane %v1901, 7
    %v1904 = vshll.u32 %v1639, 16
    %v1906 = vor.u32 %v1903, %v1904
    %v1907 = vsel %vm446, %v1899, %v1906
    %v1908 = vrot.slane %v1903, 4
    %v1910 = vshrl.u32 %v1640, 16
    %v1912 = vrot.slane %v1910, 7
    %v1913 = vshll.u32 %v1640, 16
    %v1915 = vor.u32 %v1912, %v1913
    %v1916 = vsel %vm446, %v1908, %v1915
    %v1918 = vshrl.u32 %v1641, 16
    %v1920 = vrot.slane %v1918, 7
    %v1921 = vrot.slane %v1920, 4
    %v1923 = vshrl.u32 %v1642, 16
    %v1925 = vrot.slane %v1923, 7
    %v1926 = vshll.u32 %v1642, 16
    %v1928 = vor.u32 %v1925, %v1926
    %v1929 = vsel %vm446, %v1921, %v1928
    %v1930 = vrot.slane %v1925, 4
    %v1932 = vshrl.u32 %v1643, 16
    %v1934 = vrot.slane %v1932, 7
    %v1935 = vshll.u32 %v1643, 16
    %v1937 = vor.u32 %v1934, %v1935
    %v1938 = vsel %vm446, %v1930, %v1937
    %v1940 = vshrl.u32 %v1644, 16
    %v1942 = vrot.slane %v1940, 7
    %v1943 = vrot.slane %v1942, 4
    %v1945 = vshrl.u32 %v1645, 16
    %v1947 = vrot.slane %v1945, 7
    %v1948 = vshll.u32 %v1645, 16
    %v1950 = vor.u32 %v1947, %v1948
    %v1951 = vsel %vm446, %v1943, %v1950
    %v1952 = vrot.slane %v1947, 4
    %v1954 = vshrl.u32 %v1646, 16
    %v1956 = vrot.slane %v1954, 7
    %v1957 = vshll.u32 %v1646, 16
    %v1959 = vor.u32 %v1956, %v1957
    %v1960 = vsel %vm446, %v1952, %v1959
    %v1962 = vshrl.u32 %v1647, 16
    %v1964 = vrot.slane %v1962, 7
    %v1965 = vrot.slane %v1964, 4
    %v1967 = vshrl.u32 %v1648, 16
    %v1969 = vrot.slane %v1967, 7
    %v1970 = vshll.u32 %v1648, 16
    %v1972 = vor.u32 %v1969, %v1970
    %v1973 = vsel %vm446, %v1965, %v1972
    %v1974 = vrot.slane %v1969, 4
    %v1976 = vshrl.u32 %v1649, 16
    %v1978 = vrot.slane %v1976, 7
    %v1979 = vshll.u32 %v1649, 16
    %v1981 = vor.u32 %v1978, %v1979
    %v1982 = vsel %vm446, %v1974, %v1981
    %v1984 = vshrl.u32 %v1650, 16
    %v1986 = vrot.slane %v1984, 7
    %v1987 = vrot.slane %v1986, 4
    %v1989 = vshrl.u32 %v1651, 16
    %v1991 = vrot.slane %v1989, 7
    %v1992 = vshll.u32 %v1651, 16
    %v1994 = vor.u32 %v1991, %v1992
    %v1995 = vsel %vm446, %v1987, %v1994
    %v1996 = vrot.slane %v1991, 4
    %v1998 = vshrl.u32 %v1652, 16
    %v2000 = vrot.slane %v1998, 7
    %v2001 = vshll.u32 %v1652, 16
    %v2003 = vor.u32 %v2000, %v2001
    %v2004 = vsel %vm446, %v1996, %v2003
    %v2005 = vunpack.c.l.b16 %v1665
    %v2006 = vunpack.c.l.b16 %v1674
    %v2007 = vunpack.c.l.b16 %v1687
    %v2008 = vunpack.c.l.b16 %v1696
    %v2009 = vunpack.c.l.b16 %v1709
    %v2010 = vunpack.c.l.b16 %v1718
    %v2011 = vunpack.c.l.b16 %v1731
    %v2012 = vunpack.c.l.b16 %v1740
    %v2013 = vunpack.c.l.b16 %v1753
    %v2014 = vunpack.c.l.b16 %v1762
    %v2015 = vunpack.c.l.b16 %v1775
    %v2016 = vunpack.c.l.b16 %v1784
    %v2017 = vunpack.c.l.b16 %v1797
    %v2018 = vunpack.c.l.b16 %v1806
    %v2019 = vunpack.c.l.b16 %v1819
    %v2020 = vunpack.c.l.b16 %v1828
    %v2021 = vunpack.c.l.b16 %v1841
    %v2022 = vunpack.c.l.b16 %v1850
    %v2023 = vunpack.c.l.b16 %v1863
    %v2024 = vunpack.c.l.b16 %v1872
    %v2025 = vunpack.c.l.b16 %v1885
    %v2026 = vunpack.c.l.b16 %v1894
    %v2027 = vunpack.c.l.b16 %v1907
    %v2028 = vunpack.c.l.b16 %v1916
    %v2029 = vunpack.c.l.b16 %v1929
    %v2030 = vunpack.c.l.b16 %v1938
    %v2031 = vunpack.c.l.b16 %v1951
    %v2032 = vunpack.c.l.b16 %v1960
    %v2033 = vunpack.c.l.b16 %v1973
    %v2034 = vunpack.c.l.b16 %v1982
    %v2035 = vunpack.c.l.b16 %v1995
    %v2036 = vunpack.c.l.b16 %v2004
    %v2037 = vpack.c.b16 %v2006, %v2005
    %v2038 = vpack.c.b16 %v2008, %v2007
    %v2039 = vpack.c.b16 %v2010, %v2009
    %v2040 = vpack.c.b16 %v2012, %v2011
    %v2041 = vpack.c.b16 %v2014, %v2013
    %v2042 = vpack.c.b16 %v2016, %v2015
    %v2043 = vpack.c.b16 %v2018, %v2017
    %v2044 = vpack.c.b16 %v2020, %v2019
    %v2045 = vpack.c.b16 %v2022, %v2021
    %v2046 = vpack.c.b16 %v2024, %v2023
    %v2047 = vpack.c.b16 %v2026, %v2025
    %v2048 = vpack.c.b16 %v2028, %v2027
    %v2049 = vpack.c.b16 %v2030, %v2029
    %v2050 = vpack.c.b16 %v2032, %v2031
    %v2051 = vpack.c.b16 %v2034, %v2033
    %v2052 = vpack.c.b16 %v2036, %v2035
    %2053 = vrot.lane.b32.xlu0 %v2037, 96
    %v2054 = vpop.permute.xlu0 %2053
    %2055 = vrot.lane.b32.xlu0 %v2038, 96
    %v2056 = vpop.permute.xlu0 %2055
    %2057 = vrot.lane.b32.xlu0 %v2039, 96
    %v2058 = vpop.permute.xlu0 %2057
    %2059 = vrot.lane.b32.xlu0 %v2040, 96
    %v2060 = vpop.permute.xlu0 %2059
    %2061 = vrot.lane.b32.xlu0 %v2041, 96
    %v2062 = vpop.permute.xlu0 %2061
    %2063 = vrot.lane.b32.xlu0 %v2042, 96
    %v2064 = vpop.permute.xlu0 %2063
    %2065 = vrot.lane.b32.xlu0 %v2043, 96
    %v2066 = vpop.permute.xlu0 %2065
    %2067 = vrot.lane.b32.xlu0 %v2044, 96
    %v2068 = vpop.permute.xlu0 %2067
    %2069 = vrot.lane.b32.xlu0 %v2045, 96
    %v2070 = vpop.permute.xlu0 %2069
    %2071 = vrot.lane.b32.xlu0 %v2046, 96
    %v2072 = vpop.permute.xlu0 %2071
    %2073 = vrot.lane.b32.xlu0 %v2047, 96
    %v2074 = vpop.permute.xlu0 %2073
    %2075 = vrot.lane.b32.xlu0 %v2048, 96
    %v2076 = vpop.permute.xlu0 %2075
    %2077 = vrot.lane.b32.xlu0 %v2049, 96
    %v2078 = vpop.permute.xlu0 %2077
    %2079 = vrot.lane.b32.xlu0 %v2050, 96
    %v2080 = vpop.permute.xlu0 %2079
    %2081 = vrot.lane.b32.xlu0 %v2051, 96
    %v2082 = vpop.permute.xlu0 %2081
    %2083 = vrot.lane.b32.xlu0 %v2052, 96
    %v2084 = vpop.permute.xlu0 %2083
    %vm2101 = vcmask 1048320
    %2102 = vst.msk [vmem:[#allocation3] sm:$0xff] %vm2101, %v2054
    %2103 = vst.msk [vmem:[#allocation3 + $0x18] sm:$0xff] %vm2101, %v2056
    %2104 = vst.msk [vmem:[#allocation3 + $0x30] sm:$0xff] %vm2101, %v2058
    %2105 = vst.msk [vmem:[#allocation3 + $0x48] sm:$0xff] %vm2101, %v2060
    %2106 = vst.msk [vmem:[#allocation3 + $0x60] sm:$0xff] %vm2101, %v2062
    %2107 = vst.msk [vmem:[#allocation3 + $0x78] sm:$0xff] %vm2101, %v2064
    %2108 = vst.msk [vmem:[#allocation3 + $0x90] sm:$0xff] %vm2101, %v2066
    %2109 = vst.msk [vmem:[#allocation3 + $0xa8] sm:$0xff] %vm2101, %v2068
    %2110 = vst.msk [vmem:[#allocation3 + $0xc0] sm:$0xff] %vm2101, %v2070
    %2111 = vst.msk [vmem:[#allocation3 + $0xd8] sm:$0xff] %vm2101, %v2072
    %2112 = vst.msk [vmem:[#allocation3 + $0xf0] sm:$0xff] %vm2101, %v2074
    %2113 = vst.msk [vmem:[#allocation3 + $0x108] sm:$0xff] %vm2101, %v2076
    %2114 = vst.msk [vmem:[#allocation3 + $0x120] sm:$0xff] %vm2101, %v2078
    %2115 = vst.msk [vmem:[#allocation3 + $0x138] sm:$0xff] %vm2101, %v2080
    %2116 = vst.msk [vmem:[#allocation3 + $0x150] sm:$0xff] %vm2101, %v2082
    %2117 = vst.msk [vmem:[#allocation3 + $0x168] sm:$0xff] %vm2101, %v2084
    %v2118 = vld [vmem:[%s68 + $0x8] sm:$0xf]
    %v2119 = vld [vmem:[%s68 + $0xc] sm:$0xf]
    %v2120 = vld [vmem:[%s68 + $0x1c] sm:$0xf]
    %v2121 = vld [vmem:[%s68 + $0x20] sm:$0xf]
    %v2122 = vld [vmem:[%s68 + $0x30] sm:$0xf]
    %v2123 = vld [vmem:[%s68 + $0x34] sm:$0xf]
    %v2124 = vld [vmem:[%s68 + $0x44] sm:$0xf]
    %v2125 = vld [vmem:[%s68 + $0x48] sm:$0xf]
    %v2126 = vld [vmem:[%s68 + $0x58] sm:$0xf]
    %v2127 = vld [vmem:[%s68 + $0x5c] sm:$0xf]
    %v2128 = vld [vmem:[%s68 + $0x6c] sm:$0xf]
    %v2129 = vld [vmem:[%s68 + $0x70] sm:$0xf]
    %v2130 = vld [vmem:[%s68 + $0x80] sm:$0xf]
    %v2131 = vld [vmem:[%s68 + $0x84] sm:$0xf]
    %v2132 = vld [vmem:[%s68 + $0x94] sm:$0xf]
    %v2133 = vld [vmem:[%s68 + $0x98] sm:$0xf]
    %v2134 = vld [vmem:[%s68 + $0xa8] sm:$0xf]
    %v2135 = vld [vmem:[%s68 + $0xac] sm:$0xf]
    %v2136 = vld [vmem:[%s68 + $0xbc] sm:$0xf]
    %v2137 = vld [vmem:[%s68 + $0xc0] sm:$0xf]
    %v2138 = vld [vmem:[%s68 + $0xd0] sm:$0xf]
    %v2139 = vld [vmem:[%s68 + $0xd4] sm:$0xf]
    %v2140 = vld [vmem:[%s68 + $0xe4] sm:$0xf]
    %v2141 = vld [vmem:[%s68 + $0xe8] sm:$0xf]
    %v2142 = vld [vmem:[%s68 + $0xf8] sm:$0xf]
    %v2143 = vld [vmem:[%s68 + $0xfc] sm:$0xf]
    %v2144 = vld [vmem:[%s68 + $0x10c] sm:$0xf]
    %v2145 = vld [vmem:[%s68 + $0x110] sm:$0xf]
    %v2146 = vld [vmem:[%s68 + $0x120] sm:$0xf]
    %v2147 = vld [vmem:[%s68 + $0x124] sm:$0xf]
    %v2148 = vld [vmem:[%s68 + $0x134] sm:$0xf]
    %v2149 = vld [vmem:[%s68 + $0x138] sm:$0xf]
    %v2182 = vunpack.c.l.b16 %v2118
    %v2183 = vunpack.c.l.b16 %v2119
    %v2184 = vunpack.c.l.b16 %v2120
    %v2185 = vunpack.c.l.b16 %v2121
    %v2186 = vunpack.c.l.b16 %v2122
    %v2187 = vunpack.c.l.b16 %v2123
    %v2188 = vunpack.c.l.b16 %v2124
    %v2189 = vunpack.c.l.b16 %v2125
    %v2190 = vunpack.c.l.b16 %v2126
    %v2191 = vunpack.c.l.b16 %v2127
    %v2192 = vunpack.c.l.b16 %v2128
    %v2193 = vunpack.c.l.b16 %v2129
    %v2194 = vunpack.c.l.b16 %v2130
    %v2195 = vunpack.c.l.b16 %v2131
    %v2196 = vunpack.c.l.b16 %v2132
    %v2197 = vunpack.c.l.b16 %v2133
    %v2198 = vunpack.c.l.b16 %v2134
    %v2199 = vunpack.c.l.b16 %v2135
    %v2200 = vunpack.c.l.b16 %v2136
    %v2201 = vunpack.c.l.b16 %v2137
    %v2202 = vunpack.c.l.b16 %v2138
    %v2203 = vunpack.c.l.b16 %v2139
    %v2204 = vunpack.c.l.b16 %v2140
    %v2205 = vunpack.c.l.b16 %v2141
    %v2206 = vunpack.c.l.b16 %v2142
    %v2207 = vunpack.c.l.b16 %v2143
    %v2208 = vunpack.c.l.b16 %v2144
    %v2209 = vunpack.c.l.b16 %v2145
    %v2210 = vunpack.c.l.b16 %v2146
    %v2211 = vunpack.c.l.b16 %v2147
    %v2212 = vunpack.c.l.b16 %v2148
    %v2213 = vunpack.c.l.b16 %v2149
    %v2214 = vpack.c.b16 %v2183, %v2182
    %v2215 = vpack.c.b16 %v2185, %v2184
    %v2216 = vpack.c.b16 %v2187, %v2186
    %v2217 = vpack.c.b16 %v2189, %v2188
    %v2218 = vpack.c.b16 %v2191, %v2190
    %v2219 = vpack.c.b16 %v2193, %v2192
    %v2220 = vpack.c.b16 %v2195, %v2194
    %v2221 = vpack.c.b16 %v2197, %v2196
    %v2222 = vpack.c.b16 %v2199, %v2198
    %v2223 = vpack.c.b16 %v2201, %v2200
    %v2224 = vpack.c.b16 %v2203, %v2202
    %v2225 = vpack.c.b16 %v2205, %v2204
    %v2226 = vpack.c.b16 %v2207, %v2206
    %v2227 = vpack.c.b16 %v2209, %v2208
    %v2228 = vpack.c.b16 %v2211, %v2210
    %v2229 = vpack.c.b16 %v2213, %v2212
    %2246 = vst.msk [vmem:[#allocation3 + $0x8] sm:$0xff] %vm863, %v2214
    %2247 = vst.msk [vmem:[#allocation3 + $0x20] sm:$0xff] %vm863, %v2215
    %2248 = vst.msk [vmem:[#allocation3 + $0x38] sm:$0xff] %vm863, %v2216
    %2249 = vst.msk [vmem:[#allocation3 + $0x50] sm:$0xff] %vm863, %v2217
    %2250 = vst.msk [vmem:[#allocation3 + $0x68] sm:$0xff] %vm863, %v2218
    %2251 = vst.msk [vmem:[#allocation3 + $0x80] sm:$0xff] %vm863, %v2219
    %2252 = vst.msk [vmem:[#allocation3 + $0x98] sm:$0xff] %vm863, %v2220
    %2253 = vst.msk [vmem:[#allocation3 + $0xb0] sm:$0xff] %vm863, %v2221
    %2254 = vst.msk [vmem:[#allocation3 + $0xc8] sm:$0xff] %vm863, %v2222
    %2255 = vst.msk [vmem:[#allocation3 + $0xe0] sm:$0xff] %vm863, %v2223
    %2256 = vst.msk [vmem:[#allocation3 + $0xf8] sm:$0xff] %vm863, %v2224
    %2257 = vst.msk [vmem:[#allocation3 + $0x110] sm:$0xff] %vm863, %v2225
    %2258 = vst.msk [vmem:[#allocation3 + $0x128] sm:$0xff] %vm863, %v2226
    %2259 = vst.msk [vmem:[#allocation3 + $0x140] sm:$0xff] %vm863, %v2227
    %2260 = vst.msk [vmem:[#allocation3 + $0x158] sm:$0xff] %vm863, %v2228
    %2261 = vst.msk [vmem:[#allocation3 + $0x170] sm:$0xff] %vm863, %v2229
    %v2262 = vld [vmem:[%s68 + $0x8] sm:$0xf]
    %v2263 = vld [vmem:[%s68 + $0xc] sm:$0xf]
    %v2264 = vld [vmem:[%s68 + $0x10] sm:$0x1]
    %v2265 = vld [vmem:[%s68 + $0x1c] sm:$0xf]
    %v2266 = vld [vmem:[%s68 + $0x20] sm:$0xf]
    %v2267 = vld [vmem:[%s68 + $0x24] sm:$0x1]
    %v2268 = vld [vmem:[%s68 + $0x30] sm:$0xf]
    %v2269 = vld [vmem:[%s68 + $0x34] sm:$0xf]
    %v2270 = vld [vmem:[%s68 + $0x38] sm:$0x1]
    %v2271 = vld [vmem:[%s68 + $0x44] sm:$0xf]
    %v2272 = vld [vmem:[%s68 + $0x48] sm:$0xf]
    %v2273 = vld [vmem:[%s68 + $0x4c] sm:$0x1]
    %v2274 = vld [vmem:[%s68 + $0x58] sm:$0xf]
    %v2275 = vld [vmem:[%s68 + $0x5c] sm:$0xf]
    %v2276 = vld [vmem:[%s68 + $0x60] sm:$0x1]
    %v2277 = vld [vmem:[%s68 + $0x6c] sm:$0xf]
    %v2278 = vld [vmem:[%s68 + $0x70] sm:$0xf]
    %v2279 = vld [vmem:[%s68 + $0x74] sm:$0x1]
    %v2280 = vld [vmem:[%s68 + $0x80] sm:$0xf]
    %v2281 = vld [vmem:[%s68 + $0x84] sm:$0xf]
    %v2282 = vld [vmem:[%s68 + $0x88] sm:$0x1]
    %v2283 = vld [vmem:[%s68 + $0x94] sm:$0xf]
    %v2284 = vld [vmem:[%s68 + $0x98] sm:$0xf]
    %v2285 = vld [vmem:[%s68 + $0x9c] sm:$0x1]
    %v2286 = vld [vmem:[%s68 + $0xa8] sm:$0xf]
    %v2287 = vld [vmem:[%s68 + $0xac] sm:$0xf]
    %v2288 = vld [vmem:[%s68 + $0xb0] sm:$0x1]
    %v2289 = vld [vmem:[%s68 + $0xbc] sm:$0xf]
    %v2290 = vld [vmem:[%s68 + $0xc0] sm:$0xf]
    %v2291 = vld [vmem:[%s68 + $0xc4] sm:$0x1]
    %v2292 = vld [vmem:[%s68 + $0xd0] sm:$0xf]
    %v2293 = vld [vmem:[%s68 + $0xd4] sm:$0xf]
    %v2294 = vld [vmem:[%s68 + $0xd8] sm:$0x1]
    %v2295 = vld [vmem:[%s68 + $0xe4] sm:$0xf]
    %v2296 = vld [vmem:[%s68 + $0xe8] sm:$0xf]
    %v2297 = vld [vmem:[%s68 + $0xec] sm:$0x1]
    %v2298 = vld [vmem:[%s68 + $0xf8] sm:$0xf]
    %v2299 = vld [vmem:[%s68 + $0xfc] sm:$0xf]
    %v2300 = vld [vmem:[%s68 + $0x100] sm:$0x1]
    %v2301 = vld [vmem:[%s68 + $0x10c] sm:$0xf]
    %v2302 = vld [vmem:[%s68 + $0x110] sm:$0xf]
    %v2303 = vld [vmem:[%s68 + $0x114] sm:$0x1]
    %v2304 = vld [vmem:[%s68 + $0x120] sm:$0xf]
    %v2305 = vld [vmem:[%s68 + $0x124] sm:$0xf]
    %v2306 = vld [vmem:[%s68 + $0x128] sm:$0x1]
    %v2307 = vld [vmem:[%s68 + $0x134] sm:$0xf]
    %v2308 = vld [vmem:[%s68 + $0x138] sm:$0xf]
    %v2309 = vld [vmem:[%s68 + $0x13c] sm:$0x1]
    %v2311 = vshrl.u32 %v2262, 16
    %v2313 = vrot.slane %v2311, 4
    %v2314 = vshll.u32 %v2262, 16
    %v2316 = vrot.slane %v2314, 5
    %v2317 = vor.u32 %v2313, %v2316
    %v2318 = vrot.slane %v2317, 4
    %v2320 = vshll.u32 %v2263, 16
    %v2322 = vrot.slane %v2320, 5
    %v2323 = vsel %vm1107, %v2318, %v2322
    %v2324 = vshrl.u32 %v2263, 16
    %v2326 = vrot.slane %v2324, 4
    %v2327 = vor.u32 %v2326, %v2322
    %v2328 = vrot.slane %v2327, 4
    %v2330 = vshll.u32 %v2264, 16
    %v2332 = vrot.slane %v2330, 5
    %v2333 = vsel %vm1107, %v2328, %v2332
    %v2335 = vshrl.u32 %v2265, 16
    %v2337 = vrot.slane %v2335, 4
    %v2338 = vshll.u32 %v2265, 16
    %v2340 = vrot.slane %v2338, 5
    %v2341 = vor.u32 %v2337, %v2340
    %v2342 = vrot.slane %v2341, 4
    %v2344 = vshll.u32 %v2266, 16
    %v2346 = vrot.slane %v2344, 5
    %v2347 = vsel %vm1107, %v2342, %v2346
    %v2348 = vshrl.u32 %v2266, 16
    %v2350 = vrot.slane %v2348, 4
    %v2351 = vor.u32 %v2350, %v2346
    %v2352 = vrot.slane %v2351, 4
    %v2354 = vshll.u32 %v2267, 16
    %v2356 = vrot.slane %v2354, 5
    %v2357 = vsel %vm1107, %v2352, %v2356
    %v2359 = vshrl.u32 %v2268, 16
    %v2361 = vrot.slane %v2359, 4
    %v2362 = vshll.u32 %v2268, 16
    %v2364 = vrot.slane %v2362, 5
    %v2365 = vor.u32 %v2361, %v2364
    %v2366 = vrot.slane %v2365, 4
    %v2368 = vshll.u32 %v2269, 16
    %v2370 = vrot.slane %v2368, 5
    %v2371 = vsel %vm1107, %v2366, %v2370
    %v2372 = vshrl.u32 %v2269, 16
    %v2374 = vrot.slane %v2372, 4
    %v2375 = vor.u32 %v2374, %v2370
    %v2376 = vrot.slane %v2375, 4
    %v2378 = vshll.u32 %v2270, 16
    %v2380 = vrot.slane %v2378, 5
    %v2381 = vsel %vm1107, %v2376, %v2380
    %v2383 = vshrl.u32 %v2271, 16
    %v2385 = vrot.slane %v2383, 4
    %v2386 = vshll.u32 %v2271, 16
    %v2388 = vrot.slane %v2386, 5
    %v2389 = vor.u32 %v2385, %v2388
    %v2390 = vrot.slane %v2389, 4
    %v2392 = vshll.u32 %v2272, 16
    %v2394 = vrot.slane %v2392, 5
    %v2395 = vsel %vm1107, %v2390, %v2394
    %v2396 = vshrl.u32 %v2272, 16
    %v2398 = vrot.slane %v2396, 4
    %v2399 = vor.u32 %v2398, %v2394
    %v2400 = vrot.slane %v2399, 4
    %v2402 = vshll.u32 %v2273, 16
    %v2404 = vrot.slane %v2402, 5
    %v2405 = vsel %vm1107, %v2400, %v2404
    %v2407 = vshrl.u32 %v2274, 16
    %v2409 = vrot.slane %v2407, 4
    %v2410 = vshll.u32 %v2274, 16
    %v2412 = vrot.slane %v2410, 5
    %v2413 = vor.u32 %v2409, %v2412
    %v2414 = vrot.slane %v2413, 4
    %v2416 = vshll.u32 %v2275, 16
    %v2418 = vrot.slane %v2416, 5
    %v2419 = vsel %vm1107, %v2414, %v2418
    %v2420 = vshrl.u32 %v2275, 16
    %v2422 = vrot.slane %v2420, 4
    %v2423 = vor.u32 %v2422, %v2418
    %v2424 = vrot.slane %v2423, 4
    %v2426 = vshll.u32 %v2276, 16
    %v2428 = vrot.slane %v2426, 5
    %v2429 = vsel %vm1107, %v2424, %v2428
    %v2431 = vshrl.u32 %v2277, 16
    %v2433 = vrot.slane %v2431, 4
    %v2434 = vshll.u32 %v2277, 16
    %v2436 = vrot.slane %v2434, 5
    %v2437 = vor.u32 %v2433, %v2436
    %v2438 = vrot.slane %v2437, 4
    %v2440 = vshll.u32 %v2278, 16
    %v2442 = vrot.slane %v2440, 5
    %v2443 = vsel %vm1107, %v2438, %v2442
    %v2444 = vshrl.u32 %v2278, 16
    %v2446 = vrot.slane %v2444, 4
    %v2447 = vor.u32 %v2446, %v2442
    %v2448 = vrot.slane %v2447, 4
    %v2450 = vshll.u32 %v2279, 16
    %v2452 = vrot.slane %v2450, 5
    %v2453 = vsel %vm1107, %v2448, %v2452
    %v2455 = vshrl.u32 %v2280, 16
    %v2457 = vrot.slane %v2455, 4
    %v2458 = vshll.u32 %v2280, 16
    %v2460 = vrot.slane %v2458, 5
    %v2461 = vor.u32 %v2457, %v2460
    %v2462 = vrot.slane %v2461, 4
    %v2464 = vshll.u32 %v2281, 16
    %v2466 = vrot.slane %v2464, 5
    %v2467 = vsel %vm1107, %v2462, %v2466
    %v2468 = vshrl.u32 %v2281, 16
    %v2470 = vrot.slane %v2468, 4
    %v2471 = vor.u32 %v2470, %v2466
    %v2472 = vrot.slane %v2471, 4
    %v2474 = vshll.u32 %v2282, 16
    %v2476 = vrot.slane %v2474, 5
    %v2477 = vsel %vm1107, %v2472, %v2476
    %v2479 = vshrl.u32 %v2283, 16
    %v2481 = vrot.slane %v2479, 4
    %v2482 = vshll.u32 %v2283, 16
    %v2484 = vrot.slane %v2482, 5
    %v2485 = vor.u32 %v2481, %v2484
    %v2486 = vrot.slane %v2485, 4
    %v2488 = vshll.u32 %v2284, 16
    %v2490 = vrot.slane %v2488, 5
    %v2491 = vsel %vm1107, %v2486, %v2490
    %v2492 = vshrl.u32 %v2284, 16
    %v2494 = vrot.slane %v2492, 4
    %v2495 = vor.u32 %v2494, %v2490
    %v2496 = vrot.slane %v2495, 4
    %v2498 = vshll.u32 %v2285, 16
    %v2500 = vrot.slane %v2498, 5
    %v2501 = vsel %vm1107, %v2496, %v2500
    %v2503 = vshrl.u32 %v2286, 16
    %v2505 = vrot.slane %v2503, 4
    %v2506 = vshll.u32 %v2286, 16
    %v2508 = vrot.slane %v2506, 5
    %v2509 = vor.u32 %v2505, %v2508
    %v2510 = vrot.slane %v2509, 4
    %v2512 = vshll.u32 %v2287, 16
    %v2514 = vrot.slane %v2512, 5
    %v2515 = vsel %vm1107, %v2510, %v2514
    %v2516 = vshrl.u32 %v2287, 16
    %v2518 = vrot.slane %v2516, 4
    %v2519 = vor.u32 %v2518, %v2514
    %v2520 = vrot.slane %v2519, 4
    %v2522 = vshll.u32 %v2288, 16
    %v2524 = vrot.slane %v2522, 5
    %v2525 = vsel %vm1107, %v2520, %v2524
    %v2527 = vshrl.u32 %v2289, 16
    %v2529 = vrot.slane %v2527, 4
    %v2530 = vshll.u32 %v2289, 16
    %v2532 = vrot.slane %v2530, 5
    %v2533 = vor.u32 %v2529, %v2532
    %v2534 = vrot.slane %v2533, 4
    %v2536 = vshll.u32 %v2290, 16
    %v2538 = vrot.slane %v2536, 5
    %v2539 = vsel %vm1107, %v2534, %v2538
    %v2540 = vshrl.u32 %v2290, 16
    %v2542 = vrot.slane %v2540, 4
    %v2543 = vor.u32 %v2542, %v2538
    %v2544 = vrot.slane %v2543, 4
    %v2546 = vshll.u32 %v2291, 16
    %v2548 = vrot.slane %v2546, 5
    %v2549 = vsel %vm1107, %v2544, %v2548
    %v2551 = vshrl.u32 %v2292, 16
    %v2553 = vrot.slane %v2551, 4
    %v2554 = vshll.u32 %v2292, 16
    %v2556 = vrot.slane %v2554, 5
    %v2557 = vor.u32 %v2553, %v2556
    %v2558 = vrot.slane %v2557, 4
    %v2560 = vshll.u32 %v2293, 16
    %v2562 = vrot.slane %v2560, 5
    %v2563 = vsel %vm1107, %v2558, %v2562
    %v2564 = vshrl.u32 %v2293, 16
    %v2566 = vrot.slane %v2564, 4
    %v2567 = vor.u32 %v2566, %v2562
    %v2568 = vrot.slane %v2567, 4
    %v2570 = vshll.u32 %v2294, 16
    %v2572 = vrot.slane %v2570, 5
    %v2573 = vsel %vm1107, %v2568, %v2572
    %v2575 = vshrl.u32 %v2295, 16
    %v2577 = vrot.slane %v2575, 4
    %v2578 = vshll.u32 %v2295, 16
    %v2580 = vrot.slane %v2578, 5
    %v2581 = vor.u32 %v2577, %v2580
    %v2582 = vrot.slane %v2581, 4
    %v2584 = vshll.u32 %v2296, 16
    %v2586 = vrot.slane %v2584, 5
    %v2587 = vsel %vm1107, %v2582, %v2586
    %v2588 = vshrl.u32 %v2296, 16
    %v2590 = vrot.slane %v2588, 4
    %v2591 = vor.u32 %v2590, %v2586
    %v2592 = vrot.slane %v2591, 4
    %v2594 = vshll.u32 %v2297, 16
    %v2596 = vrot.slane %v2594, 5
    %v2597 = vsel %vm1107, %v2592, %v2596
    %v2599 = vshrl.u32 %v2298, 16
    %v2601 = vrot.slane %v2599, 4
    %v2602 = vshll.u32 %v2298, 16
    %v2604 = vrot.slane %v2602, 5
    %v2605 = vor.u32 %v2601, %v2604
    %v2606 = vrot.slane %v2605, 4
    %v2608 = vshll.u32 %v2299, 16
    %v2610 = vrot.slane %v2608, 5
    %v2611 = vsel %vm1107, %v2606, %v2610
    %v2612 = vshrl.u32 %v2299, 16
    %v2614 = vrot.slane %v2612, 4
    %v2615 = vor.u32 %v2614, %v2610
    %v2616 = vrot.slane %v2615, 4
    %v2618 = vshll.u32 %v2300, 16
    %v2620 = vrot.slane %v2618, 5
    %v2621 = vsel %vm1107, %v2616, %v2620
    %v2623 = vshrl.u32 %v2301, 16
    %v2625 = vrot.slane %v2623, 4
    %v2626 = vshll.u32 %v2301, 16
    %v2628 = vrot.slane %v2626, 5
    %v2629 = vor.u32 %v2625, %v2628
    %v2630 = vrot.slane %v2629, 4
    %v2632 = vshll.u32 %v2302, 16
    %v2634 = vrot.slane %v2632, 5
    %v2635 = vsel %vm1107, %v2630, %v2634
    %v2636 = vshrl.u32 %v2302, 16
    %v2638 = vrot.slane %v2636, 4
    %v2639 = vor.u32 %v2638, %v2634
    %v2640 = vrot.slane %v2639, 4
    %v2642 = vshll.u32 %v2303, 16
    %v2644 = vrot.slane %v2642, 5
    %v2645 = vsel %vm1107, %v2640, %v2644
    %v2647 = vshrl.u32 %v2304, 16
    %v2649 = vrot.slane %v2647, 4
    %v2650 = vshll.u32 %v2304, 16
    %v2652 = vrot.slane %v2650, 5
    %v2653 = vor.u32 %v2649, %v2652
    %v2654 = vrot.slane %v2653, 4
    %v2656 = vshll.u32 %v2305, 16
    %v2658 = vrot.slane %v2656, 5
    %v2659 = vsel %vm1107, %v2654, %v2658
    %v2660 = vshrl.u32 %v2305, 16
    %v2662 = vrot.slane %v2660, 4
    %v2663 = vor.u32 %v2662, %v2658
    %v2664 = vrot.slane %v2663, 4
    %v2666 = vshll.u32 %v2306, 16
    %v2668 = vrot.slane %v2666, 5
    %v2669 = vsel %vm1107, %v2664, %v2668
    %v2671 = vshrl.u32 %v2307, 16
    %v2673 = vrot.slane %v2671, 4
    %v2674 = vshll.u32 %v2307, 16
    %v2676 = vrot.slane %v2674, 5
    %v2677 = vor.u32 %v2673, %v2676
    %v2678 = vrot.slane %v2677, 4
    %v2680 = vshll.u32 %v2308, 16
    %v2682 = vrot.slane %v2680, 5
    %v2683 = vsel %vm1107, %v2678, %v2682
    %v2684 = vshrl.u32 %v2308, 16
    %v2686 = vrot.slane %v2684, 4
    %v2687 = vor.u32 %v2686, %v2682
    %v2688 = vrot.slane %v2687, 4
    %v2690 = vshll.u32 %v2309, 16
    %v2692 = vrot.slane %v2690, 5
    %v2693 = vsel %vm1107, %v2688, %v2692
    %v2694 = vunpack.c.l.b16 %v2323
    %v2695 = vunpack.c.l.b16 %v2333
    %v2696 = vunpack.c.l.b16 %v2347
    %v2697 = vunpack.c.l.b16 %v2357
    %v2698 = vunpack.c.l.b16 %v2371
    %v2699 = vunpack.c.l.b16 %v2381
    %v2700 = vunpack.c.l.b16 %v2395
    %v2701 = vunpack.c.l.b16 %v2405
    %v2702 = vunpack.c.l.b16 %v2419
    %v2703 = vunpack.c.l.b16 %v2429
    %v2704 = vunpack.c.l.b16 %v2443
    %v2705 = vunpack.c.l.b16 %v2453
    %v2706 = vunpack.c.l.b16 %v2467
    %v2707 = vunpack.c.l.b16 %v2477
    %v2708 = vunpack.c.l.b16 %v2491
    %v2709 = vunpack.c.l.b16 %v2501
    %v2710 = vunpack.c.l.b16 %v2515
    %v2711 = vunpack.c.l.b16 %v2525
    %v2712 = vunpack.c.l.b16 %v2539
    %v2713 = vunpack.c.l.b16 %v2549
    %v2714 = vunpack.c.l.b16 %v2563
    %v2715 = vunpack.c.l.b16 %v2573
    %v2716 = vunpack.c.l.b16 %v2587
    %v2717 = vunpack.c.l.b16 %v2597
    %v2718 = vunpack.c.l.b16 %v2611
    %v2719 = vunpack.c.l.b16 %v2621
    %v2720 = vunpack.c.l.b16 %v2635
    %v2721 = vunpack.c.l.b16 %v2645
    %v2722 = vunpack.c.l.b16 %v2659
    %v2723 = vunpack.c.l.b16 %v2669
    %v2724 = vunpack.c.l.b16 %v2683
    %v2725 = vunpack.c.l.b16 %v2693
    %v2726 = vpack.c.b16 %v2695, %v2694
    %v2727 = vpack.c.b16 %v2697, %v2696
    %v2728 = vpack.c.b16 %v2699, %v2698
    %v2729 = vpack.c.b16 %v2701, %v2700
    %v2730 = vpack.c.b16 %v2703, %v2702
    %v2731 = vpack.c.b16 %v2705, %v2704
    %v2732 = vpack.c.b16 %v2707, %v2706
    %v2733 = vpack.c.b16 %v2709, %v2708
    %v2734 = vpack.c.b16 %v2711, %v2710
    %v2735 = vpack.c.b16 %v2713, %v2712
    %v2736 = vpack.c.b16 %v2715, %v2714
    %v2737 = vpack.c.b16 %v2717, %v2716
    %v2738 = vpack.c.b16 %v2719, %v2718
    %v2739 = vpack.c.b16 %v2721, %v2720
    %v2740 = vpack.c.b16 %v2723, %v2722
    %v2741 = vpack.c.b16 %v2725, %v2724
    %2742 = vrot.lane.b32.xlu0 %v2726, 32
    %v2743 = vpop.permute.xlu0 %2742
    %2744 = vrot.lane.b32.xlu0 %v2727, 32
    %v2745 = vpop.permute.xlu0 %2744
    %2746 = vrot.lane.b32.xlu0 %v2728, 32
    %v2747 = vpop.permute.xlu0 %2746
    %2748 = vrot.lane.b32.xlu0 %v2729, 32
    %v2749 = vpop.permute.xlu0 %2748
    %2750 = vrot.lane.b32.xlu0 %v2730, 32
    %v2751 = vpop.permute.xlu0 %2750
    %2752 = vrot.lane.b32.xlu0 %v2731, 32
    %v2753 = vpop.permute.xlu0 %2752
    %2754 = vrot.lane.b32.xlu0 %v2732, 32
    %v2755 = vpop.permute.xlu0 %2754
    %2756 = vrot.lane.b32.xlu0 %v2733, 32
    %v2757 = vpop.permute.xlu0 %2756
    %2758 = vrot.lane.b32.xlu0 %v2734, 32
    %v2759 = vpop.permute.xlu0 %2758
    %2760 = vrot.lane.b32.xlu0 %v2735, 32
    %v2761 = vpop.permute.xlu0 %2760
    %2762 = vrot.lane.b32.xlu0 %v2736, 32
    %v2763 = vpop.permute.xlu0 %2762
    %2764 = vrot.lane.b32.xlu0 %v2737, 32
    %v2765 = vpop.permute.xlu0 %2764
    %2766 = vrot.lane.b32.xlu0 %v2738, 32
    %v2767 = vpop.permute.xlu0 %2766
    %2768 = vrot.lane.b32.xlu0 %v2739, 32
    %v2769 = vpop.permute.xlu0 %2768
    %2770 = vrot.lane.b32.xlu0 %v2740, 32
    %v2771 = vpop.permute.xlu0 %2770
    %2772 = vrot.lane.b32.xlu0 %v2741, 32
    %v2773 = vpop.permute.xlu0 %2772
    %2790 = vst.msk [vmem:[#allocation3 + $0x8] sm:$0xff] %vm1040, %v2743
    %2791 = vst.msk [vmem:[#allocation3 + $0x20] sm:$0xff] %vm1040, %v2745
    %2792 = vst.msk [vmem:[#allocation3 + $0x38] sm:$0xff] %vm1040, %v2747
    %2793 = vst.msk [vmem:[#allocation3 + $0x50] sm:$0xff] %vm1040, %v2749
    %2794 = vst.msk [vmem:[#allocation3 + $0x68] sm:$0xff] %vm1040, %v2751
    %2795 = vst.msk [vmem:[#allocation3 + $0x80] sm:$0xff] %vm1040, %v2753
    %2796 = vst.msk [vmem:[#allocation3 + $0x98] sm:$0xff] %vm1040, %v2755
    %2797 = vst.msk [vmem:[#allocation3 + $0xb0] sm:$0xff] %vm1040, %v2757
    %2798 = vst.msk [vmem:[#allocation3 + $0xc8] sm:$0xff] %vm1040, %v2759
    %2799 = vst.msk [vmem:[#allocation3 + $0xe0] sm:$0xff] %vm1040, %v2761
    %2800 = vst.msk [vmem:[#allocation3 + $0xf8] sm:$0xff] %vm1040, %v2763
    %2801 = vst.msk [vmem:[#allocation3 + $0x110] sm:$0xff] %vm1040, %v2765
    %2802 = vst.msk [vmem:[#allocation3 + $0x128] sm:$0xff] %vm1040, %v2767
    %2803 = vst.msk [vmem:[#allocation3 + $0x140] sm:$0xff] %vm1040, %v2769
    %2804 = vst.msk [vmem:[#allocation3 + $0x158] sm:$0xff] %vm1040, %v2771
    %2805 = vst.msk [vmem:[#allocation3 + $0x170] sm:$0xff] %vm1040, %v2773
    %s2806 = scalar_lea.vmem [#allocation2], 40
    %v2807 = vld [vmem:[%s2806 + $0x4] sm:$0x8]
    %v2808 = vld [vmem:[%s2806 + $0x8] sm:$0xf]
    %v2809 = vld [vmem:[%s2806 + $0xc] sm:$0xf]
    %v2810 = vld [vmem:[%s2806 + $0x18] sm:$0x8]
    %v2811 = vld [vmem:[%s2806 + $0x1c] sm:$0xf]
    %v2812 = vld [vmem:[%s2806 + $0x20] sm:$0xf]
    %v2813 = vld [vmem:[%s2806 + $0x2c] sm:$0x8]
    %v2814 = vld [vmem:[%s2806 + $0x30] sm:$0xf]
    %v2815 = vld [vmem:[%s2806 + $0x34] sm:$0xf]
    %v2816 = vld [vmem:[%s2806 + $0x40] sm:$0x8]
    %v2817 = vld [vmem:[%s2806 + $0x44] sm:$0xf]
    %v2818 = vld [vmem:[%s2806 + $0x48] sm:$0xf]
    %v2819 = vld [vmem:[%s2806 + $0x54] sm:$0x8]
    %v2820 = vld [vmem:[%s2806 + $0x58] sm:$0xf]
    %v2821 = vld [vmem:[%s2806 + $0x5c] sm:$0xf]
    %v2822 = vld [vmem:[%s2806 + $0x68] sm:$0x8]
    %v2823 = vld [vmem:[%s2806 + $0x6c] sm:$0xf]
    %v2824 = vld [vmem:[%s2806 + $0x70] sm:$0xf]
    %v2825 = vld [vmem:[%s2806 + $0x7c] sm:$0x8]
    %v2826 = vld [vmem:[%s2806 + $0x80] sm:$0xf]
    %v2827 = vld [vmem:[%s2806 + $0x84] sm:$0xf]
    %v2828 = vld [vmem:[%s2806 + $0x90] sm:$0x8]
    %v2829 = vld [vmem:[%s2806 + $0x94] sm:$0xf]
    %v2830 = vld [vmem:[%s2806 + $0x98] sm:$0xf]
    %v2831 = vld [vmem:[%s2806 + $0xa4] sm:$0x8]
    %v2832 = vld [vmem:[%s2806 + $0xa8] sm:$0xf]
    %v2833 = vld [vmem:[%s2806 + $0xac] sm:$0xf]
    %v2834 = vld [vmem:[%s2806 + $0xb8] sm:$0x8]
    %v2835 = vld [vmem:[%s2806 + $0xbc] sm:$0xf]
    %v2836 = vld [vmem:[%s2806 + $0xc0] sm:$0xf]
    %v2837 = vld [vmem:[%s2806 + $0xcc] sm:$0x8]
    %v2838 = vld [vmem:[%s2806 + $0xd0] sm:$0xf]
    %v2839 = vld [vmem:[%s2806 + $0xd4] sm:$0xf]
    %v2840 = vld [vmem:[%s2806 + $0xe0] sm:$0x8]
    %v2841 = vld [vmem:[%s2806 + $0xe4] sm:$0xf]
    %v2842 = vld [vmem:[%s2806 + $0xe8] sm:$0xf]
    %v2843 = vld [vmem:[%s2806 + $0xf4] sm:$0x8]
    %v2844 = vld [vmem:[%s2806 + $0xf8] sm:$0xf]
    %v2845 = vld [vmem:[%s2806 + $0xfc] sm:$0xf]
    %v2846 = vld [vmem:[%s2806 + $0x108] sm:$0x8]
    %v2847 = vld [vmem:[%s2806 + $0x10c] sm:$0xf]
    %v2848 = vld [vmem:[%s2806 + $0x110] sm:$0xf]
    %v2849 = vld [vmem:[%s2806 + $0x11c] sm:$0x8]
    %v2850 = vld [vmem:[%s2806 + $0x120] sm:$0xf]
    %v2851 = vld [vmem:[%s2806 + $0x124] sm:$0xf]
    %v2852 = vld [vmem:[%s2806 + $0x130] sm:$0x8]
    %v2853 = vld [vmem:[%s2806 + $0x134] sm:$0xf]
    %v2854 = vld [vmem:[%s2806 + $0x138] sm:$0xf]
    %v2856 = vshrl.u32 %v2807, 16
    %v2858 = vrot.slane %v2856, 7
    %v2859 = vrot.slane %v2858, 4
    %v2861 = vshrl.u32 %v2808, 16
    %v2863 = vrot.slane %v2861, 7
    %v2864 = vshll.u32 %v2808, 16
    %v2866 = vor.u32 %v2863, %v2864
    %v2867 = vsel %vm446, %v2859, %v2866
    %v2868 = vrot.slane %v2863, 4
    %v2870 = vshrl.u32 %v2809, 16
    %v2872 = vrot.slane %v2870, 7
    %v2873 = vshll.u32 %v2809, 16
    %v2875 = vor.u32 %v2872, %v2873
    %v2876 = vsel %vm446, %v2868, %v2875
    %v2878 = vshrl.u32 %v2810, 16
    %v2880 = vrot.slane %v2878, 7
    %v2881 = vrot.slane %v2880, 4
    %v2883 = vshrl.u32 %v2811, 16
    %v2885 = vrot.slane %v2883, 7
    %v2886 = vshll.u32 %v2811, 16
    %v2888 = vor.u32 %v2885, %v2886
    %v2889 = vsel %vm446, %v2881, %v2888
    %v2890 = vrot.slane %v2885, 4
    %v2892 = vshrl.u32 %v2812, 16
    %v2894 = vrot.slane %v2892, 7
    %v2895 = vshll.u32 %v2812, 16
    %v2897 = vor.u32 %v2894, %v2895
    %v2898 = vsel %vm446, %v2890, %v2897
    %v2900 = vshrl.u32 %v2813, 16
    %v2902 = vrot.slane %v2900, 7
    %v2903 = vrot.slane %v2902, 4
    %v2905 = vshrl.u32 %v2814, 16
    %v2907 = vrot.slane %v2905, 7
    %v2908 = vshll.u32 %v2814, 16
    %v2910 = vor.u32 %v2907, %v2908
    %v2911 = vsel %vm446, %v2903, %v2910
    %v2912 = vrot.slane %v2907, 4
    %v2914 = vshrl.u32 %v2815, 16
    %v2916 = vrot.slane %v2914, 7
    %v2917 = vshll.u32 %v2815, 16
    %v2919 = vor.u32 %v2916, %v2917
    %v2920 = vsel %vm446, %v2912, %v2919
    %v2922 = vshrl.u32 %v2816, 16
    %v2924 = vrot.slane %v2922, 7
    %v2925 = vrot.slane %v2924, 4
    %v2927 = vshrl.u32 %v2817, 16
    %v2929 = vrot.slane %v2927, 7
    %v2930 = vshll.u32 %v2817, 16
    %v2932 = vor.u32 %v2929, %v2930
    %v2933 = vsel %vm446, %v2925, %v2932
    %v2934 = vrot.slane %v2929, 4
    %v2936 = vshrl.u32 %v2818, 16
    %v2938 = vrot.slane %v2936, 7
    %v2939 = vshll.u32 %v2818, 16
    %v2941 = vor.u32 %v2938, %v2939
    %v2942 = vsel %vm446, %v2934, %v2941
    %v2944 = vshrl.u32 %v2819, 16
    %v2946 = vrot.slane %v2944, 7
    %v2947 = vrot.slane %v2946, 4
    %v2949 = vshrl.u32 %v2820, 16
    %v2951 = vrot.slane %v2949, 7
    %v2952 = vshll.u32 %v2820, 16
    %v2954 = vor.u32 %v2951, %v2952
    %v2955 = vsel %vm446, %v2947, %v2954
    %v2956 = vrot.slane %v2951, 4
    %v2958 = vshrl.u32 %v2821, 16
    %v2960 = vrot.slane %v2958, 7
    %v2961 = vshll.u32 %v2821, 16
    %v2963 = vor.u32 %v2960, %v2961
    %v2964 = vsel %vm446, %v2956, %v2963
    %v2966 = vshrl.u32 %v2822, 16
    %v2968 = vrot.slane %v2966, 7
    %v2969 = vrot.slane %v2968, 4
    %v2971 = vshrl.u32 %v2823, 16
    %v2973 = vrot.slane %v2971, 7
    %v2974 = vshll.u32 %v2823, 16
    %v2976 = vor.u32 %v2973, %v2974
    %v2977 = vsel %vm446, %v2969, %v2976
    %v2978 = vrot.slane %v2973, 4
    %v2980 = vshrl.u32 %v2824, 16
    %v2982 = vrot.slane %v2980, 7
    %v2983 = vshll.u32 %v2824, 16
    %v2985 = vor.u32 %v2982, %v2983
    %v2986 = vsel %vm446, %v2978, %v2985
    %v2988 = vshrl.u32 %v2825, 16
    %v2990 = vrot.slane %v2988, 7
    %v2991 = vrot.slane %v2990, 4
    %v2993 = vshrl.u32 %v2826, 16
    %v2995 = vrot.slane %v2993, 7
    %v2996 = vshll.u32 %v2826, 16
    %v2998 = vor.u32 %v2995, %v2996
    %v2999 = vsel %vm446, %v2991, %v2998
    %v3000 = vrot.slane %v2995, 4
    %v3002 = vshrl.u32 %v2827, 16
    %v3004 = vrot.slane %v3002, 7
    %v3005 = vshll.u32 %v2827, 16
    %v3007 = vor.u32 %v3004, %v3005
    %v3008 = vsel %vm446, %v3000, %v3007
    %v3010 = vshrl.u32 %v2828, 16
    %v3012 = vrot.slane %v3010, 7
    %v3013 = vrot.slane %v3012, 4
    %v3015 = vshrl.u32 %v2829, 16
    %v3017 = vrot.slane %v3015, 7
    %v3018 = vshll.u32 %v2829, 16
    %v3020 = vor.u32 %v3017, %v3018
    %v3021 = vsel %vm446, %v3013, %v3020
    %v3022 = vrot.slane %v3017, 4
    %v3024 = vshrl.u32 %v2830, 16
    %v3026 = vrot.slane %v3024, 7
    %v3027 = vshll.u32 %v2830, 16
    %v3029 = vor.u32 %v3026, %v3027
    %v3030 = vsel %vm446, %v3022, %v3029
    %v3032 = vshrl.u32 %v2831, 16
    %v3034 = vrot.slane %v3032, 7
    %v3035 = vrot.slane %v3034, 4
    %v3037 = vshrl.u32 %v2832, 16
    %v3039 = vrot.slane %v3037, 7
    %v3040 = vshll.u32 %v2832, 16
    %v3042 = vor.u32 %v3039, %v3040
    %v3043 = vsel %vm446, %v3035, %v3042
    %v3044 = vrot.slane %v3039, 4
    %v3046 = vshrl.u32 %v2833, 16
    %v3048 = vrot.slane %v3046, 7
    %v3049 = vshll.u32 %v2833, 16
    %v3051 = vor.u32 %v3048, %v3049
    %v3052 = vsel %vm446, %v3044, %v3051
    %v3054 = vshrl.u32 %v2834, 16
    %v3056 = vrot.slane %v3054, 7
    %v3057 = vrot.slane %v3056, 4
    %v3059 = vshrl.u32 %v2835, 16
    %v3061 = vrot.slane %v3059, 7
    %v3062 = vshll.u32 %v2835, 16
    %v3064 = vor.u32 %v3061, %v3062
    %v3065 = vsel %vm446, %v3057, %v3064
    %v3066 = vrot.slane %v3061, 4
    %v3068 = vshrl.u32 %v2836, 16
    %v3070 = vrot.slane %v3068, 7
    %v3071 = vshll.u32 %v2836, 16
    %v3073 = vor.u32 %v3070, %v3071
    %v3074 = vsel %vm446, %v3066, %v3073
    %v3076 = vshrl.u32 %v2837, 16
    %v3078 = vrot.slane %v3076, 7
    %v3079 = vrot.slane %v3078, 4
    %v3081 = vshrl.u32 %v2838, 16
    %v3083 = vrot.slane %v3081, 7
    %v3084 = vshll.u32 %v2838, 16
    %v3086 = vor.u32 %v3083, %v3084
    %v3087 = vsel %vm446, %v3079, %v3086
    %v3088 = vrot.slane %v3083, 4
    %v3090 = vshrl.u32 %v2839, 16
    %v3092 = vrot.slane %v3090, 7
    %v3093 = vshll.u32 %v2839, 16
    %v3095 = vor.u32 %v3092, %v3093
    %v3096 = vsel %vm446, %v3088, %v3095
    %v3098 = vshrl.u32 %v2840, 16
    %v3100 = vrot.slane %v3098, 7
    %v3101 = vrot.slane %v3100, 4
    %v3103 = vshrl.u32 %v2841, 16
    %v3105 = vrot.slane %v3103, 7
    %v3106 = vshll.u32 %v2841, 16
    %v3108 = vor.u32 %v3105, %v3106
    %v3109 = vsel %vm446, %v3101, %v3108
    %v3110 = vrot.slane %v3105, 4
    %v3112 = vshrl.u32 %v2842, 16
    %v3114 = vrot.slane %v3112, 7
    %v3115 = vshll.u32 %v2842, 16
    %v3117 = vor.u32 %v3114, %v3115
    %v3118 = vsel %vm446, %v3110, %v3117
    %v3120 = vshrl.u32 %v2843, 16
    %v3122 = vrot.slane %v3120, 7
    %v3123 = vrot.slane %v3122, 4
    %v3125 = vshrl.u32 %v2844, 16
    %v3127 = vrot.slane %v3125, 7
    %v3128 = vshll.u32 %v2844, 16
    %v3130 = vor.u32 %v3127, %v3128
    %v3131 = vsel %vm446, %v3123, %v3130
    %v3132 = vrot.slane %v3127, 4
    %v3134 = vshrl.u32 %v2845, 16
    %v3136 = vrot.slane %v3134, 7
    %v3137 = vshll.u32 %v2845, 16
    %v3139 = vor.u32 %v3136, %v3137
    %v3140 = vsel %vm446, %v3132, %v3139
    %v3142 = vshrl.u32 %v2846, 16
    %v3144 = vrot.slane %v3142, 7
    %v3145 = vrot.slane %v3144, 4
    %v3147 = vshrl.u32 %v2847, 16
    %v3149 = vrot.slane %v3147, 7
    %v3150 = vshll.u32 %v2847, 16
    %v3152 = vor.u32 %v3149, %v3150
    %v3153 = vsel %vm446, %v3145, %v3152
    %v3154 = vrot.slane %v3149, 4
    %v3156 = vshrl.u32 %v2848, 16
    %v3158 = vrot.slane %v3156, 7
    %v3159 = vshll.u32 %v2848, 16
    %v3161 = vor.u32 %v3158, %v3159
    %v3162 = vsel %vm446, %v3154, %v3161
    %v3164 = vshrl.u32 %v2849, 16
    %v3166 = vrot.slane %v3164, 7
    %v3167 = vrot.slane %v3166, 4
    %v3169 = vshrl.u32 %v2850, 16
    %v3171 = vrot.slane %v3169, 7
    %v3172 = vshll.u32 %v2850, 16
    %v3174 = vor.u32 %v3171, %v3172
    %v3175 = vsel %vm446, %v3167, %v3174
    %v3176 = vrot.slane %v3171, 4
    %v3178 = vshrl.u32 %v2851, 16
    %v3180 = vrot.slane %v3178, 7
    %v3181 = vshll.u32 %v2851, 16
    %v3183 = vor.u32 %v3180, %v3181
    %v3184 = vsel %vm446, %v3176, %v3183
    %v3186 = vshrl.u32 %v2852, 16
    %v3188 = vrot.slane %v3186, 7
    %v3189 = vrot.slane %v3188, 4
    %v3191 = vshrl.u32 %v2853, 16
    %v3193 = vrot.slane %v3191, 7
    %v3194 = vshll.u32 %v2853, 16
    %v3196 = vor.u32 %v3193, %v3194
    %v3197 = vsel %vm446, %v3189, %v3196
    %v3198 = vrot.slane %v3193, 4
    %v3200 = vshrl.u32 %v2854, 16
    %v3202 = vrot.slane %v3200, 7
    %v3203 = vshll.u32 %v2854, 16
    %v3205 = vor.u32 %v3202, %v3203
    %v3206 = vsel %vm446, %v3198, %v3205
    %v3207 = vunpack.c.l.b16 %v2867
    %v3208 = vunpack.c.l.b16 %v2876
    %v3209 = vunpack.c.l.b16 %v2889
    %v3210 = vunpack.c.l.b16 %v2898
    %v3211 = vunpack.c.l.b16 %v2911
    %v3212 = vunpack.c.l.b16 %v2920
    %v3213 = vunpack.c.l.b16 %v2933
    %v3214 = vunpack.c.l.b16 %v2942
    %v3215 = vunpack.c.l.b16 %v2955
    %v3216 = vunpack.c.l.b16 %v2964
    %v3217 = vunpack.c.l.b16 %v2977
    %v3218 = vunpack.c.l.b16 %v2986
    %v3219 = vunpack.c.l.b16 %v2999
    %v3220 = vunpack.c.l.b16 %v3008
    %v3221 = vunpack.c.l.b16 %v3021
    %v3222 = vunpack.c.l.b16 %v3030
    %v3223 = vunpack.c.l.b16 %v3043
    %v3224 = vunpack.c.l.b16 %v3052
    %v3225 = vunpack.c.l.b16 %v3065
    %v3226 = vunpack.c.l.b16 %v3074
    %v3227 = vunpack.c.l.b16 %v3087
    %v3228 = vunpack.c.l.b16 %v3096
    %v3229 = vunpack.c.l.b16 %v3109
    %v3230 = vunpack.c.l.b16 %v3118
    %v3231 = vunpack.c.l.b16 %v3131
    %v3232 = vunpack.c.l.b16 %v3140
    %v3233 = vunpack.c.l.b16 %v3153
    %v3234 = vunpack.c.l.b16 %v3162
    %v3235 = vunpack.c.l.b16 %v3175
    %v3236 = vunpack.c.l.b16 %v3184
    %v3237 = vunpack.c.l.b16 %v3197
    %v3238 = vunpack.c.l.b16 %v3206
    %v3239 = vpack.c.b16 %v3208, %v3207
    %v3240 = vpack.c.b16 %v3210, %v3209
    %v3241 = vpack.c.b16 %v3212, %v3211
    %v3242 = vpack.c.b16 %v3214, %v3213
    %v3243 = vpack.c.b16 %v3216, %v3215
    %v3244 = vpack.c.b16 %v3218, %v3217
    %v3245 = vpack.c.b16 %v3220, %v3219
    %v3246 = vpack.c.b16 %v3222, %v3221
    %v3247 = vpack.c.b16 %v3224, %v3223
    %v3248 = vpack.c.b16 %v3226, %v3225
    %v3249 = vpack.c.b16 %v3228, %v3227
    %v3250 = vpack.c.b16 %v3230, %v3229
    %v3251 = vpack.c.b16 %v3232, %v3231
    %v3252 = vpack.c.b16 %v3234, %v3233
    %v3253 = vpack.c.b16 %v3236, %v3235
    %v3254 = vpack.c.b16 %v3238, %v3237
    %3255 = vrot.lane.b32.xlu0 %v3239, 64
    %v3256 = vpop.permute.xlu0 %3255
    %3257 = vrot.lane.b32.xlu0 %v3240, 64
    %v3258 = vpop.permute.xlu0 %3257
    %3259 = vrot.lane.b32.xlu0 %v3241, 64
    %v3260 = vpop.permute.xlu0 %3259
    %3261 = vrot.lane.b32.xlu0 %v3242, 64
    %v3262 = vpop.permute.xlu0 %3261
    %3263 = vrot.lane.b32.xlu0 %v3243, 64
    %v3264 = vpop.permute.xlu0 %3263
    %3265 = vrot.lane.b32.xlu0 %v3244, 64
    %v3266 = vpop.permute.xlu0 %3265
    %3267 = vrot.lane.b32.xlu0 %v3245, 64
    %v3268 = vpop.permute.xlu0 %3267
    %3269 = vrot.lane.b32.xlu0 %v3246, 64
    %v3270 = vpop.permute.xlu0 %3269
    %3271 = vrot.lane.b32.xlu0 %v3247, 64
    %v3272 = vpop.permute.xlu0 %3271
    %3273 = vrot.lane.b32.xlu0 %v3248, 64
    %v3274 = vpop.permute.xlu0 %3273
    %3275 = vrot.lane.b32.xlu0 %v3249, 64
    %v3276 = vpop.permute.xlu0 %3275
    %3277 = vrot.lane.b32.xlu0 %v3250, 64
    %v3278 = vpop.permute.xlu0 %3277
    %3279 = vrot.lane.b32.xlu0 %v3251, 64
    %v3280 = vpop.permute.xlu0 %3279
    %3281 = vrot.lane.b32.xlu0 %v3252, 64
    %v3282 = vpop.permute.xlu0 %3281
    %3283 = vrot.lane.b32.xlu0 %v3253, 64
    %v3284 = vpop.permute.xlu0 %3283
    %3285 = vrot.lane.b32.xlu0 %v3254, 64
    %v3286 = vpop.permute.xlu0 %3285
    %3303 = vst.msk [vmem:[#allocation3 + $0x8] sm:$0xff] %vm1588, %v3256
    %3304 = vst.msk [vmem:[#allocation3 + $0x20] sm:$0xff] %vm1588, %v3258
    %3305 = vst.msk [vmem:[#allocation3 + $0x38] sm:$0xff] %vm1588, %v3260
    %3306 = vst.msk [vmem:[#allocation3 + $0x50] sm:$0xff] %vm1588, %v3262
    %3307 = vst.msk [vmem:[#allocation3 + $0x68] sm:$0xff] %vm1588, %v3264
    %3308 = vst.msk [vmem:[#allocation3 + $0x80] sm:$0xff] %vm1588, %v3266
    %3309 = vst.msk [vmem:[#allocation3 + $0x98] sm:$0xff] %vm1588, %v3268
    %3310 = vst.msk [vmem:[#allocation3 + $0xb0] sm:$0xff] %vm1588, %v3270
    %3311 = vst.msk [vmem:[#allocation3 + $0xc8] sm:$0xff] %vm1588, %v3272
    %3312 = vst.msk [vmem:[#allocation3 + $0xe0] sm:$0xff] %vm1588, %v3274
    %3313 = vst.msk [vmem:[#allocation3 + $0xf8] sm:$0xff] %vm1588, %v3276
    %3314 = vst.msk [vmem:[#allocation3 + $0x110] sm:$0xff] %vm1588, %v3278
    %3315 = vst.msk [vmem:[#allocation3 + $0x128] sm:$0xff] %vm1588, %v3280
    %3316 = vst.msk [vmem:[#allocation3 + $0x140] sm:$0xff] %vm1588, %v3282
    %3317 = vst.msk [vmem:[#allocation3 + $0x158] sm:$0xff] %vm1588, %v3284
    %3318 = vst.msk [vmem:[#allocation3 + $0x170] sm:$0xff] %vm1588, %v3286
    %v3319 = vld [vmem:[%s2806 + $0x8] sm:$0xf]
    %v3320 = vld [vmem:[%s2806 + $0xc] sm:$0xf]
    %v3321 = vld [vmem:[%s2806 + $0x1c] sm:$0xf]
    %v3322 = vld [vmem:[%s2806 + $0x20] sm:$0xf]
    %v3323 = vld [vmem:[%s2806 + $0x30] sm:$0xf]
    %v3324 = vld [vmem:[%s2806 + $0x34] sm:$0xf]
    %v3325 = vld [vmem:[%s2806 + $0x44] sm:$0xf]
    %v3326 = vld [vmem:[%s2806 + $0x48] sm:$0xf]
    %v3327 = vld [vmem:[%s2806 + $0x58] sm:$0xf]
    %v3328 = vld [vmem:[%s2806 + $0x5c] sm:$0xf]
    %v3329 = vld [vmem:[%s2806 + $0x6c] sm:$0xf]
    %v3330 = vld [vmem:[%s2806 + $0x70] sm:$0xf]
    %v3331 = vld [vmem:[%s2806 + $0x80] sm:$0xf]
    %v3332 = vld [vmem:[%s2806 + $0x84] sm:$0xf]
    %v3333 = vld [vmem:[%s2806 + $0x94] sm:$0xf]
    %v3334 = vld [vmem:[%s2806 + $0x98] sm:$0xf]
    %v3335 = vld [vmem:[%s2806 + $0xa8] sm:$0xf]
    %v3336 = vld [vmem:[%s2806 + $0xac] sm:$0xf]
    %v3337 = vld [vmem:[%s2806 + $0xbc] sm:$0xf]
    %v3338 = vld [vmem:[%s2806 + $0xc0] sm:$0xf]
    %v3339 = vld [vmem:[%s2806 + $0xd0] sm:$0xf]
    %v3340 = vld [vmem:[%s2806 + $0xd4] sm:$0xf]
    %v3341 = vld [vmem:[%s2806 + $0xe4] sm:$0xf]
    %v3342 = vld [vmem:[%s2806 + $0xe8] sm:$0xf]
    %v3343 = vld [vmem:[%s2806 + $0xf8] sm:$0xf]
    %v3344 = vld [vmem:[%s2806 + $0xfc] sm:$0xf]
    %v3345 = vld [vmem:[%s2806 + $0x10c] sm:$0xf]
    %v3346 = vld [vmem:[%s2806 + $0x110] sm:$0xf]
    %v3347 = vld [vmem:[%s2806 + $0x120] sm:$0xf]
    %v3348 = vld [vmem:[%s2806 + $0x124] sm:$0xf]
    %v3349 = vld [vmem:[%s2806 + $0x134] sm:$0xf]
    %v3350 = vld [vmem:[%s2806 + $0x138] sm:$0xf]
    %v3383 = vunpack.c.l.b16 %v3319
    %v3384 = vunpack.c.l.b16 %v3320
    %v3385 = vunpack.c.l.b16 %v3321
    %v3386 = vunpack.c.l.b16 %v3322
    %v3387 = vunpack.c.l.b16 %v3323
    %v3388 = vunpack.c.l.b16 %v3324
    %v3389 = vunpack.c.l.b16 %v3325
    %v3390 = vunpack.c.l.b16 %v3326
    %v3391 = vunpack.c.l.b16 %v3327
    %v3392 = vunpack.c.l.b16 %v3328
    %v3393 = vunpack.c.l.b16 %v3329
    %v3394 = vunpack.c.l.b16 %v3330
    %v3395 = vunpack.c.l.b16 %v3331
    %v3396 = vunpack.c.l.b16 %v3332
    %v3397 = vunpack.c.l.b16 %v3333
    %v3398 = vunpack.c.l.b16 %v3334
    %v3399 = vunpack.c.l.b16 %v3335
    %v3400 = vunpack.c.l.b16 %v3336
    %v3401 = vunpack.c.l.b16 %v3337
    %v3402 = vunpack.c.l.b16 %v3338
    %v3403 = vunpack.c.l.b16 %v3339
    %v3404 = vunpack.c.l.b16 %v3340
    %v3405 = vunpack.c.l.b16 %v3341
    %v3406 = vunpack.c.l.b16 %v3342
    %v3407 = vunpack.c.l.b16 %v3343
    %v3408 = vunpack.c.l.b16 %v3344
    %v3409 = vunpack.c.l.b16 %v3345
    %v3410 = vunpack.c.l.b16 %v3346
    %v3411 = vunpack.c.l.b16 %v3347
    %v3412 = vunpack.c.l.b16 %v3348
    %v3413 = vunpack.c.l.b16 %v3349
    %v3414 = vunpack.c.l.b16 %v3350
    %v3415 = vpack.c.b16 %v3384, %v3383
    %v3416 = vpack.c.b16 %v3386, %v3385
    %v3417 = vpack.c.b16 %v3388, %v3387
    %v3418 = vpack.c.b16 %v3390, %v3389
    %v3419 = vpack.c.b16 %v3392, %v3391
    %v3420 = vpack.c.b16 %v3394, %v3393
    %v3421 = vpack.c.b16 %v3396, %v3395
    %v3422 = vpack.c.b16 %v3398, %v3397
    %v3423 = vpack.c.b16 %v3400, %v3399
    %v3424 = vpack.c.b16 %v3402, %v3401
    %v3425 = vpack.c.b16 %v3404, %v3403
    %v3426 = vpack.c.b16 %v3406, %v3405
    %v3427 = vpack.c.b16 %v3408, %v3407
    %v3428 = vpack.c.b16 %v3410, %v3409
    %v3429 = vpack.c.b16 %v3412, %v3411
    %v3430 = vpack.c.b16 %v3414, %v3413
    %3431 = vrot.lane.b32.xlu0 %v3415, 96
    %v3432 = vpop.permute.xlu0 %3431
    %3433 = vrot.lane.b32.xlu0 %v3416, 96
    %v3434 = vpop.permute.xlu0 %3433
    %3435 = vrot.lane.b32.xlu0 %v3417, 96
    %v3436 = vpop.permute.xlu0 %3435
    %3437 = vrot.lane.b32.xlu0 %v3418, 96
    %v3438 = vpop.permute.xlu0 %3437
    %3439 = vrot.lane.b32.xlu0 %v3419, 96
    %v3440 = vpop.permute.xlu0 %3439
    %3441 = vrot.lane.b32.xlu0 %v3420, 96
    %v3442 = vpop.permute.xlu0 %3441
    %3443 = vrot.lane.b32.xlu0 %v3421, 96
    %v3444 = vpop.permute.xlu0 %3443
    %3445 = vrot.lane.b32.xlu0 %v3422, 96
    %v3446 = vpop.permute.xlu0 %3445
    %3447 = vrot.lane.b32.xlu0 %v3423, 96
    %v3448 = vpop.permute.xlu0 %3447
    %3449 = vrot.lane.b32.xlu0 %v3424, 96
    %v3450 = vpop.permute.xlu0 %3449
    %3451 = vrot.lane.b32.xlu0 %v3425, 96
    %v3452 = vpop.permute.xlu0 %3451
    %3453 = vrot.lane.b32.xlu0 %v3426, 96
    %v3454 = vpop.permute.xlu0 %3453
    %3455 = vrot.lane.b32.xlu0 %v3427, 96
    %v3456 = vpop.permute.xlu0 %3455
    %3457 = vrot.lane.b32.xlu0 %v3428, 96
    %v3458 = vpop.permute.xlu0 %3457
    %3459 = vrot.lane.b32.xlu0 %v3429, 96
    %v3460 = vpop.permute.xlu0 %3459
    %3461 = vrot.lane.b32.xlu0 %v3430, 96
    %v3462 = vpop.permute.xlu0 %3461
    %3479 = vst.msk [vmem:[#allocation3 + $0x8] sm:$0xff] %vm2101, %v3432
    %3480 = vst.msk [vmem:[#allocation3 + $0x20] sm:$0xff] %vm2101, %v3434
    %3481 = vst.msk [vmem:[#allocation3 + $0x38] sm:$0xff] %vm2101, %v3436
    %3482 = vst.msk [vmem:[#allocation3 + $0x50] sm:$0xff] %vm2101, %v3438
    %3483 = vst.msk [vmem:[#allocation3 + $0x68] sm:$0xff] %vm2101, %v3440
    %3484 = vst.msk [vmem:[#allocation3 + $0x80] sm:$0xff] %vm2101, %v3442
    %3485 = vst.msk [vmem:[#allocation3 + $0x98] sm:$0xff] %vm2101, %v3444
    %3486 = vst.msk [vmem:[#allocation3 + $0xb0] sm:$0xff] %vm2101, %v3446
    %3487 = vst.msk [vmem:[#allocation3 + $0xc8] sm:$0xff] %vm2101, %v3448
    %3488 = vst.msk [vmem:[#allocation3 + $0xe0] sm:$0xff] %vm2101, %v3450
    %3489 = vst.msk [vmem:[#allocation3 + $0xf8] sm:$0xff] %vm2101, %v3452
    %3490 = vst.msk [vmem:[#allocation3 + $0x110] sm:$0xff] %vm2101, %v3454
    %3491 = vst.msk [vmem:[#allocation3 + $0x128] sm:$0xff] %vm2101, %v3456
    %3492 = vst.msk [vmem:[#allocation3 + $0x140] sm:$0xff] %vm2101, %v3458
    %3493 = vst.msk [vmem:[#allocation3 + $0x158] sm:$0xff] %vm2101, %v3460
    %3494 = vst.msk [vmem:[#allocation3 + $0x170] sm:$0xff] %vm2101, %v3462
    %v3495 = vld [vmem:[%s2806 + $0x8] sm:$0xf]
    %v3496 = vld [vmem:[%s2806 + $0xc] sm:$0xf]
    %v3497 = vld [vmem:[%s2806 + $0x10] sm:$0x1]
    %v3498 = vld [vmem:[%s2806 + $0x1c] sm:$0xf]
    %v3499 = vld [vmem:[%s2806 + $0x20] sm:$0xf]
    %v3500 = vld [vmem:[%s2806 + $0x24] sm:$0x1]
    %v3501 = vld [vmem:[%s2806 + $0x30] sm:$0xf]
    %v3502 = vld [vmem:[%s2806 + $0x34] sm:$0xf]
    %v3503 = vld [vmem:[%s2806 + $0x38] sm:$0x1]
    %v3504 = vld [vmem:[%s2806 + $0x44] sm:$0xf]
    %v3505 = vld [vmem:[%s2806 + $0x48] sm:$0xf]
    %v3506 = vld [vmem:[%s2806 + $0x4c] sm:$0x1]
    %v3507 = vld [vmem:[%s2806 + $0x58] sm:$0xf]
    %v3508 = vld [vmem:[%s2806 + $0x5c] sm:$0xf]
    %v3509 = vld [vmem:[%s2806 + $0x60] sm:$0x1]
    %v3510 = vld [vmem:[%s2806 + $0x6c] sm:$0xf]
    %v3511 = vld [vmem:[%s2806 + $0x70] sm:$0xf]
    %v3512 = vld [vmem:[%s2806 + $0x74] sm:$0x1]
    %v3513 = vld [vmem:[%s2806 + $0x80] sm:$0xf]
    %v3514 = vld [vmem:[%s2806 + $0x84] sm:$0xf]
    %v3515 = vld [vmem:[%s2806 + $0x88] sm:$0x1]
    %v3516 = vld [vmem:[%s2806 + $0x94] sm:$0xf]
    %v3517 = vld [vmem:[%s2806 + $0x98] sm:$0xf]
    %v3518 = vld [vmem:[%s2806 + $0x9c] sm:$0x1]
    %v3519 = vld [vmem:[%s2806 + $0xa8] sm:$0xf]
    %v3520 = vld [vmem:[%s2806 + $0xac] sm:$0xf]
    %v3521 = vld [vmem:[%s2806 + $0xb0] sm:$0x1]
    %v3522 = vld [vmem:[%s2806 + $0xbc] sm:$0xf]
    %v3523 = vld [vmem:[%s2806 + $0xc0] sm:$0xf]
    %v3524 = vld [vmem:[%s2806 + $0xc4] sm:$0x1]
    %v3525 = vld [vmem:[%s2806 + $0xd0] sm:$0xf]
    %v3526 = vld [vmem:[%s2806 + $0xd4] sm:$0xf]
    %v3527 = vld [vmem:[%s2806 + $0xd8] sm:$0x1]
    %v3528 = vld [vmem:[%s2806 + $0xe4] sm:$0xf]
    %v3529 = vld [vmem:[%s2806 + $0xe8] sm:$0xf]
    %v3530 = vld [vmem:[%s2806 + $0xec] sm:$0x1]
    %v3531 = vld [vmem:[%s2806 + $0xf8] sm:$0xf]
    %v3532 = vld [vmem:[%s2806 + $0xfc] sm:$0xf]
    %v3533 = vld [vmem:[%s2806 + $0x100] sm:$0x1]
    %v3534 = vld [vmem:[%s2806 + $0x10c] sm:$0xf]
    %v3535 = vld [vmem:[%s2806 + $0x110] sm:$0xf]
    %v3536 = vld [vmem:[%s2806 + $0x114] sm:$0x1]
    %v3537 = vld [vmem:[%s2806 + $0x120] sm:$0xf]
    %v3538 = vld [vmem:[%s2806 + $0x124] sm:$0xf]
    %v3539 = vld [vmem:[%s2806 + $0x128] sm:$0x1]
    %v3540 = vld [vmem:[%s2806 + $0x134] sm:$0xf]
    %v3541 = vld [vmem:[%s2806 + $0x138] sm:$0xf]
    %v3542 = vld [vmem:[%s2806 + $0x13c] sm:$0x1]
    %v3544 = vshrl.u32 %v3495, 16
    %v3546 = vrot.slane %v3544, 4
    %v3547 = vshll.u32 %v3495, 16
    %v3549 = vrot.slane %v3547, 5
    %v3550 = vor.u32 %v3546, %v3549
    %v3551 = vrot.slane %v3550, 4
    %v3553 = vshll.u32 %v3496, 16
    %v3555 = vrot.slane %v3553, 5
    %v3556 = vsel %vm1107, %v3551, %v3555
    %v3557 = vshrl.u32 %v3496, 16
    %v3559 = vrot.slane %v3557, 4
    %v3560 = vor.u32 %v3559, %v3555
    %v3561 = vrot.slane %v3560, 4
    %v3563 = vshll.u32 %v3497, 16
    %v3565 = vrot.slane %v3563, 5
    %v3566 = vsel %vm1107, %v3561, %v3565
    %v3568 = vshrl.u32 %v3498, 16
    %v3570 = vrot.slane %v3568, 4
    %v3571 = vshll.u32 %v3498, 16
    %v3573 = vrot.slane %v3571, 5
    %v3574 = vor.u32 %v3570, %v3573
    %v3575 = vrot.slane %v3574, 4
    %v3577 = vshll.u32 %v3499, 16
    %v3579 = vrot.slane %v3577, 5
    %v3580 = vsel %vm1107, %v3575, %v3579
    %v3581 = vshrl.u32 %v3499, 16
    %v3583 = vrot.slane %v3581, 4
    %v3584 = vor.u32 %v3583, %v3579
    %v3585 = vrot.slane %v3584, 4
    %v3587 = vshll.u32 %v3500, 16
    %v3589 = vrot.slane %v3587, 5
    %v3590 = vsel %vm1107, %v3585, %v3589
    %v3592 = vshrl.u32 %v3501, 16
    %v3594 = vrot.slane %v3592, 4
    %v3595 = vshll.u32 %v3501, 16
    %v3597 = vrot.slane %v3595, 5
    %v3598 = vor.u32 %v3594, %v3597
    %v3599 = vrot.slane %v3598, 4
    %v3601 = vshll.u32 %v3502, 16
    %v3603 = vrot.slane %v3601, 5
    %v3604 = vsel %vm1107, %v3599, %v3603
    %v3605 = vshrl.u32 %v3502, 16
    %v3607 = vrot.slane %v3605, 4
    %v3608 = vor.u32 %v3607, %v3603
    %v3609 = vrot.slane %v3608, 4
    %v3611 = vshll.u32 %v3503, 16
    %v3613 = vrot.slane %v3611, 5
    %v3614 = vsel %vm1107, %v3609, %v3613
    %v3616 = vshrl.u32 %v3504, 16
    %v3618 = vrot.slane %v3616, 4
    %v3619 = vshll.u32 %v3504, 16
    %v3621 = vrot.slane %v3619, 5
    %v3622 = vor.u32 %v3618, %v3621
    %v3623 = vrot.slane %v3622, 4
    %v3625 = vshll.u32 %v3505, 16
    %v3627 = vrot.slane %v3625, 5
    %v3628 = vsel %vm1107, %v3623, %v3627
    %v3629 = vshrl.u32 %v3505, 16
    %v3631 = vrot.slane %v3629, 4
    %v3632 = vor.u32 %v3631, %v3627
    %v3633 = vrot.slane %v3632, 4
    %v3635 = vshll.u32 %v3506, 16
    %v3637 = vrot.slane %v3635, 5
    %v3638 = vsel %vm1107, %v3633, %v3637
    %v3640 = vshrl.u32 %v3507, 16
    %v3642 = vrot.slane %v3640, 4
    %v3643 = vshll.u32 %v3507, 16
    %v3645 = vrot.slane %v3643, 5
    %v3646 = vor.u32 %v3642, %v3645
    %v3647 = vrot.slane %v3646, 4
    %v3649 = vshll.u32 %v3508, 16
    %v3651 = vrot.slane %v3649, 5
    %v3652 = vsel %vm1107, %v3647, %v3651
    %v3653 = vshrl.u32 %v3508, 16
    %v3655 = vrot.slane %v3653, 4
    %v3656 = vor.u32 %v3655, %v3651
    %v3657 = vrot.slane %v3656, 4
    %v3659 = vshll.u32 %v3509, 16
    %v3661 = vrot.slane %v3659, 5
    %v3662 = vsel %vm1107, %v3657, %v3661
    %v3664 = vshrl.u32 %v3510, 16
    %v3666 = vrot.slane %v3664, 4
    %v3667 = vshll.u32 %v3510, 16
    %v3669 = vrot.slane %v3667, 5
    %v3670 = vor.u32 %v3666, %v3669
    %v3671 = vrot.slane %v3670, 4
    %v3673 = vshll.u32 %v3511, 16
    %v3675 = vrot.slane %v3673, 5
    %v3676 = vsel %vm1107, %v3671, %v3675
    %v3677 = vshrl.u32 %v3511, 16
    %v3679 = vrot.slane %v3677, 4
    %v3680 = vor.u32 %v3679, %v3675
    %v3681 = vrot.slane %v3680, 4
    %v3683 = vshll.u32 %v3512, 16
    %v3685 = vrot.slane %v3683, 5
    %v3686 = vsel %vm1107, %v3681, %v3685
    %v3688 = vshrl.u32 %v3513, 16
    %v3690 = vrot.slane %v3688, 4
    %v3691 = vshll.u32 %v3513, 16
    %v3693 = vrot.slane %v3691, 5
    %v3694 = vor.u32 %v3690, %v3693
    %v3695 = vrot.slane %v3694, 4
    %v3697 = vshll.u32 %v3514, 16
    %v3699 = vrot.slane %v3697, 5
    %v3700 = vsel %vm1107, %v3695, %v3699
    %v3701 = vshrl.u32 %v3514, 16
    %v3703 = vrot.slane %v3701, 4
    %v3704 = vor.u32 %v3703, %v3699
    %v3705 = vrot.slane %v3704, 4
    %v3707 = vshll.u32 %v3515, 16
    %v3709 = vrot.slane %v3707, 5
    %v3710 = vsel %vm1107, %v3705, %v3709
    %v3712 = vshrl.u32 %v3516, 16
    %v3714 = vrot.slane %v3712, 4
    %v3715 = vshll.u32 %v3516, 16
    %v3717 = vrot.slane %v3715, 5
    %v3718 = vor.u32 %v3714, %v3717
    %v3719 = vrot.slane %v3718, 4
    %v3721 = vshll.u32 %v3517, 16
    %v3723 = vrot.slane %v3721, 5
    %v3724 = vsel %vm1107, %v3719, %v3723
    %v3725 = vshrl.u32 %v3517, 16
    %v3727 = vrot.slane %v3725, 4
    %v3728 = vor.u32 %v3727, %v3723
    %v3729 = vrot.slane %v3728, 4
    %v3731 = vshll.u32 %v3518, 16
    %v3733 = vrot.slane %v3731, 5
    %v3734 = vsel %vm1107, %v3729, %v3733
    %v3736 = vshrl.u32 %v3519, 16
    %v3738 = vrot.slane %v3736, 4
    %v3739 = vshll.u32 %v3519, 16
    %v3741 = vrot.slane %v3739, 5
    %v3742 = vor.u32 %v3738, %v3741
    %v3743 = vrot.slane %v3742, 4
    %v3745 = vshll.u32 %v3520, 16
    %v3747 = vrot.slane %v3745, 5
    %v3748 = vsel %vm1107, %v3743, %v3747
    %v3749 = vshrl.u32 %v3520, 16
    %v3751 = vrot.slane %v3749, 4
    %v3752 = vor.u32 %v3751, %v3747
    %v3753 = vrot.slane %v3752, 4
    %v3755 = vshll.u32 %v3521, 16
    %v3757 = vrot.slane %v3755, 5
    %v3758 = vsel %vm1107, %v3753, %v3757
    %v3760 = vshrl.u32 %v3522, 16
    %v3762 = vrot.slane %v3760, 4
    %v3763 = vshll.u32 %v3522, 16
    %v3765 = vrot.slane %v3763, 5
    %v3766 = vor.u32 %v3762, %v3765
    %v3767 = vrot.slane %v3766, 4
    %v3769 = vshll.u32 %v3523, 16
    %v3771 = vrot.slane %v3769, 5
    %v3772 = vsel %vm1107, %v3767, %v3771
    %v3773 = vshrl.u32 %v3523, 16
    %v3775 = vrot.slane %v3773, 4
    %v3776 = vor.u32 %v3775, %v3771
    %v3777 = vrot.slane %v3776, 4
    %v3779 = vshll.u32 %v3524, 16
    %v3781 = vrot.slane %v3779, 5
    %v3782 = vsel %vm1107, %v3777, %v3781
    %v3784 = vshrl.u32 %v3525, 16
    %v3786 = vrot.slane %v3784, 4
    %v3787 = vshll.u32 %v3525, 16
    %v3789 = vrot.slane %v3787, 5
    %v3790 = vor.u32 %v3786, %v3789
    %v3791 = vrot.slane %v3790, 4
    %v3793 = vshll.u32 %v3526, 16
    %v3795 = vrot.slane %v3793, 5
    %v3796 = vsel %vm1107, %v3791, %v3795
    %v3797 = vshrl.u32 %v3526, 16
    %v3799 = vrot.slane %v3797, 4
    %v3800 = vor.u32 %v3799, %v3795
    %v3801 = vrot.slane %v3800, 4
    %v3803 = vshll.u32 %v3527, 16
    %v3805 = vrot.slane %v3803, 5
    %v3806 = vsel %vm1107, %v3801, %v3805
    %v3808 = vshrl.u32 %v3528, 16
    %v3810 = vrot.slane %v3808, 4
    %v3811 = vshll.u32 %v3528, 16
    %v3813 = vrot.slane %v3811, 5
    %v3814 = vor.u32 %v3810, %v3813
    %v3815 = vrot.slane %v3814, 4
    %v3817 = vshll.u32 %v3529, 16
    %v3819 = vrot.slane %v3817, 5
    %v3820 = vsel %vm1107, %v3815, %v3819
    %v3821 = vshrl.u32 %v3529, 16
    %v3823 = vrot.slane %v3821, 4
    %v3824 = vor.u32 %v3823, %v3819
    %v3825 = vrot.slane %v3824, 4
    %v3827 = vshll.u32 %v3530, 16
    %v3829 = vrot.slane %v3827, 5
    %v3830 = vsel %vm1107, %v3825, %v3829
    %v3832 = vshrl.u32 %v3531, 16
    %v3834 = vrot.slane %v3832, 4
    %v3835 = vshll.u32 %v3531, 16
    %v3837 = vrot.slane %v3835, 5
    %v3838 = vor.u32 %v3834, %v3837
    %v3839 = vrot.slane %v3838, 4
    %v3841 = vshll.u32 %v3532, 16
    %v3843 = vrot.slane %v3841, 5
    %v3844 = vsel %vm1107, %v3839, %v3843
    %v3845 = vshrl.u32 %v3532, 16
    %v3847 = vrot.slane %v3845, 4
    %v3848 = vor.u32 %v3847, %v3843
    %v3849 = vrot.slane %v3848, 4
    %v3851 = vshll.u32 %v3533, 16
    %v3853 = vrot.slane %v3851, 5
    %v3854 = vsel %vm1107, %v3849, %v3853
    %v3856 = vshrl.u32 %v3534, 16
    %v3858 = vrot.slane %v3856, 4
    %v3859 = vshll.u32 %v3534, 16
    %v3861 = vrot.slane %v3859, 5
    %v3862 = vor.u32 %v3858, %v3861
    %v3863 = vrot.slane %v3862, 4
    %v3865 = vshll.u32 %v3535, 16
    %v3867 = vrot.slane %v3865, 5
    %v3868 = vsel %vm1107, %v3863, %v3867
    %v3869 = vshrl.u32 %v3535, 16
    %v3871 = vrot.slane %v3869, 4
    %v3872 = vor.u32 %v3871, %v3867
    %v3873 = vrot.slane %v3872, 4
    %v3875 = vshll.u32 %v3536, 16
    %v3877 = vrot.slane %v3875, 5
    %v3878 = vsel %vm1107, %v3873, %v3877
    %v3880 = vshrl.u32 %v3537, 16
    %v3882 = vrot.slane %v3880, 4
    %v3883 = vshll.u32 %v3537, 16
    %v3885 = vrot.slane %v3883, 5
    %v3886 = vor.u32 %v3882, %v3885
    %v3887 = vrot.slane %v3886, 4
    %v3889 = vshll.u32 %v3538, 16
    %v3891 = vrot.slane %v3889, 5
    %v3892 = vsel %vm1107, %v3887, %v3891
    %v3893 = vshrl.u32 %v3538, 16
    %v3895 = vrot.slane %v3893, 4
    %v3896 = vor.u32 %v3895, %v3891
    %v3897 = vrot.slane %v3896, 4
    %v3899 = vshll.u32 %v3539, 16
    %v3901 = vrot.slane %v3899, 5
    %v3902 = vsel %vm1107, %v3897, %v3901
    %v3904 = vshrl.u32 %v3540, 16
    %v3906 = vrot.slane %v3904, 4
    %v3907 = vshll.u32 %v3540, 16
    %v3909 = vrot.slane %v3907, 5
    %v3910 = vor.u32 %v3906, %v3909
    %v3911 = vrot.slane %v3910, 4
    %v3913 = vshll.u32 %v3541, 16
    %v3915 = vrot.slane %v3913, 5
    %v3916 = vsel %vm1107, %v3911, %v3915
    %v3917 = vshrl.u32 %v3541, 16
    %v3919 = vrot.slane %v3917, 4
    %v3920 = vor.u32 %v3919, %v3915
    %v3921 = vrot.slane %v3920, 4
    %v3923 = vshll.u32 %v3542, 16
    %v3925 = vrot.slane %v3923, 5
    %v3926 = vsel %vm1107, %v3921, %v3925
    %v3927 = vunpack.c.l.b16 %v3556
    %v3928 = vunpack.c.l.b16 %v3566
    %v3929 = vunpack.c.l.b16 %v3580
    %v3930 = vunpack.c.l.b16 %v3590
    %v3931 = vunpack.c.l.b16 %v3604
    %v3932 = vunpack.c.l.b16 %v3614
    %v3933 = vunpack.c.l.b16 %v3628
    %v3934 = vunpack.c.l.b16 %v3638
    %v3935 = vunpack.c.l.b16 %v3652
    %v3936 = vunpack.c.l.b16 %v3662
    %v3937 = vunpack.c.l.b16 %v3676
    %v3938 = vunpack.c.l.b16 %v3686
    %v3939 = vunpack.c.l.b16 %v3700
    %v3940 = vunpack.c.l.b16 %v3710
    %v3941 = vunpack.c.l.b16 %v3724
    %v3942 = vunpack.c.l.b16 %v3734
    %v3943 = vunpack.c.l.b16 %v3748
    %v3944 = vunpack.c.l.b16 %v3758
    %v3945 = vunpack.c.l.b16 %v3772
    %v3946 = vunpack.c.l.b16 %v3782
    %v3947 = vunpack.c.l.b16 %v3796
    %v3948 = vunpack.c.l.b16 %v3806
    %v3949 = vunpack.c.l.b16 %v3820
    %v3950 = vunpack.c.l.b16 %v3830
    %v3951 = vunpack.c.l.b16 %v3844
    %v3952 = vunpack.c.l.b16 %v3854
    %v3953 = vunpack.c.l.b16 %v3868
    %v3954 = vunpack.c.l.b16 %v3878
    %v3955 = vunpack.c.l.b16 %v3892
    %v3956 = vunpack.c.l.b16 %v3902
    %v3957 = vunpack.c.l.b16 %v3916
    %v3958 = vunpack.c.l.b16 %v3926
    %v3959 = vpack.c.b16 %v3928, %v3927
    %v3960 = vpack.c.b16 %v3930, %v3929
    %v3961 = vpack.c.b16 %v3932, %v3931
    %v3962 = vpack.c.b16 %v3934, %v3933
    %v3963 = vpack.c.b16 %v3936, %v3935
    %v3964 = vpack.c.b16 %v3938, %v3937
    %v3965 = vpack.c.b16 %v3940, %v3939
    %v3966 = vpack.c.b16 %v3942, %v3941
    %v3967 = vpack.c.b16 %v3944, %v3943
    %v3968 = vpack.c.b16 %v3946, %v3945
    %v3969 = vpack.c.b16 %v3948, %v3947
    %v3970 = vpack.c.b16 %v3950, %v3949
    %v3971 = vpack.c.b16 %v3952, %v3951
    %v3972 = vpack.c.b16 %v3954, %v3953
    %v3973 = vpack.c.b16 %v3956, %v3955
    %v3974 = vpack.c.b16 %v3958, %v3957
    %3991 = vst.msk [vmem:[#allocation3 + $0x10] sm:$0xff] %vm863, %v3959
    %3992 = vst.msk [vmem:[#allocation3 + $0x28] sm:$0xff] %vm863, %v3960
    %3993 = vst.msk [vmem:[#allocation3 + $0x40] sm:$0xff] %vm863, %v3961
    %3994 = vst.msk [vmem:[#allocation3 + $0x58] sm:$0xff] %vm863, %v3962
    %3995 = vst.msk [vmem:[#allocation3 + $0x70] sm:$0xff] %vm863, %v3963
    %3996 = vst.msk [vmem:[#allocation3 + $0x88] sm:$0xff] %vm863, %v3964
    %3997 = vst.msk [vmem:[#allocation3 + $0xa0] sm:$0xff] %vm863, %v3965
    %3998 = vst.msk [vmem:[#allocation3 + $0xb8] sm:$0xff] %vm863, %v3966
    %3999 = vst.msk [vmem:[#allocation3 + $0xd0] sm:$0xff] %vm863, %v3967
    %4000 = vst.msk [vmem:[#allocation3 + $0xe8] sm:$0xff] %vm863, %v3968
    %4001 = vst.msk [vmem:[#allocation3 + $0x100] sm:$0xff] %vm863, %v3969
    %4002 = vst.msk [vmem:[#allocation3 + $0x118] sm:$0xff] %vm863, %v3970
    %4003 = vst.msk [vmem:[#allocation3 + $0x130] sm:$0xff] %vm863, %v3971
    %4004 = vst.msk [vmem:[#allocation3 + $0x148] sm:$0xff] %vm863, %v3972
    %4005 = vst.msk [vmem:[#allocation3 + $0x160] sm:$0xff] %vm863, %v3973
    %4006 = vst.msk [vmem:[#allocation3 + $0x178] sm:$0xff] %vm863, %v3974
    %s4007 = scalar_lea.vmem [#allocation2], 360
    %v4008 = vld [vmem:[%s4007 + $0x4] sm:$0x8]
    %v4009 = vsel %vm46, 0, %v4008
    %4010 = vst [vmem:[%s4007 + $0x4] sm:$0x8] %v4009
    %4011 = vst.msk [vmem:[%s4007 + $0x8] sm:$0xf] %vm50, 0
    %4012 = vst.msk [vmem:[%s4007 + $0xc] sm:$0xf] %vm50, 0
    %v4013 = vld [vmem:[%s4007 + $0x10] sm:$0x1]
    %v4014 = vsel %vm55, 0, %v4013
    %4015 = vst [vmem:[%s4007 + $0x10] sm:$0x1] %v4014
    %s4016 = scalar_lea.vmem [#allocation2], 700
    %v4017 = vld [vmem:[%s4016 + $0x4] sm:$0x8]
    %v4018 = vsel %vm46, 0, %v4017
    %4019 = vst [vmem:[%s4016 + $0x4] sm:$0x8] %v4018
    %4020 = vst.msk [vmem:[%s4016 + $0x8] sm:$0xf] %vm50, 0
    %4021 = vst.msk [vmem:[%s4016 + $0xc] sm:$0xf] %vm50, 0
    %v4022 = vld [vmem:[%s4016 + $0x10] sm:$0x1]
    %v4023 = vsel %vm55, 0, %v4022
    %4024 = vst [vmem:[%s4016 + $0x10] sm:$0x1] %v4023
    %s4025 = scalar_lea.vmem [#allocation2], 380
    %v4026 = vld [vmem:[%s4025 + $0x4] sm:$0x8]
    %v4027 = vsel %vm46, 0, %v4026
    %4028 = vst [vmem:[%s4025 + $0x4] sm:$0x8] %v4027
    %v4029 = vld [vmem:[%s4025 + $0x18] sm:$0x8]
    %v4030 = vsel %vm46, 0, %v4029
    %4031 = vst [vmem:[%s4025 + $0x18] sm:$0x8] %v4030
    %v4032 = vld [vmem:[%s4025 + $0x2c] sm:$0x8]
    %v4033 = vsel %vm46, 0, %v4032
    %4034 = vst [vmem:[%s4025 + $0x2c] sm:$0x8] %v4033
    %v4035 = vld [vmem:[%s4025 + $0x40] sm:$0x8]
    %v4036 = vsel %vm46, 0, %v4035
    %4037 = vst [vmem:[%s4025 + $0x40] sm:$0x8] %v4036
    %v4038 = vld [vmem:[%s4025 + $0x54] sm:$0x8]
    %v4039 = vsel %vm46, 0, %v4038
    %4040 = vst [vmem:[%s4025 + $0x54] sm:$0x8] %v4039
    %v4041 = vld [vmem:[%s4025 + $0x68] sm:$0x8]
    %v4042 = vsel %vm46, 0, %v4041
    %4043 = vst [vmem:[%s4025 + $0x68] sm:$0x8] %v4042
    %v4044 = vld [vmem:[%s4025 + $0x7c] sm:$0x8]
    %v4045 = vsel %vm46, 0, %v4044
    %4046 = vst [vmem:[%s4025 + $0x7c] sm:$0x8] %v4045
    %v4047 = vld [vmem:[%s4025 + $0x90] sm:$0x8]
    %v4048 = vsel %vm46, 0, %v4047
    %4049 = vst [vmem:[%s4025 + $0x90] sm:$0x8] %v4048
    %v4050 = vld [vmem:[%s4025 + $0xa4] sm:$0x8]
    %v4051 = vsel %vm46, 0, %v4050
    %4052 = vst [vmem:[%s4025 + $0xa4] sm:$0x8] %v4051
    %v4053 = vld [vmem:[%s4025 + $0xb8] sm:$0x8]
    %v4054 = vsel %vm46, 0, %v4053
    %4055 = vst [vmem:[%s4025 + $0xb8] sm:$0x8] %v4054
    %v4056 = vld [vmem:[%s4025 + $0xcc] sm:$0x8]
    %v4057 = vsel %vm46, 0, %v4056
    %4058 = vst [vmem:[%s4025 + $0xcc] sm:$0x8] %v4057
    %v4059 = vld [vmem:[%s4025 + $0xe0] sm:$0x8]
    %v4060 = vsel %vm46, 0, %v4059
    %4061 = vst [vmem:[%s4025 + $0xe0] sm:$0x8] %v4060
    %v4062 = vld [vmem:[%s4025 + $0xf4] sm:$0x8]
    %v4063 = vsel %vm46, 0, %v4062
    %4064 = vst [vmem:[%s4025 + $0xf4] sm:$0x8] %v4063
    %v4065 = vld [vmem:[%s4025 + $0x108] sm:$0x8]
    %v4066 = vsel %vm46, 0, %v4065
    %4067 = vst [vmem:[%s4025 + $0x108] sm:$0x8] %v4066
    %v4068 = vld [vmem:[%s4025 + $0x11c] sm:$0x8]
    %v4069 = vsel %vm46, 0, %v4068
    %4070 = vst [vmem:[%s4025 + $0x11c] sm:$0x8] %v4069
    %v4071 = vld [vmem:[%s4025 + $0x130] sm:$0x8]
    %v4072 = vsel %vm46, 0, %v4071
    %4073 = vst [vmem:[%s4025 + $0x130] sm:$0x8] %v4072
    %v4074 = vld [vmem:[%s4025 + $0x10] sm:$0x1]
    %v4075 = vsel %vm55, 0, %v4074
    %4076 = vst [vmem:[%s4025 + $0x10] sm:$0x1] %v4075
    %v4077 = vld [vmem:[%s4025 + $0x24] sm:$0x1]
    %v4078 = vsel %vm55, 0, %v4077
    %4079 = vst [vmem:[%s4025 + $0x24] sm:$0x1] %v4078
    %v4080 = vld [vmem:[%s4025 + $0x38] sm:$0x1]
    %v4081 = vsel %vm55, 0, %v4080
    %4082 = vst [vmem:[%s4025 + $0x38] sm:$0x1] %v4081
    %v4083 = vld [vmem:[%s4025 + $0x4c] sm:$0x1]
    %v4084 = vsel %vm55, 0, %v4083
    %4085 = vst [vmem:[%s4025 + $0x4c] sm:$0x1] %v4084
    %v4086 = vld [vmem:[%s4025 + $0x60] sm:$0x1]
    %v4087 = vsel %vm55, 0, %v4086
    %4088 = vst [vmem:[%s4025 + $0x60] sm:$0x1] %v4087
    %v4089 = vld [vmem:[%s4025 + $0x74] sm:$0x1]
    %v4090 = vsel %vm55, 0, %v4089
    %4091 = vst [vmem:[%s4025 + $0x74] sm:$0x1] %v4090
    %v4092 = vld [vmem:[%s4025 + $0x88] sm:$0x1]
    %v4093 = vsel %vm55, 0, %v4092
    %4094 = vst [vmem:[%s4025 + $0x88] sm:$0x1] %v4093
    %v4095 = vld [vmem:[%s4025 + $0x9c] sm:$0x1]
    %v4096 = vsel %vm55, 0, %v4095
    %4097 = vst [vmem:[%s4025 + $0x9c] sm:$0x1] %v4096
    %v4098 = vld [vmem:[%s4025 + $0xb0] sm:$0x1]
    %v4099 = vsel %vm55, 0, %v4098
    %4100 = vst [vmem:[%s4025 + $0xb0] sm:$0x1] %v4099
    %v4101 = vld [vmem:[%s4025 + $0xc4] sm:$0x1]
    %v4102 = vsel %vm55, 0, %v4101
    %4103 = vst [vmem:[%s4025 + $0xc4] sm:$0x1] %v4102
    %v4104 = vld [vmem:[%s4025 + $0xd8] sm:$0x1]
    %v4105 = vsel %vm55, 0, %v4104
    %4106 = vst [vmem:[%s4025 + $0xd8] sm:$0x1] %v4105
    %v4107 = vld [vmem:[%s4025 + $0xec] sm:$0x1]
    %v4108 = vsel %vm55, 0, %v4107
    %4109 = vst [vmem:[%s4025 + $0xec] sm:$0x1] %v4108
    %v4110 = vld [vmem:[%s4025 + $0x100] sm:$0x1]
    %v4111 = vsel %vm55, 0, %v4110
    %4112 = vst [vmem:[%s4025 + $0x100] sm:$0x1] %v4111
    %v4113 = vld [vmem:[%s4025 + $0x114] sm:$0x1]
    %v4114 = vsel %vm55, 0, %v4113
    %4115 = vst [vmem:[%s4025 + $0x114] sm:$0x1] %v4114
    %v4116 = vld [vmem:[%s4025 + $0x128] sm:$0x1]
    %v4117 = vsel %vm55, 0, %v4116
    %4118 = vst [vmem:[%s4025 + $0x128] sm:$0x1] %v4117
    %v4119 = vld [vmem:[%s4025 + $0x13c] sm:$0x1]
    %v4120 = vsel %vm55, 0, %v4119
    %4121 = vst [vmem:[%s4025 + $0x13c] sm:$0x1] %v4120
    %s4122 = scalar_lea.vmem [#allocation4], 64
    %v4123 = vld [vmem:[%s4122] sm:$0xff]
    %v4124 = vld [vmem:[%s4122 + $0x8] sm:$0xff]
    %v4125 = vld [vmem:[%s4122 + $0x10] sm:$0xff]
    %v4126 = vld [vmem:[%s4122 + $0x18] sm:$0xff]
    %v4127 = vld [vmem:[%s4122 + $0x20] sm:$0xff]
    %v4128 = vld [vmem:[%s4122 + $0x28] sm:$0xff]
    %v4129 = vld [vmem:[%s4122 + $0x30] sm:$0xff]
    %v4130 = vld [vmem:[%s4122 + $0x38] sm:$0xff]
    %4131 = vxpose.xlu0.b32.start [1/16] %v4123, 128
    %4132 = vxpose.xlu0.b32.cont [2/16] %v4125, 128
    %4133 = vxpose.xlu0.b32.cont [3/16] %v4127, 128
    %4134 = vxpose.xlu0.b32.cont [4/16] %v4129, 128
    %4135 = vxpose.xlu0.b32.cont [5/16] 0.0, 128
    %4136 = vxpose.xlu0.b32.cont [6/16] 0.0, 128
    %4137 = vxpose.xlu0.b32.cont [7/16] 0.0, 128
    %4138 = vxpose.xlu0.b32.cont [8/16] 0.0, 128
    %4139 = vxpose.xlu0.b32.cont [9/16] 0.0, 128
    %4140 = vxpose.xlu0.b32.cont [10/16] 0.0, 128
    %4141 = vxpose.xlu0.b32.cont [11/16] 0.0, 128
    %4142 = vxpose.xlu0.b32.cont [12/16] 0.0, 128
    %4143 = vxpose.xlu0.b32.cont [13/16] 0.0, 128
    %4144 = vxpose.xlu0.b32.cont [14/16] 0.0, 128
    %4145 = vxpose.xlu0.b32.cont [15/16] 0.0, 128
    %4146 = vxpose.xlu0.b32.end [16/16] 0.0, 128
    %v4147 = vpop.trf.xlu0
    %v4148 = vpop.trf.xlu0
    %v4149 = vpop.trf.xlu0
    %v4150 = vpop.trf.xlu0
    %v4151 = vpop.trf.xlu0
    %v4152 = vpop.trf.xlu0
    %v4153 = vpop.trf.xlu0
    %v4154 = vpop.trf.xlu0
    %v4155 = vpop.trf.xlu0
    %v4156 = vpop.trf.xlu0
    %v4157 = vpop.trf.xlu0
    %v4158 = vpop.trf.xlu0
    %v4159 = vpop.trf.xlu0
    %v4160 = vpop.trf.xlu0
    %v4161 = vpop.trf.xlu0
    %v4162 = vpop.trf.xlu0
    %4163 = vxpose.xlu0.b32.start [1/16] %v4124, 128
    %4164 = vxpose.xlu0.b32.cont [2/16] %v4126, 128
    %4165 = vxpose.xlu0.b32.cont [3/16] %v4128, 128
    %4166 = vxpose.xlu0.b32.cont [4/16] %v4130, 128
    %4167 = vxpose.xlu0.b32.cont [5/16] 0.0, 128
    %4168 = vxpose.xlu0.b32.cont [6/16] 0.0, 128
    %4169 = vxpose.xlu0.b32.cont [7/16] 0.0, 128
    %4170 = vxpose.xlu0.b32.cont [8/16] 0.0, 128
    %4171 = vxpose.xlu0.b32.cont [9/16] 0.0, 128
    %4172 = vxpose.xlu0.b32.cont [10/16] 0.0, 128
    %4173 = vxpose.xlu0.b32.cont [11/16] 0.0, 128
    %4174 = vxpose.xlu0.b32.cont [12/16] 0.0, 128
    %4175 = vxpose.xlu0.b32.cont [13/16] 0.0, 128
    %4176 = vxpose.xlu0.b32.cont [14/16] 0.0, 128
    %4177 = vxpose.xlu0.b32.cont [15/16] 0.0, 128
    %4178 = vxpose.xlu0.b32.end [16/16] 0.0, 128
    %v4179 = vpop.trf.xlu0
    %v4180 = vpop.trf.xlu0
    %v4181 = vpop.trf.xlu0
    %v4182 = vpop.trf.xlu0
    %v4183 = vpop.trf.xlu0
    %v4184 = vpop.trf.xlu0
    %v4185 = vpop.trf.xlu0
    %v4186 = vpop.trf.xlu0
    %v4187 = vpop.trf.xlu0
    %v4188 = vpop.trf.xlu0
    %v4189 = vpop.trf.xlu0
    %v4190 = vpop.trf.xlu0
    %v4191 = vpop.trf.xlu0
    %v4192 = vpop.trf.xlu0
    %v4193 = vpop.trf.xlu0
    %v4194 = vpop.trf.xlu0
    %v4195 = vpack.c.bf16 %v4148, %v4147
    %v4196 = vpack.c.bf16 %v4150, %v4149
    %v4197 = vpack.c.bf16 %v4152, %v4151
    %v4198 = vpack.c.bf16 %v4154, %v4153
    %v4199 = vpack.c.bf16 %v4156, %v4155
    %v4200 = vpack.c.bf16 %v4158, %v4157
    %v4201 = vpack.c.bf16 %v4160, %v4159
    %v4202 = vpack.c.bf16 %v4162, %v4161
    %v4203 = vpack.c.bf16 %v4180, %v4179
    %v4204 = vpack.c.bf16 %v4182, %v4181
    %v4205 = vpack.c.bf16 %v4184, %v4183
    %v4206 = vpack.c.bf16 %v4186, %v4185
    %v4207 = vpack.c.bf16 %v4188, %v4187
    %v4208 = vpack.c.bf16 %v4190, %v4189
    %v4209 = vpack.c.bf16 %v4192, %v4191
    %v4210 = vpack.c.bf16 %v4194, %v4193
    %v4227 = vunpack.c.l.b16 %v4195
    %v4228 = vunpack.c.h.b16 %v4195
    %v4229 = vunpack.c.l.b16 %v4196
    %v4230 = vunpack.c.h.b16 %v4196
    %v4231 = vunpack.c.l.b16 %v4197
    %v4232 = vunpack.c.h.b16 %v4197
    %v4233 = vunpack.c.l.b16 %v4198
    %v4234 = vunpack.c.h.b16 %v4198
    %v4235 = vunpack.c.l.b16 %v4199
    %v4236 = vunpack.c.h.b16 %v4199
    %v4237 = vunpack.c.l.b16 %v4200
    %v4238 = vunpack.c.h.b16 %v4200
    %v4239 = vunpack.c.l.b16 %v4201
    %v4240 = vunpack.c.h.b16 %v4201
    %v4241 = vunpack.c.l.b16 %v4202
    %v4242 = vunpack.c.h.b16 %v4202
    %v4243 = vunpack.c.l.b16 %v4203
    %v4244 = vunpack.c.h.b16 %v4203
    %v4245 = vunpack.c.l.b16 %v4204
    %v4246 = vunpack.c.h.b16 %v4204
    %v4247 = vunpack.c.l.b16 %v4205
    %v4248 = vunpack.c.h.b16 %v4205
    %v4249 = vunpack.c.l.b16 %v4206
    %v4250 = vunpack.c.h.b16 %v4206
    %v4251 = vunpack.c.l.b16 %v4207
    %v4252 = vunpack.c.h.b16 %v4207
    %v4253 = vunpack.c.l.b16 %v4208
    %v4254 = vunpack.c.h.b16 %v4208
    %v4255 = vunpack.c.l.b16 %v4209
    %v4256 = vunpack.c.h.b16 %v4209
    %v4257 = vunpack.c.l.b16 %v4210
    %v4258 = vunpack.c.h.b16 %v4210
    %v4259 = vpack.c.b16 %v4227, %v4227
    %v4260 = vpack.c.b16 %v4228, %v4228
    %v4261 = vpack.c.b16 %v4229, %v4229
    %v4262 = vpack.c.b16 %v4230, %v4230
    %v4263 = vpack.c.b16 %v4231, %v4231
    %v4264 = vpack.c.b16 %v4232, %v4232
    %v4265 = vpack.c.b16 %v4233, %v4233
    %v4266 = vpack.c.b16 %v4234, %v4234
    %v4267 = vpack.c.b16 %v4235, %v4235
    %v4268 = vpack.c.b16 %v4236, %v4236
    %v4269 = vpack.c.b16 %v4237, %v4237
    %v4270 = vpack.c.b16 %v4238, %v4238
    %v4271 = vpack.c.b16 %v4239, %v4239
    %v4272 = vpack.c.b16 %v4240, %v4240
    %v4273 = vpack.c.b16 %v4241, %v4241
    %v4274 = vpack.c.b16 %v4242, %v4242
    %v4275 = vpack.c.b16 %v4243, %v4243
    %v4276 = vpack.c.b16 %v4244, %v4244
    %v4277 = vpack.c.b16 %v4245, %v4245
    %v4278 = vpack.c.b16 %v4246, %v4246
    %v4279 = vpack.c.b16 %v4247, %v4247
    %v4280 = vpack.c.b16 %v4248, %v4248
    %v4281 = vpack.c.b16 %v4249, %v4249
    %v4282 = vpack.c.b16 %v4250, %v4250
    %v4283 = vpack.c.b16 %v4251, %v4251
    %v4284 = vpack.c.b16 %v4252, %v4252
    %v4285 = vpack.c.b16 %v4253, %v4253
    %v4286 = vpack.c.b16 %v4254, %v4254
    %v4287 = vpack.c.b16 %v4255, %v4255
    %v4288 = vpack.c.b16 %v4256, %v4256
    %v4289 = vpack.c.b16 %v4257, %v4257
    %v4290 = vpack.c.b16 %v4258, %v4258
    %4323 = vst.msk [vmem:[%s4025 + $0x8] sm:$0xf] %vm50, %v4259
    %4324 = vst.msk [vmem:[%s4025 + $0xc] sm:$0xf] %vm50, %v4260
    %4325 = vst.msk [vmem:[%s4025 + $0x1c] sm:$0xf] %vm50, %v4261
    %4326 = vst.msk [vmem:[%s4025 + $0x20] sm:$0xf] %vm50, %v4262
    %4327 = vst.msk [vmem:[%s4025 + $0x30] sm:$0xf] %vm50, %v4263
    %4328 = vst.msk [vmem:[%s4025 + $0x34] sm:$0xf] %vm50, %v4264
    %4329 = vst.msk [vmem:[%s4025 + $0x44] sm:$0xf] %vm50, %v4265
    %4330 = vst.msk [vmem:[%s4025 + $0x48] sm:$0xf] %vm50, %v4266
    %4331 = vst.msk [vmem:[%s4025 + $0x58] sm:$0xf] %vm50, %v4267
    %4332 = vst.msk [vmem:[%s4025 + $0x5c] sm:$0xf] %vm50, %v4268
    %4333 = vst.msk [vmem:[%s4025 + $0x6c] sm:$0xf] %vm50, %v4269
    %4334 = vst.msk [vmem:[%s4025 + $0x70] sm:$0xf] %vm50, %v4270
    %4335 = vst.msk [vmem:[%s4025 + $0x80] sm:$0xf] %vm50, %v4271
    %4336 = vst.msk [vmem:[%s4025 + $0x84] sm:$0xf] %vm50, %v4272
    %4337 = vst.msk [vmem:[%s4025 + $0x94] sm:$0xf] %vm50, %v4273
    %4338 = vst.msk [vmem:[%s4025 + $0x98] sm:$0xf] %vm50, %v4274
    %4339 = vst.msk [vmem:[%s4025 + $0xa8] sm:$0xf] %vm50, %v4275
    %4340 = vst.msk [vmem:[%s4025 + $0xac] sm:$0xf] %vm50, %v4276
    %4341 = vst.msk [vmem:[%s4025 + $0xbc] sm:$0xf] %vm50, %v4277
    %4342 = vst.msk [vmem:[%s4025 + $0xc0] sm:$0xf] %vm50, %v4278
    %4343 = vst.msk [vmem:[%s4025 + $0xd0] sm:$0xf] %vm50, %v4279
    %4344 = vst.msk [vmem:[%s4025 + $0xd4] sm:$0xf] %vm50, %v4280
    %4345 = vst.msk [vmem:[%s4025 + $0xe4] sm:$0xf] %vm50, %v4281
    %4346 = vst.msk [vmem:[%s4025 + $0xe8] sm:$0xf] %vm50, %v4282
    %4347 = vst.msk [vmem:[%s4025 + $0xf8] sm:$0xf] %vm50, %v4283
    %4348 = vst.msk [vmem:[%s4025 + $0xfc] sm:$0xf] %vm50, %v4284
    %4349 = vst.msk [vmem:[%s4025 + $0x10c] sm:$0xf] %vm50, %v4285
    %4350 = vst.msk [vmem:[%s4025 + $0x110] sm:$0xf] %vm50, %v4286
    %4351 = vst.msk [vmem:[%s4025 + $0x120] sm:$0xf] %vm50, %v4287
    %4352 = vst.msk [vmem:[%s4025 + $0x124] sm:$0xf] %vm50, %v4288
    %4353 = vst.msk [vmem:[%s4025 + $0x134] sm:$0xf] %vm50, %v4289
    %4354 = vst.msk [vmem:[%s4025 + $0x138] sm:$0xf] %vm50, %v4290
    %v4355 = vld [vmem:[%s4007 + $0x4] sm:$0x8]
    %v4356 = vld [vmem:[%s4007 + $0x8] sm:$0xf]
    %v4357 = vld [vmem:[%s4007 + $0xc] sm:$0xf]
    %v4358 = vld [vmem:[%s4007 + $0x18] sm:$0x8]
    %v4359 = vld [vmem:[%s4007 + $0x1c] sm:$0xf]
    %v4360 = vld [vmem:[%s4007 + $0x20] sm:$0xf]
    %v4361 = vld [vmem:[%s4007 + $0x2c] sm:$0x8]
    %v4362 = vld [vmem:[%s4007 + $0x30] sm:$0xf]
    %v4363 = vld [vmem:[%s4007 + $0x34] sm:$0xf]
    %v4364 = vld [vmem:[%s4007 + $0x40] sm:$0x8]
    %v4365 = vld [vmem:[%s4007 + $0x44] sm:$0xf]
    %v4366 = vld [vmem:[%s4007 + $0x48] sm:$0xf]
    %v4367 = vld [vmem:[%s4007 + $0x54] sm:$0x8]
    %v4368 = vld [vmem:[%s4007 + $0x58] sm:$0xf]
    %v4369 = vld [vmem:[%s4007 + $0x5c] sm:$0xf]
    %v4370 = vld [vmem:[%s4007 + $0x68] sm:$0x8]
    %v4371 = vld [vmem:[%s4007 + $0x6c] sm:$0xf]
    %v4372 = vld [vmem:[%s4007 + $0x70] sm:$0xf]
    %v4373 = vld [vmem:[%s4007 + $0x7c] sm:$0x8]
    %v4374 = vld [vmem:[%s4007 + $0x80] sm:$0xf]
    %v4375 = vld [vmem:[%s4007 + $0x84] sm:$0xf]
    %v4376 = vld [vmem:[%s4007 + $0x90] sm:$0x8]
    %v4377 = vld [vmem:[%s4007 + $0x94] sm:$0xf]
    %v4378 = vld [vmem:[%s4007 + $0x98] sm:$0xf]
    %v4379 = vld [vmem:[%s4007 + $0xa4] sm:$0x8]
    %v4380 = vld [vmem:[%s4007 + $0xa8] sm:$0xf]
    %v4381 = vld [vmem:[%s4007 + $0xac] sm:$0xf]
    %v4382 = vld [vmem:[%s4007 + $0xb8] sm:$0x8]
    %v4383 = vld [vmem:[%s4007 + $0xbc] sm:$0xf]
    %v4384 = vld [vmem:[%s4007 + $0xc0] sm:$0xf]
    %v4385 = vld [vmem:[%s4007 + $0xcc] sm:$0x8]
    %v4386 = vld [vmem:[%s4007 + $0xd0] sm:$0xf]
    %v4387 = vld [vmem:[%s4007 + $0xd4] sm:$0xf]
    %v4388 = vld [vmem:[%s4007 + $0xe0] sm:$0x8]
    %v4389 = vld [vmem:[%s4007 + $0xe4] sm:$0xf]
    %v4390 = vld [vmem:[%s4007 + $0xe8] sm:$0xf]
    %v4391 = vld [vmem:[%s4007 + $0xf4] sm:$0x8]
    %v4392 = vld [vmem:[%s4007 + $0xf8] sm:$0xf]
    %v4393 = vld [vmem:[%s4007 + $0xfc] sm:$0xf]
    %v4394 = vld [vmem:[%s4007 + $0x108] sm:$0x8]
    %v4395 = vld [vmem:[%s4007 + $0x10c] sm:$0xf]
    %v4396 = vld [vmem:[%s4007 + $0x110] sm:$0xf]
    %v4397 = vld [vmem:[%s4007 + $0x11c] sm:$0x8]
    %v4398 = vld [vmem:[%s4007 + $0x120] sm:$0xf]
    %v4399 = vld [vmem:[%s4007 + $0x124] sm:$0xf]
    %v4400 = vld [vmem:[%s4007 + $0x130] sm:$0x8]
    %v4401 = vld [vmem:[%s4007 + $0x134] sm:$0xf]
    %v4402 = vld [vmem:[%s4007 + $0x138] sm:$0xf]
    %v4404 = vshrl.u32 %v4355, 16
    %v4406 = vrot.slane %v4404, 7
    %v4407 = vrot.slane %v4406, 4
    %v4409 = vshrl.u32 %v4356, 16
    %v4411 = vrot.slane %v4409, 7
    %v4412 = vshll.u32 %v4356, 16
    %v4414 = vor.u32 %v4411, %v4412
    %v4415 = vsel %vm446, %v4407, %v4414
    %v4416 = vrot.slane %v4411, 4
    %v4418 = vshrl.u32 %v4357, 16
    %v4420 = vrot.slane %v4418, 7
    %v4421 = vshll.u32 %v4357, 16
    %v4423 = vor.u32 %v4420, %v4421
    %v4424 = vsel %vm446, %v4416, %v4423
    %v4426 = vshrl.u32 %v4358, 16
    %v4428 = vrot.slane %v4426, 7
    %v4429 = vrot.slane %v4428, 4
    %v4431 = vshrl.u32 %v4359, 16
    %v4433 = vrot.slane %v4431, 7
    %v4434 = vshll.u32 %v4359, 16
    %v4436 = vor.u32 %v4433, %v4434
    %v4437 = vsel %vm446, %v4429, %v4436
    %v4438 = vrot.slane %v4433, 4
    %v4440 = vshrl.u32 %v4360, 16
    %v4442 = vrot.slane %v4440, 7
    %v4443 = vshll.u32 %v4360, 16
    %v4445 = vor.u32 %v4442, %v4443
    %v4446 = vsel %vm446, %v4438, %v4445
    %v4448 = vshrl.u32 %v4361, 16
    %v4450 = vrot.slane %v4448, 7
    %v4451 = vrot.slane %v4450, 4
    %v4453 = vshrl.u32 %v4362, 16
    %v4455 = vrot.slane %v4453, 7
    %v4456 = vshll.u32 %v4362, 16
    %v4458 = vor.u32 %v4455, %v4456
    %v4459 = vsel %vm446, %v4451, %v4458
    %v4460 = vrot.slane %v4455, 4
    %v4462 = vshrl.u32 %v4363, 16
    %v4464 = vrot.slane %v4462, 7
    %v4465 = vshll.u32 %v4363, 16
    %v4467 = vor.u32 %v4464, %v4465
    %v4468 = vsel %vm446, %v4460, %v4467
    %v4470 = vshrl.u32 %v4364, 16
    %v4472 = vrot.slane %v4470, 7
    %v4473 = vrot.slane %v4472, 4
    %v4475 = vshrl.u32 %v4365, 16
    %v4477 = vrot.slane %v4475, 7
    %v4478 = vshll.u32 %v4365, 16
    %v4480 = vor.u32 %v4477, %v4478
    %v4481 = vsel %vm446, %v4473, %v4480
    %v4482 = vrot.slane %v4477, 4
    %v4484 = vshrl.u32 %v4366, 16
    %v4486 = vrot.slane %v4484, 7
    %v4487 = vshll.u32 %v4366, 16
    %v4489 = vor.u32 %v4486, %v4487
    %v4490 = vsel %vm446, %v4482, %v4489
    %v4492 = vshrl.u32 %v4367, 16
    %v4494 = vrot.slane %v4492, 7
    %v4495 = vrot.slane %v4494, 4
    %v4497 = vshrl.u32 %v4368, 16
    %v4499 = vrot.slane %v4497, 7
    %v4500 = vshll.u32 %v4368, 16
    %v4502 = vor.u32 %v4499, %v4500
    %v4503 = vsel %vm446, %v4495, %v4502
    %v4504 = vrot.slane %v4499, 4
    %v4506 = vshrl.u32 %v4369, 16
    %v4508 = vrot.slane %v4506, 7
    %v4509 = vshll.u32 %v4369, 16
    %v4511 = vor.u32 %v4508, %v4509
    %v4512 = vsel %vm446, %v4504, %v4511
    %v4514 = vshrl.u32 %v4370, 16
    %v4516 = vrot.slane %v4514, 7
    %v4517 = vrot.slane %v4516, 4
    %v4519 = vshrl.u32 %v4371, 16
    %v4521 = vrot.slane %v4519, 7
    %v4522 = vshll.u32 %v4371, 16
    %v4524 = vor.u32 %v4521, %v4522
    %v4525 = vsel %vm446, %v4517, %v4524
    %v4526 = vrot.slane %v4521, 4
    %v4528 = vshrl.u32 %v4372, 16
    %v4530 = vrot.slane %v4528, 7
    %v4531 = vshll.u32 %v4372, 16
    %v4533 = vor.u32 %v4530, %v4531
    %v4534 = vsel %vm446, %v4526, %v4533
    %v4536 = vshrl.u32 %v4373, 16
    %v4538 = vrot.slane %v4536, 7
    %v4539 = vrot.slane %v4538, 4
    %v4541 = vshrl.u32 %v4374, 16
    %v4543 = vrot.slane %v4541, 7
    %v4544 = vshll.u32 %v4374, 16
    %v4546 = vor.u32 %v4543, %v4544
    %v4547 = vsel %vm446, %v4539, %v4546
    %v4548 = vrot.slane %v4543, 4
    %v4550 = vshrl.u32 %v4375, 16
    %v4552 = vrot.slane %v4550, 7
    %v4553 = vshll.u32 %v4375, 16
    %v4555 = vor.u32 %v4552, %v4553
    %v4556 = vsel %vm446, %v4548, %v4555
    %v4558 = vshrl.u32 %v4376, 16
    %v4560 = vrot.slane %v4558, 7
    %v4561 = vrot.slane %v4560, 4
    %v4563 = vshrl.u32 %v4377, 16
    %v4565 = vrot.slane %v4563, 7
    %v4566 = vshll.u32 %v4377, 16
    %v4568 = vor.u32 %v4565, %v4566
    %v4569 = vsel %vm446, %v4561, %v4568
    %v4570 = vrot.slane %v4565, 4
    %v4572 = vshrl.u32 %v4378, 16
    %v4574 = vrot.slane %v4572, 7
    %v4575 = vshll.u32 %v4378, 16
    %v4577 = vor.u32 %v4574, %v4575
    %v4578 = vsel %vm446, %v4570, %v4577
    %v4580 = vshrl.u32 %v4379, 16
    %v4582 = vrot.slane %v4580, 7
    %v4583 = vrot.slane %v4582, 4
    %v4585 = vshrl.u32 %v4380, 16
    %v4587 = vrot.slane %v4585, 7
    %v4588 = vshll.u32 %v4380, 16
    %v4590 = vor.u32 %v4587, %v4588
    %v4591 = vsel %vm446, %v4583, %v4590
    %v4592 = vrot.slane %v4587, 4
    %v4594 = vshrl.u32 %v4381, 16
    %v4596 = vrot.slane %v4594, 7
    %v4597 = vshll.u32 %v4381, 16
    %v4599 = vor.u32 %v4596, %v4597
    %v4600 = vsel %vm446, %v4592, %v4599
    %v4602 = vshrl.u32 %v4382, 16
    %v4604 = vrot.slane %v4602, 7
    %v4605 = vrot.slane %v4604, 4
    %v4607 = vshrl.u32 %v4383, 16
    %v4609 = vrot.slane %v4607, 7
    %v4610 = vshll.u32 %v4383, 16
    %v4612 = vor.u32 %v4609, %v4610
    %v4613 = vsel %vm446, %v4605, %v4612
    %v4614 = vrot.slane %v4609, 4
    %v4616 = vshrl.u32 %v4384, 16
    %v4618 = vrot.slane %v4616, 7
    %v4619 = vshll.u32 %v4384, 16
    %v4621 = vor.u32 %v4618, %v4619
    %v4622 = vsel %vm446, %v4614, %v4621
    %v4624 = vshrl.u32 %v4385, 16
    %v4626 = vrot.slane %v4624, 7
    %v4627 = vrot.slane %v4626, 4
    %v4629 = vshrl.u32 %v4386, 16
    %v4631 = vrot.slane %v4629, 7
    %v4632 = vshll.u32 %v4386, 16
    %v4634 = vor.u32 %v4631, %v4632
    %v4635 = vsel %vm446, %v4627, %v4634
    %v4636 = vrot.slane %v4631, 4
    %v4638 = vshrl.u32 %v4387, 16
    %v4640 = vrot.slane %v4638, 7
    %v4641 = vshll.u32 %v4387, 16
    %v4643 = vor.u32 %v4640, %v4641
    %v4644 = vsel %vm446, %v4636, %v4643
    %v4646 = vshrl.u32 %v4388, 16
    %v4648 = vrot.slane %v4646, 7
    %v4649 = vrot.slane %v4648, 4
    %v4651 = vshrl.u32 %v4389, 16
    %v4653 = vrot.slane %v4651, 7
    %v4654 = vshll.u32 %v4389, 16
    %v4656 = vor.u32 %v4653, %v4654
    %v4657 = vsel %vm446, %v4649, %v4656
    %v4658 = vrot.slane %v4653, 4
    %v4660 = vshrl.u32 %v4390, 16
    %v4662 = vrot.slane %v4660, 7
    %v4663 = vshll.u32 %v4390, 16
    %v4665 = vor.u32 %v4662, %v4663
    %v4666 = vsel %vm446, %v4658, %v4665
    %v4668 = vshrl.u32 %v4391, 16
    %v4670 = vrot.slane %v4668, 7
    %v4671 = vrot.slane %v4670, 4
    %v4673 = vshrl.u32 %v4392, 16
    %v4675 = vrot.slane %v4673, 7
    %v4676 = vshll.u32 %v4392, 16
    %v4678 = vor.u32 %v4675, %v4676
    %v4679 = vsel %vm446, %v4671, %v4678
    %v4680 = vrot.slane %v4675, 4
    %v4682 = vshrl.u32 %v4393, 16
    %v4684 = vrot.slane %v4682, 7
    %v4685 = vshll.u32 %v4393, 16
    %v4687 = vor.u32 %v4684, %v4685
    %v4688 = vsel %vm446, %v4680, %v4687
    %v4690 = vshrl.u32 %v4394, 16
    %v4692 = vrot.slane %v4690, 7
    %v4693 = vrot.slane %v4692, 4
    %v4695 = vshrl.u32 %v4395, 16
    %v4697 = vrot.slane %v4695, 7
    %v4698 = vshll.u32 %v4395, 16
    %v4700 = vor.u32 %v4697, %v4698
    %v4701 = vsel %vm446, %v4693, %v4700
    %v4702 = vrot.slane %v4697, 4
    %v4704 = vshrl.u32 %v4396, 16
    %v4706 = vrot.slane %v4704, 7
    %v4707 = vshll.u32 %v4396, 16
    %v4709 = vor.u32 %v4706, %v4707
    %v4710 = vsel %vm446, %v4702, %v4709
    %v4712 = vshrl.u32 %v4397, 16
    %v4714 = vrot.slane %v4712, 7
    %v4715 = vrot.slane %v4714, 4
    %v4717 = vshrl.u32 %v4398, 16
    %v4719 = vrot.slane %v4717, 7
    %v4720 = vshll.u32 %v4398, 16
    %v4722 = vor.u32 %v4719, %v4720
    %v4723 = vsel %vm446, %v4715, %v4722
    %v4724 = vrot.slane %v4719, 4
    %v4726 = vshrl.u32 %v4399, 16
    %v4728 = vrot.slane %v4726, 7
    %v4729 = vshll.u32 %v4399, 16
    %v4731 = vor.u32 %v4728, %v4729
    %v4732 = vsel %vm446, %v4724, %v4731
    %v4734 = vshrl.u32 %v4400, 16
    %v4736 = vrot.slane %v4734, 7
    %v4737 = vrot.slane %v4736, 4
    %v4739 = vshrl.u32 %v4401, 16
    %v4741 = vrot.slane %v4739, 7
    %v4742 = vshll.u32 %v4401, 16
    %v4744 = vor.u32 %v4741, %v4742
    %v4745 = vsel %vm446, %v4737, %v4744
    %v4746 = vrot.slane %v4741, 4
    %v4748 = vshrl.u32 %v4402, 16
    %v4750 = vrot.slane %v4748, 7
    %v4751 = vshll.u32 %v4402, 16
    %v4753 = vor.u32 %v4750, %v4751
    %v4754 = vsel %vm446, %v4746, %v4753
    %v4755 = vunpack.c.l.b16 %v4415
    %v4756 = vunpack.c.l.b16 %v4424
    %v4757 = vunpack.c.l.b16 %v4437
    %v4758 = vunpack.c.l.b16 %v4446
    %v4759 = vunpack.c.l.b16 %v4459
    %v4760 = vunpack.c.l.b16 %v4468
    %v4761 = vunpack.c.l.b16 %v4481
    %v4762 = vunpack.c.l.b16 %v4490
    %v4763 = vunpack.c.l.b16 %v4503
    %v4764 = vunpack.c.l.b16 %v4512
    %v4765 = vunpack.c.l.b16 %v4525
    %v4766 = vunpack.c.l.b16 %v4534
    %v4767 = vunpack.c.l.b16 %v4547
    %v4768 = vunpack.c.l.b16 %v4556
    %v4769 = vunpack.c.l.b16 %v4569
    %v4770 = vunpack.c.l.b16 %v4578
    %v4771 = vunpack.c.l.b16 %v4591
    %v4772 = vunpack.c.l.b16 %v4600
    %v4773 = vunpack.c.l.b16 %v4613
    %v4774 = vunpack.c.l.b16 %v4622
    %v4775 = vunpack.c.l.b16 %v4635
    %v4776 = vunpack.c.l.b16 %v4644
    %v4777 = vunpack.c.l.b16 %v4657
    %v4778 = vunpack.c.l.b16 %v4666
    %v4779 = vunpack.c.l.b16 %v4679
    %v4780 = vunpack.c.l.b16 %v4688
    %v4781 = vunpack.c.l.b16 %v4701
    %v4782 = vunpack.c.l.b16 %v4710
    %v4783 = vunpack.c.l.b16 %v4723
    %v4784 = vunpack.c.l.b16 %v4732
    %v4785 = vunpack.c.l.b16 %v4745
    %v4786 = vunpack.c.l.b16 %v4754
    %v4787 = vpack.c.b16 %v4756, %v4755
    %v4788 = vpack.c.b16 %v4758, %v4757
    %v4789 = vpack.c.b16 %v4760, %v4759
    %v4790 = vpack.c.b16 %v4762, %v4761
    %v4791 = vpack.c.b16 %v4764, %v4763
    %v4792 = vpack.c.b16 %v4766, %v4765
    %v4793 = vpack.c.b16 %v4768, %v4767
    %v4794 = vpack.c.b16 %v4770, %v4769
    %v4795 = vpack.c.b16 %v4772, %v4771
    %v4796 = vpack.c.b16 %v4774, %v4773
    %v4797 = vpack.c.b16 %v4776, %v4775
    %v4798 = vpack.c.b16 %v4778, %v4777
    %v4799 = vpack.c.b16 %v4780, %v4779
    %v4800 = vpack.c.b16 %v4782, %v4781
    %v4801 = vpack.c.b16 %v4784, %v4783
    %v4802 = vpack.c.b16 %v4786, %v4785
    %4819 = vst.msk [vmem:[#allocation3 + $0x180] sm:$0xff] %vm863, %v4787
    %4820 = vst.msk [vmem:[#allocation3 + $0x198] sm:$0xff] %vm863, %v4788
    %4821 = vst.msk [vmem:[#allocation3 + $0x1b0] sm:$0xff] %vm863, %v4789
    %4822 = vst.msk [vmem:[#allocation3 + $0x1c8] sm:$0xff] %vm863, %v4790
    %4823 = vst.msk [vmem:[#allocation3 + $0x1e0] sm:$0xff] %vm863, %v4791
    %4824 = vst.msk [vmem:[#allocation3 + $0x1f8] sm:$0xff] %vm863, %v4792
    %4825 = vst.msk [vmem:[#allocation3 + $0x210] sm:$0xff] %vm863, %v4793
    %4826 = vst.msk [vmem:[#allocation3 + $0x228] sm:$0xff] %vm863, %v4794
    %4827 = vst.msk [vmem:[#allocation3 + $0x240] sm:$0xff] %vm863, %v4795
    %4828 = vst.msk [vmem:[#allocation3 + $0x258] sm:$0xff] %vm863, %v4796
    %4829 = vst.msk [vmem:[#allocation3 + $0x270] sm:$0xff] %vm863, %v4797
    %4830 = vst.msk [vmem:[#allocation3 + $0x288] sm:$0xff] %vm863, %v4798
    %4831 = vst.msk [vmem:[#allocation3 + $0x2a0] sm:$0xff] %vm863, %v4799
    %4832 = vst.msk [vmem:[#allocation3 + $0x2b8] sm:$0xff] %vm863, %v4800
    %4833 = vst.msk [vmem:[#allocation3 + $0x2d0] sm:$0xff] %vm863, %v4801
    %4834 = vst.msk [vmem:[#allocation3 + $0x2e8] sm:$0xff] %vm863, %v4802
    %v4835 = vld [vmem:[%s4007 + $0x8] sm:$0xf]
    %v4836 = vld [vmem:[%s4007 + $0xc] sm:$0xf]
    %v4837 = vld [vmem:[%s4007 + $0x1c] sm:$0xf]
    %v4838 = vld [vmem:[%s4007 + $0x20] sm:$0xf]
    %v4839 = vld [vmem:[%s4007 + $0x30] sm:$0xf]
    %v4840 = vld [vmem:[%s4007 + $0x34] sm:$0xf]
    %v4841 = vld [vmem:[%s4007 + $0x44] sm:$0xf]
    %v4842 = vld [vmem:[%s4007 + $0x48] sm:$0xf]
    %v4843 = vld [vmem:[%s4007 + $0x58] sm:$0xf]
    %v4844 = vld [vmem:[%s4007 + $0x5c] sm:$0xf]
    %v4845 = vld [vmem:[%s4007 + $0x6c] sm:$0xf]
    %v4846 = vld [vmem:[%s4007 + $0x70] sm:$0xf]
    %v4847 = vld [vmem:[%s4007 + $0x80] sm:$0xf]
    %v4848 = vld [vmem:[%s4007 + $0x84] sm:$0xf]
    %v4849 = vld [vmem:[%s4007 + $0x94] sm:$0xf]
    %v4850 = vld [vmem:[%s4007 + $0x98] sm:$0xf]
    %v4851 = vld [vmem:[%s4007 + $0xa8] sm:$0xf]
    %v4852 = vld [vmem:[%s4007 + $0xac] sm:$0xf]
    %v4853 = vld [vmem:[%s4007 + $0xbc] sm:$0xf]
    %v4854 = vld [vmem:[%s4007 + $0xc0] sm:$0xf]
    %v4855 = vld [vmem:[%s4007 + $0xd0] sm:$0xf]
    %v4856 = vld [vmem:[%s4007 + $0xd4] sm:$0xf]
    %v4857 = vld [vmem:[%s4007 + $0xe4] sm:$0xf]
    %v4858 = vld [vmem:[%s4007 + $0xe8] sm:$0xf]
    %v4859 = vld [vmem:[%s4007 + $0xf8] sm:$0xf]
    %v4860 = vld [vmem:[%s4007 + $0xfc] sm:$0xf]
    %v4861 = vld [vmem:[%s4007 + $0x10c] sm:$0xf]
    %v4862 = vld [vmem:[%s4007 + $0x110] sm:$0xf]
    %v4863 = vld [vmem:[%s4007 + $0x120] sm:$0xf]
    %v4864 = vld [vmem:[%s4007 + $0x124] sm:$0xf]
    %v4865 = vld [vmem:[%s4007 + $0x134] sm:$0xf]
    %v4866 = vld [vmem:[%s4007 + $0x138] sm:$0xf]
    %v4899 = vunpack.c.l.b16 %v4835
    %v4900 = vunpack.c.l.b16 %v4836
    %v4901 = vunpack.c.l.b16 %v4837
    %v4902 = vunpack.c.l.b16 %v4838
    %v4903 = vunpack.c.l.b16 %v4839
    %v4904 = vunpack.c.l.b16 %v4840
    %v4905 = vunpack.c.l.b16 %v4841
    %v4906 = vunpack.c.l.b16 %v4842
    %v4907 = vunpack.c.l.b16 %v4843
    %v4908 = vunpack.c.l.b16 %v4844
    %v4909 = vunpack.c.l.b16 %v4845
    %v4910 = vunpack.c.l.b16 %v4846
    %v4911 = vunpack.c.l.b16 %v4847
    %v4912 = vunpack.c.l.b16 %v4848
    %v4913 = vunpack.c.l.b16 %v4849
    %v4914 = vunpack.c.l.b16 %v4850
    %v4915 = vunpack.c.l.b16 %v4851
    %v4916 = vunpack.c.l.b16 %v4852
    %v4917 = vunpack.c.l.b16 %v4853
    %v4918 = vunpack.c.l.b16 %v4854
    %v4919 = vunpack.c.l.b16 %v4855
    %v4920 = vunpack.c.l.b16 %v4856
    %v4921 = vunpack.c.l.b16 %v4857
    %v4922 = vunpack.c.l.b16 %v4858
    %v4923 = vunpack.c.l.b16 %v4859
    %v4924 = vunpack.c.l.b16 %v4860
    %v4925 = vunpack.c.l.b16 %v4861
    %v4926 = vunpack.c.l.b16 %v4862
    %v4927 = vunpack.c.l.b16 %v4863
    %v4928 = vunpack.c.l.b16 %v4864
    %v4929 = vunpack.c.l.b16 %v4865
    %v4930 = vunpack.c.l.b16 %v4866
    %v4931 = vpack.c.b16 %v4900, %v4899
    %v4932 = vpack.c.b16 %v4902, %v4901
    %v4933 = vpack.c.b16 %v4904, %v4903
    %v4934 = vpack.c.b16 %v4906, %v4905
    %v4935 = vpack.c.b16 %v4908, %v4907
    %v4936 = vpack.c.b16 %v4910, %v4909
    %v4937 = vpack.c.b16 %v4912, %v4911
    %v4938 = vpack.c.b16 %v4914, %v4913
    %v4939 = vpack.c.b16 %v4916, %v4915
    %v4940 = vpack.c.b16 %v4918, %v4917
    %v4941 = vpack.c.b16 %v4920, %v4919
    %v4942 = vpack.c.b16 %v4922, %v4921
    %v4943 = vpack.c.b16 %v4924, %v4923
    %v4944 = vpack.c.b16 %v4926, %v4925
    %v4945 = vpack.c.b16 %v4928, %v4927
    %v4946 = vpack.c.b16 %v4930, %v4929
    %4947 = vrot.lane.b32.xlu0 %v4931, 32
    %v4948 = vpop.permute.xlu0 %4947
    %4949 = vrot.lane.b32.xlu0 %v4932, 32
    %v4950 = vpop.permute.xlu0 %4949
    %4951 = vrot.lane.b32.xlu0 %v4933, 32
    %v4952 = vpop.permute.xlu0 %4951
    %4953 = vrot.lane.b32.xlu0 %v4934, 32
    %v4954 = vpop.permute.xlu0 %4953
    %4955 = vrot.lane.b32.xlu0 %v4935, 32
    %v4956 = vpop.permute.xlu0 %4955
    %4957 = vrot.lane.b32.xlu0 %v4936, 32
    %v4958 = vpop.permute.xlu0 %4957
    %4959 = vrot.lane.b32.xlu0 %v4937, 32
    %v4960 = vpop.permute.xlu0 %4959
    %4961 = vrot.lane.b32.xlu0 %v4938, 32
    %v4962 = vpop.permute.xlu0 %4961
    %4963 = vrot.lane.b32.xlu0 %v4939, 32
    %v4964 = vpop.permute.xlu0 %4963
    %4965 = vrot.lane.b32.xlu0 %v4940, 32
    %v4966 = vpop.permute.xlu0 %4965
    %4967 = vrot.lane.b32.xlu0 %v4941, 32
    %v4968 = vpop.permute.xlu0 %4967
    %4969 = vrot.lane.b32.xlu0 %v4942, 32
    %v4970 = vpop.permute.xlu0 %4969
    %4971 = vrot.lane.b32.xlu0 %v4943, 32
    %v4972 = vpop.permute.xlu0 %4971
    %4973 = vrot.lane.b32.xlu0 %v4944, 32
    %v4974 = vpop.permute.xlu0 %4973
    %4975 = vrot.lane.b32.xlu0 %v4945, 32
    %v4976 = vpop.permute.xlu0 %4975
    %4977 = vrot.lane.b32.xlu0 %v4946, 32
    %v4978 = vpop.permute.xlu0 %4977
    %4995 = vst.msk [vmem:[#allocation3 + $0x180] sm:$0xff] %vm1040, %v4948
    %4996 = vst.msk [vmem:[#allocation3 + $0x198] sm:$0xff] %vm1040, %v4950
    %4997 = vst.msk [vmem:[#allocation3 + $0x1b0] sm:$0xff] %vm1040, %v4952
    %4998 = vst.msk [vmem:[#allocation3 + $0x1c8] sm:$0xff] %vm1040, %v4954
    %4999 = vst.msk [vmem:[#allocation3 + $0x1e0] sm:$0xff] %vm1040, %v4956
    %5000 = vst.msk [vmem:[#allocation3 + $0x1f8] sm:$0xff] %vm1040, %v4958
    %5001 = vst.msk [vmem:[#allocation3 + $0x210] sm:$0xff] %vm1040, %v4960
    %5002 = vst.msk [vmem:[#allocation3 + $0x228] sm:$0xff] %vm1040, %v4962
    %5003 = vst.msk [vmem:[#allocation3 + $0x240] sm:$0xff] %vm1040, %v4964
    %5004 = vst.msk [vmem:[#allocation3 + $0x258] sm:$0xff] %vm1040, %v4966
    %5005 = vst.msk [vmem:[#allocation3 + $0x270] sm:$0xff] %vm1040, %v4968
    %5006 = vst.msk [vmem:[#allocation3 + $0x288] sm:$0xff] %vm1040, %v4970
    %5007 = vst.msk [vmem:[#allocation3 + $0x2a0] sm:$0xff] %vm1040, %v4972
    %5008 = vst.msk [vmem:[#allocation3 + $0x2b8] sm:$0xff] %vm1040, %v4974
    %5009 = vst.msk [vmem:[#allocation3 + $0x2d0] sm:$0xff] %vm1040, %v4976
    %5010 = vst.msk [vmem:[#allocation3 + $0x2e8] sm:$0xff] %vm1040, %v4978
    %v5011 = vld [vmem:[%s4007 + $0x8] sm:$0xf]
    %v5012 = vld [vmem:[%s4007 + $0xc] sm:$0xf]
    %v5013 = vld [vmem:[%s4007 + $0x10] sm:$0x1]
    %v5014 = vld [vmem:[%s4007 + $0x1c] sm:$0xf]
    %v5015 = vld [vmem:[%s4007 + $0x20] sm:$0xf]
    %v5016 = vld [vmem:[%s4007 + $0x24] sm:$0x1]
    %v5017 = vld [vmem:[%s4007 + $0x30] sm:$0xf]
    %v5018 = vld [vmem:[%s4007 + $0x34] sm:$0xf]
    %v5019 = vld [vmem:[%s4007 + $0x38] sm:$0x1]
    %v5020 = vld [vmem:[%s4007 + $0x44] sm:$0xf]
    %v5021 = vld [vmem:[%s4007 + $0x48] sm:$0xf]
    %v5022 = vld [vmem:[%s4007 + $0x4c] sm:$0x1]
    %v5023 = vld [vmem:[%s4007 + $0x58] sm:$0xf]
    %v5024 = vld [vmem:[%s4007 + $0x5c] sm:$0xf]
    %v5025 = vld [vmem:[%s4007 + $0x60] sm:$0x1]
    %v5026 = vld [vmem:[%s4007 + $0x6c] sm:$0xf]
    %v5027 = vld [vmem:[%s4007 + $0x70] sm:$0xf]
    %v5028 = vld [vmem:[%s4007 + $0x74] sm:$0x1]
    %v5029 = vld [vmem:[%s4007 + $0x80] sm:$0xf]
    %v5030 = vld [vmem:[%s4007 + $0x84] sm:$0xf]
    %v5031 = vld [vmem:[%s4007 + $0x88] sm:$0x1]
    %v5032 = vld [vmem:[%s4007 + $0x94] sm:$0xf]
    %v5033 = vld [vmem:[%s4007 + $0x98] sm:$0xf]
    %v5034 = vld [vmem:[%s4007 + $0x9c] sm:$0x1]
    %v5035 = vld [vmem:[%s4007 + $0xa8] sm:$0xf]
    %v5036 = vld [vmem:[%s4007 + $0xac] sm:$0xf]
    %v5037 = vld [vmem:[%s4007 + $0xb0] sm:$0x1]
    %v5038 = vld [vmem:[%s4007 + $0xbc] sm:$0xf]
    %v5039 = vld [vmem:[%s4007 + $0xc0] sm:$0xf]
    %v5040 = vld [vmem:[%s4007 + $0xc4] sm:$0x1]
    %v5041 = vld [vmem:[%s4007 + $0xd0] sm:$0xf]
    %v5042 = vld [vmem:[%s4007 + $0xd4] sm:$0xf]
    %v5043 = vld [vmem:[%s4007 + $0xd8] sm:$0x1]
    %v5044 = vld [vmem:[%s4007 + $0xe4] sm:$0xf]
    %v5045 = vld [vmem:[%s4007 + $0xe8] sm:$0xf]
    %v5046 = vld [vmem:[%s4007 + $0xec] sm:$0x1]
    %v5047 = vld [vmem:[%s4007 + $0xf8] sm:$0xf]
    %v5048 = vld [vmem:[%s4007 + $0xfc] sm:$0xf]
    %v5049 = vld [vmem:[%s4007 + $0x100] sm:$0x1]
    %v5050 = vld [vmem:[%s4007 + $0x10c] sm:$0xf]
    %v5051 = vld [vmem:[%s4007 + $0x110] sm:$0xf]
    %v5052 = vld [vmem:[%s4007 + $0x114] sm:$0x1]
    %v5053 = vld [vmem:[%s4007 + $0x120] sm:$0xf]
    %v5054 = vld [vmem:[%s4007 + $0x124] sm:$0xf]
    %v5055 = vld [vmem:[%s4007 + $0x128] sm:$0x1]
    %v5056 = vld [vmem:[%s4007 + $0x134] sm:$0xf]
    %v5057 = vld [vmem:[%s4007 + $0x138] sm:$0xf]
    %v5058 = vld [vmem:[%s4007 + $0x13c] sm:$0x1]
    %v5060 = vshrl.u32 %v5011, 16
    %v5062 = vrot.slane %v5060, 4
    %v5063 = vshll.u32 %v5011, 16
    %v5065 = vrot.slane %v5063, 5
    %v5066 = vor.u32 %v5062, %v5065
    %v5067 = vrot.slane %v5066, 4
    %v5069 = vshll.u32 %v5012, 16
    %v5071 = vrot.slane %v5069, 5
    %v5072 = vsel %vm1107, %v5067, %v5071
    %v5073 = vshrl.u32 %v5012, 16
    %v5075 = vrot.slane %v5073, 4
    %v5076 = vor.u32 %v5075, %v5071
    %v5077 = vrot.slane %v5076, 4
    %v5079 = vshll.u32 %v5013, 16
    %v5081 = vrot.slane %v5079, 5
    %v5082 = vsel %vm1107, %v5077, %v5081
    %v5084 = vshrl.u32 %v5014, 16
    %v5086 = vrot.slane %v5084, 4
    %v5087 = vshll.u32 %v5014, 16
    %v5089 = vrot.slane %v5087, 5
    %v5090 = vor.u32 %v5086, %v5089
    %v5091 = vrot.slane %v5090, 4
    %v5093 = vshll.u32 %v5015, 16
    %v5095 = vrot.slane %v5093, 5
    %v5096 = vsel %vm1107, %v5091, %v5095
    %v5097 = vshrl.u32 %v5015, 16
    %v5099 = vrot.slane %v5097, 4
    %v5100 = vor.u32 %v5099, %v5095
    %v5101 = vrot.slane %v5100, 4
    %v5103 = vshll.u32 %v5016, 16
    %v5105 = vrot.slane %v5103, 5
    %v5106 = vsel %vm1107, %v5101, %v5105
    %v5108 = vshrl.u32 %v5017, 16
    %v5110 = vrot.slane %v5108, 4
    %v5111 = vshll.u32 %v5017, 16
    %v5113 = vrot.slane %v5111, 5
    %v5114 = vor.u32 %v5110, %v5113
    %v5115 = vrot.slane %v5114, 4
    %v5117 = vshll.u32 %v5018, 16
    %v5119 = vrot.slane %v5117, 5
    %v5120 = vsel %vm1107, %v5115, %v5119
    %v5121 = vshrl.u32 %v5018, 16
    %v5123 = vrot.slane %v5121, 4
    %v5124 = vor.u32 %v5123, %v5119
    %v5125 = vrot.slane %v5124, 4
    %v5127 = vshll.u32 %v5019, 16
    %v5129 = vrot.slane %v5127, 5
    %v5130 = vsel %vm1107, %v5125, %v5129
    %v5132 = vshrl.u32 %v5020, 16
    %v5134 = vrot.slane %v5132, 4
    %v5135 = vshll.u32 %v5020, 16
    %v5137 = vrot.slane %v5135, 5
    %v5138 = vor.u32 %v5134, %v5137
    %v5139 = vrot.slane %v5138, 4
    %v5141 = vshll.u32 %v5021, 16
    %v5143 = vrot.slane %v5141, 5
    %v5144 = vsel %vm1107, %v5139, %v5143
    %v5145 = vshrl.u32 %v5021, 16
    %v5147 = vrot.slane %v5145, 4
    %v5148 = vor.u32 %v5147, %v5143
    %v5149 = vrot.slane %v5148, 4
    %v5151 = vshll.u32 %v5022, 16
    %v5153 = vrot.slane %v5151, 5
    %v5154 = vsel %vm1107, %v5149, %v5153
    %v5156 = vshrl.u32 %v5023, 16
    %v5158 = vrot.slane %v5156, 4
    %v5159 = vshll.u32 %v5023, 16
    %v5161 = vrot.slane %v5159, 5
    %v5162 = vor.u32 %v5158, %v5161
    %v5163 = vrot.slane %v5162, 4
    %v5165 = vshll.u32 %v5024, 16
    %v5167 = vrot.slane %v5165, 5
    %v5168 = vsel %vm1107, %v5163, %v5167
    %v5169 = vshrl.u32 %v5024, 16
    %v5171 = vrot.slane %v5169, 4
    %v5172 = vor.u32 %v5171, %v5167
    %v5173 = vrot.slane %v5172, 4
    %v5175 = vshll.u32 %v5025, 16
    %v5177 = vrot.slane %v5175, 5
    %v5178 = vsel %vm1107, %v5173, %v5177
    %v5180 = vshrl.u32 %v5026, 16
    %v5182 = vrot.slane %v5180, 4
    %v5183 = vshll.u32 %v5026, 16
    %v5185 = vrot.slane %v5183, 5
    %v5186 = vor.u32 %v5182, %v5185
    %v5187 = vrot.slane %v5186, 4
    %v5189 = vshll.u32 %v5027, 16
    %v5191 = vrot.slane %v5189, 5
    %v5192 = vsel %vm1107, %v5187, %v5191
    %v5193 = vshrl.u32 %v5027, 16
    %v5195 = vrot.slane %v5193, 4
    %v5196 = vor.u32 %v5195, %v5191
    %v5197 = vrot.slane %v5196, 4
    %v5199 = vshll.u32 %v5028, 16
    %v5201 = vrot.slane %v5199, 5
    %v5202 = vsel %vm1107, %v5197, %v5201
    %v5204 = vshrl.u32 %v5029, 16
    %v5206 = vrot.slane %v5204, 4
    %v5207 = vshll.u32 %v5029, 16
    %v5209 = vrot.slane %v5207, 5
    %v5210 = vor.u32 %v5206, %v5209
    %v5211 = vrot.slane %v5210, 4
    %v5213 = vshll.u32 %v5030, 16
    %v5215 = vrot.slane %v5213, 5
    %v5216 = vsel %vm1107, %v5211, %v5215
    %v5217 = vshrl.u32 %v5030, 16
    %v5219 = vrot.slane %v5217, 4
    %v5220 = vor.u32 %v5219, %v5215
    %v5221 = vrot.slane %v5220, 4
    %v5223 = vshll.u32 %v5031, 16
    %v5225 = vrot.slane %v5223, 5
    %v5226 = vsel %vm1107, %v5221, %v5225
    %v5228 = vshrl.u32 %v5032, 16
    %v5230 = vrot.slane %v5228, 4
    %v5231 = vshll.u32 %v5032, 16
    %v5233 = vrot.slane %v5231, 5
    %v5234 = vor.u32 %v5230, %v5233
    %v5235 = vrot.slane %v5234, 4
    %v5237 = vshll.u32 %v5033, 16
    %v5239 = vrot.slane %v5237, 5
    %v5240 = vsel %vm1107, %v5235, %v5239
    %v5241 = vshrl.u32 %v5033, 16
    %v5243 = vrot.slane %v5241, 4
    %v5244 = vor.u32 %v5243, %v5239
    %v5245 = vrot.slane %v5244, 4
    %v5247 = vshll.u32 %v5034, 16
    %v5249 = vrot.slane %v5247, 5
    %v5250 = vsel %vm1107, %v5245, %v5249
    %v5252 = vshrl.u32 %v5035, 16
    %v5254 = vrot.slane %v5252, 4
    %v5255 = vshll.u32 %v5035, 16
    %v5257 = vrot.slane %v5255, 5
    %v5258 = vor.u32 %v5254, %v5257
    %v5259 = vrot.slane %v5258, 4
    %v5261 = vshll.u32 %v5036, 16
    %v5263 = vrot.slane %v5261, 5
    %v5264 = vsel %vm1107, %v5259, %v5263
    %v5265 = vshrl.u32 %v5036, 16
    %v5267 = vrot.slane %v5265, 4
    %v5268 = vor.u32 %v5267, %v5263
    %v5269 = vrot.slane %v5268, 4
    %v5271 = vshll.u32 %v5037, 16
    %v5273 = vrot.slane %v5271, 5
    %v5274 = vsel %vm1107, %v5269, %v5273
    %v5276 = vshrl.u32 %v5038, 16
    %v5278 = vrot.slane %v5276, 4
    %v5279 = vshll.u32 %v5038, 16
    %v5281 = vrot.slane %v5279, 5
    %v5282 = vor.u32 %v5278, %v5281
    %v5283 = vrot.slane %v5282, 4
    %v5285 = vshll.u32 %v5039, 16
    %v5287 = vrot.slane %v5285, 5
    %v5288 = vsel %vm1107, %v5283, %v5287
    %v5289 = vshrl.u32 %v5039, 16
    %v5291 = vrot.slane %v5289, 4
    %v5292 = vor.u32 %v5291, %v5287
    %v5293 = vrot.slane %v5292, 4
    %v5295 = vshll.u32 %v5040, 16
    %v5297 = vrot.slane %v5295, 5
    %v5298 = vsel %vm1107, %v5293, %v5297
    %v5300 = vshrl.u32 %v5041, 16
    %v5302 = vrot.slane %v5300, 4
    %v5303 = vshll.u32 %v5041, 16
    %v5305 = vrot.slane %v5303, 5
    %v5306 = vor.u32 %v5302, %v5305
    %v5307 = vrot.slane %v5306, 4
    %v5309 = vshll.u32 %v5042, 16
    %v5311 = vrot.slane %v5309, 5
    %v5312 = vsel %vm1107, %v5307, %v5311
    %v5313 = vshrl.u32 %v5042, 16
    %v5315 = vrot.slane %v5313, 4
    %v5316 = vor.u32 %v5315, %v5311
    %v5317 = vrot.slane %v5316, 4
    %v5319 = vshll.u32 %v5043, 16
    %v5321 = vrot.slane %v5319, 5
    %v5322 = vsel %vm1107, %v5317, %v5321
    %v5324 = vshrl.u32 %v5044, 16
    %v5326 = vrot.slane %v5324, 4
    %v5327 = vshll.u32 %v5044, 16
    %v5329 = vrot.slane %v5327, 5
    %v5330 = vor.u32 %v5326, %v5329
    %v5331 = vrot.slane %v5330, 4
    %v5333 = vshll.u32 %v5045, 16
    %v5335 = vrot.slane %v5333, 5
    %v5336 = vsel %vm1107, %v5331, %v5335
    %v5337 = vshrl.u32 %v5045, 16
    %v5339 = vrot.slane %v5337, 4
    %v5340 = vor.u32 %v5339, %v5335
    %v5341 = vrot.slane %v5340, 4
    %v5343 = vshll.u32 %v5046, 16
    %v5345 = vrot.slane %v5343, 5
    %v5346 = vsel %vm1107, %v5341, %v5345
    %v5348 = vshrl.u32 %v5047, 16
    %v5350 = vrot.slane %v5348, 4
    %v5351 = vshll.u32 %v5047, 16
    %v5353 = vrot.slane %v5351, 5
    %v5354 = vor.u32 %v5350, %v5353
    %v5355 = vrot.slane %v5354, 4
    %v5357 = vshll.u32 %v5048, 16
    %v5359 = vrot.slane %v5357, 5
    %v5360 = vsel %vm1107, %v5355, %v5359
    %v5361 = vshrl.u32 %v5048, 16
    %v5363 = vrot.slane %v5361, 4
    %v5364 = vor.u32 %v5363, %v5359
    %v5365 = vrot.slane %v5364, 4
    %v5367 = vshll.u32 %v5049, 16
    %v5369 = vrot.slane %v5367, 5
    %v5370 = vsel %vm1107, %v5365, %v5369
    %v5372 = vshrl.u32 %v5050, 16
    %v5374 = vrot.slane %v5372, 4
    %v5375 = vshll.u32 %v5050, 16
    %v5377 = vrot.slane %v5375, 5
    %v5378 = vor.u32 %v5374, %v5377
    %v5379 = vrot.slane %v5378, 4
    %v5381 = vshll.u32 %v5051, 16
    %v5383 = vrot.slane %v5381, 5
    %v5384 = vsel %vm1107, %v5379, %v5383
    %v5385 = vshrl.u32 %v5051, 16
    %v5387 = vrot.slane %v5385, 4
    %v5388 = vor.u32 %v5387, %v5383
    %v5389 = vrot.slane %v5388, 4
    %v5391 = vshll.u32 %v5052, 16
    %v5393 = vrot.slane %v5391, 5
    %v5394 = vsel %vm1107, %v5389, %v5393
    %v5396 = vshrl.u32 %v5053, 16
    %v5398 = vrot.slane %v5396, 4
    %v5399 = vshll.u32 %v5053, 16
    %v5401 = vrot.slane %v5399, 5
    %v5402 = vor.u32 %v5398, %v5401
    %v5403 = vrot.slane %v5402, 4
    %v5405 = vshll.u32 %v5054, 16
    %v5407 = vrot.slane %v5405, 5
    %v5408 = vsel %vm1107, %v5403, %v5407
    %v5409 = vshrl.u32 %v5054, 16
    %v5411 = vrot.slane %v5409, 4
    %v5412 = vor.u32 %v5411, %v5407
    %v5413 = vrot.slane %v5412, 4
    %v5415 = vshll.u32 %v5055, 16
    %v5417 = vrot.slane %v5415, 5
    %v5418 = vsel %vm1107, %v5413, %v5417
    %v5420 = vshrl.u32 %v5056, 16
    %v5422 = vrot.slane %v5420, 4
    %v5423 = vshll.u32 %v5056, 16
    %v5425 = vrot.slane %v5423, 5
    %v5426 = vor.u32 %v5422, %v5425
    %v5427 = vrot.slane %v5426, 4
    %v5429 = vshll.u32 %v5057, 16
    %v5431 = vrot.slane %v5429, 5
    %v5432 = vsel %vm1107, %v5427, %v5431
    %v5433 = vshrl.u32 %v5057, 16
    %v5435 = vrot.slane %v5433, 4
    %v5436 = vor.u32 %v5435, %v5431
    %v5437 = vrot.slane %v5436, 4
    %v5439 = vshll.u32 %v5058, 16
    %v5441 = vrot.slane %v5439, 5
    %v5442 = vsel %vm1107, %v5437, %v5441
    %v5443 = vunpack.c.l.b16 %v5072
    %v5444 = vunpack.c.l.b16 %v5082
    %v5445 = vunpack.c.l.b16 %v5096
    %v5446 = vunpack.c.l.b16 %v5106
    %v5447 = vunpack.c.l.b16 %v5120
    %v5448 = vunpack.c.l.b16 %v5130
    %v5449 = vunpack.c.l.b16 %v5144
    %v5450 = vunpack.c.l.b16 %v5154
    %v5451 = vunpack.c.l.b16 %v5168
    %v5452 = vunpack.c.l.b16 %v5178
    %v5453 = vunpack.c.l.b16 %v5192
    %v5454 = vunpack.c.l.b16 %v5202
    %v5455 = vunpack.c.l.b16 %v5216
    %v5456 = vunpack.c.l.b16 %v5226
    %v5457 = vunpack.c.l.b16 %v5240
    %v5458 = vunpack.c.l.b16 %v5250
    %v5459 = vunpack.c.l.b16 %v5264
    %v5460 = vunpack.c.l.b16 %v5274
    %v5461 = vunpack.c.l.b16 %v5288
    %v5462 = vunpack.c.l.b16 %v5298
    %v5463 = vunpack.c.l.b16 %v5312
    %v5464 = vunpack.c.l.b16 %v5322
    %v5465 = vunpack.c.l.b16 %v5336
    %v5466 = vunpack.c.l.b16 %v5346
    %v5467 = vunpack.c.l.b16 %v5360
    %v5468 = vunpack.c.l.b16 %v5370
    %v5469 = vunpack.c.l.b16 %v5384
    %v5470 = vunpack.c.l.b16 %v5394
    %v5471 = vunpack.c.l.b16 %v5408
    %v5472 = vunpack.c.l.b16 %v5418
    %v5473 = vunpack.c.l.b16 %v5432
    %v5474 = vunpack.c.l.b16 %v5442
    %v5475 = vpack.c.b16 %v5444, %v5443
    %v5476 = vpack.c.b16 %v5446, %v5445
    %v5477 = vpack.c.b16 %v5448, %v5447
    %v5478 = vpack.c.b16 %v5450, %v5449
    %v5479 = vpack.c.b16 %v5452, %v5451
    %v5480 = vpack.c.b16 %v5454, %v5453
    %v5481 = vpack.c.b16 %v5456, %v5455
    %v5482 = vpack.c.b16 %v5458, %v5457
    %v5483 = vpack.c.b16 %v5460, %v5459
    %v5484 = vpack.c.b16 %v5462, %v5461
    %v5485 = vpack.c.b16 %v5464, %v5463
    %v5486 = vpack.c.b16 %v5466, %v5465
    %v5487 = vpack.c.b16 %v5468, %v5467
    %v5488 = vpack.c.b16 %v5470, %v5469
    %v5489 = vpack.c.b16 %v5472, %v5471
    %v5490 = vpack.c.b16 %v5474, %v5473
    %5491 = vrot.lane.b32.xlu0 %v5475, 64
    %v5492 = vpop.permute.xlu0 %5491
    %5493 = vrot.lane.b32.xlu0 %v5476, 64
    %v5494 = vpop.permute.xlu0 %5493
    %5495 = vrot.lane.b32.xlu0 %v5477, 64
    %v5496 = vpop.permute.xlu0 %5495
    %5497 = vrot.lane.b32.xlu0 %v5478, 64
    %v5498 = vpop.permute.xlu0 %5497
    %5499 = vrot.lane.b32.xlu0 %v5479, 64
    %v5500 = vpop.permute.xlu0 %5499
    %5501 = vrot.lane.b32.xlu0 %v5480, 64
    %v5502 = vpop.permute.xlu0 %5501
    %5503 = vrot.lane.b32.xlu0 %v5481, 64
    %v5504 = vpop.permute.xlu0 %5503
    %5505 = vrot.lane.b32.xlu0 %v5482, 64
    %v5506 = vpop.permute.xlu0 %5505
    %5507 = vrot.lane.b32.xlu0 %v5483, 64
    %v5508 = vpop.permute.xlu0 %5507
    %5509 = vrot.lane.b32.xlu0 %v5484, 64
    %v5510 = vpop.permute.xlu0 %5509
    %5511 = vrot.lane.b32.xlu0 %v5485, 64
    %v5512 = vpop.permute.xlu0 %5511
    %5513 = vrot.lane.b32.xlu0 %v5486, 64
    %v5514 = vpop.permute.xlu0 %5513
    %5515 = vrot.lane.b32.xlu0 %v5487, 64
    %v5516 = vpop.permute.xlu0 %5515
    %5517 = vrot.lane.b32.xlu0 %v5488, 64
    %v5518 = vpop.permute.xlu0 %5517
    %5519 = vrot.lane.b32.xlu0 %v5489, 64
    %v5520 = vpop.permute.xlu0 %5519
    %5521 = vrot.lane.b32.xlu0 %v5490, 64
    %v5522 = vpop.permute.xlu0 %5521
    %5539 = vst.msk [vmem:[#allocation3 + $0x180] sm:$0xff] %vm1588, %v5492
    %5540 = vst.msk [vmem:[#allocation3 + $0x198] sm:$0xff] %vm1588, %v5494
    %5541 = vst.msk [vmem:[#allocation3 + $0x1b0] sm:$0xff] %vm1588, %v5496
    %5542 = vst.msk [vmem:[#allocation3 + $0x1c8] sm:$0xff] %vm1588, %v5498
    %5543 = vst.msk [vmem:[#allocation3 + $0x1e0] sm:$0xff] %vm1588, %v5500
    %5544 = vst.msk [vmem:[#allocation3 + $0x1f8] sm:$0xff] %vm1588, %v5502
    %5545 = vst.msk [vmem:[#allocation3 + $0x210] sm:$0xff] %vm1588, %v5504
    %5546 = vst.msk [vmem:[#allocation3 + $0x228] sm:$0xff] %vm1588, %v5506
    %5547 = vst.msk [vmem:[#allocation3 + $0x240] sm:$0xff] %vm1588, %v5508
    %5548 = vst.msk [vmem:[#allocation3 + $0x258] sm:$0xff] %vm1588, %v5510
    %5549 = vst.msk [vmem:[#allocation3 + $0x270] sm:$0xff] %vm1588, %v5512
    %5550 = vst.msk [vmem:[#allocation3 + $0x288] sm:$0xff] %vm1588, %v5514
    %5551 = vst.msk [vmem:[#allocation3 + $0x2a0] sm:$0xff] %vm1588, %v5516
    %5552 = vst.msk [vmem:[#allocation3 + $0x2b8] sm:$0xff] %vm1588, %v5518
    %5553 = vst.msk [vmem:[#allocation3 + $0x2d0] sm:$0xff] %vm1588, %v5520
    %5554 = vst.msk [vmem:[#allocation3 + $0x2e8] sm:$0xff] %vm1588, %v5522
    %v5555 = vld [vmem:[%s4025 + $0x4] sm:$0x8]
    %v5556 = vld [vmem:[%s4025 + $0x8] sm:$0xf]
    %v5557 = vld [vmem:[%s4025 + $0xc] sm:$0xf]
    %v5558 = vld [vmem:[%s4025 + $0x18] sm:$0x8]
    %v5559 = vld [vmem:[%s4025 + $0x1c] sm:$0xf]
    %v5560 = vld [vmem:[%s4025 + $0x20] sm:$0xf]
    %v5561 = vld [vmem:[%s4025 + $0x2c] sm:$0x8]
    %v5562 = vld [vmem:[%s4025 + $0x30] sm:$0xf]
    %v5563 = vld [vmem:[%s4025 + $0x34] sm:$0xf]
    %v5564 = vld [vmem:[%s4025 + $0x40] sm:$0x8]
    %v5565 = vld [vmem:[%s4025 + $0x44] sm:$0xf]
    %v5566 = vld [vmem:[%s4025 + $0x48] sm:$0xf]
    %v5567 = vld [vmem:[%s4025 + $0x54] sm:$0x8]
    %v5568 = vld [vmem:[%s4025 + $0x58] sm:$0xf]
    %v5569 = vld [vmem:[%s4025 + $0x5c] sm:$0xf]
    %v5570 = vld [vmem:[%s4025 + $0x68] sm:$0x8]
    %v5571 = vld [vmem:[%s4025 + $0x6c] sm:$0xf]
    %v5572 = vld [vmem:[%s4025 + $0x70] sm:$0xf]
    %v5573 = vld [vmem:[%s4025 + $0x7c] sm:$0x8]
    %v5574 = vld [vmem:[%s4025 + $0x80] sm:$0xf]
    %v5575 = vld [vmem:[%s4025 + $0x84] sm:$0xf]
    %v5576 = vld [vmem:[%s4025 + $0x90] sm:$0x8]
    %v5577 = vld [vmem:[%s4025 + $0x94] sm:$0xf]
    %v5578 = vld [vmem:[%s4025 + $0x98] sm:$0xf]
    %v5579 = vld [vmem:[%s4025 + $0xa4] sm:$0x8]
    %v5580 = vld [vmem:[%s4025 + $0xa8] sm:$0xf]
    %v5581 = vld [vmem:[%s4025 + $0xac] sm:$0xf]
    %v5582 = vld [vmem:[%s4025 + $0xb8] sm:$0x8]
    %v5583 = vld [vmem:[%s4025 + $0xbc] sm:$0xf]
    %v5584 = vld [vmem:[%s4025 + $0xc0] sm:$0xf]
    %v5585 = vld [vmem:[%s4025 + $0xcc] sm:$0x8]
    %v5586 = vld [vmem:[%s4025 + $0xd0] sm:$0xf]
    %v5587 = vld [vmem:[%s4025 + $0xd4] sm:$0xf]
    %v5588 = vld [vmem:[%s4025 + $0xe0] sm:$0x8]
    %v5589 = vld [vmem:[%s4025 + $0xe4] sm:$0xf]
    %v5590 = vld [vmem:[%s4025 + $0xe8] sm:$0xf]
    %v5591 = vld [vmem:[%s4025 + $0xf4] sm:$0x8]
    %v5592 = vld [vmem:[%s4025 + $0xf8] sm:$0xf]
    %v5593 = vld [vmem:[%s4025 + $0xfc] sm:$0xf]
    %v5594 = vld [vmem:[%s4025 + $0x108] sm:$0x8]
    %v5595 = vld [vmem:[%s4025 + $0x10c] sm:$0xf]
    %v5596 = vld [vmem:[%s4025 + $0x110] sm:$0xf]
    %v5597 = vld [vmem:[%s4025 + $0x11c] sm:$0x8]
    %v5598 = vld [vmem:[%s4025 + $0x120] sm:$0xf]
    %v5599 = vld [vmem:[%s4025 + $0x124] sm:$0xf]
    %v5600 = vld [vmem:[%s4025 + $0x130] sm:$0x8]
    %v5601 = vld [vmem:[%s4025 + $0x134] sm:$0xf]
    %v5602 = vld [vmem:[%s4025 + $0x138] sm:$0xf]
    %v5604 = vshrl.u32 %v5555, 16
    %v5606 = vrot.slane %v5604, 7
    %v5607 = vrot.slane %v5606, 4
    %v5609 = vshrl.u32 %v5556, 16
    %v5611 = vrot.slane %v5609, 7
    %v5612 = vshll.u32 %v5556, 16
    %v5614 = vor.u32 %v5611, %v5612
    %v5615 = vsel %vm446, %v5607, %v5614
    %v5616 = vrot.slane %v5611, 4
    %v5618 = vshrl.u32 %v5557, 16
    %v5620 = vrot.slane %v5618, 7
    %v5621 = vshll.u32 %v5557, 16
    %v5623 = vor.u32 %v5620, %v5621
    %v5624 = vsel %vm446, %v5616, %v5623
    %v5626 = vshrl.u32 %v5558, 16
    %v5628 = vrot.slane %v5626, 7
    %v5629 = vrot.slane %v5628, 4
    %v5631 = vshrl.u32 %v5559, 16
    %v5633 = vrot.slane %v5631, 7
    %v5634 = vshll.u32 %v5559, 16
    %v5636 = vor.u32 %v5633, %v5634
    %v5637 = vsel %vm446, %v5629, %v5636
    %v5638 = vrot.slane %v5633, 4
    %v5640 = vshrl.u32 %v5560, 16
    %v5642 = vrot.slane %v5640, 7
    %v5643 = vshll.u32 %v5560, 16
    %v5645 = vor.u32 %v5642, %v5643
    %v5646 = vsel %vm446, %v5638, %v5645
    %v5648 = vshrl.u32 %v5561, 16
    %v5650 = vrot.slane %v5648, 7
    %v5651 = vrot.slane %v5650, 4
    %v5653 = vshrl.u32 %v5562, 16
    %v5655 = vrot.slane %v5653, 7
    %v5656 = vshll.u32 %v5562, 16
    %v5658 = vor.u32 %v5655, %v5656
    %v5659 = vsel %vm446, %v5651, %v5658
    %v5660 = vrot.slane %v5655, 4
    %v5662 = vshrl.u32 %v5563, 16
    %v5664 = vrot.slane %v5662, 7
    %v5665 = vshll.u32 %v5563, 16
    %v5667 = vor.u32 %v5664, %v5665
    %v5668 = vsel %vm446, %v5660, %v5667
    %v5670 = vshrl.u32 %v5564, 16
    %v5672 = vrot.slane %v5670, 7
    %v5673 = vrot.slane %v5672, 4
    %v5675 = vshrl.u32 %v5565, 16
    %v5677 = vrot.slane %v5675, 7
    %v5678 = vshll.u32 %v5565, 16
    %v5680 = vor.u32 %v5677, %v5678
    %v5681 = vsel %vm446, %v5673, %v5680
    %v5682 = vrot.slane %v5677, 4
    %v5684 = vshrl.u32 %v5566, 16
    %v5686 = vrot.slane %v5684, 7
    %v5687 = vshll.u32 %v5566, 16
    %v5689 = vor.u32 %v5686, %v5687
    %v5690 = vsel %vm446, %v5682, %v5689
    %v5692 = vshrl.u32 %v5567, 16
    %v5694 = vrot.slane %v5692, 7
    %v5695 = vrot.slane %v5694, 4
    %v5697 = vshrl.u32 %v5568, 16
    %v5699 = vrot.slane %v5697, 7
    %v5700 = vshll.u32 %v5568, 16
    %v5702 = vor.u32 %v5699, %v5700
    %v5703 = vsel %vm446, %v5695, %v5702
    %v5704 = vrot.slane %v5699, 4
    %v5706 = vshrl.u32 %v5569, 16
    %v5708 = vrot.slane %v5706, 7
    %v5709 = vshll.u32 %v5569, 16
    %v5711 = vor.u32 %v5708, %v5709
    %v5712 = vsel %vm446, %v5704, %v5711
    %v5714 = vshrl.u32 %v5570, 16
    %v5716 = vrot.slane %v5714, 7
    %v5717 = vrot.slane %v5716, 4
    %v5719 = vshrl.u32 %v5571, 16
    %v5721 = vrot.slane %v5719, 7
    %v5722 = vshll.u32 %v5571, 16
    %v5724 = vor.u32 %v5721, %v5722
    %v5725 = vsel %vm446, %v5717, %v5724
    %v5726 = vrot.slane %v5721, 4
    %v5728 = vshrl.u32 %v5572, 16
    %v5730 = vrot.slane %v5728, 7
    %v5731 = vshll.u32 %v5572, 16
    %v5733 = vor.u32 %v5730, %v5731
    %v5734 = vsel %vm446, %v5726, %v5733
    %v5736 = vshrl.u32 %v5573, 16
    %v5738 = vrot.slane %v5736, 7
    %v5739 = vrot.slane %v5738, 4
    %v5741 = vshrl.u32 %v5574, 16
    %v5743 = vrot.slane %v5741, 7
    %v5744 = vshll.u32 %v5574, 16
    %v5746 = vor.u32 %v5743, %v5744
    %v5747 = vsel %vm446, %v5739, %v5746
    %v5748 = vrot.slane %v5743, 4
    %v5750 = vshrl.u32 %v5575, 16
    %v5752 = vrot.slane %v5750, 7
    %v5753 = vshll.u32 %v5575, 16
    %v5755 = vor.u32 %v5752, %v5753
    %v5756 = vsel %vm446, %v5748, %v5755
    %v5758 = vshrl.u32 %v5576, 16
    %v5760 = vrot.slane %v5758, 7
    %v5761 = vrot.slane %v5760, 4
    %v5763 = vshrl.u32 %v5577, 16
    %v5765 = vrot.slane %v5763, 7
    %v5766 = vshll.u32 %v5577, 16
    %v5768 = vor.u32 %v5765, %v5766
    %v5769 = vsel %vm446, %v5761, %v5768
    %v5770 = vrot.slane %v5765, 4
    %v5772 = vshrl.u32 %v5578, 16
    %v5774 = vrot.slane %v5772, 7
    %v5775 = vshll.u32 %v5578, 16
    %v5777 = vor.u32 %v5774, %v5775
    %v5778 = vsel %vm446, %v5770, %v5777
    %v5780 = vshrl.u32 %v5579, 16
    %v5782 = vrot.slane %v5780, 7
    %v5783 = vrot.slane %v5782, 4
    %v5785 = vshrl.u32 %v5580, 16
    %v5787 = vrot.slane %v5785, 7
    %v5788 = vshll.u32 %v5580, 16
    %v5790 = vor.u32 %v5787, %v5788
    %v5791 = vsel %vm446, %v5783, %v5790
    %v5792 = vrot.slane %v5787, 4
    %v5794 = vshrl.u32 %v5581, 16
    %v5796 = vrot.slane %v5794, 7
    %v5797 = vshll.u32 %v5581, 16
    %v5799 = vor.u32 %v5796, %v5797
    %v5800 = vsel %vm446, %v5792, %v5799
    %v5802 = vshrl.u32 %v5582, 16
    %v5804 = vrot.slane %v5802, 7
    %v5805 = vrot.slane %v5804, 4
    %v5807 = vshrl.u32 %v5583, 16
    %v5809 = vrot.slane %v5807, 7
    %v5810 = vshll.u32 %v5583, 16
    %v5812 = vor.u32 %v5809, %v5810
    %v5813 = vsel %vm446, %v5805, %v5812
    %v5814 = vrot.slane %v5809, 4
    %v5816 = vshrl.u32 %v5584, 16
    %v5818 = vrot.slane %v5816, 7
    %v5819 = vshll.u32 %v5584, 16
    %v5821 = vor.u32 %v5818, %v5819
    %v5822 = vsel %vm446, %v5814, %v5821
    %v5824 = vshrl.u32 %v5585, 16
    %v5826 = vrot.slane %v5824, 7
    %v5827 = vrot.slane %v5826, 4
    %v5829 = vshrl.u32 %v5586, 16
    %v5831 = vrot.slane %v5829, 7
    %v5832 = vshll.u32 %v5586, 16
    %v5834 = vor.u32 %v5831, %v5832
    %v5835 = vsel %vm446, %v5827, %v5834
    %v5836 = vrot.slane %v5831, 4
    %v5838 = vshrl.u32 %v5587, 16
    %v5840 = vrot.slane %v5838, 7
    %v5841 = vshll.u32 %v5587, 16
    %v5843 = vor.u32 %v5840, %v5841
    %v5844 = vsel %vm446, %v5836, %v5843
    %v5846 = vshrl.u32 %v5588, 16
    %v5848 = vrot.slane %v5846, 7
    %v5849 = vrot.slane %v5848, 4
    %v5851 = vshrl.u32 %v5589, 16
    %v5853 = vrot.slane %v5851, 7
    %v5854 = vshll.u32 %v5589, 16
    %v5856 = vor.u32 %v5853, %v5854
    %v5857 = vsel %vm446, %v5849, %v5856
    %v5858 = vrot.slane %v5853, 4
    %v5860 = vshrl.u32 %v5590, 16
    %v5862 = vrot.slane %v5860, 7
    %v5863 = vshll.u32 %v5590, 16
    %v5865 = vor.u32 %v5862, %v5863
    %v5866 = vsel %vm446, %v5858, %v5865
    %v5868 = vshrl.u32 %v5591, 16
    %v5870 = vrot.slane %v5868, 7
    %v5871 = vrot.slane %v5870, 4
    %v5873 = vshrl.u32 %v5592, 16
    %v5875 = vrot.slane %v5873, 7
    %v5876 = vshll.u32 %v5592, 16
    %v5878 = vor.u32 %v5875, %v5876
    %v5879 = vsel %vm446, %v5871, %v5878
    %v5880 = vrot.slane %v5875, 4
    %v5882 = vshrl.u32 %v5593, 16
    %v5884 = vrot.slane %v5882, 7
    %v5885 = vshll.u32 %v5593, 16
    %v5887 = vor.u32 %v5884, %v5885
    %v5888 = vsel %vm446, %v5880, %v5887
    %v5890 = vshrl.u32 %v5594, 16
    %v5892 = vrot.slane %v5890, 7
    %v5893 = vrot.slane %v5892, 4
    %v5895 = vshrl.u32 %v5595, 16
    %v5897 = vrot.slane %v5895, 7
    %v5898 = vshll.u32 %v5595, 16
    %v5900 = vor.u32 %v5897, %v5898
    %v5901 = vsel %vm446, %v5893, %v5900
    %v5902 = vrot.slane %v5897, 4
    %v5904 = vshrl.u32 %v5596, 16
    %v5906 = vrot.slane %v5904, 7
    %v5907 = vshll.u32 %v5596, 16
    %v5909 = vor.u32 %v5906, %v5907
    %v5910 = vsel %vm446, %v5902, %v5909
    %v5912 = vshrl.u32 %v5597, 16
    %v5914 = vrot.slane %v5912, 7
    %v5915 = vrot.slane %v5914, 4
    %v5917 = vshrl.u32 %v5598, 16
    %v5919 = vrot.slane %v5917, 7
    %v5920 = vshll.u32 %v5598, 16
    %v5922 = vor.u32 %v5919, %v5920
    %v5923 = vsel %vm446, %v5915, %v5922
    %v5924 = vrot.slane %v5919, 4
    %v5926 = vshrl.u32 %v5599, 16
    %v5928 = vrot.slane %v5926, 7
    %v5929 = vshll.u32 %v5599, 16
    %v5931 = vor.u32 %v5928, %v5929
    %v5932 = vsel %vm446, %v5924, %v5931
    %v5934 = vshrl.u32 %v5600, 16
    %v5936 = vrot.slane %v5934, 7
    %v5937 = vrot.slane %v5936, 4
    %v5939 = vshrl.u32 %v5601, 16
    %v5941 = vrot.slane %v5939, 7
    %v5942 = vshll.u32 %v5601, 16
    %v5944 = vor.u32 %v5941, %v5942
    %v5945 = vsel %vm446, %v5937, %v5944
    %v5946 = vrot.slane %v5941, 4
    %v5948 = vshrl.u32 %v5602, 16
    %v5950 = vrot.slane %v5948, 7
    %v5951 = vshll.u32 %v5602, 16
    %v5953 = vor.u32 %v5950, %v5951
    %v5954 = vsel %vm446, %v5946, %v5953
    %v5955 = vunpack.c.l.b16 %v5615
    %v5956 = vunpack.c.l.b16 %v5624
    %v5957 = vunpack.c.l.b16 %v5637
    %v5958 = vunpack.c.l.b16 %v5646
    %v5959 = vunpack.c.l.b16 %v5659
    %v5960 = vunpack.c.l.b16 %v5668
    %v5961 = vunpack.c.l.b16 %v5681
    %v5962 = vunpack.c.l.b16 %v5690
    %v5963 = vunpack.c.l.b16 %v5703
    %v5964 = vunpack.c.l.b16 %v5712
    %v5965 = vunpack.c.l.b16 %v5725
    %v5966 = vunpack.c.l.b16 %v5734
    %v5967 = vunpack.c.l.b16 %v5747
    %v5968 = vunpack.c.l.b16 %v5756
    %v5969 = vunpack.c.l.b16 %v5769
    %v5970 = vunpack.c.l.b16 %v5778
    %v5971 = vunpack.c.l.b16 %v5791
    %v5972 = vunpack.c.l.b16 %v5800
    %v5973 = vunpack.c.l.b16 %v5813
    %v5974 = vunpack.c.l.b16 %v5822
    %v5975 = vunpack.c.l.b16 %v5835
    %v5976 = vunpack.c.l.b16 %v5844
    %v5977 = vunpack.c.l.b16 %v5857
    %v5978 = vunpack.c.l.b16 %v5866
    %v5979 = vunpack.c.l.b16 %v5879
    %v5980 = vunpack.c.l.b16 %v5888
    %v5981 = vunpack.c.l.b16 %v5901
    %v5982 = vunpack.c.l.b16 %v5910
    %v5983 = vunpack.c.l.b16 %v5923
    %v5984 = vunpack.c.l.b16 %v5932
    %v5985 = vunpack.c.l.b16 %v5945
    %v5986 = vunpack.c.l.b16 %v5954
    %v5987 = vpack.c.b16 %v5956, %v5955
    %v5988 = vpack.c.b16 %v5958, %v5957
    %v5989 = vpack.c.b16 %v5960, %v5959
    %v5990 = vpack.c.b16 %v5962, %v5961
    %v5991 = vpack.c.b16 %v5964, %v5963
    %v5992 = vpack.c.b16 %v5966, %v5965
    %v5993 = vpack.c.b16 %v5968, %v5967
    %v5994 = vpack.c.b16 %v5970, %v5969
    %v5995 = vpack.c.b16 %v5972, %v5971
    %v5996 = vpack.c.b16 %v5974, %v5973
    %v5997 = vpack.c.b16 %v5976, %v5975
    %v5998 = vpack.c.b16 %v5978, %v5977
    %v5999 = vpack.c.b16 %v5980, %v5979
    %v6000 = vpack.c.b16 %v5982, %v5981
    %v6001 = vpack.c.b16 %v5984, %v5983
    %v6002 = vpack.c.b16 %v5986, %v5985
    %6003 = vrot.lane.b32.xlu0 %v5987, 96
    %v6004 = vpop.permute.xlu0 %6003
    %6005 = vrot.lane.b32.xlu0 %v5988, 96
    %v6006 = vpop.permute.xlu0 %6005
    %6007 = vrot.lane.b32.xlu0 %v5989, 96
    %v6008 = vpop.permute.xlu0 %6007
    %6009 = vrot.lane.b32.xlu0 %v5990, 96
    %v6010 = vpop.permute.xlu0 %6009
    %6011 = vrot.lane.b32.xlu0 %v5991, 96
    %v6012 = vpop.permute.xlu0 %6011
    %6013 = vrot.lane.b32.xlu0 %v5992, 96
    %v6014 = vpop.permute.xlu0 %6013
    %6015 = vrot.lane.b32.xlu0 %v5993, 96
    %v6016 = vpop.permute.xlu0 %6015
    %6017 = vrot.lane.b32.xlu0 %v5994, 96
    %v6018 = vpop.permute.xlu0 %6017
    %6019 = vrot.lane.b32.xlu0 %v5995, 96
    %v6020 = vpop.permute.xlu0 %6019
    %6021 = vrot.lane.b32.xlu0 %v5996, 96
    %v6022 = vpop.permute.xlu0 %6021
    %6023 = vrot.lane.b32.xlu0 %v5997, 96
    %v6024 = vpop.permute.xlu0 %6023
    %6025 = vrot.lane.b32.xlu0 %v5998, 96
    %v6026 = vpop.permute.xlu0 %6025
    %6027 = vrot.lane.b32.xlu0 %v5999, 96
    %v6028 = vpop.permute.xlu0 %6027
    %6029 = vrot.lane.b32.xlu0 %v6000, 96
    %v6030 = vpop.permute.xlu0 %6029
    %6031 = vrot.lane.b32.xlu0 %v6001, 96
    %v6032 = vpop.permute.xlu0 %6031
    %6033 = vrot.lane.b32.xlu0 %v6002, 96
    %v6034 = vpop.permute.xlu0 %6033
    %6051 = vst.msk [vmem:[#allocation3 + $0x180] sm:$0xff] %vm2101, %v6004
    %6052 = vst.msk [vmem:[#allocation3 + $0x198] sm:$0xff] %vm2101, %v6006
    %6053 = vst.msk [vmem:[#allocation3 + $0x1b0] sm:$0xff] %vm2101, %v6008
    %6054 = vst.msk [vmem:[#allocation3 + $0x1c8] sm:$0xff] %vm2101, %v6010
    %6055 = vst.msk [vmem:[#allocation3 + $0x1e0] sm:$0xff] %vm2101, %v6012
    %6056 = vst.msk [vmem:[#allocation3 + $0x1f8] sm:$0xff] %vm2101, %v6014
    %6057 = vst.msk [vmem:[#allocation3 + $0x210] sm:$0xff] %vm2101, %v6016
    %6058 = vst.msk [vmem:[#allocation3 + $0x228] sm:$0xff] %vm2101, %v6018
    %6059 = vst.msk [vmem:[#allocation3 + $0x240] sm:$0xff] %vm2101, %v6020
    %6060 = vst.msk [vmem:[#allocation3 + $0x258] sm:$0xff] %vm2101, %v6022
    %6061 = vst.msk [vmem:[#allocation3 + $0x270] sm:$0xff] %vm2101, %v6024
    %6062 = vst.msk [vmem:[#allocation3 + $0x288] sm:$0xff] %vm2101, %v6026
    %6063 = vst.msk [vmem:[#allocation3 + $0x2a0] sm:$0xff] %vm2101, %v6028
    %6064 = vst.msk [vmem:[#allocation3 + $0x2b8] sm:$0xff] %vm2101, %v6030
    %6065 = vst.msk [vmem:[#allocation3 + $0x2d0] sm:$0xff] %vm2101, %v6032
    %6066 = vst.msk [vmem:[#allocation3 + $0x2e8] sm:$0xff] %vm2101, %v6034
    %v6067 = vld [vmem:[%s4025 + $0x8] sm:$0xf]
    %v6068 = vld [vmem:[%s4025 + $0xc] sm:$0xf]
    %v6069 = vld [vmem:[%s4025 + $0x1c] sm:$0xf]
    %v6070 = vld [vmem:[%s4025 + $0x20] sm:$0xf]
    %v6071 = vld [vmem:[%s4025 + $0x30] sm:$0xf]
    %v6072 = vld [vmem:[%s4025 + $0x34] sm:$0xf]
    %v6073 = vld [vmem:[%s4025 + $0x44] sm:$0xf]
    %v6074 = vld [vmem:[%s4025 + $0x48] sm:$0xf]
    %v6075 = vld [vmem:[%s4025 + $0x58] sm:$0xf]
    %v6076 = vld [vmem:[%s4025 + $0x5c] sm:$0xf]
    %v6077 = vld [vmem:[%s4025 + $0x6c] sm:$0xf]
    %v6078 = vld [vmem:[%s4025 + $0x70] sm:$0xf]
    %v6079 = vld [vmem:[%s4025 + $0x80] sm:$0xf]
    %v6080 = vld [vmem:[%s4025 + $0x84] sm:$0xf]
    %v6081 = vld [vmem:[%s4025 + $0x94] sm:$0xf]
    %v6082 = vld [vmem:[%s4025 + $0x98] sm:$0xf]
    %v6083 = vld [vmem:[%s4025 + $0xa8] sm:$0xf]
    %v6084 = vld [vmem:[%s4025 + $0xac] sm:$0xf]
    %v6085 = vld [vmem:[%s4025 + $0xbc] sm:$0xf]
    %v6086 = vld [vmem:[%s4025 + $0xc0] sm:$0xf]
    %v6087 = vld [vmem:[%s4025 + $0xd0] sm:$0xf]
    %v6088 = vld [vmem:[%s4025 + $0xd4] sm:$0xf]
    %v6089 = vld [vmem:[%s4025 + $0xe4] sm:$0xf]
    %v6090 = vld [vmem:[%s4025 + $0xe8] sm:$0xf]
    %v6091 = vld [vmem:[%s4025 + $0xf8] sm:$0xf]
    %v6092 = vld [vmem:[%s4025 + $0xfc] sm:$0xf]
    %v6093 = vld [vmem:[%s4025 + $0x10c] sm:$0xf]
    %v6094 = vld [vmem:[%s4025 + $0x110] sm:$0xf]
    %v6095 = vld [vmem:[%s4025 + $0x120] sm:$0xf]
    %v6096 = vld [vmem:[%s4025 + $0x124] sm:$0xf]
    %v6097 = vld [vmem:[%s4025 + $0x134] sm:$0xf]
    %v6098 = vld [vmem:[%s4025 + $0x138] sm:$0xf]
    %v6131 = vunpack.c.l.b16 %v6067
    %v6132 = vunpack.c.l.b16 %v6068
    %v6133 = vunpack.c.l.b16 %v6069
    %v6134 = vunpack.c.l.b16 %v6070
    %v6135 = vunpack.c.l.b16 %v6071
    %v6136 = vunpack.c.l.b16 %v6072
    %v6137 = vunpack.c.l.b16 %v6073
    %v6138 = vunpack.c.l.b16 %v6074
    %v6139 = vunpack.c.l.b16 %v6075
    %v6140 = vunpack.c.l.b16 %v6076
    %v6141 = vunpack.c.l.b16 %v6077
    %v6142 = vunpack.c.l.b16 %v6078
    %v6143 = vunpack.c.l.b16 %v6079
    %v6144 = vunpack.c.l.b16 %v6080
    %v6145 = vunpack.c.l.b16 %v6081
    %v6146 = vunpack.c.l.b16 %v6082
    %v6147 = vunpack.c.l.b16 %v6083
    %v6148 = vunpack.c.l.b16 %v6084
    %v6149 = vunpack.c.l.b16 %v6085
    %v6150 = vunpack.c.l.b16 %v6086
    %v6151 = vunpack.c.l.b16 %v6087
    %v6152 = vunpack.c.l.b16 %v6088
    %v6153 = vunpack.c.l.b16 %v6089
    %v6154 = vunpack.c.l.b16 %v6090
    %v6155 = vunpack.c.l.b16 %v6091
    %v6156 = vunpack.c.l.b16 %v6092
    %v6157 = vunpack.c.l.b16 %v6093
    %v6158 = vunpack.c.l.b16 %v6094
    %v6159 = vunpack.c.l.b16 %v6095
    %v6160 = vunpack.c.l.b16 %v6096
    %v6161 = vunpack.c.l.b16 %v6097
    %v6162 = vunpack.c.l.b16 %v6098
    %v6163 = vpack.c.b16 %v6132, %v6131
    %v6164 = vpack.c.b16 %v6134, %v6133
    %v6165 = vpack.c.b16 %v6136, %v6135
    %v6166 = vpack.c.b16 %v6138, %v6137
    %v6167 = vpack.c.b16 %v6140, %v6139
    %v6168 = vpack.c.b16 %v6142, %v6141
    %v6169 = vpack.c.b16 %v6144, %v6143
    %v6170 = vpack.c.b16 %v6146, %v6145
    %v6171 = vpack.c.b16 %v6148, %v6147
    %v6172 = vpack.c.b16 %v6150, %v6149
    %v6173 = vpack.c.b16 %v6152, %v6151
    %v6174 = vpack.c.b16 %v6154, %v6153
    %v6175 = vpack.c.b16 %v6156, %v6155
    %v6176 = vpack.c.b16 %v6158, %v6157
    %v6177 = vpack.c.b16 %v6160, %v6159
    %v6178 = vpack.c.b16 %v6162, %v6161
    %6195 = vst.msk [vmem:[#allocation3 + $0x188] sm:$0xff] %vm863, %v6163
    %6196 = vst.msk [vmem:[#allocation3 + $0x1a0] sm:$0xff] %vm863, %v6164
    %6197 = vst.msk [vmem:[#allocation3 + $0x1b8] sm:$0xff] %vm863, %v6165
    %6198 = vst.msk [vmem:[#allocation3 + $0x1d0] sm:$0xff] %vm863, %v6166
    %6199 = vst.msk [vmem:[#allocation3 + $0x1e8] sm:$0xff] %vm863, %v6167
    %6200 = vst.msk [vmem:[#allocation3 + $0x200] sm:$0xff] %vm863, %v6168
    %6201 = vst.msk [vmem:[#allocation3 + $0x218] sm:$0xff] %vm863, %v6169
    %6202 = vst.msk [vmem:[#allocation3 + $0x230] sm:$0xff] %vm863, %v6170
    %6203 = vst.msk [vmem:[#allocation3 + $0x248] sm:$0xff] %vm863, %v6171
    %6204 = vst.msk [vmem:[#allocation3 + $0x260] sm:$0xff] %vm863, %v6172
    %6205 = vst.msk [vmem:[#allocation3 + $0x278] sm:$0xff] %vm863, %v6173
    %6206 = vst.msk [vmem:[#allocation3 + $0x290] sm:$0xff] %vm863, %v6174
    %6207 = vst.msk [vmem:[#allocation3 + $0x2a8] sm:$0xff] %vm863, %v6175
    %6208 = vst.msk [vmem:[#allocation3 + $0x2c0] sm:$0xff] %vm863, %v6176
    %6209 = vst.msk [vmem:[#allocation3 + $0x2d8] sm:$0xff] %vm863, %v6177
    %6210 = vst.msk [vmem:[#allocation3 + $0x2f0] sm:$0xff] %vm863, %v6178
    %v6211 = vld [vmem:[%s4025 + $0x8] sm:$0xf]
    %v6212 = vld [vmem:[%s4025 + $0xc] sm:$0xf]
    %v6213 = vld [vmem:[%s4025 + $0x10] sm:$0x1]
    %v6214 = vld [vmem:[%s4025 + $0x1c] sm:$0xf]
    %v6215 = vld [vmem:[%s4025 + $0x20] sm:$0xf]
    %v6216 = vld [vmem:[%s4025 + $0x24] sm:$0x1]
    %v6217 = vld [vmem:[%s4025 + $0x30] sm:$0xf]
    %v6218 = vld [vmem:[%s4025 + $0x34] sm:$0xf]
    %v6219 = vld [vmem:[%s4025 + $0x38] sm:$0x1]
    %v6220 = vld [vmem:[%s4025 + $0x44] sm:$0xf]
    %v6221 = vld [vmem:[%s4025 + $0x48] sm:$0xf]
    %v6222 = vld [vmem:[%s4025 + $0x4c] sm:$0x1]
    %v6223 = vld [vmem:[%s4025 + $0x58] sm:$0xf]
    %v6224 = vld [vmem:[%s4025 + $0x5c] sm:$0xf]
    %v6225 = vld [vmem:[%s4025 + $0x60] sm:$0x1]
    %v6226 = vld [vmem:[%s4025 + $0x6c] sm:$0xf]
    %v6227 = vld [vmem:[%s4025 + $0x70] sm:$0xf]
    %v6228 = vld [vmem:[%s4025 + $0x74] sm:$0x1]
    %v6229 = vld [vmem:[%s4025 + $0x80] sm:$0xf]
    %v6230 = vld [vmem:[%s4025 + $0x84] sm:$0xf]
    %v6231 = vld [vmem:[%s4025 + $0x88] sm:$0x1]
    %v6232 = vld [vmem:[%s4025 + $0x94] sm:$0xf]
    %v6233 = vld [vmem:[%s4025 + $0x98] sm:$0xf]
    %v6234 = vld [vmem:[%s4025 + $0x9c] sm:$0x1]
    %v6235 = vld [vmem:[%s4025 + $0xa8] sm:$0xf]
    %v6236 = vld [vmem:[%s4025 + $0xac] sm:$0xf]
    %v6237 = vld [vmem:[%s4025 + $0xb0] sm:$0x1]
    %v6238 = vld [vmem:[%s4025 + $0xbc] sm:$0xf]
    %v6239 = vld [vmem:[%s4025 + $0xc0] sm:$0xf]
    %v6240 = vld [vmem:[%s4025 + $0xc4] sm:$0x1]
    %v6241 = vld [vmem:[%s4025 + $0xd0] sm:$0xf]
    %v6242 = vld [vmem:[%s4025 + $0xd4] sm:$0xf]
    %v6243 = vld [vmem:[%s4025 + $0xd8] sm:$0x1]
    %v6244 = vld [vmem:[%s4025 + $0xe4] sm:$0xf]
    %v6245 = vld [vmem:[%s4025 + $0xe8] sm:$0xf]
    %v6246 = vld [vmem:[%s4025 + $0xec] sm:$0x1]
    %v6247 = vld [vmem:[%s4025 + $0xf8] sm:$0xf]
    %v6248 = vld [vmem:[%s4025 + $0xfc] sm:$0xf]
    %v6249 = vld [vmem:[%s4025 + $0x100] sm:$0x1]
    %v6250 = vld [vmem:[%s4025 + $0x10c] sm:$0xf]
    %v6251 = vld [vmem:[%s4025 + $0x110] sm:$0xf]
    %v6252 = vld [vmem:[%s4025 + $0x114] sm:$0x1]
    %v6253 = vld [vmem:[%s4025 + $0x120] sm:$0xf]
    %v6254 = vld [vmem:[%s4025 + $0x124] sm:$0xf]
    %v6255 = vld [vmem:[%s4025 + $0x128] sm:$0x1]
    %v6256 = vld [vmem:[%s4025 + $0x134] sm:$0xf]
    %v6257 = vld [vmem:[%s4025 + $0x138] sm:$0xf]
    %v6258 = vld [vmem:[%s4025 + $0x13c] sm:$0x1]
    %v6260 = vshrl.u32 %v6211, 16
    %v6262 = vrot.slane %v6260, 4
    %v6263 = vshll.u32 %v6211, 16
    %v6265 = vrot.slane %v6263, 5
    %v6266 = vor.u32 %v6262, %v6265
    %v6267 = vrot.slane %v6266, 4
    %v6269 = vshll.u32 %v6212, 16
    %v6271 = vrot.slane %v6269, 5
    %v6272 = vsel %vm1107, %v6267, %v6271
    %v6273 = vshrl.u32 %v6212, 16
    %v6275 = vrot.slane %v6273, 4
    %v6276 = vor.u32 %v6275, %v6271
    %v6277 = vrot.slane %v6276, 4
    %v6279 = vshll.u32 %v6213, 16
    %v6281 = vrot.slane %v6279, 5
    %v6282 = vsel %vm1107, %v6277, %v6281
    %v6284 = vshrl.u32 %v6214, 16
    %v6286 = vrot.slane %v6284, 4
    %v6287 = vshll.u32 %v6214, 16
    %v6289 = vrot.slane %v6287, 5
    %v6290 = vor.u32 %v6286, %v6289
    %v6291 = vrot.slane %v6290, 4
    %v6293 = vshll.u32 %v6215, 16
    %v6295 = vrot.slane %v6293, 5
    %v6296 = vsel %vm1107, %v6291, %v6295
    %v6297 = vshrl.u32 %v6215, 16
    %v6299 = vrot.slane %v6297, 4
    %v6300 = vor.u32 %v6299, %v6295
    %v6301 = vrot.slane %v6300, 4
    %v6303 = vshll.u32 %v6216, 16
    %v6305 = vrot.slane %v6303, 5
    %v6306 = vsel %vm1107, %v6301, %v6305
    %v6308 = vshrl.u32 %v6217, 16
    %v6310 = vrot.slane %v6308, 4
    %v6311 = vshll.u32 %v6217, 16
    %v6313 = vrot.slane %v6311, 5
    %v6314 = vor.u32 %v6310, %v6313
    %v6315 = vrot.slane %v6314, 4
    %v6317 = vshll.u32 %v6218, 16
    %v6319 = vrot.slane %v6317, 5
    %v6320 = vsel %vm1107, %v6315, %v6319
    %v6321 = vshrl.u32 %v6218, 16
    %v6323 = vrot.slane %v6321, 4
    %v6324 = vor.u32 %v6323, %v6319
    %v6325 = vrot.slane %v6324, 4
    %v6327 = vshll.u32 %v6219, 16
    %v6329 = vrot.slane %v6327, 5
    %v6330 = vsel %vm1107, %v6325, %v6329
    %v6332 = vshrl.u32 %v6220, 16
    %v6334 = vrot.slane %v6332, 4
    %v6335 = vshll.u32 %v6220, 16
    %v6337 = vrot.slane %v6335, 5
    %v6338 = vor.u32 %v6334, %v6337
    %v6339 = vrot.slane %v6338, 4
    %v6341 = vshll.u32 %v6221, 16
    %v6343 = vrot.slane %v6341, 5
    %v6344 = vsel %vm1107, %v6339, %v6343
    %v6345 = vshrl.u32 %v6221, 16
    %v6347 = vrot.slane %v6345, 4
    %v6348 = vor.u32 %v6347, %v6343
    %v6349 = vrot.slane %v6348, 4
    %v6351 = vshll.u32 %v6222, 16
    %v6353 = vrot.slane %v6351, 5
    %v6354 = vsel %vm1107, %v6349, %v6353
    %v6356 = vshrl.u32 %v6223, 16
    %v6358 = vrot.slane %v6356, 4
    %v6359 = vshll.u32 %v6223, 16
    %v6361 = vrot.slane %v6359, 5
    %v6362 = vor.u32 %v6358, %v6361
    %v6363 = vrot.slane %v6362, 4
    %v6365 = vshll.u32 %v6224, 16
    %v6367 = vrot.slane %v6365, 5
    %v6368 = vsel %vm1107, %v6363, %v6367
    %v6369 = vshrl.u32 %v6224, 16
    %v6371 = vrot.slane %v6369, 4
    %v6372 = vor.u32 %v6371, %v6367
    %v6373 = vrot.slane %v6372, 4
    %v6375 = vshll.u32 %v6225, 16
    %v6377 = vrot.slane %v6375, 5
    %v6378 = vsel %vm1107, %v6373, %v6377
    %v6380 = vshrl.u32 %v6226, 16
    %v6382 = vrot.slane %v6380, 4
    %v6383 = vshll.u32 %v6226, 16
    %v6385 = vrot.slane %v6383, 5
    %v6386 = vor.u32 %v6382, %v6385
    %v6387 = vrot.slane %v6386, 4
    %v6389 = vshll.u32 %v6227, 16
    %v6391 = vrot.slane %v6389, 5
    %v6392 = vsel %vm1107, %v6387, %v6391
    %v6393 = vshrl.u32 %v6227, 16
    %v6395 = vrot.slane %v6393, 4
    %v6396 = vor.u32 %v6395, %v6391
    %v6397 = vrot.slane %v6396, 4
    %v6399 = vshll.u32 %v6228, 16
    %v6401 = vrot.slane %v6399, 5
    %v6402 = vsel %vm1107, %v6397, %v6401
    %v6404 = vshrl.u32 %v6229, 16
    %v6406 = vrot.slane %v6404, 4
    %v6407 = vshll.u32 %v6229, 16
    %v6409 = vrot.slane %v6407, 5
    %v6410 = vor.u32 %v6406, %v6409
    %v6411 = vrot.slane %v6410, 4
    %v6413 = vshll.u32 %v6230, 16
    %v6415 = vrot.slane %v6413, 5
    %v6416 = vsel %vm1107, %v6411, %v6415
    %v6417 = vshrl.u32 %v6230, 16
    %v6419 = vrot.slane %v6417, 4
    %v6420 = vor.u32 %v6419, %v6415
    %v6421 = vrot.slane %v6420, 4
    %v6423 = vshll.u32 %v6231, 16
    %v6425 = vrot.slane %v6423, 5
    %v6426 = vsel %vm1107, %v6421, %v6425
    %v6428 = vshrl.u32 %v6232, 16
    %v6430 = vrot.slane %v6428, 4
    %v6431 = vshll.u32 %v6232, 16
    %v6433 = vrot.slane %v6431, 5
    %v6434 = vor.u32 %v6430, %v6433
    %v6435 = vrot.slane %v6434, 4
    %v6437 = vshll.u32 %v6233, 16
    %v6439 = vrot.slane %v6437, 5
    %v6440 = vsel %vm1107, %v6435, %v6439
    %v6441 = vshrl.u32 %v6233, 16
    %v6443 = vrot.slane %v6441, 4
    %v6444 = vor.u32 %v6443, %v6439
    %v6445 = vrot.slane %v6444, 4
    %v6447 = vshll.u32 %v6234, 16
    %v6449 = vrot.slane %v6447, 5
    %v6450 = vsel %vm1107, %v6445, %v6449
    %v6452 = vshrl.u32 %v6235, 16
    %v6454 = vrot.slane %v6452, 4
    %v6455 = vshll.u32 %v6235, 16
    %v6457 = vrot.slane %v6455, 5
    %v6458 = vor.u32 %v6454, %v6457
    %v6459 = vrot.slane %v6458, 4
    %v6461 = vshll.u32 %v6236, 16
    %v6463 = vrot.slane %v6461, 5
    %v6464 = vsel %vm1107, %v6459, %v6463
    %v6465 = vshrl.u32 %v6236, 16
    %v6467 = vrot.slane %v6465, 4
    %v6468 = vor.u32 %v6467, %v6463
    %v6469 = vrot.slane %v6468, 4
    %v6471 = vshll.u32 %v6237, 16
    %v6473 = vrot.slane %v6471, 5
    %v6474 = vsel %vm1107, %v6469, %v6473
    %v6476 = vshrl.u32 %v6238, 16
    %v6478 = vrot.slane %v6476, 4
    %v6479 = vshll.u32 %v6238, 16
    %v6481 = vrot.slane %v6479, 5
    %v6482 = vor.u32 %v6478, %v6481
    %v6483 = vrot.slane %v6482, 4
    %v6485 = vshll.u32 %v6239, 16
    %v6487 = vrot.slane %v6485, 5
    %v6488 = vsel %vm1107, %v6483, %v6487
    %v6489 = vshrl.u32 %v6239, 16
    %v6491 = vrot.slane %v6489, 4
    %v6492 = vor.u32 %v6491, %v6487
    %v6493 = vrot.slane %v6492, 4
    %v6495 = vshll.u32 %v6240, 16
    %v6497 = vrot.slane %v6495, 5
    %v6498 = vsel %vm1107, %v6493, %v6497
    %v6500 = vshrl.u32 %v6241, 16
    %v6502 = vrot.slane %v6500, 4
    %v6503 = vshll.u32 %v6241, 16
    %v6505 = vrot.slane %v6503, 5
    %v6506 = vor.u32 %v6502, %v6505
    %v6507 = vrot.slane %v6506, 4
    %v6509 = vshll.u32 %v6242, 16
    %v6511 = vrot.slane %v6509, 5
    %v6512 = vsel %vm1107, %v6507, %v6511
    %v6513 = vshrl.u32 %v6242, 16
    %v6515 = vrot.slane %v6513, 4
    %v6516 = vor.u32 %v6515, %v6511
    %v6517 = vrot.slane %v6516, 4
    %v6519 = vshll.u32 %v6243, 16
    %v6521 = vrot.slane %v6519, 5
    %v6522 = vsel %vm1107, %v6517, %v6521
    %v6524 = vshrl.u32 %v6244, 16
    %v6526 = vrot.slane %v6524, 4
    %v6527 = vshll.u32 %v6244, 16
    %v6529 = vrot.slane %v6527, 5
    %v6530 = vor.u32 %v6526, %v6529
    %v6531 = vrot.slane %v6530, 4
    %v6533 = vshll.u32 %v6245, 16
    %v6535 = vrot.slane %v6533, 5
    %v6536 = vsel %vm1107, %v6531, %v6535
    %v6537 = vshrl.u32 %v6245, 16
    %v6539 = vrot.slane %v6537, 4
    %v6540 = vor.u32 %v6539, %v6535
    %v6541 = vrot.slane %v6540, 4
    %v6543 = vshll.u32 %v6246, 16
    %v6545 = vrot.slane %v6543, 5
    %v6546 = vsel %vm1107, %v6541, %v6545
    %v6548 = vshrl.u32 %v6247, 16
    %v6550 = vrot.slane %v6548, 4
    %v6551 = vshll.u32 %v6247, 16
    %v6553 = vrot.slane %v6551, 5
    %v6554 = vor.u32 %v6550, %v6553
    %v6555 = vrot.slane %v6554, 4
    %v6557 = vshll.u32 %v6248, 16
    %v6559 = vrot.slane %v6557, 5
    %v6560 = vsel %vm1107, %v6555, %v6559
    %v6561 = vshrl.u32 %v6248, 16
    %v6563 = vrot.slane %v6561, 4
    %v6564 = vor.u32 %v6563, %v6559
    %v6565 = vrot.slane %v6564, 4
    %v6567 = vshll.u32 %v6249, 16
    %v6569 = vrot.slane %v6567, 5
    %v6570 = vsel %vm1107, %v6565, %v6569
    %v6572 = vshrl.u32 %v6250, 16
    %v6574 = vrot.slane %v6572, 4
    %v6575 = vshll.u32 %v6250, 16
    %v6577 = vrot.slane %v6575, 5
    %v6578 = vor.u32 %v6574, %v6577
    %v6579 = vrot.slane %v6578, 4
    %v6581 = vshll.u32 %v6251, 16
    %v6583 = vrot.slane %v6581, 5
    %v6584 = vsel %vm1107, %v6579, %v6583
    %v6585 = vshrl.u32 %v6251, 16
    %v6587 = vrot.slane %v6585, 4
    %v6588 = vor.u32 %v6587, %v6583
    %v6589 = vrot.slane %v6588, 4
    %v6591 = vshll.u32 %v6252, 16
    %v6593 = vrot.slane %v6591, 5
    %v6594 = vsel %vm1107, %v6589, %v6593
    %v6596 = vshrl.u32 %v6253, 16
    %v6598 = vrot.slane %v6596, 4
    %v6599 = vshll.u32 %v6253, 16
    %v6601 = vrot.slane %v6599, 5
    %v6602 = vor.u32 %v6598, %v6601
    %v6603 = vrot.slane %v6602, 4
    %v6605 = vshll.u32 %v6254, 16
    %v6607 = vrot.slane %v6605, 5
    %v6608 = vsel %vm1107, %v6603, %v6607
    %v6609 = vshrl.u32 %v6254, 16
    %v6611 = vrot.slane %v6609, 4
    %v6612 = vor.u32 %v6611, %v6607
    %v6613 = vrot.slane %v6612, 4
    %v6615 = vshll.u32 %v6255, 16
    %v6617 = vrot.slane %v6615, 5
    %v6618 = vsel %vm1107, %v6613, %v6617
    %v6620 = vshrl.u32 %v6256, 16
    %v6622 = vrot.slane %v6620, 4
    %v6623 = vshll.u32 %v6256, 16
    %v6625 = vrot.slane %v6623, 5
    %v6626 = vor.u32 %v6622, %v6625
    %v6627 = vrot.slane %v6626, 4
    %v6629 = vshll.u32 %v6257, 16
    %v6631 = vrot.slane %v6629, 5
    %v6632 = vsel %vm1107, %v6627, %v6631
    %v6633 = vshrl.u32 %v6257, 16
    %v6635 = vrot.slane %v6633, 4
    %v6636 = vor.u32 %v6635, %v6631
    %v6637 = vrot.slane %v6636, 4
    %v6639 = vshll.u32 %v6258, 16
    %v6641 = vrot.slane %v6639, 5
    %v6642 = vsel %vm1107, %v6637, %v6641
    %v6643 = vunpack.c.l.b16 %v6272
    %v6644 = vunpack.c.l.b16 %v6282
    %v6645 = vunpack.c.l.b16 %v6296
    %v6646 = vunpack.c.l.b16 %v6306
    %v6647 = vunpack.c.l.b16 %v6320
    %v6648 = vunpack.c.l.b16 %v6330
    %v6649 = vunpack.c.l.b16 %v6344
    %v6650 = vunpack.c.l.b16 %v6354
    %v6651 = vunpack.c.l.b16 %v6368
    %v6652 = vunpack.c.l.b16 %v6378
    %v6653 = vunpack.c.l.b16 %v6392
    %v6654 = vunpack.c.l.b16 %v6402
    %v6655 = vunpack.c.l.b16 %v6416
    %v6656 = vunpack.c.l.b16 %v6426
    %v6657 = vunpack.c.l.b16 %v6440
    %v6658 = vunpack.c.l.b16 %v6450
    %v6659 = vunpack.c.l.b16 %v6464
    %v6660 = vunpack.c.l.b16 %v6474
    %v6661 = vunpack.c.l.b16 %v6488
    %v6662 = vunpack.c.l.b16 %v6498
    %v6663 = vunpack.c.l.b16 %v6512
    %v6664 = vunpack.c.l.b16 %v6522
    %v6665 = vunpack.c.l.b16 %v6536
    %v6666 = vunpack.c.l.b16 %v6546
    %v6667 = vunpack.c.l.b16 %v6560
    %v6668 = vunpack.c.l.b16 %v6570
    %v6669 = vunpack.c.l.b16 %v6584
    %v6670 = vunpack.c.l.b16 %v6594
    %v6671 = vunpack.c.l.b16 %v6608
    %v6672 = vunpack.c.l.b16 %v6618
    %v6673 = vunpack.c.l.b16 %v6632
    %v6674 = vunpack.c.l.b16 %v6642
    %v6675 = vpack.c.b16 %v6644, %v6643
    %v6676 = vpack.c.b16 %v6646, %v6645
    %v6677 = vpack.c.b16 %v6648, %v6647
    %v6678 = vpack.c.b16 %v6650, %v6649
    %v6679 = vpack.c.b16 %v6652, %v6651
    %v6680 = vpack.c.b16 %v6654, %v6653
    %v6681 = vpack.c.b16 %v6656, %v6655
    %v6682 = vpack.c.b16 %v6658, %v6657
    %v6683 = vpack.c.b16 %v6660, %v6659
    %v6684 = vpack.c.b16 %v6662, %v6661
    %v6685 = vpack.c.b16 %v6664, %v6663
    %v6686 = vpack.c.b16 %v6666, %v6665
    %v6687 = vpack.c.b16 %v6668, %v6667
    %v6688 = vpack.c.b16 %v6670, %v6669
    %v6689 = vpack.c.b16 %v6672, %v6671
    %v6690 = vpack.c.b16 %v6674, %v6673
    %6691 = vrot.lane.b32.xlu0 %v6675, 32
    %v6692 = vpop.permute.xlu0 %6691
    %6693 = vrot.lane.b32.xlu0 %v6676, 32
    %v6694 = vpop.permute.xlu0 %6693
    %6695 = vrot.lane.b32.xlu0 %v6677, 32
    %v6696 = vpop.permute.xlu0 %6695
    %6697 = vrot.lane.b32.xlu0 %v6678, 32
    %v6698 = vpop.permute.xlu0 %6697
    %6699 = vrot.lane.b32.xlu0 %v6679, 32
    %v6700 = vpop.permute.xlu0 %6699
    %6701 = vrot.lane.b32.xlu0 %v6680, 32
    %v6702 = vpop.permute.xlu0 %6701
    %6703 = vrot.lane.b32.xlu0 %v6681, 32
    %v6704 = vpop.permute.xlu0 %6703
    %6705 = vrot.lane.b32.xlu0 %v6682, 32
    %v6706 = vpop.permute.xlu0 %6705
    %6707 = vrot.lane.b32.xlu0 %v6683, 32
    %v6708 = vpop.permute.xlu0 %6707
    %6709 = vrot.lane.b32.xlu0 %v6684, 32
    %v6710 = vpop.permute.xlu0 %6709
    %6711 = vrot.lane.b32.xlu0 %v6685, 32
    %v6712 = vpop.permute.xlu0 %6711
    %6713 = vrot.lane.b32.xlu0 %v6686, 32
    %v6714 = vpop.permute.xlu0 %6713
    %6715 = vrot.lane.b32.xlu0 %v6687, 32
    %v6716 = vpop.permute.xlu0 %6715
    %6717 = vrot.lane.b32.xlu0 %v6688, 32
    %v6718 = vpop.permute.xlu0 %6717
    %6719 = vrot.lane.b32.xlu0 %v6689, 32
    %v6720 = vpop.permute.xlu0 %6719
    %6721 = vrot.lane.b32.xlu0 %v6690, 32
    %v6722 = vpop.permute.xlu0 %6721
    %6739 = vst.msk [vmem:[#allocation3 + $0x188] sm:$0xff] %vm1040, %v6692
    %6740 = vst.msk [vmem:[#allocation3 + $0x1a0] sm:$0xff] %vm1040, %v6694
    %6741 = vst.msk [vmem:[#allocation3 + $0x1b8] sm:$0xff] %vm1040, %v6696
    %6742 = vst.msk [vmem:[#allocation3 + $0x1d0] sm:$0xff] %vm1040, %v6698
    %6743 = vst.msk [vmem:[#allocation3 + $0x1e8] sm:$0xff] %vm1040, %v6700
    %6744 = vst.msk [vmem:[#allocation3 + $0x200] sm:$0xff] %vm1040, %v6702
    %6745 = vst.msk [vmem:[#allocation3 + $0x218] sm:$0xff] %vm1040, %v6704
    %6746 = vst.msk [vmem:[#allocation3 + $0x230] sm:$0xff] %vm1040, %v6706
    %6747 = vst.msk [vmem:[#allocation3 + $0x248] sm:$0xff] %vm1040, %v6708
    %6748 = vst.msk [vmem:[#allocation3 + $0x260] sm:$0xff] %vm1040, %v6710
    %6749 = vst.msk [vmem:[#allocation3 + $0x278] sm:$0xff] %vm1040, %v6712
    %6750 = vst.msk [vmem:[#allocation3 + $0x290] sm:$0xff] %vm1040, %v6714
    %6751 = vst.msk [vmem:[#allocation3 + $0x2a8] sm:$0xff] %vm1040, %v6716
    %6752 = vst.msk [vmem:[#allocation3 + $0x2c0] sm:$0xff] %vm1040, %v6718
    %6753 = vst.msk [vmem:[#allocation3 + $0x2d8] sm:$0xff] %vm1040, %v6720
    %6754 = vst.msk [vmem:[#allocation3 + $0x2f0] sm:$0xff] %vm1040, %v6722
    %s6755 = scalar_lea.vmem [#allocation2], 400
    %v6756 = vld [vmem:[%s6755 + $0x4] sm:$0x8]
    %v6757 = vld [vmem:[%s6755 + $0x8] sm:$0xf]
    %v6758 = vld [vmem:[%s6755 + $0xc] sm:$0xf]
    %v6759 = vld [vmem:[%s6755 + $0x18] sm:$0x8]
    %v6760 = vld [vmem:[%s6755 + $0x1c] sm:$0xf]
    %v6761 = vld [vmem:[%s6755 + $0x20] sm:$0xf]
    %v6762 = vld [vmem:[%s6755 + $0x2c] sm:$0x8]
    %v6763 = vld [vmem:[%s6755 + $0x30] sm:$0xf]
    %v6764 = vld [vmem:[%s6755 + $0x34] sm:$0xf]
    %v6765 = vld [vmem:[%s6755 + $0x40] sm:$0x8]
    %v6766 = vld [vmem:[%s6755 + $0x44] sm:$0xf]
    %v6767 = vld [vmem:[%s6755 + $0x48] sm:$0xf]
    %v6768 = vld [vmem:[%s6755 + $0x54] sm:$0x8]
    %v6769 = vld [vmem:[%s6755 + $0x58] sm:$0xf]
    %v6770 = vld [vmem:[%s6755 + $0x5c] sm:$0xf]
    %v6771 = vld [vmem:[%s6755 + $0x68] sm:$0x8]
    %v6772 = vld [vmem:[%s6755 + $0x6c] sm:$0xf]
    %v6773 = vld [vmem:[%s6755 + $0x70] sm:$0xf]
    %v6774 = vld [vmem:[%s6755 + $0x7c] sm:$0x8]
    %v6775 = vld [vmem:[%s6755 + $0x80] sm:$0xf]
    %v6776 = vld [vmem:[%s6755 + $0x84] sm:$0xf]
    %v6777 = vld [vmem:[%s6755 + $0x90] sm:$0x8]
    %v6778 = vld [vmem:[%s6755 + $0x94] sm:$0xf]
    %v6779 = vld [vmem:[%s6755 + $0x98] sm:$0xf]
    %v6780 = vld [vmem:[%s6755 + $0xa4] sm:$0x8]
    %v6781 = vld [vmem:[%s6755 + $0xa8] sm:$0xf]
    %v6782 = vld [vmem:[%s6755 + $0xac] sm:$0xf]
    %v6783 = vld [vmem:[%s6755 + $0xb8] sm:$0x8]
    %v6784 = vld [vmem:[%s6755 + $0xbc] sm:$0xf]
    %v6785 = vld [vmem:[%s6755 + $0xc0] sm:$0xf]
    %v6786 = vld [vmem:[%s6755 + $0xcc] sm:$0x8]
    %v6787 = vld [vmem:[%s6755 + $0xd0] sm:$0xf]
    %v6788 = vld [vmem:[%s6755 + $0xd4] sm:$0xf]
    %v6789 = vld [vmem:[%s6755 + $0xe0] sm:$0x8]
    %v6790 = vld [vmem:[%s6755 + $0xe4] sm:$0xf]
    %v6791 = vld [vmem:[%s6755 + $0xe8] sm:$0xf]
    %v6792 = vld [vmem:[%s6755 + $0xf4] sm:$0x8]
    %v6793 = vld [vmem:[%s6755 + $0xf8] sm:$0xf]
    %v6794 = vld [vmem:[%s6755 + $0xfc] sm:$0xf]
    %v6795 = vld [vmem:[%s6755 + $0x108] sm:$0x8]
    %v6796 = vld [vmem:[%s6755 + $0x10c] sm:$0xf]
    %v6797 = vld [vmem:[%s6755 + $0x110] sm:$0xf]
    %v6798 = vld [vmem:[%s6755 + $0x11c] sm:$0x8]
    %v6799 = vld [vmem:[%s6755 + $0x120] sm:$0xf]
    %v6800 = vld [vmem:[%s6755 + $0x124] sm:$0xf]
    %v6801 = vld [vmem:[%s6755 + $0x130] sm:$0x8]
    %v6802 = vld [vmem:[%s6755 + $0x134] sm:$0xf]
    %v6803 = vld [vmem:[%s6755 + $0x138] sm:$0xf]
    %v6805 = vshrl.u32 %v6756, 16
    %v6807 = vrot.slane %v6805, 7
    %v6808 = vrot.slane %v6807, 4
    %v6810 = vshrl.u32 %v6757, 16
    %v6812 = vrot.slane %v6810, 7
    %v6813 = vshll.u32 %v6757, 16
    %v6815 = vor.u32 %v6812, %v6813
    %v6816 = vsel %vm446, %v6808, %v6815
    %v6817 = vrot.slane %v6812, 4
    %v6819 = vshrl.u32 %v6758, 16
    %v6821 = vrot.slane %v6819, 7
    %v6822 = vshll.u32 %v6758, 16
    %v6824 = vor.u32 %v6821, %v6822
    %v6825 = vsel %vm446, %v6817, %v6824
    %v6827 = vshrl.u32 %v6759, 16
    %v6829 = vrot.slane %v6827, 7
    %v6830 = vrot.slane %v6829, 4
    %v6832 = vshrl.u32 %v6760, 16
    %v6834 = vrot.slane %v6832, 7
    %v6835 = vshll.u32 %v6760, 16
    %v6837 = vor.u32 %v6834, %v6835
    %v6838 = vsel %vm446, %v6830, %v6837
    %v6839 = vrot.slane %v6834, 4
    %v6841 = vshrl.u32 %v6761, 16
    %v6843 = vrot.slane %v6841, 7
    %v6844 = vshll.u32 %v6761, 16
    %v6846 = vor.u32 %v6843, %v6844
    %v6847 = vsel %vm446, %v6839, %v6846
    %v6849 = vshrl.u32 %v6762, 16
    %v6851 = vrot.slane %v6849, 7
    %v6852 = vrot.slane %v6851, 4
    %v6854 = vshrl.u32 %v6763, 16
    %v6856 = vrot.slane %v6854, 7
    %v6857 = vshll.u32 %v6763, 16
    %v6859 = vor.u32 %v6856, %v6857
    %v6860 = vsel %vm446, %v6852, %v6859
    %v6861 = vrot.slane %v6856, 4
    %v6863 = vshrl.u32 %v6764, 16
    %v6865 = vrot.slane %v6863, 7
    %v6866 = vshll.u32 %v6764, 16
    %v6868 = vor.u32 %v6865, %v6866
    %v6869 = vsel %vm446, %v6861, %v6868
    %v6871 = vshrl.u32 %v6765, 16
    %v6873 = vrot.slane %v6871, 7
    %v6874 = vrot.slane %v6873, 4
    %v6876 = vshrl.u32 %v6766, 16
    %v6878 = vrot.slane %v6876, 7
    %v6879 = vshll.u32 %v6766, 16
    %v6881 = vor.u32 %v6878, %v6879
    %v6882 = vsel %vm446, %v6874, %v6881
    %v6883 = vrot.slane %v6878, 4
    %v6885 = vshrl.u32 %v6767, 16
    %v6887 = vrot.slane %v6885, 7
    %v6888 = vshll.u32 %v6767, 16
    %v6890 = vor.u32 %v6887, %v6888
    %v6891 = vsel %vm446, %v6883, %v6890
    %v6893 = vshrl.u32 %v6768, 16
    %v6895 = vrot.slane %v6893, 7
    %v6896 = vrot.slane %v6895, 4
    %v6898 = vshrl.u32 %v6769, 16
    %v6900 = vrot.slane %v6898, 7
    %v6901 = vshll.u32 %v6769, 16
    %v6903 = vor.u32 %v6900, %v6901
    %v6904 = vsel %vm446, %v6896, %v6903
    %v6905 = vrot.slane %v6900, 4
    %v6907 = vshrl.u32 %v6770, 16
    %v6909 = vrot.slane %v6907, 7
    %v6910 = vshll.u32 %v6770, 16
    %v6912 = vor.u32 %v6909, %v6910
    %v6913 = vsel %vm446, %v6905, %v6912
    %v6915 = vshrl.u32 %v6771, 16
    %v6917 = vrot.slane %v6915, 7
    %v6918 = vrot.slane %v6917, 4
    %v6920 = vshrl.u32 %v6772, 16
    %v6922 = vrot.slane %v6920, 7
    %v6923 = vshll.u32 %v6772, 16
    %v6925 = vor.u32 %v6922, %v6923
    %v6926 = vsel %vm446, %v6918, %v6925
    %v6927 = vrot.slane %v6922, 4
    %v6929 = vshrl.u32 %v6773, 16
    %v6931 = vrot.slane %v6929, 7
    %v6932 = vshll.u32 %v6773, 16
    %v6934 = vor.u32 %v6931, %v6932
    %v6935 = vsel %vm446, %v6927, %v6934
    %v6937 = vshrl.u32 %v6774, 16
    %v6939 = vrot.slane %v6937, 7
    %v6940 = vrot.slane %v6939, 4
    %v6942 = vshrl.u32 %v6775, 16
    %v6944 = vrot.slane %v6942, 7
    %v6945 = vshll.u32 %v6775, 16
    %v6947 = vor.u32 %v6944, %v6945
    %v6948 = vsel %vm446, %v6940, %v6947
    %v6949 = vrot.slane %v6944, 4
    %v6951 = vshrl.u32 %v6776, 16
    %v6953 = vrot.slane %v6951, 7
    %v6954 = vshll.u32 %v6776, 16
    %v6956 = vor.u32 %v6953, %v6954
    %v6957 = vsel %vm446, %v6949, %v6956
    %v6959 = vshrl.u32 %v6777, 16
    %v6961 = vrot.slane %v6959, 7
    %v6962 = vrot.slane %v6961, 4
    %v6964 = vshrl.u32 %v6778, 16
    %v6966 = vrot.slane %v6964, 7
    %v6967 = vshll.u32 %v6778, 16
    %v6969 = vor.u32 %v6966, %v6967
    %v6970 = vsel %vm446, %v6962, %v6969
    %v6971 = vrot.slane %v6966, 4
    %v6973 = vshrl.u32 %v6779, 16
    %v6975 = vrot.slane %v6973, 7
    %v6976 = vshll.u32 %v6779, 16
    %v6978 = vor.u32 %v6975, %v6976
    %v6979 = vsel %vm446, %v6971, %v6978
    %v6981 = vshrl.u32 %v6780, 16
    %v6983 = vrot.slane %v6981, 7
    %v6984 = vrot.slane %v6983, 4
    %v6986 = vshrl.u32 %v6781, 16
    %v6988 = vrot.slane %v6986, 7
    %v6989 = vshll.u32 %v6781, 16
    %v6991 = vor.u32 %v6988, %v6989
    %v6992 = vsel %vm446, %v6984, %v6991
    %v6993 = vrot.slane %v6988, 4
    %v6995 = vshrl.u32 %v6782, 16
    %v6997 = vrot.slane %v6995, 7
    %v6998 = vshll.u32 %v6782, 16
    %v7000 = vor.u32 %v6997, %v6998
    %v7001 = vsel %vm446, %v6993, %v7000
    %v7003 = vshrl.u32 %v6783, 16
    %v7005 = vrot.slane %v7003, 7
    %v7006 = vrot.slane %v7005, 4
    %v7008 = vshrl.u32 %v6784, 16
    %v7010 = vrot.slane %v7008, 7
    %v7011 = vshll.u32 %v6784, 16
    %v7013 = vor.u32 %v7010, %v7011
    %v7014 = vsel %vm446, %v7006, %v7013
    %v7015 = vrot.slane %v7010, 4
    %v7017 = vshrl.u32 %v6785, 16
    %v7019 = vrot.slane %v7017, 7
    %v7020 = vshll.u32 %v6785, 16
    %v7022 = vor.u32 %v7019, %v7020
    %v7023 = vsel %vm446, %v7015, %v7022
    %v7025 = vshrl.u32 %v6786, 16
    %v7027 = vrot.slane %v7025, 7
    %v7028 = vrot.slane %v7027, 4
    %v7030 = vshrl.u32 %v6787, 16
    %v7032 = vrot.slane %v7030, 7
    %v7033 = vshll.u32 %v6787, 16
    %v7035 = vor.u32 %v7032, %v7033
    %v7036 = vsel %vm446, %v7028, %v7035
    %v7037 = vrot.slane %v7032, 4
    %v7039 = vshrl.u32 %v6788, 16
    %v7041 = vrot.slane %v7039, 7
    %v7042 = vshll.u32 %v6788, 16
    %v7044 = vor.u32 %v7041, %v7042
    %v7045 = vsel %vm446, %v7037, %v7044
    %v7047 = vshrl.u32 %v6789, 16
    %v7049 = vrot.slane %v7047, 7
    %v7050 = vrot.slane %v7049, 4
    %v7052 = vshrl.u32 %v6790, 16
    %v7054 = vrot.slane %v7052, 7
    %v7055 = vshll.u32 %v6790, 16
    %v7057 = vor.u32 %v7054, %v7055
    %v7058 = vsel %vm446, %v7050, %v7057
    %v7059 = vrot.slane %v7054, 4
    %v7061 = vshrl.u32 %v6791, 16
    %v7063 = vrot.slane %v7061, 7
    %v7064 = vshll.u32 %v6791, 16
    %v7066 = vor.u32 %v7063, %v7064
    %v7067 = vsel %vm446, %v7059, %v7066
    %v7069 = vshrl.u32 %v6792, 16
    %v7071 = vrot.slane %v7069, 7
    %v7072 = vrot.slane %v7071, 4
    %v7074 = vshrl.u32 %v6793, 16
    %v7076 = vrot.slane %v7074, 7
    %v7077 = vshll.u32 %v6793, 16
    %v7079 = vor.u32 %v7076, %v7077
    %v7080 = vsel %vm446, %v7072, %v7079
    %v7081 = vrot.slane %v7076, 4
    %v7083 = vshrl.u32 %v6794, 16
    %v7085 = vrot.slane %v7083, 7
    %v7086 = vshll.u32 %v6794, 16
    %v7088 = vor.u32 %v7085, %v7086
    %v7089 = vsel %vm446, %v7081, %v7088
    %v7091 = vshrl.u32 %v6795, 16
    %v7093 = vrot.slane %v7091, 7
    %v7094 = vrot.slane %v7093, 4
    %v7096 = vshrl.u32 %v6796, 16
    %v7098 = vrot.slane %v7096, 7
    %v7099 = vshll.u32 %v6796, 16
    %v7101 = vor.u32 %v7098, %v7099
    %v7102 = vsel %vm446, %v7094, %v7101
    %v7103 = vrot.slane %v7098, 4
    %v7105 = vshrl.u32 %v6797, 16
    %v7107 = vrot.slane %v7105, 7
    %v7108 = vshll.u32 %v6797, 16
    %v7110 = vor.u32 %v7107, %v7108
    %v7111 = vsel %vm446, %v7103, %v7110
    %v7113 = vshrl.u32 %v6798, 16
    %v7115 = vrot.slane %v7113, 7
    %v7116 = vrot.slane %v7115, 4
    %v7118 = vshrl.u32 %v6799, 16
    %v7120 = vrot.slane %v7118, 7
    %v7121 = vshll.u32 %v6799, 16
    %v7123 = vor.u32 %v7120, %v7121
    %v7124 = vsel %vm446, %v7116, %v7123
    %v7125 = vrot.slane %v7120, 4
    %v7127 = vshrl.u32 %v6800, 16
    %v7129 = vrot.slane %v7127, 7
    %v7130 = vshll.u32 %v6800, 16
    %v7132 = vor.u32 %v7129, %v7130
    %v7133 = vsel %vm446, %v7125, %v7132
    %v7135 = vshrl.u32 %v6801, 16
    %v7137 = vrot.slane %v7135, 7
    %v7138 = vrot.slane %v7137, 4
    %v7140 = vshrl.u32 %v6802, 16
    %v7142 = vrot.slane %v7140, 7
    %v7143 = vshll.u32 %v6802, 16
    %v7145 = vor.u32 %v7142, %v7143
    %v7146 = vsel %vm446, %v7138, %v7145
    %v7147 = vrot.slane %v7142, 4
    %v7149 = vshrl.u32 %v6803, 16
    %v7151 = vrot.slane %v7149, 7
    %v7152 = vshll.u32 %v6803, 16
    %v7154 = vor.u32 %v7151, %v7152
    %v7155 = vsel %vm446, %v7147, %v7154
    %v7156 = vunpack.c.l.b16 %v6816
    %v7157 = vunpack.c.l.b16 %v6825
    %v7158 = vunpack.c.l.b16 %v6838
    %v7159 = vunpack.c.l.b16 %v6847
    %v7160 = vunpack.c.l.b16 %v6860
    %v7161 = vunpack.c.l.b16 %v6869
    %v7162 = vunpack.c.l.b16 %v6882
    %v7163 = vunpack.c.l.b16 %v6891
    %v7164 = vunpack.c.l.b16 %v6904
    %v7165 = vunpack.c.l.b16 %v6913
    %v7166 = vunpack.c.l.b16 %v6926
    %v7167 = vunpack.c.l.b16 %v6935
    %v7168 = vunpack.c.l.b16 %v6948
    %v7169 = vunpack.c.l.b16 %v6957
    %v7170 = vunpack.c.l.b16 %v6970
    %v7171 = vunpack.c.l.b16 %v6979
    %v7172 = vunpack.c.l.b16 %v6992
    %v7173 = vunpack.c.l.b16 %v7001
    %v7174 = vunpack.c.l.b16 %v7014
    %v7175 = vunpack.c.l.b16 %v7023
    %v7176 = vunpack.c.l.b16 %v7036
    %v7177 = vunpack.c.l.b16 %v7045
    %v7178 = vunpack.c.l.b16 %v7058
    %v7179 = vunpack.c.l.b16 %v7067
    %v7180 = vunpack.c.l.b16 %v7080
    %v7181 = vunpack.c.l.b16 %v7089
    %v7182 = vunpack.c.l.b16 %v7102
    %v7183 = vunpack.c.l.b16 %v7111
    %v7184 = vunpack.c.l.b16 %v7124
    %v7185 = vunpack.c.l.b16 %v7133
    %v7186 = vunpack.c.l.b16 %v7146
    %v7187 = vunpack.c.l.b16 %v7155
    %v7188 = vpack.c.b16 %v7157, %v7156
    %v7189 = vpack.c.b16 %v7159, %v7158
    %v7190 = vpack.c.b16 %v7161, %v7160
    %v7191 = vpack.c.b16 %v7163, %v7162
    %v7192 = vpack.c.b16 %v7165, %v7164
    %v7193 = vpack.c.b16 %v7167, %v7166
    %v7194 = vpack.c.b16 %v7169, %v7168
    %v7195 = vpack.c.b16 %v7171, %v7170
    %v7196 = vpack.c.b16 %v7173, %v7172
    %v7197 = vpack.c.b16 %v7175, %v7174
    %v7198 = vpack.c.b16 %v7177, %v7176
    %v7199 = vpack.c.b16 %v7179, %v7178
    %v7200 = vpack.c.b16 %v7181, %v7180
    %v7201 = vpack.c.b16 %v7183, %v7182
    %v7202 = vpack.c.b16 %v7185, %v7184
    %v7203 = vpack.c.b16 %v7187, %v7186
    %7204 = vrot.lane.b32.xlu0 %v7188, 64
    %v7205 = vpop.permute.xlu0 %7204
    %7206 = vrot.lane.b32.xlu0 %v7189, 64
    %v7207 = vpop.permute.xlu0 %7206
    %7208 = vrot.lane.b32.xlu0 %v7190, 64
    %v7209 = vpop.permute.xlu0 %7208
    %7210 = vrot.lane.b32.xlu0 %v7191, 64
    %v7211 = vpop.permute.xlu0 %7210
    %7212 = vrot.lane.b32.xlu0 %v7192, 64
    %v7213 = vpop.permute.xlu0 %7212
    %7214 = vrot.lane.b32.xlu0 %v7193, 64
    %v7215 = vpop.permute.xlu0 %7214
    %7216 = vrot.lane.b32.xlu0 %v7194, 64
    %v7217 = vpop.permute.xlu0 %7216
    %7218 = vrot.lane.b32.xlu0 %v7195, 64
    %v7219 = vpop.permute.xlu0 %7218
    %7220 = vrot.lane.b32.xlu0 %v7196, 64
    %v7221 = vpop.permute.xlu0 %7220
    %7222 = vrot.lane.b32.xlu0 %v7197, 64
    %v7223 = vpop.permute.xlu0 %7222
    %7224 = vrot.lane.b32.xlu0 %v7198, 64
    %v7225 = vpop.permute.xlu0 %7224
    %7226 = vrot.lane.b32.xlu0 %v7199, 64
    %v7227 = vpop.permute.xlu0 %7226
    %7228 = vrot.lane.b32.xlu0 %v7200, 64
    %v7229 = vpop.permute.xlu0 %7228
    %7230 = vrot.lane.b32.xlu0 %v7201, 64
    %v7231 = vpop.permute.xlu0 %7230
    %7232 = vrot.lane.b32.xlu0 %v7202, 64
    %v7233 = vpop.permute.xlu0 %7232
    %7234 = vrot.lane.b32.xlu0 %v7203, 64
    %v7235 = vpop.permute.xlu0 %7234
    %7252 = vst.msk [vmem:[#allocation3 + $0x188] sm:$0xff] %vm1588, %v7205
    %7253 = vst.msk [vmem:[#allocation3 + $0x1a0] sm:$0xff] %vm1588, %v7207
    %7254 = vst.msk [vmem:[#allocation3 + $0x1b8] sm:$0xff] %vm1588, %v7209
    %7255 = vst.msk [vmem:[#allocation3 + $0x1d0] sm:$0xff] %vm1588, %v7211
    %7256 = vst.msk [vmem:[#allocation3 + $0x1e8] sm:$0xff] %vm1588, %v7213
    %7257 = vst.msk [vmem:[#allocation3 + $0x200] sm:$0xff] %vm1588, %v7215
    %7258 = vst.msk [vmem:[#allocation3 + $0x218] sm:$0xff] %vm1588, %v7217
    %7259 = vst.msk [vmem:[#allocation3 + $0x230] sm:$0xff] %vm1588, %v7219
    %7260 = vst.msk [vmem:[#allocation3 + $0x248] sm:$0xff] %vm1588, %v7221
    %7261 = vst.msk [vmem:[#allocation3 + $0x260] sm:$0xff] %vm1588, %v7223
    %7262 = vst.msk [vmem:[#allocation3 + $0x278] sm:$0xff] %vm1588, %v7225
    %7263 = vst.msk [vmem:[#allocation3 + $0x290] sm:$0xff] %vm1588, %v7227
    %7264 = vst.msk [vmem:[#allocation3 + $0x2a8] sm:$0xff] %vm1588, %v7229
    %7265 = vst.msk [vmem:[#allocation3 + $0x2c0] sm:$0xff] %vm1588, %v7231
    %7266 = vst.msk [vmem:[#allocation3 + $0x2d8] sm:$0xff] %vm1588, %v7233
    %7267 = vst.msk [vmem:[#allocation3 + $0x2f0] sm:$0xff] %vm1588, %v7235
    %v7268 = vld [vmem:[%s6755 + $0x8] sm:$0xf]
    %v7269 = vld [vmem:[%s6755 + $0xc] sm:$0xf]
    %v7270 = vld [vmem:[%s6755 + $0x1c] sm:$0xf]
    %v7271 = vld [vmem:[%s6755 + $0x20] sm:$0xf]
    %v7272 = vld [vmem:[%s6755 + $0x30] sm:$0xf]
    %v7273 = vld [vmem:[%s6755 + $0x34] sm:$0xf]
    %v7274 = vld [vmem:[%s6755 + $0x44] sm:$0xf]
    %v7275 = vld [vmem:[%s6755 + $0x48] sm:$0xf]
    %v7276 = vld [vmem:[%s6755 + $0x58] sm:$0xf]
    %v7277 = vld [vmem:[%s6755 + $0x5c] sm:$0xf]
    %v7278 = vld [vmem:[%s6755 + $0x6c] sm:$0xf]
    %v7279 = vld [vmem:[%s6755 + $0x70] sm:$0xf]
    %v7280 = vld [vmem:[%s6755 + $0x80] sm:$0xf]
    %v7281 = vld [vmem:[%s6755 + $0x84] sm:$0xf]
    %v7282 = vld [vmem:[%s6755 + $0x94] sm:$0xf]
    %v7283 = vld [vmem:[%s6755 + $0x98] sm:$0xf]
    %v7284 = vld [vmem:[%s6755 + $0xa8] sm:$0xf]
    %v7285 = vld [vmem:[%s6755 + $0xac] sm:$0xf]
    %v7286 = vld [vmem:[%s6755 + $0xbc] sm:$0xf]
    %v7287 = vld [vmem:[%s6755 + $0xc0] sm:$0xf]
    %v7288 = vld [vmem:[%s6755 + $0xd0] sm:$0xf]
    %v7289 = vld [vmem:[%s6755 + $0xd4] sm:$0xf]
    %v7290 = vld [vmem:[%s6755 + $0xe4] sm:$0xf]
    %v7291 = vld [vmem:[%s6755 + $0xe8] sm:$0xf]
    %v7292 = vld [vmem:[%s6755 + $0xf8] sm:$0xf]
    %v7293 = vld [vmem:[%s6755 + $0xfc] sm:$0xf]
    %v7294 = vld [vmem:[%s6755 + $0x10c] sm:$0xf]
    %v7295 = vld [vmem:[%s6755 + $0x110] sm:$0xf]
    %v7296 = vld [vmem:[%s6755 + $0x120] sm:$0xf]
    %v7297 = vld [vmem:[%s6755 + $0x124] sm:$0xf]
    %v7298 = vld [vmem:[%s6755 + $0x134] sm:$0xf]
    %v7299 = vld [vmem:[%s6755 + $0x138] sm:$0xf]
    %v7332 = vunpack.c.l.b16 %v7268
    %v7333 = vunpack.c.l.b16 %v7269
    %v7334 = vunpack.c.l.b16 %v7270
    %v7335 = vunpack.c.l.b16 %v7271
    %v7336 = vunpack.c.l.b16 %v7272
    %v7337 = vunpack.c.l.b16 %v7273
    %v7338 = vunpack.c.l.b16 %v7274
    %v7339 = vunpack.c.l.b16 %v7275
    %v7340 = vunpack.c.l.b16 %v7276
    %v7341 = vunpack.c.l.b16 %v7277
    %v7342 = vunpack.c.l.b16 %v7278
    %v7343 = vunpack.c.l.b16 %v7279
    %v7344 = vunpack.c.l.b16 %v7280
    %v7345 = vunpack.c.l.b16 %v7281
    %v7346 = vunpack.c.l.b16 %v7282
    %v7347 = vunpack.c.l.b16 %v7283
    %v7348 = vunpack.c.l.b16 %v7284
    %v7349 = vunpack.c.l.b16 %v7285
    %v7350 = vunpack.c.l.b16 %v7286
    %v7351 = vunpack.c.l.b16 %v7287
    %v7352 = vunpack.c.l.b16 %v7288
    %v7353 = vunpack.c.l.b16 %v7289
    %v7354 = vunpack.c.l.b16 %v7290
    %v7355 = vunpack.c.l.b16 %v7291
    %v7356 = vunpack.c.l.b16 %v7292
    %v7357 = vunpack.c.l.b16 %v7293
    %v7358 = vunpack.c.l.b16 %v7294
    %v7359 = vunpack.c.l.b16 %v7295
    %v7360 = vunpack.c.l.b16 %v7296
    %v7361 = vunpack.c.l.b16 %v7297
    %v7362 = vunpack.c.l.b16 %v7298
    %v7363 = vunpack.c.l.b16 %v7299
    %v7364 = vpack.c.b16 %v7333, %v7332
    %v7365 = vpack.c.b16 %v7335, %v7334
    %v7366 = vpack.c.b16 %v7337, %v7336
    %v7367 = vpack.c.b16 %v7339, %v7338
    %v7368 = vpack.c.b16 %v7341, %v7340
    %v7369 = vpack.c.b16 %v7343, %v7342
    %v7370 = vpack.c.b16 %v7345, %v7344
    %v7371 = vpack.c.b16 %v7347, %v7346
    %v7372 = vpack.c.b16 %v7349, %v7348
    %v7373 = vpack.c.b16 %v7351, %v7350
    %v7374 = vpack.c.b16 %v7353, %v7352
    %v7375 = vpack.c.b16 %v7355, %v7354
    %v7376 = vpack.c.b16 %v7357, %v7356
    %v7377 = vpack.c.b16 %v7359, %v7358
    %v7378 = vpack.c.b16 %v7361, %v7360
    %v7379 = vpack.c.b16 %v7363, %v7362
    %7380 = vrot.lane.b32.xlu0 %v7364, 96
    %v7381 = vpop.permute.xlu0 %7380
    %7382 = vrot.lane.b32.xlu0 %v7365, 96
    %v7383 = vpop.permute.xlu0 %7382
    %7384 = vrot.lane.b32.xlu0 %v7366, 96
    %v7385 = vpop.permute.xlu0 %7384
    %7386 = vrot.lane.b32.xlu0 %v7367, 96
    %v7387 = vpop.permute.xlu0 %7386
    %7388 = vrot.lane.b32.xlu0 %v7368, 96
    %v7389 = vpop.permute.xlu0 %7388
    %7390 = vrot.lane.b32.xlu0 %v7369, 96
    %v7391 = vpop.permute.xlu0 %7390
    %7392 = vrot.lane.b32.xlu0 %v7370, 96
    %v7393 = vpop.permute.xlu0 %7392
    %7394 = vrot.lane.b32.xlu0 %v7371, 96
    %v7395 = vpop.permute.xlu0 %7394
    %7396 = vrot.lane.b32.xlu0 %v7372, 96
    %v7397 = vpop.permute.xlu0 %7396
    %7398 = vrot.lane.b32.xlu0 %v7373, 96
    %v7399 = vpop.permute.xlu0 %7398
    %7400 = vrot.lane.b32.xlu0 %v7374, 96
    %v7401 = vpop.permute.xlu0 %7400
    %7402 = vrot.lane.b32.xlu0 %v7375, 96
    %v7403 = vpop.permute.xlu0 %7402
    %7404 = vrot.lane.b32.xlu0 %v7376, 96
    %v7405 = vpop.permute.xlu0 %7404
    %7406 = vrot.lane.b32.xlu0 %v7377, 96
    %v7407 = vpop.permute.xlu0 %7406
    %7408 = vrot.lane.b32.xlu0 %v7378, 96
    %v7409 = vpop.permute.xlu0 %7408
    %7410 = vrot.lane.b32.xlu0 %v7379, 96
    %v7411 = vpop.permute.xlu0 %7410
    %7428 = vst.msk [vmem:[#allocation3 + $0x188] sm:$0xff] %vm2101, %v7381
    %7429 = vst.msk [vmem:[#allocation3 + $0x1a0] sm:$0xff] %vm2101, %v7383
    %7430 = vst.msk [vmem:[#allocation3 + $0x1b8] sm:$0xff] %vm2101, %v7385
    %7431 = vst.msk [vmem:[#allocation3 + $0x1d0] sm:$0xff] %vm2101, %v7387
    %7432 = vst.msk [vmem:[#allocation3 + $0x1e8] sm:$0xff] %vm2101, %v7389
    %7433 = vst.msk [vmem:[#allocation3 + $0x200] sm:$0xff] %vm2101, %v7391
    %7434 = vst.msk [vmem:[#allocation3 + $0x218] sm:$0xff] %vm2101, %v7393
    %7435 = vst.msk [vmem:[#allocation3 + $0x230] sm:$0xff] %vm2101, %v7395
    %7436 = vst.msk [vmem:[#allocation3 + $0x248] sm:$0xff] %vm2101, %v7397
    %7437 = vst.msk [vmem:[#allocation3 + $0x260] sm:$0xff] %vm2101, %v7399
    %7438 = vst.msk [vmem:[#allocation3 + $0x278] sm:$0xff] %vm2101, %v7401
    %7439 = vst.msk [vmem:[#allocation3 + $0x290] sm:$0xff] %vm2101, %v7403
    %7440 = vst.msk [vmem:[#allocation3 + $0x2a8] sm:$0xff] %vm2101, %v7405
    %7441 = vst.msk [vmem:[#allocation3 + $0x2c0] sm:$0xff] %vm2101, %v7407
    %7442 = vst.msk [vmem:[#allocation3 + $0x2d8] sm:$0xff] %vm2101, %v7409
    %7443 = vst.msk [vmem:[#allocation3 + $0x2f0] sm:$0xff] %vm2101, %v7411
    %v7444 = vld [vmem:[%s6755 + $0x8] sm:$0xf]
    %v7445 = vld [vmem:[%s6755 + $0xc] sm:$0xf]
    %v7446 = vld [vmem:[%s6755 + $0x10] sm:$0x1]
    %v7447 = vld [vmem:[%s6755 + $0x1c] sm:$0xf]
    %v7448 = vld [vmem:[%s6755 + $0x20] sm:$0xf]
    %v7449 = vld [vmem:[%s6755 + $0x24] sm:$0x1]
    %v7450 = vld [vmem:[%s6755 + $0x30] sm:$0xf]
    %v7451 = vld [vmem:[%s6755 + $0x34] sm:$0xf]
    %v7452 = vld [vmem:[%s6755 + $0x38] sm:$0x1]
    %v7453 = vld [vmem:[%s6755 + $0x44] sm:$0xf]
    %v7454 = vld [vmem:[%s6755 + $0x48] sm:$0xf]
    %v7455 = vld [vmem:[%s6755 + $0x4c] sm:$0x1]
    %v7456 = vld [vmem:[%s6755 + $0x58] sm:$0xf]
    %v7457 = vld [vmem:[%s6755 + $0x5c] sm:$0xf]
    %v7458 = vld [vmem:[%s6755 + $0x60] sm:$0x1]
    %v7459 = vld [vmem:[%s6755 + $0x6c] sm:$0xf]
    %v7460 = vld [vmem:[%s6755 + $0x70] sm:$0xf]
    %v7461 = vld [vmem:[%s6755 + $0x74] sm:$0x1]
    %v7462 = vld [vmem:[%s6755 + $0x80] sm:$0xf]
    %v7463 = vld [vmem:[%s6755 + $0x84] sm:$0xf]
    %v7464 = vld [vmem:[%s6755 + $0x88] sm:$0x1]
    %v7465 = vld [vmem:[%s6755 + $0x94] sm:$0xf]
    %v7466 = vld [vmem:[%s6755 + $0x98] sm:$0xf]
    %v7467 = vld [vmem:[%s6755 + $0x9c] sm:$0x1]
    %v7468 = vld [vmem:[%s6755 + $0xa8] sm:$0xf]
    %v7469 = vld [vmem:[%s6755 + $0xac] sm:$0xf]
    %v7470 = vld [vmem:[%s6755 + $0xb0] sm:$0x1]
    %v7471 = vld [vmem:[%s6755 + $0xbc] sm:$0xf]
    %v7472 = vld [vmem:[%s6755 + $0xc0] sm:$0xf]
    %v7473 = vld [vmem:[%s6755 + $0xc4] sm:$0x1]
    %v7474 = vld [vmem:[%s6755 + $0xd0] sm:$0xf]
    %v7475 = vld [vmem:[%s6755 + $0xd4] sm:$0xf]
    %v7476 = vld [vmem:[%s6755 + $0xd8] sm:$0x1]
    %v7477 = vld [vmem:[%s6755 + $0xe4] sm:$0xf]
    %v7478 = vld [vmem:[%s6755 + $0xe8] sm:$0xf]
    %v7479 = vld [vmem:[%s6755 + $0xec] sm:$0x1]
    %v7480 = vld [vmem:[%s6755 + $0xf8] sm:$0xf]
    %v7481 = vld [vmem:[%s6755 + $0xfc] sm:$0xf]
    %v7482 = vld [vmem:[%s6755 + $0x100] sm:$0x1]
    %v7483 = vld [vmem:[%s6755 + $0x10c] sm:$0xf]
    %v7484 = vld [vmem:[%s6755 + $0x110] sm:$0xf]
    %v7485 = vld [vmem:[%s6755 + $0x114] sm:$0x1]
    %v7486 = vld [vmem:[%s6755 + $0x120] sm:$0xf]
    %v7487 = vld [vmem:[%s6755 + $0x124] sm:$0xf]
    %v7488 = vld [vmem:[%s6755 + $0x128] sm:$0x1]
    %v7489 = vld [vmem:[%s6755 + $0x134] sm:$0xf]
    %v7490 = vld [vmem:[%s6755 + $0x138] sm:$0xf]
    %v7491 = vld [vmem:[%s6755 + $0x13c] sm:$0x1]
    %v7493 = vshrl.u32 %v7444, 16
    %v7495 = vrot.slane %v7493, 4
    %v7496 = vshll.u32 %v7444, 16
    %v7498 = vrot.slane %v7496, 5
    %v7499 = vor.u32 %v7495, %v7498
    %v7500 = vrot.slane %v7499, 4
    %v7502 = vshll.u32 %v7445, 16
    %v7504 = vrot.slane %v7502, 5
    %v7505 = vsel %vm1107, %v7500, %v7504
    %v7506 = vshrl.u32 %v7445, 16
    %v7508 = vrot.slane %v7506, 4
    %v7509 = vor.u32 %v7508, %v7504
    %v7510 = vrot.slane %v7509, 4
    %v7512 = vshll.u32 %v7446, 16
    %v7514 = vrot.slane %v7512, 5
    %v7515 = vsel %vm1107, %v7510, %v7514
    %v7517 = vshrl.u32 %v7447, 16
    %v7519 = vrot.slane %v7517, 4
    %v7520 = vshll.u32 %v7447, 16
    %v7522 = vrot.slane %v7520, 5
    %v7523 = vor.u32 %v7519, %v7522
    %v7524 = vrot.slane %v7523, 4
    %v7526 = vshll.u32 %v7448, 16
    %v7528 = vrot.slane %v7526, 5
    %v7529 = vsel %vm1107, %v7524, %v7528
    %v7530 = vshrl.u32 %v7448, 16
    %v7532 = vrot.slane %v7530, 4
    %v7533 = vor.u32 %v7532, %v7528
    %v7534 = vrot.slane %v7533, 4
    %v7536 = vshll.u32 %v7449, 16
    %v7538 = vrot.slane %v7536, 5
    %v7539 = vsel %vm1107, %v7534, %v7538
    %v7541 = vshrl.u32 %v7450, 16
    %v7543 = vrot.slane %v7541, 4
    %v7544 = vshll.u32 %v7450, 16
    %v7546 = vrot.slane %v7544, 5
    %v7547 = vor.u32 %v7543, %v7546
    %v7548 = vrot.slane %v7547, 4
    %v7550 = vshll.u32 %v7451, 16
    %v7552 = vrot.slane %v7550, 5
    %v7553 = vsel %vm1107, %v7548, %v7552
    %v7554 = vshrl.u32 %v7451, 16
    %v7556 = vrot.slane %v7554, 4
    %v7557 = vor.u32 %v7556, %v7552
    %v7558 = vrot.slane %v7557, 4
    %v7560 = vshll.u32 %v7452, 16
    %v7562 = vrot.slane %v7560, 5
    %v7563 = vsel %vm1107, %v7558, %v7562
    %v7565 = vshrl.u32 %v7453, 16
    %v7567 = vrot.slane %v7565, 4
    %v7568 = vshll.u32 %v7453, 16
    %v7570 = vrot.slane %v7568, 5
    %v7571 = vor.u32 %v7567, %v7570
    %v7572 = vrot.slane %v7571, 4
    %v7574 = vshll.u32 %v7454, 16
    %v7576 = vrot.slane %v7574, 5
    %v7577 = vsel %vm1107, %v7572, %v7576
    %v7578 = vshrl.u32 %v7454, 16
    %v7580 = vrot.slane %v7578, 4
    %v7581 = vor.u32 %v7580, %v7576
    %v7582 = vrot.slane %v7581, 4
    %v7584 = vshll.u32 %v7455, 16
    %v7586 = vrot.slane %v7584, 5
    %v7587 = vsel %vm1107, %v7582, %v7586
    %v7589 = vshrl.u32 %v7456, 16
    %v7591 = vrot.slane %v7589, 4
    %v7592 = vshll.u32 %v7456, 16
    %v7594 = vrot.slane %v7592, 5
    %v7595 = vor.u32 %v7591, %v7594
    %v7596 = vrot.slane %v7595, 4
    %v7598 = vshll.u32 %v7457, 16
    %v7600 = vrot.slane %v7598, 5
    %v7601 = vsel %vm1107, %v7596, %v7600
    %v7602 = vshrl.u32 %v7457, 16
    %v7604 = vrot.slane %v7602, 4
    %v7605 = vor.u32 %v7604, %v7600
    %v7606 = vrot.slane %v7605, 4
    %v7608 = vshll.u32 %v7458, 16
    %v7610 = vrot.slane %v7608, 5
    %v7611 = vsel %vm1107, %v7606, %v7610
    %v7613 = vshrl.u32 %v7459, 16
    %v7615 = vrot.slane %v7613, 4
    %v7616 = vshll.u32 %v7459, 16
    %v7618 = vrot.slane %v7616, 5
    %v7619 = vor.u32 %v7615, %v7618
    %v7620 = vrot.slane %v7619, 4
    %v7622 = vshll.u32 %v7460, 16
    %v7624 = vrot.slane %v7622, 5
    %v7625 = vsel %vm1107, %v7620, %v7624
    %v7626 = vshrl.u32 %v7460, 16
    %v7628 = vrot.slane %v7626, 4
    %v7629 = vor.u32 %v7628, %v7624
    %v7630 = vrot.slane %v7629, 4
    %v7632 = vshll.u32 %v7461, 16
    %v7634 = vrot.slane %v7632, 5
    %v7635 = vsel %vm1107, %v7630, %v7634
    %v7637 = vshrl.u32 %v7462, 16
    %v7639 = vrot.slane %v7637, 4
    %v7640 = vshll.u32 %v7462, 16
    %v7642 = vrot.slane %v7640, 5
    %v7643 = vor.u32 %v7639, %v7642
    %v7644 = vrot.slane %v7643, 4
    %v7646 = vshll.u32 %v7463, 16
    %v7648 = vrot.slane %v7646, 5
    %v7649 = vsel %vm1107, %v7644, %v7648
    %v7650 = vshrl.u32 %v7463, 16
    %v7652 = vrot.slane %v7650, 4
    %v7653 = vor.u32 %v7652, %v7648
    %v7654 = vrot.slane %v7653, 4
    %v7656 = vshll.u32 %v7464, 16
    %v7658 = vrot.slane %v7656, 5
    %v7659 = vsel %vm1107, %v7654, %v7658
    %v7661 = vshrl.u32 %v7465, 16
    %v7663 = vrot.slane %v7661, 4
    %v7664 = vshll.u32 %v7465, 16
    %v7666 = vrot.slane %v7664, 5
    %v7667 = vor.u32 %v7663, %v7666
    %v7668 = vrot.slane %v7667, 4
    %v7670 = vshll.u32 %v7466, 16
    %v7672 = vrot.slane %v7670, 5
    %v7673 = vsel %vm1107, %v7668, %v7672
    %v7674 = vshrl.u32 %v7466, 16
    %v7676 = vrot.slane %v7674, 4
    %v7677 = vor.u32 %v7676, %v7672
    %v7678 = vrot.slane %v7677, 4
    %v7680 = vshll.u32 %v7467, 16
    %v7682 = vrot.slane %v7680, 5
    %v7683 = vsel %vm1107, %v7678, %v7682
    %v7685 = vshrl.u32 %v7468, 16
    %v7687 = vrot.slane %v7685, 4
    %v7688 = vshll.u32 %v7468, 16
    %v7690 = vrot.slane %v7688, 5
    %v7691 = vor.u32 %v7687, %v7690
    %v7692 = vrot.slane %v7691, 4
    %v7694 = vshll.u32 %v7469, 16
    %v7696 = vrot.slane %v7694, 5
    %v7697 = vsel %vm1107, %v7692, %v7696
    %v7698 = vshrl.u32 %v7469, 16
    %v7700 = vrot.slane %v7698, 4
    %v7701 = vor.u32 %v7700, %v7696
    %v7702 = vrot.slane %v7701, 4
    %v7704 = vshll.u32 %v7470, 16
    %v7706 = vrot.slane %v7704, 5
    %v7707 = vsel %vm1107, %v7702, %v7706
    %v7709 = vshrl.u32 %v7471, 16
    %v7711 = vrot.slane %v7709, 4
    %v7712 = vshll.u32 %v7471, 16
    %v7714 = vrot.slane %v7712, 5
    %v7715 = vor.u32 %v7711, %v7714
    %v7716 = vrot.slane %v7715, 4
    %v7718 = vshll.u32 %v7472, 16
    %v7720 = vrot.slane %v7718, 5
    %v7721 = vsel %vm1107, %v7716, %v7720
    %v7722 = vshrl.u32 %v7472, 16
    %v7724 = vrot.slane %v7722, 4
    %v7725 = vor.u32 %v7724, %v7720
    %v7726 = vrot.slane %v7725, 4
    %v7728 = vshll.u32 %v7473, 16
    %v7730 = vrot.slane %v7728, 5
    %v7731 = vsel %vm1107, %v7726, %v7730
    %v7733 = vshrl.u32 %v7474, 16
    %v7735 = vrot.slane %v7733, 4
    %v7736 = vshll.u32 %v7474, 16
    %v7738 = vrot.slane %v7736, 5
    %v7739 = vor.u32 %v7735, %v7738
    %v7740 = vrot.slane %v7739, 4
    %v7742 = vshll.u32 %v7475, 16
    %v7744 = vrot.slane %v7742, 5
    %v7745 = vsel %vm1107, %v7740, %v7744
    %v7746 = vshrl.u32 %v7475, 16
    %v7748 = vrot.slane %v7746, 4
    %v7749 = vor.u32 %v7748, %v7744
    %v7750 = vrot.slane %v7749, 4
    %v7752 = vshll.u32 %v7476, 16
    %v7754 = vrot.slane %v7752, 5
    %v7755 = vsel %vm1107, %v7750, %v7754
    %v7757 = vshrl.u32 %v7477, 16
    %v7759 = vrot.slane %v7757, 4
    %v7760 = vshll.u32 %v7477, 16
    %v7762 = vrot.slane %v7760, 5
    %v7763 = vor.u32 %v7759, %v7762
    %v7764 = vrot.slane %v7763, 4
    %v7766 = vshll.u32 %v7478, 16
    %v7768 = vrot.slane %v7766, 5
    %v7769 = vsel %vm1107, %v7764, %v7768
    %v7770 = vshrl.u32 %v7478, 16
    %v7772 = vrot.slane %v7770, 4
    %v7773 = vor.u32 %v7772, %v7768
    %v7774 = vrot.slane %v7773, 4
    %v7776 = vshll.u32 %v7479, 16
    %v7778 = vrot.slane %v7776, 5
    %v7779 = vsel %vm1107, %v7774, %v7778
    %v7781 = vshrl.u32 %v7480, 16
    %v7783 = vrot.slane %v7781, 4
    %v7784 = vshll.u32 %v7480, 16
    %v7786 = vrot.slane %v7784, 5
    %v7787 = vor.u32 %v7783, %v7786
    %v7788 = vrot.slane %v7787, 4
    %v7790 = vshll.u32 %v7481, 16
    %v7792 = vrot.slane %v7790, 5
    %v7793 = vsel %vm1107, %v7788, %v7792
    %v7794 = vshrl.u32 %v7481, 16
    %v7796 = vrot.slane %v7794, 4
    %v7797 = vor.u32 %v7796, %v7792
    %v7798 = vrot.slane %v7797, 4
    %v7800 = vshll.u32 %v7482, 16
    %v7802 = vrot.slane %v7800, 5
    %v7803 = vsel %vm1107, %v7798, %v7802
    %v7805 = vshrl.u32 %v7483, 16
    %v7807 = vrot.slane %v7805, 4
    %v7808 = vshll.u32 %v7483, 16
    %v7810 = vrot.slane %v7808, 5
    %v7811 = vor.u32 %v7807, %v7810
    %v7812 = vrot.slane %v7811, 4
    %v7814 = vshll.u32 %v7484, 16
    %v7816 = vrot.slane %v7814, 5
    %v7817 = vsel %vm1107, %v7812, %v7816
    %v7818 = vshrl.u32 %v7484, 16
    %v7820 = vrot.slane %v7818, 4
    %v7821 = vor.u32 %v7820, %v7816
    %v7822 = vrot.slane %v7821, 4
    %v7824 = vshll.u32 %v7485, 16
    %v7826 = vrot.slane %v7824, 5
    %v7827 = vsel %vm1107, %v7822, %v7826
    %v7829 = vshrl.u32 %v7486, 16
    %v7831 = vrot.slane %v7829, 4
    %v7832 = vshll.u32 %v7486, 16
    %v7834 = vrot.slane %v7832, 5
    %v7835 = vor.u32 %v7831, %v7834
    %v7836 = vrot.slane %v7835, 4
    %v7838 = vshll.u32 %v7487, 16
    %v7840 = vrot.slane %v7838, 5
    %v7841 = vsel %vm1107, %v7836, %v7840
    %v7842 = vshrl.u32 %v7487, 16
    %v7844 = vrot.slane %v7842, 4
    %v7845 = vor.u32 %v7844, %v7840
    %v7846 = vrot.slane %v7845, 4
    %v7848 = vshll.u32 %v7488, 16
    %v7850 = vrot.slane %v7848, 5
    %v7851 = vsel %vm1107, %v7846, %v7850
    %v7853 = vshrl.u32 %v7489, 16
    %v7855 = vrot.slane %v7853, 4
    %v7856 = vshll.u32 %v7489, 16
    %v7858 = vrot.slane %v7856, 5
    %v7859 = vor.u32 %v7855, %v7858
    %v7860 = vrot.slane %v7859, 4
    %v7862 = vshll.u32 %v7490, 16
    %v7864 = vrot.slane %v7862, 5
    %v7865 = vsel %vm1107, %v7860, %v7864
    %v7866 = vshrl.u32 %v7490, 16
    %v7868 = vrot.slane %v7866, 4
    %v7869 = vor.u32 %v7868, %v7864
    %v7870 = vrot.slane %v7869, 4
    %v7872 = vshll.u32 %v7491, 16
    %v7874 = vrot.slane %v7872, 5
    %v7875 = vsel %vm1107, %v7870, %v7874
    %v7876 = vunpack.c.l.b16 %v7505
    %v7877 = vunpack.c.l.b16 %v7515
    %v7878 = vunpack.c.l.b16 %v7529
    %v7879 = vunpack.c.l.b16 %v7539
    %v7880 = vunpack.c.l.b16 %v7553
    %v7881 = vunpack.c.l.b16 %v7563
    %v7882 = vunpack.c.l.b16 %v7577
    %v7883 = vunpack.c.l.b16 %v7587
    %v7884 = vunpack.c.l.b16 %v7601
    %v7885 = vunpack.c.l.b16 %v7611
    %v7886 = vunpack.c.l.b16 %v7625
    %v7887 = vunpack.c.l.b16 %v7635
    %v7888 = vunpack.c.l.b16 %v7649
    %v7889 = vunpack.c.l.b16 %v7659
    %v7890 = vunpack.c.l.b16 %v7673
    %v7891 = vunpack.c.l.b16 %v7683
    %v7892 = vunpack.c.l.b16 %v7697
    %v7893 = vunpack.c.l.b16 %v7707
    %v7894 = vunpack.c.l.b16 %v7721
    %v7895 = vunpack.c.l.b16 %v7731
    %v7896 = vunpack.c.l.b16 %v7745
    %v7897 = vunpack.c.l.b16 %v7755
    %v7898 = vunpack.c.l.b16 %v7769
    %v7899 = vunpack.c.l.b16 %v7779
    %v7900 = vunpack.c.l.b16 %v7793
    %v7901 = vunpack.c.l.b16 %v7803
    %v7902 = vunpack.c.l.b16 %v7817
    %v7903 = vunpack.c.l.b16 %v7827
    %v7904 = vunpack.c.l.b16 %v7841
    %v7905 = vunpack.c.l.b16 %v7851
    %v7906 = vunpack.c.l.b16 %v7865
    %v7907 = vunpack.c.l.b16 %v7875
    %v7908 = vpack.c.b16 %v7877, %v7876
    %v7909 = vpack.c.b16 %v7879, %v7878
    %v7910 = vpack.c.b16 %v7881, %v7880
    %v7911 = vpack.c.b16 %v7883, %v7882
    %v7912 = vpack.c.b16 %v7885, %v7884
    %v7913 = vpack.c.b16 %v7887, %v7886
    %v7914 = vpack.c.b16 %v7889, %v7888
    %v7915 = vpack.c.b16 %v7891, %v7890
    %v7916 = vpack.c.b16 %v7893, %v7892
    %v7917 = vpack.c.b16 %v7895, %v7894
    %v7918 = vpack.c.b16 %v7897, %v7896
    %v7919 = vpack.c.b16 %v7899, %v7898
    %v7920 = vpack.c.b16 %v7901, %v7900
    %v7921 = vpack.c.b16 %v7903, %v7902
    %v7922 = vpack.c.b16 %v7905, %v7904
    %v7923 = vpack.c.b16 %v7907, %v7906
    %7940 = vst.msk [vmem:[#allocation3 + $0x190] sm:$0xff] %vm863, %v7908
    %7941 = vst.msk [vmem:[#allocation3 + $0x1a8] sm:$0xff] %vm863, %v7909
    %7942 = vst.msk [vmem:[#allocation3 + $0x1c0] sm:$0xff] %vm863, %v7910
    %7943 = vst.msk [vmem:[#allocation3 + $0x1d8] sm:$0xff] %vm863, %v7911
    %7944 = vst.msk [vmem:[#allocation3 + $0x1f0] sm:$0xff] %vm863, %v7912
    %7945 = vst.msk [vmem:[#allocation3 + $0x208] sm:$0xff] %vm863, %v7913
    %7946 = vst.msk [vmem:[#allocation3 + $0x220] sm:$0xff] %vm863, %v7914
    %7947 = vst.msk [vmem:[#allocation3 + $0x238] sm:$0xff] %vm863, %v7915
    %7948 = vst.msk [vmem:[#allocation3 + $0x250] sm:$0xff] %vm863, %v7916
    %7949 = vst.msk [vmem:[#allocation3 + $0x268] sm:$0xff] %vm863, %v7917
    %7950 = vst.msk [vmem:[#allocation3 + $0x280] sm:$0xff] %vm863, %v7918
    %7951 = vst.msk [vmem:[#allocation3 + $0x298] sm:$0xff] %vm863, %v7919
    %7952 = vst.msk [vmem:[#allocation3 + $0x2b0] sm:$0xff] %vm863, %v7920
    %7953 = vst.msk [vmem:[#allocation3 + $0x2c8] sm:$0xff] %vm863, %v7921
    %7954 = vst.msk [vmem:[#allocation3 + $0x2e0] sm:$0xff] %vm863, %v7922
    %7955 = vst.msk [vmem:[#allocation3 + $0x2f8] sm:$0xff] %vm863, %v7923
    %v7956 = vld [vmem:[#allocation7] sm:$0xff]
    %v7957 = vld [vmem:[#allocation7 + $0x8] sm:$0xf]
    %v7958 = vld [vmem:[#allocation7 + $0xc] sm:$0xff]
    %v7959 = vld [vmem:[#allocation7 + $0x14] sm:$0xf]
    %v7960 = vld [vmem:[#allocation7 + $0x18] sm:$0xff]
    %v7961 = vld [vmem:[#allocation7 + $0x20] sm:$0xf]
    %v7962 = vld [vmem:[#allocation7 + $0x24] sm:$0xff]
    %v7963 = vld [vmem:[#allocation7 + $0x2c] sm:$0xf]
    %v7964 = vld [vmem:[#allocation3] sm:$0xff]
    %v7965 = vld [vmem:[#allocation3 + $0x8] sm:$0xff]
    %v7966 = vld [vmem:[#allocation3 + $0x10] sm:$0xff]
    %v7967 = vld [vmem:[#allocation3 + $0x18] sm:$0xff]
    %v7968 = vld [vmem:[#allocation3 + $0x20] sm:$0xff]
    %v7969 = vld [vmem:[#allocation3 + $0x28] sm:$0xff]
    %v7970 = vld [vmem:[#allocation3 + $0x30] sm:$0xff]
    %v7971 = vld [vmem:[#allocation3 + $0x38] sm:$0xff]
    %v7972 = vld [vmem:[#allocation3 + $0x40] sm:$0xff]
    %v7973 = vld [vmem:[#allocation3 + $0x48] sm:$0xff]
    %v7974 = vld [vmem:[#allocation3 + $0x50] sm:$0xff]
    %v7975 = vld [vmem:[#allocation3 + $0x58] sm:$0xff]
    %v7976 = vld [vmem:[#allocation3 + $0x60] sm:$0xff]
    %v7977 = vld [vmem:[#allocation3 + $0x68] sm:$0xff]
    %v7978 = vld [vmem:[#allocation3 + $0x70] sm:$0xff]
    %v7979 = vld [vmem:[#allocation3 + $0x78] sm:$0xff]
    %v7980 = vld [vmem:[#allocation3 + $0x80] sm:$0xff]
    %v7981 = vld [vmem:[#allocation3 + $0x88] sm:$0xff]
    %v7982 = vld [vmem:[#allocation3 + $0x90] sm:$0xff]
    %v7983 = vld [vmem:[#allocation3 + $0x98] sm:$0xff]
    %v7984 = vld [vmem:[#allocation3 + $0xa0] sm:$0xff]
    %v7985 = vld [vmem:[#allocation3 + $0xa8] sm:$0xff]
    %v7986 = vld [vmem:[#allocation3 + $0xb0] sm:$0xff]
    %v7987 = vld [vmem:[#allocation3 + $0xb8] sm:$0xff]
    %v7988 = vld [vmem:[#allocation3 + $0xc0] sm:$0xff]
    %v7989 = vld [vmem:[#allocation3 + $0xc8] sm:$0xff]
    %v7990 = vld [vmem:[#allocation3 + $0xd0] sm:$0xff]
    %v7991 = vld [vmem:[#allocation3 + $0xd8] sm:$0xff]
    %v7992 = vld [vmem:[#allocation3 + $0xe0] sm:$0xff]
    %v7993 = vld [vmem:[#allocation3 + $0xe8] sm:$0xff]
    %v7994 = vld [vmem:[#allocation3 + $0xf0] sm:$0xff]
    %v7995 = vld [vmem:[#allocation3 + $0xf8] sm:$0xff]
    %v7996 = vld [vmem:[#allocation3 + $0x100] sm:$0xff]
    %v7997 = vld [vmem:[#allocation3 + $0x108] sm:$0xff]
    %v7998 = vld [vmem:[#allocation3 + $0x110] sm:$0xff]
    %v7999 = vld [vmem:[#allocation3 + $0x118] sm:$0xff]
    %v8000 = vld [vmem:[#allocation3 + $0x120] sm:$0xff]
    %v8001 = vld [vmem:[#allocation3 + $0x128] sm:$0xff]
    %v8002 = vld [vmem:[#allocation3 + $0x130] sm:$0xff]
    %v8003 = vld [vmem:[#allocation3 + $0x138] sm:$0xff]
    %v8004 = vld [vmem:[#allocation3 + $0x140] sm:$0xff]
    %v8005 = vld [vmem:[#allocation3 + $0x148] sm:$0xff]
    %v8006 = vld [vmem:[#allocation3 + $0x150] sm:$0xff]
    %v8007 = vld [vmem:[#allocation3 + $0x158] sm:$0xff]
    %v8008 = vld [vmem:[#allocation3 + $0x160] sm:$0xff]
    %v8009 = vld [vmem:[#allocation3 + $0x168] sm:$0xff]
    %v8010 = vld [vmem:[#allocation3 + $0x170] sm:$0xff]
    %v8011 = vld [vmem:[#allocation3 + $0x178] sm:$0xff]
    %v8012 = vld [vmem:[#allocation3 + $0x180] sm:$0xff]
    %v8013 = vld [vmem:[#allocation3 + $0x188] sm:$0xff]
    %v8014 = vld [vmem:[#allocation3 + $0x190] sm:$0xff]
    %v8015 = vld [vmem:[#allocation3 + $0x198] sm:$0xff]
    %v8016 = vld [vmem:[#allocation3 + $0x1a0] sm:$0xff]
    %v8017 = vld [vmem:[#allocation3 + $0x1a8] sm:$0xff]
    %v8018 = vld [vmem:[#allocation3 + $0x1b0] sm:$0xff]
    %v8019 = vld [vmem:[#allocation3 + $0x1b8] sm:$0xff]
    %v8020 = vld [vmem:[#allocation3 + $0x1c0] sm:$0xff]
    %v8021 = vld [vmem:[#allocation3 + $0x1c8] sm:$0xff]
    %v8022 = vld [vmem:[#allocation3 + $0x1d0] sm:$0xff]
    %v8023 = vld [vmem:[#allocation3 + $0x1d8] sm:$0xff]
    %v8024 = vld [vmem:[#allocation3 + $0x1e0] sm:$0xff]
    %v8025 = vld [vmem:[#allocation3 + $0x1e8] sm:$0xff]
    %v8026 = vld [vmem:[#allocation3 + $0x1f0] sm:$0xff]
    %v8027 = vld [vmem:[#allocation3 + $0x1f8] sm:$0xff]
    %v8028 = vld [vmem:[#allocation3 + $0x200] sm:$0xff]
    %v8029 = vld [vmem:[#allocation3 + $0x208] sm:$0xff]
    %v8030 = vld [vmem:[#allocation3 + $0x210] sm:$0xff]
    %v8031 = vld [vmem:[#allocation3 + $0x218] sm:$0xff]
    %v8032 = vld [vmem:[#allocation3 + $0x220] sm:$0xff]
    %v8033 = vld [vmem:[#allocation3 + $0x228] sm:$0xff]
    %v8034 = vld [vmem:[#allocation3 + $0x230] sm:$0xff]
    %v8035 = vld [vmem:[#allocation3 + $0x238] sm:$0xff]
    %v8036 = vld [vmem:[#allocation3 + $0x240] sm:$0xff]
    %v8037 = vld [vmem:[#allocation3 + $0x248] sm:$0xff]
    %v8038 = vld [vmem:[#allocation3 + $0x250] sm:$0xff]
    %v8039 = vld [vmem:[#allocation3 + $0x258] sm:$0xff]
    %v8040 = vld [vmem:[#allocation3 + $0x260] sm:$0xff]
    %v8041 = vld [vmem:[#allocation3 + $0x268] sm:$0xff]
    %v8042 = vld [vmem:[#allocation3 + $0x270] sm:$0xff]
    %v8043 = vld [vmem:[#allocation3 + $0x278] sm:$0xff]
    %v8044 = vld [vmem:[#allocation3 + $0x280] sm:$0xff]
    %v8045 = vld [vmem:[#allocation3 + $0x288] sm:$0xff]
    %v8046 = vld [vmem:[#allocation3 + $0x290] sm:$0xff]
    %v8047 = vld [vmem:[#allocation3 + $0x298] sm:$0xff]
    %v8048 = vld [vmem:[#allocation3 + $0x2a0] sm:$0xff]
    %v8049 = vld [vmem:[#allocation3 + $0x2a8] sm:$0xff]
    %v8050 = vld [vmem:[#allocation3 + $0x2b0] sm:$0xff]
    %v8051 = vld [vmem:[#allocation3 + $0x2b8] sm:$0xff]
    %v8052 = vld [vmem:[#allocation3 + $0x2c0] sm:$0xff]
    %v8053 = vld [vmem:[#allocation3 + $0x2c8] sm:$0xff]
    %v8054 = vld [vmem:[#allocation3 + $0x2d0] sm:$0xff]
    %v8055 = vld [vmem:[#allocation3 + $0x2d8] sm:$0xff]
    %v8056 = vld [vmem:[#allocation3 + $0x2e0] sm:$0xff]
    %v8057 = vld [vmem:[#allocation3 + $0x2e8] sm:$0xff]
    %v8058 = vld [vmem:[#allocation3 + $0x2f0] sm:$0xff]
    %v8059 = vld [vmem:[#allocation3 + $0x2f8] sm:$0xff]
    %v8068 = vunpack.c.l.b16 %v7956
    %v8069 = vunpack.c.h.b16 %v7956
    %v8070 = vunpack.c.l.b16 %v7957
    %v8071 = vunpack.c.l.b16 %v7958
    %v8072 = vunpack.c.h.b16 %v7958
    %v8073 = vunpack.c.l.b16 %v7959
    %v8074 = vunpack.c.l.b16 %v7960
    %v8075 = vunpack.c.h.b16 %v7960
    %v8076 = vunpack.c.l.b16 %v7961
    %v8077 = vunpack.c.l.b16 %v7962
    %v8078 = vunpack.c.h.b16 %v7962
    %v8079 = vunpack.c.l.b16 %v7963
    %v8080 = vpack.c.b16 %v8071, %v8068
    %v8081 = vpack.c.b16 %v8072, %v8069
    %v8082 = vpack.c.b16 %v8073, %v8070
    %v8083 = vpack.c.b16 %v8077, %v8074
    %v8084 = vpack.c.b16 %v8078, %v8075
    %v8085 = vpack.c.b16 %v8079, %v8076
    %v8091 = vsel %vm863, %v8082, 0
    %v8094 = vsel %vm863, %v8085, 0
    %v8097 = vsel %vm863, %v7966, 0
    %v8100 = vsel %vm863, %v7969, 0
    %v8103 = vsel %vm863, %v7972, 0
    %v8106 = vsel %vm863, %v7975, 0
    %v8109 = vsel %vm863, %v7978, 0
    %v8112 = vsel %vm863, %v7981, 0
    %v8115 = vsel %vm863, %v7984, 0
    %v8118 = vsel %vm863, %v7987, 0
    %v8121 = vsel %vm863, %v7990, 0
    %v8124 = vsel %vm863, %v7993, 0
    %v8127 = vsel %vm863, %v7996, 0
    %v8130 = vsel %vm863, %v7999, 0
    %v8133 = vsel %vm863, %v8002, 0
    %v8136 = vsel %vm863, %v8005, 0
    %v8139 = vsel %vm863, %v8008, 0
    %v8142 = vsel %vm863, %v8011, 0
    %v8145 = vsel %vm863, %v8014, 0
    %v8148 = vsel %vm863, %v8017, 0
    %v8151 = vsel %vm863, %v8020, 0
    %v8154 = vsel %vm863, %v8023, 0
    %v8157 = vsel %vm863, %v8026, 0
    %v8160 = vsel %vm863, %v8029, 0
    %v8163 = vsel %vm863, %v8032, 0
    %v8166 = vsel %vm863, %v8035, 0
    %v8169 = vsel %vm863, %v8038, 0
    %v8172 = vsel %vm863, %v8041, 0
    %v8175 = vsel %vm863, %v8044, 0
    %v8178 = vsel %vm863, %v8047, 0
    %v8181 = vsel %vm863, %v8050, 0
    %v8184 = vsel %vm863, %v8053, 0
    %v8187 = vsel %vm863, %v8056, 0
    %v8190 = vsel %vm863, %v8059, 0
    %8192 = vmatprep.subr.bf16.mxu0 %v7965
    %8193 = vmatpush1.bf16.xpose.msra.mxu0 %v7964
    %8194 = vmatprep.subr.bf16.mxu0 %v7968
    %8195 = vmatpush1.bf16.xpose.msra.mxu0 %v7967
    %8196 = vmatprep.subr.bf16.mxu0 %v7971
    %8197 = vmatpush1.bf16.xpose.msra.mxu0 %v7970
    %8198 = vmatprep.subr.bf16.mxu0 %v7974
    %8199 = vmatpush1.bf16.xpose.msra.mxu0 %v7973
    %8200 = vmatprep.subr.bf16.mxu0 %v7977
    %8201 = vmatpush1.bf16.xpose.msra.mxu0 %v7976
    %8202 = vmatprep.subr.bf16.mxu0 %v7980
    %8203 = vmatpush1.bf16.xpose.msra.mxu0 %v7979
    %8204 = vmatprep.subr.bf16.mxu0 %v7983
    %8205 = vmatpush1.bf16.xpose.msra.mxu0 %v7982
    %8206 = vmatprep.subr.bf16.mxu0 %v7986
    %8207 = vmatpush1.bf16.xpose.msra.mxu0 %v7985
    %8208 = vmatprep.subr.bf16.mxu0 %v7989
    %8209 = vmatpush1.bf16.xpose.msra.mxu0 %v7988
    %8210 = vmatprep.subr.bf16.mxu0 %v7992
    %8211 = vmatpush1.bf16.xpose.msra.mxu0 %v7991
    %8212 = vmatprep.subr.bf16.mxu0 %v7995
    %8213 = vmatpush1.bf16.xpose.msra.mxu0 %v7994
    %8214 = vmatprep.subr.bf16.mxu0 %v7998
    %8215 = vmatpush1.bf16.xpose.msra.mxu0 %v7997
    %8216 = vmatprep.subr.bf16.mxu0 %v8001
    %8217 = vmatpush1.bf16.xpose.msra.mxu0 %v8000
    %8218 = vmatprep.subr.bf16.mxu0 %v8004
    %8219 = vmatpush1.bf16.xpose.msra.mxu0 %v8003
    %8220 = vmatprep.subr.bf16.mxu0 %v8007
    %8221 = vmatpush1.bf16.xpose.msra.mxu0 %v8006
    %8222 = vmatprep.subr.bf16.mxu0 %v8010
    %8223 = vmatpush1.bf16.xpose.msra.mxu0 %v8009
    %8224 = vmatprep.mubr.bf16.mxu0 %v8081
    %8225 = vmatmul.mubr.bf16.gmra.mrb[0].mxu0 %v8080
    %v8226 = vpop.f32.mrb[0].mxu0
    %v8227 = vadd.f32 0.0, %v8226
    %v8228 = vpop.f32.mrb[0].mxu0
    %v8229 = vadd.f32 0.0, %v8228
    %v8230 = vpop.f32.mrb[0].mxu0
    %v8231 = vadd.f32 0.0, %v8230
    %v8232 = vpop.f32.mrb[0].mxu0
    %v8233 = vadd.f32 0.0, %v8232
    %8234 = vmatprep.mubr.bf16.mxu0 %v8084
    %8235 = vmatmul.mubr.bf16.gmra.mrb[0].mxu0 %v8083
    %v8236 = vpop.f32.mrb[0].mxu0
    %v8237 = vadd.f32 0.0, %v8236
    %v8238 = vpop.f32.mrb[0].mxu0
    %v8239 = vadd.f32 0.0, %v8238
    %v8240 = vpop.f32.mrb[0].mxu0
    %v8241 = vadd.f32 0.0, %v8240
    %v8242 = vpop.f32.mrb[0].mxu0
    %v8243 = vadd.f32 0.0, %v8242
    %8244 = vdwg.mxu0
    %8245 = vmatprep.subr.bf16.mxu0 0
    %8246 = vmatpush1.bf16.xpose.msra.mxu0 %v8097
    %8247 = vmatprep.subr.bf16.mxu0 0
    %8248 = vmatpush1.bf16.xpose.msra.mxu0 %v8100
    %8249 = vmatprep.subr.bf16.mxu0 0
    %8250 = vmatpush1.bf16.xpose.msra.mxu0 %v8103
    %8251 = vmatprep.subr.bf16.mxu0 0
    %8252 = vmatpush1.bf16.xpose.msra.mxu0 %v8106
    %8253 = vmatprep.subr.bf16.mxu0 0
    %8254 = vmatpush1.bf16.xpose.msra.mxu0 %v8109
    %8255 = vmatprep.subr.bf16.mxu0 0
    %8256 = vmatpush1.bf16.xpose.msra.mxu0 %v8112
    %8257 = vmatprep.subr.bf16.mxu0 0
    %8258 = vmatpush1.bf16.xpose.msra.mxu0 %v8115
    %8259 = vmatprep.subr.bf16.mxu0 0
    %8260 = vmatpush1.bf16.xpose.msra.mxu0 %v8118
    %8261 = vmatprep.subr.bf16.mxu0 0
    %8262 = vmatpush1.bf16.xpose.msra.mxu0 %v8121
    %8263 = vmatprep.subr.bf16.mxu0 0
    %8264 = vmatpush1.bf16.xpose.msra.mxu0 %v8124
    %8265 = vmatprep.subr.bf16.mxu0 0
    %8266 = vmatpush1.bf16.xpose.msra.mxu0 %v8127
    %8267 = vmatprep.subr.bf16.mxu0 0
    %8268 = vmatpush1.bf16.xpose.msra.mxu0 %v8130
    %8269 = vmatprep.subr.bf16.mxu0 0
    %8270 = vmatpush1.bf16.xpose.msra.mxu0 %v8133
    %8271 = vmatprep.subr.bf16.mxu0 0
    %8272 = vmatpush1.bf16.xpose.msra.mxu0 %v8136
    %8273 = vmatprep.subr.bf16.mxu0 0
    %8274 = vmatpush1.bf16.xpose.msra.mxu0 %v8139
    %8275 = vmatprep.subr.bf16.mxu0 0
    %8276 = vmatpush1.bf16.xpose.msra.mxu0 %v8142
    %8277 = vmatprep.mubr.bf16.mxu0 0
    %8278 = vmatmul.mubr.bf16.gmra.mrb[0].mxu0 %v8091
    %v8279 = vpop.f32.mrb[0].mxu0
    %v8280 = vadd.f32 %v8227, %v8279
    %v8281 = vpop.f32.mrb[0].mxu0
    %v8282 = vadd.f32 %v8229, %v8281
    %v8283 = vpop.f32.mrb[0].mxu0
    %v8284 = vadd.f32 %v8231, %v8283
    %v8285 = vpop.f32.mrb[0].mxu0
    %v8286 = vadd.f32 %v8233, %v8285
    %8287 = vmatprep.mubr.bf16.mxu0 0
    %8288 = vmatmul.mubr.bf16.gmra.mrb[0].mxu0 %v8094
    %v8289 = vpop.f32.mrb[0].mxu0
    %v8290 = vadd.f32 %v8237, %v8289
    %v8291 = vpop.f32.mrb[0].mxu0
    %v8292 = vadd.f32 %v8239, %v8291
    %v8293 = vpop.f32.mrb[0].mxu0
    %v8294 = vadd.f32 %v8241, %v8293
    %v8295 = vpop.f32.mrb[0].mxu0
    %v8296 = vadd.f32 %v8243, %v8295
    %8297 = vdwg.mxu0
    %8298 = vmatprep.subr.bf16.mxu0 %v8013
    %8299 = vmatpush1.bf16.xpose.msra.mxu0 %v8012
    %8300 = vmatprep.subr.bf16.mxu0 %v8016
    %8301 = vmatpush1.bf16.xpose.msra.mxu0 %v8015
    %8302 = vmatprep.subr.bf16.mxu0 %v8019
    %8303 = vmatpush1.bf16.xpose.msra.mxu0 %v8018
    %8304 = vmatprep.subr.bf16.mxu0 %v8022
    %8305 = vmatpush1.bf16.xpose.msra.mxu0 %v8021
    %8306 = vmatprep.subr.bf16.mxu0 %v8025
    %8307 = vmatpush1.bf16.xpose.msra.mxu0 %v8024
    %8308 = vmatprep.subr.bf16.mxu0 %v8028
    %8309 = vmatpush1.bf16.xpose.msra.mxu0 %v8027
    %8310 = vmatprep.subr.bf16.mxu0 %v8031
    %8311 = vmatpush1.bf16.xpose.msra.mxu0 %v8030
    %8312 = vmatprep.subr.bf16.mxu0 %v8034
    %8313 = vmatpush1.bf16.xpose.msra.mxu0 %v8033
    %8314 = vmatprep.subr.bf16.mxu0 %v8037
    %8315 = vmatpush1.bf16.xpose.msra.mxu0 %v8036
    %8316 = vmatprep.subr.bf16.mxu0 %v8040
    %8317 = vmatpush1.bf16.xpose.msra.mxu0 %v8039
    %8318 = vmatprep.subr.bf16.mxu0 %v8043
    %8319 = vmatpush1.bf16.xpose.msra.mxu0 %v8042
    %8320 = vmatprep.subr.bf16.mxu0 %v8046
    %8321 = vmatpush1.bf16.xpose.msra.mxu0 %v8045
    %8322 = vmatprep.subr.bf16.mxu0 %v8049
    %8323 = vmatpush1.bf16.xpose.msra.mxu0 %v8048
    %8324 = vmatprep.subr.bf16.mxu0 %v8052
    %8325 = vmatpush1.bf16.xpose.msra.mxu0 %v8051
    %8326 = vmatprep.subr.bf16.mxu0 %v8055
    %8327 = vmatpush1.bf16.xpose.msra.mxu0 %v8054
    %8328 = vmatprep.subr.bf16.mxu0 %v8058
    %8329 = vmatpush1.bf16.xpose.msra.mxu0 %v8057
    %8330 = vmatprep.mubr.bf16.mxu0 %v8081
    %8331 = vmatmul.mubr.bf16.gmra.mrb[0].mxu0 %v8080
    %v8332 = vpop.f32.mrb[0].mxu0
    %v8333 = vadd.f32 0.0, %v8332
    %v8334 = vpop.f32.mrb[0].mxu0
    %v8335 = vadd.f32 0.0, %v8334
    %v8336 = vpop.f32.mrb[0].mxu0
    %v8337 = vadd.f32 0.0, %v8336
    %v8338 = vpop.f32.mrb[0].mxu0
    %v8339 = vadd.f32 0.0, %v8338
    %8340 = vmatprep.mubr.bf16.mxu0 %v8084
    %8341 = vmatmul.mubr.bf16.gmra.mrb[0].mxu0 %v8083
    %v8342 = vpop.f32.mrb[0].mxu0
    %v8343 = vadd.f32 0.0, %v8342
    %v8344 = vpop.f32.mrb[0].mxu0
    %v8345 = vadd.f32 0.0, %v8344
    %v8346 = vpop.f32.mrb[0].mxu0
    %v8347 = vadd.f32 0.0, %v8346
    %v8348 = vpop.f32.mrb[0].mxu0
    %v8349 = vadd.f32 0.0, %v8348
    %8350 = vdwg.mxu0
    %8351 = vmatprep.subr.bf16.mxu0 0
    %8352 = vmatpush1.bf16.xpose.msra.mxu0 %v8145
    %8353 = vmatprep.subr.bf16.mxu0 0
    %8354 = vmatpush1.bf16.xpose.msra.mxu0 %v8148
    %8355 = vmatprep.subr.bf16.mxu0 0
    %8356 = vmatpush1.bf16.xpose.msra.mxu0 %v8151
    %8357 = vmatprep.subr.bf16.mxu0 0
    %8358 = vmatpush1.bf16.xpose.msra.mxu0 %v8154
    %8359 = vmatprep.subr.bf16.mxu0 0
    %8360 = vmatpush1.bf16.xpose.msra.mxu0 %v8157
    %8361 = vmatprep.subr.bf16.mxu0 0
    %8362 = vmatpush1.bf16.xpose.msra.mxu0 %v8160
    %8363 = vmatprep.subr.bf16.mxu0 0
    %8364 = vmatpush1.bf16.xpose.msra.mxu0 %v8163
    %8365 = vmatprep.subr.bf16.mxu0 0
    %8366 = vmatpush1.bf16.xpose.msra.mxu0 %v8166
    %8367 = vmatprep.subr.bf16.mxu0 0
    %8368 = vmatpush1.bf16.xpose.msra.mxu0 %v8169
    %8369 = vmatprep.subr.bf16.mxu0 0
    %8370 = vmatpush1.bf16.xpose.msra.mxu0 %v8172
    %8371 = vmatprep.subr.bf16.mxu0 0
    %8372 = vmatpush1.bf16.xpose.msra.mxu0 %v8175
    %8373 = vmatprep.subr.bf16.mxu0 0
    %8374 = vmatpush1.bf16.xpose.msra.mxu0 %v8178
    %8375 = vmatprep.subr.bf16.mxu0 0
    %8376 = vmatpush1.bf16.xpose.msra.mxu0 %v8181
    %8377 = vmatprep.subr.bf16.mxu0 0
    %8378 = vmatpush1.bf16.xpose.msra.mxu0 %v8184
    %8379 = vmatprep.subr.bf16.mxu0 0
    %8380 = vmatpush1.bf16.xpose.msra.mxu0 %v8187
    %8381 = vmatprep.subr.bf16.mxu0 0
    %8382 = vmatpush1.bf16.xpose.msra.mxu0 %v8190
    %8383 = vmatprep.mubr.bf16.mxu0 0
    %8384 = vmatmul.mubr.bf16.gmra.mrb[0].mxu0 %v8091
    %v8385 = vpop.f32.mrb[0].mxu0
    %v8386 = vadd.f32 %v8333, %v8385
    %v8387 = vpop.f32.mrb[0].mxu0
    %v8388 = vadd.f32 %v8335, %v8387
    %v8389 = vpop.f32.mrb[0].mxu0
    %v8390 = vadd.f32 %v8337, %v8389
    %v8391 = vpop.f32.mrb[0].mxu0
    %v8392 = vadd.f32 %v8339, %v8391
    %8393 = vmatprep.mubr.bf16.mxu0 0
    %8394 = vmatmul.mubr.bf16.gmra.mrb[0].mxu0 %v8094
    %v8395 = vpop.f32.mrb[0].mxu0
    %v8396 = vadd.f32 %v8343, %v8395
    %v8397 = vpop.f32.mrb[0].mxu0
    %v8398 = vadd.f32 %v8345, %v8397
    %v8399 = vpop.f32.mrb[0].mxu0
    %v8400 = vadd.f32 %v8347, %v8399
    %v8401 = vpop.f32.mrb[0].mxu0
    %v8402 = vadd.f32 %v8349, %v8401
    %8403 = vdwg.mxu0
    %v8404 = vld [vmem:[%s2] sm:$0xff]
    %v8405 = vld [vmem:[%s2 + $0x8] sm:$0xff]
    %v8406 = vld [vmem:[%s2 + $0x10] sm:$0xff]
    %v8407 = vld [vmem:[%s2 + $0x18] sm:$0xff]
    %8409 = vset.pattern.permute.xlu0 0
    %8410 = vperm.xlu0 %8409, %v8404
    %v8411 = vpop.permute.xlu0 %8410
    %8414 = vset.pattern.permute.xlu0 0
    %8415 = vperm.xlu0 %8414, %v8405
    %v8416 = vpop.permute.xlu0 %8415
    %8419 = vset.pattern.permute.xlu0 0
    %8420 = vperm.xlu0 %8419, %v8406
    %v8421 = vpop.permute.xlu0 %8420
    %8424 = vset.pattern.permute.xlu0 0
    %8425 = vperm.xlu0 %8424, %v8407
    %v8426 = vpop.permute.xlu0 %8425
    %v8428 = vadd.f32 %v8280, %v8411
    %v8429 = vadd.f32 %v8282, %v8411
    %v8430 = vadd.f32 %v8284, %v8416
    %v8431 = vadd.f32 %v8286, %v8416
    %v8432 = vadd.f32 %v8290, %v8421
    %v8433 = vadd.f32 %v8292, %v8421
    %v8434 = vadd.f32 %v8294, %v8426
    %v8435 = vadd.f32 %v8296, %v8426
    %v8436 = vmax.f32 %v8428, 0.0
    %v8437 = vmax.f32 %v8429, 0.0
    %v8438 = vmax.f32 %v8430, 0.0
    %v8439 = vmax.f32 %v8431, 0.0
    %v8440 = vmax.f32 %v8432, 0.0
    %v8441 = vmax.f32 %v8433, 0.0
    %v8442 = vmax.f32 %v8434, 0.0
    %v8443 = vmax.f32 %v8435, 0.0
    %8444 = vst [vmem:[#allocation9] sm:$0xff] %v8436
    %8445 = vst [vmem:[#allocation9 + $0x8] sm:$0xff] %v8437
    %8446 = vst [vmem:[#allocation9 + $0x10] sm:$0xff] %v8438
    %8447 = vst [vmem:[#allocation9 + $0x18] sm:$0xff] %v8439
    %8448 = vst [vmem:[#allocation9 + $0x20] sm:$0xff] %v8440
    %8449 = vst [vmem:[#allocation9 + $0x28] sm:$0xff] %v8441
    %8450 = vst [vmem:[#allocation9 + $0x30] sm:$0xff] %v8442
    %8451 = vst [vmem:[#allocation9 + $0x38] sm:$0xff] %v8443
    %v8452 = vld [vmem:[%s2] sm:$0xff]
    %v8453 = vld [vmem:[%s2 + $0x8] sm:$0xff]
    %v8454 = vld [vmem:[%s2 + $0x10] sm:$0xff]
    %v8455 = vld [vmem:[%s2 + $0x18] sm:$0xff]
    %8457 = vset.pattern.permute.xlu0 0
    %8458 = vperm.xlu0 %8457, %v8452
    %v8459 = vpop.permute.xlu0 %8458
    %8462 = vset.pattern.permute.xlu0 0
    %8463 = vperm.xlu0 %8462, %v8453
    %v8464 = vpop.permute.xlu0 %8463
    %8467 = vset.pattern.permute.xlu0 0
    %8468 = vperm.xlu0 %8467, %v8454
    %v8469 = vpop.permute.xlu0 %8468
    %8472 = vset.pattern.permute.xlu0 0
    %8473 = vperm.xlu0 %8472, %v8455
    %v8474 = vpop.permute.xlu0 %8473
    %v8476 = vadd.f32 %v8386, %v8459
    %v8477 = vadd.f32 %v8388, %v8459
    %v8478 = vadd.f32 %v8390, %v8464
    %v8479 = vadd.f32 %v8392, %v8464
    %v8480 = vadd.f32 %v8396, %v8469
    %v8481 = vadd.f32 %v8398, %v8469
    %v8482 = vadd.f32 %v8400, %v8474
    %v8483 = vadd.f32 %v8402, %v8474
    %v8484 = vmax.f32 %v8476, 0.0
    %v8485 = vmax.f32 %v8477, 0.0
    %v8486 = vmax.f32 %v8478, 0.0
    %v8487 = vmax.f32 %v8479, 0.0
    %v8488 = vmax.f32 %v8480, 0.0
    %v8489 = vmax.f32 %v8481, 0.0
    %v8490 = vmax.f32 %v8482, 0.0
    %v8491 = vmax.f32 %v8483, 0.0
    %s8492 = scalar_lea.vmem [#allocation9], 64
    %8493 = vst [vmem:[%s8492] sm:$0xff] %v8484
    %8494 = vst [vmem:[%s8492 + $0x8] sm:$0xff] %v8485
    %8495 = vst [vmem:[%s8492 + $0x10] sm:$0xff] %v8486
    %8496 = vst [vmem:[%s8492 + $0x18] sm:$0xff] %v8487
    %8497 = vst [vmem:[%s8492 + $0x20] sm:$0xff] %v8488
    %8498 = vst [vmem:[%s8492 + $0x28] sm:$0xff] %v8489
    %8499 = vst [vmem:[%s8492 + $0x30] sm:$0xff] %v8490
    %8500 = vst [vmem:[%s8492 + $0x38] sm:$0xff] %v8491
    // Predicated region
    $region22: #{tpu_custom_call.1} parent=1 // pred_check
      _
    $region23: #{tpu_custom_call.1} parent=1 // pred_check_branch
      %8502 = sbr.rel (0) target = $region25
    $region24: #{tpu_custom_call.1} parent=1 // pred_region
      %s8504 = ssub.s32 2048, 2048
      %8505 = vsyncadd [#allocation6], %s8504
      %s8506 = sshll.u32 [#allocation9], 4
      %s8507 = int_to_ptr.vmem [resolvable:$true] %s8506
      %8512 = dma.vmem_to_hbm [thread:$0]  %s8507, 2048, %s3, [#allocation6], 256, 256, 16
    $region25: #{tpu_custom_call.1} parent=1 // pred_fallthru
      _
    // Predicated region
    $region26: #{tpu_custom_call.1} parent=1 // pred_check
      _
    $region27: #{tpu_custom_call.1} parent=1 // pred_check_branch
      %8514 = sbr.rel (0) target = $region29
    $region28: #{tpu_custom_call.1} parent=1 // pred_region
      %8515 = dma.done [#allocation6], 2048
    $region29: #{tpu_custom_call.1} parent=1 // pred_fallthru
      _
    %8516 = vsyncpa [#allocation5], 1
    %8517 = vsyncpa [#allocation8], 1
    %8518 = vsyncpa [#allocation6], 1

</llo_original>
